<compile_context>
chip_gen: v6e
topology: v6e:2x2x1
jax: 0.10.0
libtpu: 0.0.40
codegen_flags: <defaults>
</compile_context>

<pallas_src>
import math

import jax
import jax.numpy as jnp
from jax.experimental import pallas as pl
from jax.experimental.pallas import tpu as pltpu

# ----------------------------- config (small) --------------------------------
BATCH = 2
SEQ = 8
VOCAB = 256
HIDDEN = 32
NUM_EXPERTS = 4
IMG_C, IMG_H, IMG_W = 3, 224, 224
IMG_FLAT = IMG_C * IMG_H * IMG_W          # 150528, as hard-coded in the module
K_TILE = 12544                            # 150528 / 12544 = 12 grid steps
                                          # bf16 weight block: 12544*128*2B ~= 3.2 MB
                                          # double-buffered ~= 6.4 MB -> fits v7x easily


# ----------------------------- fused kernel -----------------------------------
def _fused_moe_kernel(
    x_ref, w1_ref, b1_ref,                    # image encoder layer 1 (K-tiled)
    onehot_ref, emb_ref,                      # text embedding mean (as matmul)
    w_img2_ref, b_img2_ref,                   # image encoder layer 2
    w_f1_img_ref, w_f1_txt_ref, b_f1_ref,     # fusion layer 1 (concat split)
    w_f2_ref, b_f2_ref,                       # fusion layer 2
    w_r_ref, b_r_ref,                         # router
    w_e1_ref, b_e1_ref,                       # experts layer 1, batched (H, 4*2H)
    w_e2_ref, b_e2_ref,                       # experts layer 2, batched (4*2H, H) + (4,H)
    expand_ref,                               # (4, 4*2H) block expander for router weights
    w_out_ref, b_out_ref,                     # output projection
    logits_ref,                               # output (B, V)
    acc_ref,                                  # scratch f32 accumulator (B, H)
):
    f32 = jnp.float32
    k = pl.program_id(0)

    @pl.when(k == 0)
    def _():
        acc_ref[...] = jnp.zeros_like(acc_ref)

    # bf16 x bf16 -> f32 accumulation on the MXU (HBM-bound weight stream).
    acc_ref[...] += jnp.dot(x_ref[...], w1_ref[...], preferred_element_type=f32)

    @pl.when(k == pl.num_programs(0) - 1)
    def _():
        # image encoder: bias + ReLU (layer 1), then layer 2 (dropout = identity)
        img_l1 = jnp.maximum(acc_ref[...] + b1_ref[...], 0.0)
        img_feat = (jnp.dot(img_l1, w_img2_ref[...], preferred_element_type=f32)
                    + b_img2_ref[...])

        # text features: mean over sequence of embeddings == onehot_mean @ E
        txt_feat = jnp.dot(onehot_ref[...], emb_ref[...], preferred_element_type=f32)

        # multimodal fusion: concat([img, txt]) @ W_f1 == img@W_f1[:H] + txt@W_f1[H:]
        h = jnp.maximum(
            jnp.dot(img_feat, w_f1_img_ref[...], preferred_element_type=f32)
            + jnp.dot(txt_feat, w_f1_txt_ref[...], preferred_element_type=f32)
            + b_f1_ref[...],
            0.0)
        fused = (jnp.dot(h, w_f2_ref[...], preferred_element_type=f32)
                 + b_f2_ref[...])

        # router softmax (EUP reciprocal)
        r_logits = (jnp.dot(fused, w_r_ref[...], preferred_element_type=f32)
                    + b_r_ref[...])
        r_max = jnp.max(r_logits, axis=-1, keepdims=True)
        r_exp = jnp.exp(r_logits - r_max)
        r_w = r_exp * pl.reciprocal(jnp.sum(r_exp, axis=-1, keepdims=True),
                                    approx=True)

        # all 4 experts, batched: layer 1 is one (B,H)@(H,4*2H) matmul;
        # router weighting is folded in before the (linear) second layer.
        he = jnp.maximum(
            jnp.dot(fused, w_e1_ref[...], preferred_element_type=f32)
            + b_e1_ref[...],
            0.0)                                                   # (B, 4*2H)
        scale = jnp.dot(r_w, expand_ref[...], preferred_element_type=f32)  # (B, 4*2H)
        weighted = (jnp.dot(he * scale, w_e2_ref[...], preferred_element_type=f32)
                    + jnp.dot(r_w, b_e2_ref[...], preferred_element_type=f32))

        # output projection
        logits_ref[...] = (jnp.dot(weighted, w_out_ref[...],
                                   preferred_element_type=f32) + b_out_ref[...])


def fused_forward(image_flat_bf16, w1_bf16, onehot_mean, params, *, k_tile=K_TILE):
    bsz, k_dim = image_flat_bf16.shape
    assert k_dim % k_tile == 0
    n_k = k_dim // k_tile
    H, V, NE = HIDDEN, VOCAB, NUM_EXPERTS

    # derived (tiny) head parameters: batch the experts into two wide matmuls
    w_e1_cat = jnp.transpose(params["w_e1"], (1, 0, 2)).reshape(H, NE * 2 * H)
    b_e1_cat = params["b_e1"].reshape(1, NE * 2 * H)
    w_e2_cat = params["w_e2"].reshape(NE * 2 * H, H)
    b_e2_mat = params["b_e2"].reshape(NE, H)
    expand = jnp.repeat(jnp.eye(NE, dtype=jnp.float32), 2 * H, axis=1)  # (4, 4*2H)

    inputs = (
        image_flat_bf16, w1_bf16, params["b_img1"],
        onehot_mean, params["emb"],
        params["w_img2"], params["b_img2"],
        params["w_f1_img"], params["w_f1_txt"], params["b_f1"],
        params["w_f2"], params["b_f2"],
        params["w_r"], params["b_r"],
        w_e1_cat, b_e1_cat,
        w_e2_cat, b_e2_mat,
        expand,
        params["w_out"], params["b_out"],
    )

    def const_spec(arr):
        # full-array block, same block index every step -> fetched once
        return pl.BlockSpec(arr.shape, lambda k: (0, 0))

    in_specs = [
        pl.BlockSpec((bsz, k_tile), lambda k: (0, k)),   # x, K-tiled
        pl.BlockSpec((k_tile, H), lambda k: (k, 0)),     # w_img1, K-tiled
    ] + [const_spec(a) for a in inputs[2:]]

    return pl.pallas_call(
        _fused_moe_kernel,
        out_shape=jax.ShapeDtypeStruct((bsz, V), jnp.float32),
        grid_spec=pltpu.PrefetchScalarGridSpec(
            num_scalar_prefetch=0,
            grid=(n_k,),
            in_specs=in_specs,
            out_specs=pl.BlockSpec((bsz, V), lambda k: (0, 0)),
            scratch_shapes=[pltpu.VMEM((bsz, H), jnp.float32)],
        ),
        compiler_params=pltpu.CompilerParams(
            dimension_semantics=("arbitrary",),
            vmem_limit_bytes=32 * 1024 * 1024,
        ),
    )(*inputs)


# ----------------------------- params & glue ----------------------------------
def _xavier(key, fan_in, fan_out):
    a = math.sqrt(6.0 / (fan_in + fan_out))
    return jax.random.uniform(key, (fan_in, fan_out), jnp.float32, -a, a)


def init_params(key):
    ks = jax.random.split(key, 16)
    H, V = HIDDEN, VOCAB
    p = {
        "emb": jax.random.normal(ks[0], (V, H), jnp.float32) * 0.02,
        "w_img1": _xavier(ks[1], IMG_FLAT, H),
        "b_img1": jnp.zeros((1, H), jnp.float32),
        "w_img2": _xavier(ks[2], H, H),
        "b_img2": jnp.zeros((1, H), jnp.float32),
        "w_f2": _xavier(ks[4], H, H),
        "b_f2": jnp.zeros((1, H), jnp.float32),
        "w_r": _xavier(ks[5], H, NUM_EXPERTS),
        "b_r": jnp.zeros((1, NUM_EXPERTS), jnp.float32),
        "w_out": _xavier(ks[6], H, V),
        "b_out": jnp.zeros((1, V), jnp.float32),
    }
    w_f1 = _xavier(ks[3], 2 * H, H)
    p["w_f1_img"] = w_f1[:H]
    p["w_f1_txt"] = w_f1[H:]
    p["b_f1"] = jnp.zeros((1, H), jnp.float32)
    p["w_e1"] = jnp.stack([_xavier(ks[7 + e], H, 2 * H) for e in range(NUM_EXPERTS)])
    p["b_e1"] = jnp.zeros((NUM_EXPERTS, 1, 2 * H), jnp.float32)
    p["w_e2"] = jnp.stack([_xavier(ks[11 + e], 2 * H, H) for e in range(NUM_EXPERTS)])
    p["b_e2"] = jnp.zeros((NUM_EXPERTS, 1, H), jnp.float32)
    return p


def robust_chart_moe_forward(params, image, input_ids):
    """Pallas implementation of RobustChartMoE.forward (logits only)."""
    bsz = image.shape[0]
    input_ids = jnp.clip(input_ids, 0, VOCAB - 1)

    # bf16 streaming of the HBM-bound first-layer operands; accumulation is f32.
    image_flat = image.reshape(bsz, -1).astype(jnp.bfloat16)
    w1_bf16 = params["w_img1"].astype(jnp.bfloat16)

    # embedding mean expressed as a onehot-mean matrix (matmul done in-kernel)
    onehot_mean = jax.nn.one_hot(input_ids, VOCAB, dtype=jnp.float32).mean(axis=1)

    return fused_forward(image_flat, w1_bf16, onehot_mean, params)


def reference_forward(params, image, input_ids):
    """Pure-JAX f32 reference for a numerical sanity check."""
    bsz = image.shape[0]
    input_ids = jnp.clip(input_ids, 0, VOCAB - 1)
    x = image.reshape(bsz, -1).astype(jnp.float32)
    h = jnp.maximum(x @ params["w_img1"] + params["b_img1"], 0.0)
    img_feat = h @ params["w_img2"] + params["b_img2"]
    txt_feat = params["emb"][input_ids].mean(axis=1)
    w_f1 = jnp.concatenate([params["w_f1_img"], params["w_f1_txt"]], axis=0)
    comb = jnp.concatenate([img_feat, txt_feat], axis=-1)
    fh = jnp.maximum(comb @ w_f1 + params["b_f1"], 0.0)
    fused = fh @ params["w_f2"] + params["b_f2"]
    r = jax.nn.softmax(fused @ params["w_r"] + params["b_r"], axis=-1)
    outs = []
    for e in range(NUM_EXPERTS):
        he = jnp.maximum(fused @ params["w_e1"][e] + params["b_e1"][e], 0.0)
        outs.append(he @ params["w_e2"][e] + params["b_e2"][e])
    expert_out = jnp.stack(outs, axis=1)                       # (B, E, H)
    weighted = jnp.sum(expert_out * r[..., None], axis=1)      # (B, H)
    return weighted @ params["w_out"] + params["b_out"]


if __name__ == "__main__":
    key = jax.random.PRNGKey(0)
    k_param, k_img, k_ids = jax.random.split(key, 3)

    params = init_params(k_param)
    image = jax.random.normal(k_img, (BATCH, IMG_C, IMG_H, IMG_W), jnp.float32)
    input_ids = jax.random.randint(k_ids, (BATCH, SEQ), 0, VOCAB, jnp.int32)

    logits = robust_chart_moe_forward(params, image, input_ids)
    logits = jax.block_until_ready(logits)

    ref = jax.block_until_ready(reference_forward(params, image, input_ids))
    assert logits.shape == (BATCH, VOCAB)
    # atol slightly relaxed vs. pure-f32 because the K=150528 first-layer
    # operands are intentionally streamed in bf16 (f32 accumulation).
    assert jnp.allclose(logits, ref, rtol=1e-2, atol=2e-2), "mismatch vs reference"

    print("KERNEL_OK")
</pallas_src>

<mosaic_0001>
module attributes {stable_mosaic.version = 11 : i64} {
  func.func @_fused_moe_kernel(%arg0: i32, %arg1: memref<2x12544xbf16, #tpu.memory_space<vmem>>, %arg2: memref<12544x32xbf16, #tpu.memory_space<vmem>>, %arg3: memref<1x32xf32, #tpu.memory_space<vmem>>, %arg4: memref<2x256xf32, #tpu.memory_space<vmem>>, %arg5: memref<256x32xf32, #tpu.memory_space<vmem>>, %arg6: memref<32x32xf32, #tpu.memory_space<vmem>>, %arg7: memref<1x32xf32, #tpu.memory_space<vmem>>, %arg8: memref<32x32xf32, #tpu.memory_space<vmem>>, %arg9: memref<32x32xf32, #tpu.memory_space<vmem>>, %arg10: memref<1x32xf32, #tpu.memory_space<vmem>>, %arg11: memref<32x32xf32, #tpu.memory_space<vmem>>, %arg12: memref<1x32xf32, #tpu.memory_space<vmem>>, %arg13: memref<32x4xf32, #tpu.memory_space<vmem>>, %arg14: memref<1x4xf32, #tpu.memory_space<vmem>>, %arg15: memref<32x256xf32, #tpu.memory_space<vmem>>, %arg16: memref<1x256xf32, #tpu.memory_space<vmem>>, %arg17: memref<256x32xf32, #tpu.memory_space<vmem>>, %arg18: memref<4x32xf32, #tpu.memory_space<vmem>>, %arg19: memref<4x256xf32, #tpu.memory_space<vmem>>, %arg20: memref<32x256xf32, #tpu.memory_space<vmem>>, %arg21: memref<1x256xf32, #tpu.memory_space<vmem>>, %arg22: memref<2x256xf32, #tpu.memory_space<vmem>>, %arg23: memref<2x32xf32, #tpu.memory_space<vmem>>) attributes {dimension_semantics = [#tpu.dimension_semantics<arbitrary>], iteration_bounds = array<i64: 12>, scalar_prefetch = 0 : i64, scratch_operands = 1 : i64, tpu.core_type = #tpu.core_type<tc>, window_params = [{transform_indices = @transform_0, window_bounds = array<i64: 2, 12544>}, {transform_indices = @transform_1, window_bounds = array<i64: 12544, 32>}, {pipeline_mode = #tpu.pipeline_mode<synchronous>, transform_indices = @transform_2, window_bounds = array<i64: 1, 32>}, {pipeline_mode = #tpu.pipeline_mode<synchronous>, transform_indices = @transform_3, window_bounds = array<i64: 2, 256>}, {pipeline_mode = #tpu.pipeline_mode<synchronous>, transform_indices = @transform_4, window_bounds = array<i64: 256, 32>}, {pipeline_mode = #tpu.pipeline_mode<synchronous>, transform_indices = @transform_5, window_bounds = array<i64: 32, 32>}, {pipeline_mode = #tpu.pipeline_mode<synchronous>, transform_indices = @transform_6, window_bounds = array<i64: 1, 32>}, {pipeline_mode = #tpu.pipeline_mode<synchronous>, transform_indices = @transform_7, window_bounds = array<i64: 32, 32>}, {pipeline_mode = #tpu.pipeline_mode<synchronous>, transform_indices = @transform_8, window_bounds = array<i64: 32, 32>}, {pipeline_mode = #tpu.pipeline_mode<synchronous>, transform_indices = @transform_9, window_bounds = array<i64: 1, 32>}, {pipeline_mode = #tpu.pipeline_mode<synchronous>, transform_indices = @transform_10, window_bounds = array<i64: 32, 32>}, {pipeline_mode = #tpu.pipeline_mode<synchronous>, transform_indices = @transform_11, window_bounds = array<i64: 1, 32>}, {pipeline_mode = #tpu.pipeline_mode<synchronous>, transform_indices = @transform_12, window_bounds = array<i64: 32, 4>}, {pipeline_mode = #tpu.pipeline_mode<synchronous>, transform_indices = @transform_13, window_bounds = array<i64: 1, 4>}, {pipeline_mode = #tpu.pipeline_mode<synchronous>, transform_indices = @transform_14, window_bounds = array<i64: 32, 256>}, {pipeline_mode = #tpu.pipeline_mode<synchronous>, transform_indices = @transform_15, window_bounds = array<i64: 1, 256>}, {pipeline_mode = #tpu.pipeline_mode<synchronous>, transform_indices = @transform_16, window_bounds = array<i64: 256, 32>}, {pipeline_mode = #tpu.pipeline_mode<synchronous>, transform_indices = @transform_17, window_bounds = array<i64: 4, 32>}, {pipeline_mode = #tpu.pipeline_mode<synchronous>, transform_indices = @transform_18, window_bounds = array<i64: 4, 256>}, {pipeline_mode = #tpu.pipeline_mode<synchronous>, transform_indices = @transform_19, window_bounds = array<i64: 32, 256>}, {pipeline_mode = #tpu.pipeline_mode<synchronous>, transform_indices = @transform_20, window_bounds = array<i64: 1, 256>}, {pipeline_mode = #tpu.pipeline_mode<synchronous>, transform_indices = @transform_21, window_bounds = array<i64: 2, 256>}]} {
    %c0_i32 = arith.constant 0 : i32
    %0 = arith.cmpi eq, %arg0, %c0_i32 : i32
    %1 = arith.extui %0 : i1 to i32
    %c0_i32_0 = arith.constant 0 : i32
    %2 = arith.cmpi ne, %1, %c0_i32_0 : i32
    scf.if %2 {
      %cst_9 = arith.constant 0.000000e+00 : f32
      %12 = vector.broadcast %cst_9 : f32 to vector<2x32xf32>
      %c0_10 = arith.constant 0 : index
      %c0_11 = arith.constant 0 : index
      %13 = vector.load %arg23[%c0_10, %c0_11] : memref<2x32xf32, #tpu.memory_space<vmem>>, vector<2x32xf32>
      tpu.vector_store %arg23[%c0_10, %c0_11], %12 {strides = array<i32>} : memref<2x32xf32, #tpu.memory_space<vmem>>, vector<2x32xf32>,
    } else {
    }
    %c0 = arith.constant 0 : index
    %c0_1 = arith.constant 0 : index
    %3 = vector.load %arg23[%c0, %c0_1] : memref<2x32xf32, #tpu.memory_space<vmem>>, vector<2x32xf32>
    %c0_2 = arith.constant 0 : index
    %c0_3 = arith.constant 0 : index
    %4 = vector.load %arg1[%c0_2, %c0_3] : memref<2x12544xbf16, #tpu.memory_space<vmem>>, vector<2x12544xbf16>
    %c0_4 = arith.constant 0 : index
    %c0_5 = arith.constant 0 : index
    %5 = vector.load %arg2[%c0_4, %c0_5] : memref<12544x32xbf16, #tpu.memory_space<vmem>>, vector<12544x32xbf16>
    %cst = arith.constant dense<0.000000e+00> : vector<2x32xf32>
    %6 = tpu.matmul %4, %5, %cst {dimension_numbers = #tpu.dot_dimension_numbers<[1], [0], [0], [1], [0, 0, 1, 1], [], []>} : vector<2x12544xbf16>, vector<12544x32xbf16>, vector<2x32xf32> -> vector<2x32xf32>
    %7 = arith.addf %3, %6 : vector<2x32xf32>
    %c0_6 = arith.constant 0 : index
    %c0_7 = arith.constant 0 : index
    %8 = vector.load %arg23[%c0_6, %c0_7] : memref<2x32xf32, #tpu.memory_space<vmem>>, vector<2x32xf32>
    tpu.vector_store %arg23[%c0_6, %c0_7], %7 {strides = array<i32>} : memref<2x32xf32, #tpu.memory_space<vmem>>, vector<2x32xf32>,
    %c11_i32 = arith.constant 11 : i32
    %9 = arith.cmpi eq, %arg0, %c11_i32 : i32
    %10 = arith.extui %9 : i1 to i32
    %c0_i32_8 = arith.constant 0 : i32
    %11 = arith.cmpi ne, %10, %c0_i32_8 : i32
    scf.if %11 {
      %c0_9 = arith.constant 0 : index
      %c0_10 = arith.constant 0 : index
      %12 = vector.load %arg23[%c0_9, %c0_10] : memref<2x32xf32, #tpu.memory_space<vmem>>, vector<2x32xf32>
      %c0_11 = arith.constant 0 : index
      %c0_12 = arith.constant 0 : index
      %13 = vector.load %arg3[%c0_11, %c0_12] : memref<1x32xf32, #tpu.memory_space<vmem>>, vector<1x32xf32>
      %14 = vector.broadcast %13 : vector<1x32xf32> to vector<2x32xf32>
      %15 = arith.addf %12, %14 : vector<2x32xf32>
      %cst_13 = arith.constant 0.000000e+00 : f32
      %16 = vector.broadcast %cst_13 : f32 to vector<2x32xf32>
      %17 = arith.maximumf %15, %16 : vector<2x32xf32>
      %c0_14 = arith.constant 0 : index
      %c0_15 = arith.constant 0 : index
      %18 = vector.load %arg6[%c0_14, %c0_15] : memref<32x32xf32, #tpu.memory_space<vmem>>, vector<32x32xf32>
      %cst_16 = arith.constant dense<0.000000e+00> : vector<2x32xf32>
      %19 = tpu.matmul %17, %18, %cst_16 {dimension_numbers = #tpu.dot_dimension_numbers<[1], [0], [0], [1], [0, 0, 1, 1], [], []>} : vector<2x32xf32>, vector<32x32xf32>, vector<2x32xf32> -> vector<2x32xf32>
      %c0_17 = arith.constant 0 : index
      %c0_18 = arith.constant 0 : index
      %20 = vector.load %arg7[%c0_17, %c0_18] : memref<1x32xf32, #tpu.memory_space<vmem>>, vector<1x32xf32>
      %21 = vector.broadcast %20 : vector<1x32xf32> to vector<2x32xf32>
      %22 = arith.addf %19, %21 : vector<2x32xf32>
      %c0_19 = arith.constant 0 : index
      %c0_20 = arith.constant 0 : index
      %23 = vector.load %arg4[%c0_19, %c0_20] : memref<2x256xf32, #tpu.memory_space<vmem>>, vector<2x256xf32>
      %c0_21 = arith.constant 0 : index
      %c0_22 = arith.constant 0 : index
      %24 = vector.load %arg5[%c0_21, %c0_22] : memref<256x32xf32, #tpu.memory_space<vmem>>, vector<256x32xf32>
      %cst_23 = arith.constant dense<0.000000e+00> : vector<2x32xf32>
      %25 = tpu.matmul %23, %24, %cst_23 {dimension_numbers = #tpu.dot_dimension_numbers<[1], [0], [0], [1], [0, 0, 1, 1], [], []>} : vector<2x256xf32>, vector<256x32xf32>, vector<2x32xf32> -> vector<2x32xf32>
      %c0_24 = arith.constant 0 : index
      %c0_25 = arith.constant 0 : index
      %26 = vector.load %arg8[%c0_24, %c0_25] : memref<32x32xf32, #tpu.memory_space<vmem>>, vector<32x32xf32>
      %cst_26 = arith.constant dense<0.000000e+00> : vector<2x32xf32>
      %27 = tpu.matmul %22, %26, %cst_26 {dimension_numbers = #tpu.dot_dimension_numbers<[1], [0], [0], [1], [0, 0, 1, 1], [], []>} : vector<2x32xf32>, vector<32x32xf32>, vector<2x32xf32> -> vector<2x32xf32>
      %c0_27 = arith.constant 0 : index
      %c0_28 = arith.constant 0 : index
      %28 = vector.load %arg9[%c0_27, %c0_28] : memref<32x32xf32, #tpu.memory_space<vmem>>, vector<32x32xf32>
      %cst_29 = arith.constant dense<0.000000e+00> : vector<2x32xf32>
      %29 = tpu.matmul %25, %28, %cst_29 {dimension_numbers = #tpu.dot_dimension_numbers<[1], [0], [0], [1], [0, 0, 1, 1], [], []>} : vector<2x32xf32>, vector<32x32xf32>, vector<2x32xf32> -> vector<2x32xf32>
      %30 = arith.addf %27, %29 : vector<2x32xf32>
      %c0_30 = arith.constant 0 : index
      %c0_31 = arith.constant 0 : index
      %31 = vector.load %arg10[%c0_30, %c0_31] : memref<1x32xf32, #tpu.memory_space<vmem>>, vector<1x32xf32>
      %32 = vector.broadcast %31 : vector<1x32xf32> to vector<2x32xf32>
      %33 = arith.addf %30, %32 : vector<2x32xf32>
      %cst_32 = arith.constant 0.000000e+00 : f32
      %34 = vector.broadcast %cst_32 : f32 to vector<2x32xf32>
      %35 = arith.maximumf %33, %34 : vector<2x32xf32>
      %c0_33 = arith.constant 0 : index
      %c0_34 = arith.constant 0 : index
      %36 = vector.load %arg11[%c0_33, %c0_34] : memref<32x32xf32, #tpu.memory_space<vmem>>, vector<32x32xf32>
      %cst_35 = arith.constant dense<0.000000e+00> : vector<2x32xf32>
      %37 = tpu.matmul %35, %36, %cst_35 {dimension_numbers = #tpu.dot_dimension_numbers<[1], [0], [0], [1], [0, 0, 1, 1], [], []>} : vector<2x32xf32>, vector<32x32xf32>, vector<2x32xf32> -> vector<2x32xf32>
      %c0_36 = arith.constant 0 : index
      %c0_37 = arith.constant 0 : index
      %38 = vector.load %arg12[%c0_36, %c0_37] : memref<1x32xf32, #tpu.memory_space<vmem>>, vector<1x32xf32>
      %39 = vector.broadcast %38 : vector<1x32xf32> to vector<2x32xf32>
      %40 = arith.addf %37, %39 : vector<2x32xf32>
      %c0_38 = arith.constant 0 : index
      %c0_39 = arith.constant 0 : index
      %41 = vector.load %arg13[%c0_38, %c0_39] : memref<32x4xf32, #tpu.memory_space<vmem>>, vector<32x4xf32>
      %cst_40 = arith.constant dense<0.000000e+00> : vector<2x4xf32>
      %42 = tpu.matmul %40, %41, %cst_40 {dimension_numbers = #tpu.dot_dimension_numbers<[1], [0], [0], [1], [0, 0, 1, 1], [], []>} : vector<2x32xf32>, vector<32x4xf32>, vector<2x4xf32> -> vector<2x4xf32>
      %c0_41 = arith.constant 0 : index
      %c0_42 = arith.constant 0 : index
      %43 = vector.load %arg14[%c0_41, %c0_42] : memref<1x4xf32, #tpu.memory_space<vmem>>, vector<1x4xf32>
      %44 = vector.broadcast %43 : vector<1x4xf32> to vector<2x4xf32>
      %45 = arith.addf %42, %44 : vector<2x4xf32>
      %cst_43 = arith.constant dense<0xFF800000> : vector<2xf32>
      %46 = vector.multi_reduction <maximumf>, %45, %cst_43 [1] : vector<2x4xf32> to vector<2xf32>
      %47 = vector.shape_cast %46 : vector<2xf32> to vector<2x1xf32>
      %48 = vector.broadcast %47 : vector<2x1xf32> to vector<2x4xf32>
      %49 = arith.subf %45, %48 : vector<2x4xf32>
      %50 = math.exp %49 : vector<2x4xf32>
      %cst_44 = arith.constant dense<0.000000e+00> : vector<2xf32>
      %51 = vector.multi_reduction <add>, %50, %cst_44 [1] : vector<2x4xf32> to vector<2xf32>
      %52 = vector.shape_cast %51 : vector<2xf32> to vector<2x1xf32>
      %53 = tpu.reciprocal %52 {approx = true} : vector<2x1xf32> -> vector<2x1xf32>
      %54 = vector.broadcast %53 : vector<2x1xf32> to vector<2x4xf32>
      %55 = arith.mulf %50, %54 : vector<2x4xf32>
      %c0_45 = arith.constant 0 : index
      %c0_46 = arith.constant 0 : index
      %56 = vector.load %arg15[%c0_45, %c0_46] : memref<32x256xf32, #tpu.memory_space<vmem>>, vector<32x256xf32>
      %cst_47 = arith.constant dense<0.000000e+00> : vector<2x256xf32>
      %57 = tpu.matmul %40, %56, %cst_47 {dimension_numbers = #tpu.dot_dimension_numbers<[1], [0], [0], [1], [0, 0, 1, 1], [], []>} : vector<2x32xf32>, vector<32x256xf32>, vector<2x256xf32> -> vector<2x256xf32>
      %c0_48 = arith.constant 0 : index
      %c0_49 = arith.constant 0 : index
      %58 = vector.load %arg16[%c0_48, %c0_49] : memref<1x256xf32, #tpu.memory_space<vmem>>, vector<1x256xf32>
      %59 = vector.broadcast %58 : vector<1x256xf32> to vector<2x256xf32>
      %60 = arith.addf %57, %59 : vector<2x256xf32>
      %cst_50 = arith.constant 0.000000e+00 : f32
      %61 = vector.broadcast %cst_50 : f32 to vector<2x256xf32>
      %62 = arith.maximumf %60, %61 : vector<2x256xf32>
      %c0_51 = arith.constant 0 : index
      %c0_52 = arith.constant 0 : index
      %63 = vector.load %arg19[%c0_51, %c0_52] : memref<4x256xf32, #tpu.memory_space<vmem>>, vector<4x256xf32>
      %cst_53 = arith.constant dense<0.000000e+00> : vector<2x256xf32>
      %64 = tpu.matmul %55, %63, %cst_53 {dimension_numbers = #tpu.dot_dimension_numbers<[1], [0], [0], [1], [0, 0, 1, 1], [], []>} : vector<2x4xf32>, vector<4x256xf32>, vector<2x256xf32> -> vector<2x256xf32>
      %65 = arith.mulf %62, %64 : vector<2x256xf32>
      %c0_54 = arith.constant 0 : index
      %c0_55 = arith.constant 0 : index
      %66 = vector.load %arg17[%c0_54, %c0_55] : memref<256x32xf32, #tpu.memory_space<vmem>>, vector<256x32xf32>
      %cst_56 = arith.constant dense<0.000000e+00> : vector<2x32xf32>
      %67 = tpu.matmul %65, %66, %cst_56 {dimension_numbers = #tpu.dot_dimension_numbers<[1], [0], [0], [1], [0, 0, 1, 1], [], []>} : vector<2x256xf32>, vector<256x32xf32>, vector<2x32xf32> -> vector<2x32xf32>
      %c0_57 = arith.constant 0 : index
      %c0_58 = arith.constant 0 : index
      %68 = vector.load %arg18[%c0_57, %c0_58] : memref<4x32xf32, #tpu.memory_space<vmem>>, vector<4x32xf32>
      %cst_59 = arith.constant dense<0.000000e+00> : vector<2x32xf32>
      %69 = tpu.matmul %55, %68, %cst_59 {dimension_numbers = #tpu.dot_dimension_numbers<[1], [0], [0], [1], [0, 0, 1, 1], [], []>} : vector<2x4xf32>, vector<4x32xf32>, vector<2x32xf32> -> vector<2x32xf32>
      %70 = arith.addf %67, %69 : vector<2x32xf32>
      %c0_60 = arith.constant 0 : index
      %c0_61 = arith.constant 0 : index
      %71 = vector.load %arg20[%c0_60, %c0_61] : memref<32x256xf32, #tpu.memory_space<vmem>>, vector<32x256xf32>
      %cst_62 = arith.constant dense<0.000000e+00> : vector<2x256xf32>
      %72 = tpu.matmul %70, %71, %cst_62 {dimension_numbers = #tpu.dot_dimension_numbers<[1], [0], [0], [1], [0, 0, 1, 1], [], []>} : vector<2x32xf32>, vector<32x256xf32>, vector<2x256xf32> -> vector<2x256xf32>
      %c0_63 = arith.constant 0 : index
      %c0_64 = arith.constant 0 : index
      %73 = vector.load %arg21[%c0_63, %c0_64] : memref<1x256xf32, #tpu.memory_space<vmem>>, vector<1x256xf32>
      %74 = vector.broadcast %73 : vector<1x256xf32> to vector<2x256xf32>
      %75 = arith.addf %72, %74 : vector<2x256xf32>
      %c0_65 = arith.constant 0 : index
      %c0_66 = arith.constant 0 : index
      %76 = vector.load %arg22[%c0_65, %c0_66] : memref<2x256xf32, #tpu.memory_space<vmem>>, vector<2x256xf32>
      tpu.vector_store %arg22[%c0_65, %c0_66], %75 {strides = array<i32>} : memref<2x256xf32, #tpu.memory_space<vmem>>, vector<2x256xf32>,
    } else {
    }
    return
  }
  func.func @transform_0(%arg0: i32) -> (i32, i32) {
    %c0_i32 = arith.constant 0 : i32
    %c0_i32_0 = arith.constant 0 : i32
    return %c0_i32, %arg0 : i32, i32
  }
  func.func @transform_1(%arg0: i32) -> (i32, i32) {
    %c0_i32 = arith.constant 0 : i32
    %c0_i32_0 = arith.constant 0 : i32
    return %arg0, %c0_i32 : i32, i32
  }
  func.func @transform_2(%arg0: i32) -> (i32, i32) {
    %c0_i32 = arith.constant 0 : i32
    %c0_i32_0 = arith.constant 0 : i32
    %c0_i32_1 = arith.constant 0 : i32
    return %c0_i32, %c0_i32_0 : i32, i32
  }
  func.func @transform_3(%arg0: i32) -> (i32, i32) {
    %c0_i32 = arith.constant 0 : i32
    %c0_i32_0 = arith.constant 0 : i32
    %c0_i32_1 = arith.constant 0 : i32
    return %c0_i32, %c0_i32_0 : i32, i32
  }
  func.func @transform_4(%arg0: i32) -> (i32, i32) {
    %c0_i32 = arith.constant 0 : i32
    %c0_i32_0 = arith.constant 0 : i32
    %c0_i32_1 = arith.constant 0 : i32
    return %c0_i32, %c0_i32_0 : i32, i32
  }
  func.func @transform_5(%arg0: i32) -> (i32, i32) {
    %c0_i32 = arith.constant 0 : i32
    %c0_i32_0 = arith.constant 0 : i32
    %c0_i32_1 = arith.constant 0 : i32
    return %c0_i32, %c0_i32_0 : i32, i32
  }
  func.func @transform_6(%arg0: i32) -> (i32, i32) {
    %c0_i32 = arith.constant 0 : i32
    %c0_i32_0 = arith.constant 0 : i32
    %c0_i32_1 = arith.constant 0 : i32
    return %c0_i32, %c0_i32_0 : i32, i32
  }
  func.func @transform_7(%arg0: i32) -> (i32, i32) {
    %c0_i32 = arith.constant 0 : i32
    %c0_i32_0 = arith.constant 0 : i32
    %c0_i32_1 = arith.constant 0 : i32
    return %c0_i32, %c0_i32_0 : i32, i32
  }
  func.func @transform_8(%arg0: i32) -> (i32, i32) {
    %c0_i32 = arith.constant 0 : i32
    %c0_i32_0 = arith.constant 0 : i32
    %c0_i32_1 = arith.constant 0 : i32
    return %c0_i32, %c0_i32_0 : i32, i32
  }
  func.func @transform_9(%arg0: i32) -> (i32, i32) {
    %c0_i32 = arith.constant 0 : i32
    %c0_i32_0 = arith.constant 0 : i32
    %c0_i32_1 = arith.constant 0 : i32
    return %c0_i32, %c0_i32_0 : i32, i32
  }
  func.func @transform_10(%arg0: i32) -> (i32, i32) {
    %c0_i32 = arith.constant 0 : i32
    %c0_i32_0 = arith.constant 0 : i32
    %c0_i32_1 = arith.constant 0 : i32
    return %c0_i32, %c0_i32_0 : i32, i32
  }
  func.func @transform_11(%arg0: i32) -> (i32, i32) {
    %c0_i32 = arith.constant 0 : i32
    %c0_i32_0 = arith.constant 0 : i32
    %c0_i32_1 = arith.constant 0 : i32
    return %c0_i32, %c0_i32_0 : i32, i32
  }
  func.func @transform_12(%arg0: i32) -> (i32, i32) {
    %c0_i32 = arith.constant 0 : i32
    %c0_i32_0 = arith.constant 0 : i32
    %c0_i32_1 = arith.constant 0 : i32
    return %c0_i32, %c0_i32_0 : i32, i32
  }
  func.func @transform_13(%arg0: i32) -> (i32, i32) {
    %c0_i32 = arith.constant 0 : i32
    %c0_i32_0 = arith.constant 0 : i32
    %c0_i32_1 = arith.constant 0 : i32
    return %c0_i32, %c0_i32_0 : i32, i32
  }
  func.func @transform_14(%arg0: i32) -> (i32, i32) {
    %c0_i32 = arith.constant 0 : i32
    %c0_i32_0 = arith.constant 0 : i32
    %c0_i32_1 = arith.constant 0 : i32
    return %c0_i32, %c0_i32_0 : i32, i32
  }
  func.func @transform_15(%arg0: i32) -> (i32, i32) {
    %c0_i32 = arith.constant 0 : i32
    %c0_i32_0 = arith.constant 0 : i32
    %c0_i32_1 = arith.constant 0 : i32
    return %c0_i32, %c0_i32_0 : i32, i32
  }
  func.func @transform_16(%arg0: i32) -> (i32, i32) {
    %c0_i32 = arith.constant 0 : i32
    %c0_i32_0 = arith.constant 0 : i32
    %c0_i32_1 = arith.constant 0 : i32
    return %c0_i32, %c0_i32_0 : i32, i32
  }
  func.func @transform_17(%arg0: i32) -> (i32, i32) {
    %c0_i32 = arith.constant 0 : i32
    %c0_i32_0 = arith.constant 0 : i32
    %c0_i32_1 = arith.constant 0 : i32
    return %c0_i32, %c0_i32_0 : i32, i32
  }
  func.func @transform_18(%arg0: i32) -> (i32, i32) {
    %c0_i32 = arith.constant 0 : i32
    %c0_i32_0 = arith.constant 0 : i32
    %c0_i32_1 = arith.constant 0 : i32
    return %c0_i32, %c0_i32_0 : i32, i32
  }
  func.func @transform_19(%arg0: i32) -> (i32, i32) {
    %c0_i32 = arith.constant 0 : i32
    %c0_i32_0 = arith.constant 0 : i32
    %c0_i32_1 = arith.constant 0 : i32
    return %c0_i32, %c0_i32_0 : i32, i32
  }
  func.func @transform_20(%arg0: i32) -> (i32, i32) {
    %c0_i32 = arith.constant 0 : i32
    %c0_i32_0 = arith.constant 0 : i32
    %c0_i32_1 = arith.constant 0 : i32
    return %c0_i32, %c0_i32_0 : i32, i32
  }
  func.func @transform_21(%arg0: i32) -> (i32, i32) {
    %c0_i32 = arith.constant 0 : i32
    %c0_i32_0 = arith.constant 0 : i32
    %c0_i32_1 = arith.constant 0 : i32
    return %c0_i32, %c0_i32_0 : i32, i32
  }
}

</mosaic_0001>

<llo_original>
// kernel: tpu_custom_call.1
$region0: #{tpu_custom_call.1}
  #allocation0 [shape = 'u32[]', space=smem, size = 0x4, offset = 0x4, fixed_abs, tag = 'smem constant byte address 0x4 - core index']
  #allocation1 [shape = 'u32[144,128]{1,0:T(1,128)}', space=vmem, size = 0x12000, scoped, tag = 'internal scratch']
  #allocation2 [shape = 'f32[2,32]{1,0:T(2,128)}', space=vmem, size = 0x400, scoped, tag = 'scratch operand']
  %s0 = inlined_call_operand.vmem [shape: bf16[2,150528], index: 0, kind: input, shape index: {}]
  %s1 = inlined_call_operand.vmem [shape: bf16[150528,32], index: 1, kind: input, shape index: {}]
  %s2 = inlined_call_operand.vmem [shape: f32[1,32], index: 2, kind: input, shape index: {}]
  %s3 = inlined_call_operand.vmem [shape: f32[2,256], index: 3, kind: input, shape index: {}]
  %s4 = inlined_call_operand.vmem [shape: f32[256,32], index: 4, kind: input, shape index: {}]
  %s5 = inlined_call_operand.vmem [shape: f32[32,32], index: 5, kind: input, shape index: {}]
  %s6 = inlined_call_operand.vmem [shape: f32[1,32], index: 6, kind: input, shape index: {}]
  %s7 = inlined_call_operand.vmem [shape: f32[32,32], index: 7, kind: input, shape index: {}]
  %s8 = inlined_call_operand.vmem [shape: f32[32,32], index: 8, kind: input, shape index: {}]
  %s9 = inlined_call_operand.vmem [shape: f32[1,32], index: 9, kind: input, shape index: {}]
  %s10 = inlined_call_operand.vmem [shape: f32[32,32], index: 10, kind: input, shape index: {}]
  %s11 = inlined_call_operand.vmem [shape: f32[1,32], index: 11, kind: input, shape index: {}]
  %s12 = inlined_call_operand.vmem [shape: f32[32,4], index: 12, kind: input, shape index: {}]
  %s13 = inlined_call_operand.vmem [shape: f32[1,4], index: 13, kind: input, shape index: {}]
  %s14 = inlined_call_operand.vmem [shape: f32[32,256], index: 14, kind: input, shape index: {}]
  %s15 = inlined_call_operand.vmem [shape: f32[1,256], index: 15, kind: input, shape index: {}]
  %s16 = inlined_call_operand.vmem [shape: f32[256,32], index: 16, kind: input, shape index: {}]
  %s17 = inlined_call_operand.vmem [shape: f32[4,32], index: 17, kind: input, shape index: {}]
  %s18 = inlined_call_operand.vmem [shape: f32[4,256], index: 18, kind: input, shape index: {}]
  %s19 = inlined_call_operand.vmem [shape: f32[32,256], index: 19, kind: input, shape index: {}]
  %s20 = inlined_call_operand.vmem [shape: f32[1,256], index: 20, kind: input, shape index: {}]
  %s21 = inlined_call_operand.hbm [shape: f32[2,256], index: 21, kind: output, shape index: {}]
  %s22 = sld [smem:[#allocation0]]
  $region125: #{tpu_custom_call.1} parent=0
    _
  %s24 = ssub.s32 1, %s22
  %s25 = scalar_select 0, %s24, %s22
  $region1: #{tpu_custom_call.1} parent=0
    #allocation3 [shape = 'u8[2048]{0}', space=vmem, size = 0x800, scoped, tag = 'output window, operand 0, single buffered']
    #allocation4 [shape = 's32[2]{0}', space=sflag, size = 0x8, scoped, tag = 'scoped memory for tpu_custom_call.1']
    %26 = vsyncpa [#allocation4], 0
    loop: start=0, step=1, limit=14
    $region2: #{tpu_custom_call.1} parent=1 // loop_pre_header
      _
    $region3: #{tpu_custom_call.1} parent=1 // loop_header
      %s28 = sphi 0, %s32
      %p29 = scmp.ge.s32.totalorder %s28, 14
      %s38 = sphi 0, %s40
      %s41 = sphi 0, %s38
      %s42 = sphi 0, %s41
      %s58 = sphi 0, %s42
      %s64 = sphi 0, %s66
      %s67 = sphi 0, %s64
      %s68 = sphi 0, %s67
      %s84 = sphi 0, %s68
      %s88 = sphi 0, %s88
      %s90 = sphi 0, %s88
      %s91 = sphi 0, %s90
      %s105 = sphi 0, %s91
      %s109 = sphi 0, %s109
      %s111 = sphi 0, %s109
      %s112 = sphi 0, %s111
      %s126 = sphi 0, %s112
      %s130 = sphi 0, %s130
      %s132 = sphi 0, %s130
      %s133 = sphi 0, %s132
      %s147 = sphi 0, %s133
      %s151 = sphi 0, %s151
      %s153 = sphi 0, %s151
      %s154 = sphi 0, %s153
      %s168 = sphi 0, %s154
      %s172 = sphi 0, %s172
      %s174 = sphi 0, %s172
      %s175 = sphi 0, %s174
      %s189 = sphi 0, %s175
      %s193 = sphi 0, %s193
      %s195 = sphi 0, %s193
      %s196 = sphi 0, %s195
      %s210 = sphi 0, %s196
      %s214 = sphi 0, %s214
      %s216 = sphi 0, %s214
      %s217 = sphi 0, %s216
      %s231 = sphi 0, %s217
      %s235 = sphi 0, %s235
      %s237 = sphi 0, %s235
      %s238 = sphi 0, %s237
      %s252 = sphi 0, %s238
      %s256 = sphi 0, %s256
      %s258 = sphi 0, %s256
      %s259 = sphi 0, %s258
      %s273 = sphi 0, %s259
      %s277 = sphi 0, %s277
      %s279 = sphi 0, %s277
      %s280 = sphi 0, %s279
      %s294 = sphi 0, %s280
      %s298 = sphi 0, %s298
      %s300 = sphi 0, %s298
      %s301 = sphi 0, %s300
      %s315 = sphi 0, %s301
      %s319 = sphi 0, %s319
      %s321 = sphi 0, %s319
      %s322 = sphi 0, %s321
      %s336 = sphi 0, %s322
      %s340 = sphi 0, %s340
      %s342 = sphi 0, %s340
      %s343 = sphi 0, %s342
      %s357 = sphi 0, %s343
      %s361 = sphi 0, %s361
      %s363 = sphi 0, %s361
      %s364 = sphi 0, %s363
      %s378 = sphi 0, %s364
      %s382 = sphi 0, %s382
      %s384 = sphi 0, %s382
      %s385 = sphi 0, %s384
      %s399 = sphi 0, %s385
      %s403 = sphi 0, %s403
      %s405 = sphi 0, %s403
      %s406 = sphi 0, %s405
      %s420 = sphi 0, %s406
      %s424 = sphi 0, %s424
      %s426 = sphi 0, %s424
      %s427 = sphi 0, %s426
      %s441 = sphi 0, %s427
      %s445 = sphi 0, %s445
      %s447 = sphi 0, %s445
      %s448 = sphi 0, %s447
      %s462 = sphi 0, %s448
      %s466 = sphi 0, %s466
      %s468 = sphi 0, %s466
      %s469 = sphi 0, %s468
      %s483 = sphi 0, %s469
      %s487 = sphi 0, %s487
      %s489 = sphi 0, %s487
      %s490 = sphi 0, %s489
      %s504 = sphi 0, %s490
    $region4: #{tpu_custom_call.1} parent=1 // loop_header_branch
      %31 = sbr.rel (%p29) target = $region8
    $region5: #{tpu_custom_call.1} parent=1 // loop_body
      %s33 = ssub.s32 %s28, 1
      %s34 = ssub.s32 %s28, 2
      %s35 = sadd.s32 %s28, 1
      %s36 = ssub.s32 %s28, %s35
      %p37 = scmp.eq.s32.totalorder %s36, 0
      %s39 = sadd.s32 %s38, 1
      %s40 = scalar_select %p37, %s38, %s39
      %p43 = pneg %p37
      %p44 = scmp.eq.s32.totalorder %s28, 11
      %p45 = por %p43, %p44
      %p46 = scmp.ne.s32.totalorder %s38, %s41
      %p47 = scmp.eq.s32.totalorder %s28, 0
      %p48 = por %p46, %p47
      %p49 = scmp.ne.s32.totalorder %s38, %s41
      %p50 = scmp.eq.s32.totalorder %s33, 11
      %p51 = por %p49, %p50
      %p52 = scmp.ne.s32.totalorder %s41, %s42
      %p53 = scmp.eq.s32.totalorder %s33, 0
      %p54 = por %p52, %p53
      %p55 = scmp.ne.s32.totalorder %s41, %s42
      %p56 = scmp.eq.s32.totalorder %s34, 11
      %p57 = por %p55, %p56
      %p59 = scmp.ne.s32.totalorder %s42, %s58
      %p60 = scmp.eq.s32.totalorder %s34, 0
      %p61 = por %p59, %p60
      %s62 = ssub.s32 %s28, %s35
      %p63 = scmp.eq.s32.totalorder %s62, 0
      %s65 = sadd.s32 %s64, 1
      %s66 = scalar_select %p63, %s64, %s65
      %p69 = pneg %p63
      %p70 = scmp.eq.s32.totalorder %s28, 11
      %p71 = por %p69, %p70
      %p72 = scmp.ne.s32.totalorder %s64, %s67
      %p73 = scmp.eq.s32.totalorder %s28, 0
      %p74 = por %p72, %p73
      %p75 = scmp.ne.s32.totalorder %s64, %s67
      %p76 = scmp.eq.s32.totalorder %s33, 11
      %p77 = por %p75, %p76
      %p78 = scmp.ne.s32.totalorder %s67, %s68
      %p79 = scmp.eq.s32.totalorder %s33, 0
      %p80 = por %p78, %p79
      %p81 = scmp.ne.s32.totalorder %s67, %s68
      %p82 = scmp.eq.s32.totalorder %s34, 11
      %p83 = por %p81, %p82
      %p85 = scmp.ne.s32.totalorder %s68, %s84
      %p86 = scmp.eq.s32.totalorder %s34, 0
      %p87 = por %p85, %p86
      %s89 = sadd.s32 %s88, 1
      %p92 = scmp.eq.s32.totalorder %s28, 11
      %p93 = scmp.ne.s32.totalorder %s88, %s90
      %p94 = scmp.eq.s32.totalorder %s28, 0
      %p95 = por %p93, %p94
      %p96 = scmp.ne.s32.totalorder %s88, %s90
      %p97 = scmp.eq.s32.totalorder %s33, 11
      %p98 = por %p96, %p97
      %p99 = scmp.ne.s32.totalorder %s90, %s91
      %p100 = scmp.eq.s32.totalorder %s33, 0
      %p101 = por %p99, %p100
      %p102 = scmp.ne.s32.totalorder %s90, %s91
      %p103 = scmp.eq.s32.totalorder %s34, 11
      %p104 = por %p102, %p103
      %p106 = scmp.ne.s32.totalorder %s91, %s105
      %p107 = scmp.eq.s32.totalorder %s34, 0
      %p108 = por %p106, %p107
      %s110 = sadd.s32 %s109, 1
      %p113 = scmp.eq.s32.totalorder %s28, 11
      %p114 = scmp.ne.s32.totalorder %s109, %s111
      %p115 = scmp.eq.s32.totalorder %s28, 0
      %p116 = por %p114, %p115
      %p117 = scmp.ne.s32.totalorder %s109, %s111
      %p118 = scmp.eq.s32.totalorder %s33, 11
      %p119 = por %p117, %p118
      %p120 = scmp.ne.s32.totalorder %s111, %s112
      %p121 = scmp.eq.s32.totalorder %s33, 0
      %p122 = por %p120, %p121
      %p123 = scmp.ne.s32.totalorder %s111, %s112
      %p124 = scmp.eq.s32.totalorder %s34, 11
      %p125 = por %p123, %p124
      %p127 = scmp.ne.s32.totalorder %s112, %s126
      %p128 = scmp.eq.s32.totalorder %s34, 0
      %p129 = por %p127, %p128
      %s131 = sadd.s32 %s130, 1
      %p134 = scmp.eq.s32.totalorder %s28, 11
      %p135 = scmp.ne.s32.totalorder %s130, %s132
      %p136 = scmp.eq.s32.totalorder %s28, 0
      %p137 = por %p135, %p136
      %p138 = scmp.ne.s32.totalorder %s130, %s132
      %p139 = scmp.eq.s32.totalorder %s33, 11
      %p140 = por %p138, %p139
      %p141 = scmp.ne.s32.totalorder %s132, %s133
      %p142 = scmp.eq.s32.totalorder %s33, 0
      %p143 = por %p141, %p142
      %p144 = scmp.ne.s32.totalorder %s132, %s133
      %p145 = scmp.eq.s32.totalorder %s34, 11
      %p146 = por %p144, %p145
      %p148 = scmp.ne.s32.totalorder %s133, %s147
      %p149 = scmp.eq.s32.totalorder %s34, 0
      %p150 = por %p148, %p149
      %s152 = sadd.s32 %s151, 1
      %p155 = scmp.eq.s32.totalorder %s28, 11
      %p156 = scmp.ne.s32.totalorder %s151, %s153
      %p157 = scmp.eq.s32.totalorder %s28, 0
      %p158 = por %p156, %p157
      %p159 = scmp.ne.s32.totalorder %s151, %s153
      %p160 = scmp.eq.s32.totalorder %s33, 11
      %p161 = por %p159, %p160
      %p162 = scmp.ne.s32.totalorder %s153, %s154
      %p163 = scmp.eq.s32.totalorder %s33, 0
      %p164 = por %p162, %p163
      %p165 = scmp.ne.s32.totalorder %s153, %s154
      %p166 = scmp.eq.s32.totalorder %s34, 11
      %p167 = por %p165, %p166
      %p169 = scmp.ne.s32.totalorder %s154, %s168
      %p170 = scmp.eq.s32.totalorder %s34, 0
      %p171 = por %p169, %p170
      %s173 = sadd.s32 %s172, 1
      %p176 = scmp.eq.s32.totalorder %s28, 11
      %p177 = scmp.ne.s32.totalorder %s172, %s174
      %p178 = scmp.eq.s32.totalorder %s28, 0
      %p179 = por %p177, %p178
      %p180 = scmp.ne.s32.totalorder %s172, %s174
      %p181 = scmp.eq.s32.totalorder %s33, 11
      %p182 = por %p180, %p181
      %p183 = scmp.ne.s32.totalorder %s174, %s175
      %p184 = scmp.eq.s32.totalorder %s33, 0
      %p185 = por %p183, %p184
      %p186 = scmp.ne.s32.totalorder %s174, %s175
      %p187 = scmp.eq.s32.totalorder %s34, 11
      %p188 = por %p186, %p187
      %p190 = scmp.ne.s32.totalorder %s175, %s189
      %p191 = scmp.eq.s32.totalorder %s34, 0
      %p192 = por %p190, %p191
      %s194 = sadd.s32 %s193, 1
      %p197 = scmp.eq.s32.totalorder %s28, 11
      %p198 = scmp.ne.s32.totalorder %s193, %s195
      %p199 = scmp.eq.s32.totalorder %s28, 0
      %p200 = por %p198, %p199
      %p201 = scmp.ne.s32.totalorder %s193, %s195
      %p202 = scmp.eq.s32.totalorder %s33, 11
      %p203 = por %p201, %p202
      %p204 = scmp.ne.s32.totalorder %s195, %s196
      %p205 = scmp.eq.s32.totalorder %s33, 0
      %p206 = por %p204, %p205
      %p207 = scmp.ne.s32.totalorder %s195, %s196
      %p208 = scmp.eq.s32.totalorder %s34, 11
      %p209 = por %p207, %p208
      %p211 = scmp.ne.s32.totalorder %s196, %s210
      %p212 = scmp.eq.s32.totalorder %s34, 0
      %p213 = por %p211, %p212
      %s215 = sadd.s32 %s214, 1
      %p218 = scmp.eq.s32.totalorder %s28, 11
      %p219 = scmp.ne.s32.totalorder %s214, %s216
      %p220 = scmp.eq.s32.totalorder %s28, 0
      %p221 = por %p219, %p220
      %p222 = scmp.ne.s32.totalorder %s214, %s216
      %p223 = scmp.eq.s32.totalorder %s33, 11
      %p224 = por %p222, %p223
      %p225 = scmp.ne.s32.totalorder %s216, %s217
      %p226 = scmp.eq.s32.totalorder %s33, 0
      %p227 = por %p225, %p226
      %p228 = scmp.ne.s32.totalorder %s216, %s217
      %p229 = scmp.eq.s32.totalorder %s34, 11
      %p230 = por %p228, %p229
      %p232 = scmp.ne.s32.totalorder %s217, %s231
      %p233 = scmp.eq.s32.totalorder %s34, 0
      %p234 = por %p232, %p233
      %s236 = sadd.s32 %s235, 1
      %p239 = scmp.eq.s32.totalorder %s28, 11
      %p240 = scmp.ne.s32.totalorder %s235, %s237
      %p241 = scmp.eq.s32.totalorder %s28, 0
      %p242 = por %p240, %p241
      %p243 = scmp.ne.s32.totalorder %s235, %s237
      %p244 = scmp.eq.s32.totalorder %s33, 11
      %p245 = por %p243, %p244
      %p246 = scmp.ne.s32.totalorder %s237, %s238
      %p247 = scmp.eq.s32.totalorder %s33, 0
      %p248 = por %p246, %p247
      %p249 = scmp.ne.s32.totalorder %s237, %s238
      %p250 = scmp.eq.s32.totalorder %s34, 11
      %p251 = por %p249, %p250
      %p253 = scmp.ne.s32.totalorder %s238, %s252
      %p254 = scmp.eq.s32.totalorder %s34, 0
      %p255 = por %p253, %p254
      %s257 = sadd.s32 %s256, 1
      %p260 = scmp.eq.s32.totalorder %s28, 11
      %p261 = scmp.ne.s32.totalorder %s256, %s258
      %p262 = scmp.eq.s32.totalorder %s28, 0
      %p263 = por %p261, %p262
      %p264 = scmp.ne.s32.totalorder %s256, %s258
      %p265 = scmp.eq.s32.totalorder %s33, 11
      %p266 = por %p264, %p265
      %p267 = scmp.ne.s32.totalorder %s258, %s259
      %p268 = scmp.eq.s32.totalorder %s33, 0
      %p269 = por %p267, %p268
      %p270 = scmp.ne.s32.totalorder %s258, %s259
      %p271 = scmp.eq.s32.totalorder %s34, 11
      %p272 = por %p270, %p271
      %p274 = scmp.ne.s32.totalorder %s259, %s273
      %p275 = scmp.eq.s32.totalorder %s34, 0
      %p276 = por %p274, %p275
      %s278 = sadd.s32 %s277, 1
      %p281 = scmp.eq.s32.totalorder %s28, 11
      %p282 = scmp.ne.s32.totalorder %s277, %s279
      %p283 = scmp.eq.s32.totalorder %s28, 0
      %p284 = por %p282, %p283
      %p285 = scmp.ne.s32.totalorder %s277, %s279
      %p286 = scmp.eq.s32.totalorder %s33, 11
      %p287 = por %p285, %p286
      %p288 = scmp.ne.s32.totalorder %s279, %s280
      %p289 = scmp.eq.s32.totalorder %s33, 0
      %p290 = por %p288, %p289
      %p291 = scmp.ne.s32.totalorder %s279, %s280
      %p292 = scmp.eq.s32.totalorder %s34, 11
      %p293 = por %p291, %p292
      %p295 = scmp.ne.s32.totalorder %s280, %s294
      %p296 = scmp.eq.s32.totalorder %s34, 0
      %p297 = por %p295, %p296
      %s299 = sadd.s32 %s298, 1
      %p302 = scmp.eq.s32.totalorder %s28, 11
      %p303 = scmp.ne.s32.totalorder %s298, %s300
      %p304 = scmp.eq.s32.totalorder %s28, 0
      %p305 = por %p303, %p304
      %p306 = scmp.ne.s32.totalorder %s298, %s300
      %p307 = scmp.eq.s32.totalorder %s33, 11
      %p308 = por %p306, %p307
      %p309 = scmp.ne.s32.totalorder %s300, %s301
      %p310 = scmp.eq.s32.totalorder %s33, 0
      %p311 = por %p309, %p310
      %p312 = scmp.ne.s32.totalorder %s300, %s301
      %p313 = scmp.eq.s32.totalorder %s34, 11
      %p314 = por %p312, %p313
      %p316 = scmp.ne.s32.totalorder %s301, %s315
      %p317 = scmp.eq.s32.totalorder %s34, 0
      %p318 = por %p316, %p317
      %s320 = sadd.s32 %s319, 1
      %p323 = scmp.eq.s32.totalorder %s28, 11
      %p324 = scmp.ne.s32.totalorder %s319, %s321
      %p325 = scmp.eq.s32.totalorder %s28, 0
      %p326 = por %p324, %p325
      %p327 = scmp.ne.s32.totalorder %s319, %s321
      %p328 = scmp.eq.s32.totalorder %s33, 11
      %p329 = por %p327, %p328
      %p330 = scmp.ne.s32.totalorder %s321, %s322
      %p331 = scmp.eq.s32.totalorder %s33, 0
      %p332 = por %p330, %p331
      %p333 = scmp.ne.s32.totalorder %s321, %s322
      %p334 = scmp.eq.s32.totalorder %s34, 11
      %p335 = por %p333, %p334
      %p337 = scmp.ne.s32.totalorder %s322, %s336
      %p338 = scmp.eq.s32.totalorder %s34, 0
      %p339 = por %p337, %p338
      %s341 = sadd.s32 %s340, 1
      %p344 = scmp.eq.s32.totalorder %s28, 11
      %p345 = scmp.ne.s32.totalorder %s340, %s342
      %p346 = scmp.eq.s32.totalorder %s28, 0
      %p347 = por %p345, %p346
      %p348 = scmp.ne.s32.totalorder %s340, %s342
      %p349 = scmp.eq.s32.totalorder %s33, 11
      %p350 = por %p348, %p349
      %p351 = scmp.ne.s32.totalorder %s342, %s343
      %p352 = scmp.eq.s32.totalorder %s33, 0
      %p353 = por %p351, %p352
      %p354 = scmp.ne.s32.totalorder %s342, %s343
      %p355 = scmp.eq.s32.totalorder %s34, 11
      %p356 = por %p354, %p355
      %p358 = scmp.ne.s32.totalorder %s343, %s357
      %p359 = scmp.eq.s32.totalorder %s34, 0
      %p360 = por %p358, %p359
      %s362 = sadd.s32 %s361, 1
      %p365 = scmp.eq.s32.totalorder %s28, 11
      %p366 = scmp.ne.s32.totalorder %s361, %s363
      %p367 = scmp.eq.s32.totalorder %s28, 0
      %p368 = por %p366, %p367
      %p369 = scmp.ne.s32.totalorder %s361, %s363
      %p370 = scmp.eq.s32.totalorder %s33, 11
      %p371 = por %p369, %p370
      %p372 = scmp.ne.s32.totalorder %s363, %s364
      %p373 = scmp.eq.s32.totalorder %s33, 0
      %p374 = por %p372, %p373
      %p375 = scmp.ne.s32.totalorder %s363, %s364
      %p376 = scmp.eq.s32.totalorder %s34, 11
      %p377 = por %p375, %p376
      %p379 = scmp.ne.s32.totalorder %s364, %s378
      %p380 = scmp.eq.s32.totalorder %s34, 0
      %p381 = por %p379, %p380
      %s383 = sadd.s32 %s382, 1
      %p386 = scmp.eq.s32.totalorder %s28, 11
      %p387 = scmp.ne.s32.totalorder %s382, %s384
      %p388 = scmp.eq.s32.totalorder %s28, 0
      %p389 = por %p387, %p388
      %p390 = scmp.ne.s32.totalorder %s382, %s384
      %p391 = scmp.eq.s32.totalorder %s33, 11
      %p392 = por %p390, %p391
      %p393 = scmp.ne.s32.totalorder %s384, %s385
      %p394 = scmp.eq.s32.totalorder %s33, 0
      %p395 = por %p393, %p394
      %p396 = scmp.ne.s32.totalorder %s384, %s385
      %p397 = scmp.eq.s32.totalorder %s34, 11
      %p398 = por %p396, %p397
      %p400 = scmp.ne.s32.totalorder %s385, %s399
      %p401 = scmp.eq.s32.totalorder %s34, 0
      %p402 = por %p400, %p401
      %s404 = sadd.s32 %s403, 1
      %p407 = scmp.eq.s32.totalorder %s28, 11
      %p408 = scmp.ne.s32.totalorder %s403, %s405
      %p409 = scmp.eq.s32.totalorder %s28, 0
      %p410 = por %p408, %p409
      %p411 = scmp.ne.s32.totalorder %s403, %s405
      %p412 = scmp.eq.s32.totalorder %s33, 11
      %p413 = por %p411, %p412
      %p414 = scmp.ne.s32.totalorder %s405, %s406
      %p415 = scmp.eq.s32.totalorder %s33, 0
      %p416 = por %p414, %p415
      %p417 = scmp.ne.s32.totalorder %s405, %s406
      %p418 = scmp.eq.s32.totalorder %s34, 11
      %p419 = por %p417, %p418
      %p421 = scmp.ne.s32.totalorder %s406, %s420
      %p422 = scmp.eq.s32.totalorder %s34, 0
      %p423 = por %p421, %p422
      %s425 = sadd.s32 %s424, 1
      %p428 = scmp.eq.s32.totalorder %s28, 11
      %p429 = scmp.ne.s32.totalorder %s424, %s426
      %p430 = scmp.eq.s32.totalorder %s28, 0
      %p431 = por %p429, %p430
      %p432 = scmp.ne.s32.totalorder %s424, %s426
      %p433 = scmp.eq.s32.totalorder %s33, 11
      %p434 = por %p432, %p433
      %p435 = scmp.ne.s32.totalorder %s426, %s427
      %p436 = scmp.eq.s32.totalorder %s33, 0
      %p437 = por %p435, %p436
      %p438 = scmp.ne.s32.totalorder %s426, %s427
      %p439 = scmp.eq.s32.totalorder %s34, 11
      %p440 = por %p438, %p439
      %p442 = scmp.ne.s32.totalorder %s427, %s441
      %p443 = scmp.eq.s32.totalorder %s34, 0
      %p444 = por %p442, %p443
      %s446 = sadd.s32 %s445, 1
      %p449 = scmp.eq.s32.totalorder %s28, 11
      %p450 = scmp.ne.s32.totalorder %s445, %s447
      %p451 = scmp.eq.s32.totalorder %s28, 0
      %p452 = por %p450, %p451
      %p453 = scmp.ne.s32.totalorder %s445, %s447
      %p454 = scmp.eq.s32.totalorder %s33, 11
      %p455 = por %p453, %p454
      %p456 = scmp.ne.s32.totalorder %s447, %s448
      %p457 = scmp.eq.s32.totalorder %s33, 0
      %p458 = por %p456, %p457
      %p459 = scmp.ne.s32.totalorder %s447, %s448
      %p460 = scmp.eq.s32.totalorder %s34, 11
      %p461 = por %p459, %p460
      %p463 = scmp.ne.s32.totalorder %s448, %s462
      %p464 = scmp.eq.s32.totalorder %s34, 0
      %p465 = por %p463, %p464
      %s467 = sadd.s32 %s466, 1
      %p470 = scmp.eq.s32.totalorder %s28, 11
      %p471 = scmp.ne.s32.totalorder %s466, %s468
      %p472 = scmp.eq.s32.totalorder %s28, 0
      %p473 = por %p471, %p472
      %p474 = scmp.ne.s32.totalorder %s466, %s468
      %p475 = scmp.eq.s32.totalorder %s33, 11
      %p476 = por %p474, %p475
      %p477 = scmp.ne.s32.totalorder %s468, %s469
      %p478 = scmp.eq.s32.totalorder %s33, 0
      %p479 = por %p477, %p478
      %p480 = scmp.ne.s32.totalorder %s468, %s469
      %p481 = scmp.eq.s32.totalorder %s34, 11
      %p482 = por %p480, %p481
      %p484 = scmp.ne.s32.totalorder %s469, %s483
      %p485 = scmp.eq.s32.totalorder %s34, 0
      %p486 = por %p484, %p485
      %s488 = sadd.s32 %s487, 1
      %p491 = scmp.eq.s32.totalorder %s28, 11
      %p492 = scmp.ne.s32.totalorder %s487, %s489
      %p493 = scmp.eq.s32.totalorder %s28, 0
      %p494 = por %p492, %p493
      %p495 = scmp.ne.s32.totalorder %s487, %s489
      %p496 = scmp.eq.s32.totalorder %s33, 11
      %p497 = por %p495, %p496
      %p498 = scmp.ne.s32.totalorder %s489, %s490
      %p499 = scmp.eq.s32.totalorder %s33, 0
      %p500 = por %p498, %p499
      %p501 = scmp.ne.s32.totalorder %s489, %s490
      %p502 = scmp.eq.s32.totalorder %s34, 11
      %p503 = por %p501, %p502
      %p505 = scmp.ne.s32.totalorder %s490, %s504
      %p506 = scmp.eq.s32.totalorder %s34, 0
      %p507 = por %p505, %p506
      %p508 = scmp.le.s32.totalorder 1, %s28
      %p509 = scmp.lt.s32.totalorder %s28, 13
      %p510 = pnand %p508, %p509
      %p511 = pneg %p510
      // Predicated region
      $region9: #{tpu_custom_call.1} parent=5 // pred_check
        _
      $region10: #{tpu_custom_call.1} parent=5 // pred_check_branch
        %513 = sbr.rel (%p510) target = $region12
      $region11: #{tpu_custom_call.1} parent=5 // pred_region
        %s514 = ssub.s32 %s28, 1
        // Predicated region
        $region13: #{tpu_custom_call.1} parent=11 // pred_check
          %p515 = pneg %p101
        $region14: #{tpu_custom_call.1} parent=11 // pred_check_branch
          %517 = sbr.rel (%p515) target = $region16
        $region15: #{tpu_custom_call.1} parent=11 // pred_region
          _
        $region16: #{tpu_custom_call.1} parent=11 // pred_fallthru
          _
        // Predicated region
        $region17: #{tpu_custom_call.1} parent=11 // pred_check
          %p518 = pneg %p122
        $region18: #{tpu_custom_call.1} parent=11 // pred_check_branch
          %520 = sbr.rel (%p518) target = $region20
        $region19: #{tpu_custom_call.1} parent=11 // pred_region
          _
        $region20: #{tpu_custom_call.1} parent=11 // pred_fallthru
          _
        // Predicated region
        $region21: #{tpu_custom_call.1} parent=11 // pred_check
          %p521 = pneg %p143
        $region22: #{tpu_custom_call.1} parent=11 // pred_check_branch
          %523 = sbr.rel (%p521) target = $region24
        $region23: #{tpu_custom_call.1} parent=11 // pred_region
          _
        $region24: #{tpu_custom_call.1} parent=11 // pred_fallthru
          _
        // Predicated region
        $region25: #{tpu_custom_call.1} parent=11 // pred_check
          %p524 = pneg %p164
        $region26: #{tpu_custom_call.1} parent=11 // pred_check_branch
          %526 = sbr.rel (%p524) target = $region28
        $region27: #{tpu_custom_call.1} parent=11 // pred_region
          _
        $region28: #{tpu_custom_call.1} parent=11 // pred_fallthru
          _
        // Predicated region
        $region29: #{tpu_custom_call.1} parent=11 // pred_check
          %p527 = pneg %p185
        $region30: #{tpu_custom_call.1} parent=11 // pred_check_branch
          %529 = sbr.rel (%p527) target = $region32
        $region31: #{tpu_custom_call.1} parent=11 // pred_region
          _
        $region32: #{tpu_custom_call.1} parent=11 // pred_fallthru
          _
        // Predicated region
        $region33: #{tpu_custom_call.1} parent=11 // pred_check
          %p530 = pneg %p206
        $region34: #{tpu_custom_call.1} parent=11 // pred_check_branch
          %532 = sbr.rel (%p530) target = $region36
        $region35: #{tpu_custom_call.1} parent=11 // pred_region
          _
        $region36: #{tpu_custom_call.1} parent=11 // pred_fallthru
          _
        // Predicated region
        $region37: #{tpu_custom_call.1} parent=11 // pred_check
          %p533 = pneg %p227
        $region38: #{tpu_custom_call.1} parent=11 // pred_check_branch
          %535 = sbr.rel (%p533) target = $region40
        $region39: #{tpu_custom_call.1} parent=11 // pred_region
          _
        $region40: #{tpu_custom_call.1} parent=11 // pred_fallthru
          _
        // Predicated region
        $region41: #{tpu_custom_call.1} parent=11 // pred_check
          %p536 = pneg %p248
        $region42: #{tpu_custom_call.1} parent=11 // pred_check_branch
          %538 = sbr.rel (%p536) target = $region44
        $region43: #{tpu_custom_call.1} parent=11 // pred_region
          _
        $region44: #{tpu_custom_call.1} parent=11 // pred_fallthru
          _
        // Predicated region
        $region45: #{tpu_custom_call.1} parent=11 // pred_check
          %p539 = pneg %p269
        $region46: #{tpu_custom_call.1} parent=11 // pred_check_branch
          %541 = sbr.rel (%p539) target = $region48
        $region47: #{tpu_custom_call.1} parent=11 // pred_region
          _
        $region48: #{tpu_custom_call.1} parent=11 // pred_fallthru
          _
        // Predicated region
        $region49: #{tpu_custom_call.1} parent=11 // pred_check
          %p542 = pneg %p290
        $region50: #{tpu_custom_call.1} parent=11 // pred_check_branch
          %544 = sbr.rel (%p542) target = $region52
        $region51: #{tpu_custom_call.1} parent=11 // pred_region
          _
        $region52: #{tpu_custom_call.1} parent=11 // pred_fallthru
          _
        // Predicated region
        $region53: #{tpu_custom_call.1} parent=11 // pred_check
          %p545 = pneg %p311
        $region54: #{tpu_custom_call.1} parent=11 // pred_check_branch
          %547 = sbr.rel (%p545) target = $region56
        $region55: #{tpu_custom_call.1} parent=11 // pred_region
          _
        $region56: #{tpu_custom_call.1} parent=11 // pred_fallthru
          _
        // Predicated region
        $region57: #{tpu_custom_call.1} parent=11 // pred_check
          %p548 = pneg %p332
        $region58: #{tpu_custom_call.1} parent=11 // pred_check_branch
          %550 = sbr.rel (%p548) target = $region60
        $region59: #{tpu_custom_call.1} parent=11 // pred_region
          _
        $region60: #{tpu_custom_call.1} parent=11 // pred_fallthru
          _
        // Predicated region
        $region61: #{tpu_custom_call.1} parent=11 // pred_check
          %p551 = pneg %p353
        $region62: #{tpu_custom_call.1} parent=11 // pred_check_branch
          %553 = sbr.rel (%p551) target = $region64
        $region63: #{tpu_custom_call.1} parent=11 // pred_region
          _
        $region64: #{tpu_custom_call.1} parent=11 // pred_fallthru
          _
        // Predicated region
        $region65: #{tpu_custom_call.1} parent=11 // pred_check
          %p554 = pneg %p374
        $region66: #{tpu_custom_call.1} parent=11 // pred_check_branch
          %556 = sbr.rel (%p554) target = $region68
        $region67: #{tpu_custom_call.1} parent=11 // pred_region
          _
        $region68: #{tpu_custom_call.1} parent=11 // pred_fallthru
          _
        // Predicated region
        $region69: #{tpu_custom_call.1} parent=11 // pred_check
          %p557 = pneg %p395
        $region70: #{tpu_custom_call.1} parent=11 // pred_check_branch
          %559 = sbr.rel (%p557) target = $region72
        $region71: #{tpu_custom_call.1} parent=11 // pred_region
          _
        $region72: #{tpu_custom_call.1} parent=11 // pred_fallthru
          _
        // Predicated region
        $region73: #{tpu_custom_call.1} parent=11 // pred_check
          %p560 = pneg %p416
        $region74: #{tpu_custom_call.1} parent=11 // pred_check_branch
          %562 = sbr.rel (%p560) target = $region76
        $region75: #{tpu_custom_call.1} parent=11 // pred_region
          _
        $region76: #{tpu_custom_call.1} parent=11 // pred_fallthru
          _
        // Predicated region
        $region77: #{tpu_custom_call.1} parent=11 // pred_check
          %p563 = pneg %p437
        $region78: #{tpu_custom_call.1} parent=11 // pred_check_branch
          %565 = sbr.rel (%p563) target = $region80
        $region79: #{tpu_custom_call.1} parent=11 // pred_region
          _
        $region80: #{tpu_custom_call.1} parent=11 // pred_fallthru
          _
        // Predicated region
        $region81: #{tpu_custom_call.1} parent=11 // pred_check
          %p566 = pneg %p458
        $region82: #{tpu_custom_call.1} parent=11 // pred_check_branch
          %568 = sbr.rel (%p566) target = $region84
        $region83: #{tpu_custom_call.1} parent=11 // pred_region
          _
        $region84: #{tpu_custom_call.1} parent=11 // pred_fallthru
          _
        // Predicated region
        $region85: #{tpu_custom_call.1} parent=11 // pred_check
          %p569 = pneg %p479
        $region86: #{tpu_custom_call.1} parent=11 // pred_check_branch
          %571 = sbr.rel (%p569) target = $region88
        $region87: #{tpu_custom_call.1} parent=11 // pred_region
          _
        $region88: #{tpu_custom_call.1} parent=11 // pred_fallthru
          _
      $region12: #{tpu_custom_call.1} parent=5 // pred_fallthru
        _
      %p572 = scmp.lt.s32.totalorder %s28, 12
      // Predicated region
      $region89: #{tpu_custom_call.1} parent=5 // pred_check
        %p573 = pneg %p572
      $region90: #{tpu_custom_call.1} parent=5 // pred_check_branch
        %575 = sbr.rel (%p573) target = $region92
      $region91: #{tpu_custom_call.1} parent=5 // pred_region
        // Predicated region
        $region93: #{tpu_custom_call.1} parent=91 // pred_check
          %p576 = pneg %p48
        $region94: #{tpu_custom_call.1} parent=91 // pred_check_branch
          %578 = sbr.rel (%p576) target = $region96
        $region95: #{tpu_custom_call.1} parent=91 // pred_region
          %s579 = smul.u32 98, %s28
          %p580 = scmp.lt.s32.totalorder %s579, 1175
          %s581 = scalar_select %p580, %s579, 1175
          %s582 = scalar_lea.vmem %s0, %s581
          %s583 = smul.u32 98, %s28
        $region96: #{tpu_custom_call.1} parent=91 // pred_fallthru
          _
        // Predicated region
        $region97: #{tpu_custom_call.1} parent=91 // pred_check
          %p584 = pneg %p74
        $region98: #{tpu_custom_call.1} parent=91 // pred_check_branch
          %586 = sbr.rel (%p584) target = $region100
        $region99: #{tpu_custom_call.1} parent=91 // pred_region
          %s587 = smul.u32 1568, %s28
          %p588 = scmp.lt.s32.totalorder %s587, 18815
          %s589 = scalar_select %p588, %s587, 18815
          %s590 = smul.addr %s589, 4
          %s591 = scalar_lea.vmem %s1, %s590
          %s592 = smul.u32 1568, %s28
        $region100: #{tpu_custom_call.1} parent=91 // pred_fallthru
          _
      $region92: #{tpu_custom_call.1} parent=5 // pred_fallthru
        _
      %p593 = scmp.le.s32.totalorder 1, %s28
      %p594 = scmp.lt.s32.totalorder %s28, 13
      %p595 = pnand %p593, %p594
      %p596 = pneg %p595
      // Predicated region
      $region101: #{tpu_custom_call.1} parent=5 // pred_check
        _
      $region102: #{tpu_custom_call.1} parent=5 // pred_check_branch
        %598 = sbr.rel (%p595) target = $region104
      $region103: #{tpu_custom_call.1} parent=5 // pred_region
        %s599 = ssub.s32 %s28, 1
        %s600 = smul.u32 98, %s33
        %p601 = scmp.lt.s32.totalorder %s600, 1175
        %s602 = scalar_select %p601, %s600, 1175
        %s603 = scalar_lea.vmem %s0, %s602
        %p604 = pneg %p54
        %p605 = pneg %p51
        %s606 = smul.u32 1568, %s33
        %p607 = scmp.lt.s32.totalorder %s606, 18815
        %s608 = scalar_select %p607, %s606, 18815
        %s609 = smul.addr %s608, 4
        %s610 = scalar_lea.vmem %s1, %s609
        %p611 = pneg %p80
        %p612 = pneg %p77
        %p613 = pneg %p101
        %p614 = pneg %p98
        %p615 = pneg %p122
        %p616 = pneg %p119
        %p617 = pneg %p143
        %p618 = pneg %p140
        %p619 = pneg %p164
        %p620 = pneg %p161
        %p621 = pneg %p185
        %p622 = pneg %p182
        %p623 = pneg %p206
        %p624 = pneg %p203
        %p625 = pneg %p227
        %p626 = pneg %p224
        %p627 = pneg %p248
        %p628 = pneg %p245
        %p629 = pneg %p269
        %p630 = pneg %p266
        %p631 = pneg %p290
        %p632 = pneg %p287
        %p633 = pneg %p311
        %p634 = pneg %p308
        %p635 = pneg %p332
        %p636 = pneg %p329
        %p637 = pneg %p353
        %p638 = pneg %p350
        %p639 = pneg %p374
        %p640 = pneg %p371
        %p641 = pneg %p395
        %p642 = pneg %p392
        %p643 = pneg %p416
        %p644 = pneg %p413
        %p645 = pneg %p437
        %p646 = pneg %p434
        %p647 = pneg %p458
        %p648 = pneg %p455
        %p649 = pneg %p479
        %p650 = pneg %p476
        %p651 = pneg %p500
        %p652 = pneg %p497
        %s653 = smul.u32 98, %s33
        %p654 = scmp.lt.s32.totalorder %s653, 1175
        %s655 = scalar_select %p654, %s653, 1175
        %s656 = scalar_lea.vmem %s0, %s655
        %s657 = smul.u32 98, %s33
        %s658 = smul.u32 1568, %s33
        %p659 = scmp.lt.s32.totalorder %s658, 18815
        %s660 = scalar_select %p659, %s658, 18815
        %s661 = smul.addr %s660, 4
        %s662 = scalar_lea.vmem %s1, %s661
        %s663 = smul.u32 1568, %s33
        %p665 = scmp.eq.s32.totalorder %s33, 0
        // Predicated region
        $region105: #{tpu_custom_call.1} parent=103 // pred_check
          %p666 = pneg %p665
        $region106: #{tpu_custom_call.1} parent=103 // pred_check_branch
          %668 = sbr.rel (%p666) target = $region108
        $region107: #{tpu_custom_call.1} parent=103 // pred_region
          %vm669 = vcmask 254976
          %670 = vst.msk [vmem:[#allocation2] sm:$0x3] %vm669, 0.0
        $region108: #{tpu_custom_call.1} parent=103 // pred_fallthru
          _
        %v671 = vld [vmem:[#allocation2] sm:$0x3]
        %v672 = vld [vmem:[%s656] sm:$0xff]
        %v673 = vld [vmem:[%s656 + $0x8] sm:$0xff]
        %v674 = vld [vmem:[%s656 + $0x10] sm:$0xff]
        %v675 = vld [vmem:[%s656 + $0x18] sm:$0xff]
        %v676 = vld [vmem:[%s656 + $0x20] sm:$0xff]
        %v677 = vld [vmem:[%s656 + $0x28] sm:$0xff]
        %v678 = vld [vmem:[%s656 + $0x30] sm:$0xff]
        %v679 = vld [vmem:[%s656 + $0x38] sm:$0xff]
        %v680 = vld [vmem:[%s656 + $0x40] sm:$0xff]
        %v681 = vld [vmem:[%s656 + $0x48] sm:$0xff]
        %v682 = vld [vmem:[%s656 + $0x50] sm:$0xff]
        %v683 = vld [vmem:[%s656 + $0x58] sm:$0xff]
        %v684 = vld [vmem:[%s656 + $0x60] sm:$0x3]
        %v685 = vld [vmem:[%s662] sm:$0xf]
        %v686 = vld [vmem:[%s662 + $0x4] sm:$0xf]
        %v687 = vld [vmem:[%s662 + $0x8] sm:$0xf]
        %v688 = vld [vmem:[%s662 + $0xc] sm:$0xf]
        %v689 = vld [vmem:[%s662 + $0x10] sm:$0xf]
        %v690 = vld [vmem:[%s662 + $0x14] sm:$0xf]
        %v691 = vld [vmem:[%s662 + $0x18] sm:$0xf]
        %v692 = vld [vmem:[%s662 + $0x1c] sm:$0xf]
        %v693 = vld [vmem:[%s662 + $0x20] sm:$0xf]
        %v694 = vld [vmem:[%s662 + $0x24] sm:$0xf]
        %v695 = vld [vmem:[%s662 + $0x28] sm:$0xf]
        %v696 = vld [vmem:[%s662 + $0x2c] sm:$0xf]
        %v697 = vld [vmem:[%s662 + $0x30] sm:$0xf]
        %v698 = vld [vmem:[%s662 + $0x34] sm:$0xf]
        %v699 = vld [vmem:[%s662 + $0x38] sm:$0xf]
        %v700 = vld [vmem:[%s662 + $0x3c] sm:$0xf]
        %v701 = vld [vmem:[%s662 + $0x40] sm:$0xf]
        %v702 = vld [vmem:[%s662 + $0x44] sm:$0xf]
        %v703 = vld [vmem:[%s662 + $0x48] sm:$0xf]
        %v704 = vld [vmem:[%s662 + $0x4c] sm:$0xf]
        %v705 = vld [vmem:[%s662 + $0x50] sm:$0xf]
        %v706 = vld [vmem:[%s662 + $0x54] sm:$0xf]
        %v707 = vld [vmem:[%s662 + $0x58] sm:$0xf]
        %v708 = vld [vmem:[%s662 + $0x5c] sm:$0xf]
        %v709 = vld [vmem:[%s662 + $0x60] sm:$0xf]
        %v710 = vld [vmem:[%s662 + $0x64] sm:$0xf]
        %v711 = vld [vmem:[%s662 + $0x68] sm:$0xf]
        %v712 = vld [vmem:[%s662 + $0x6c] sm:$0xf]
        %v713 = vld [vmem:[%s662 + $0x70] sm:$0xf]
        %v714 = vld [vmem:[%s662 + $0x74] sm:$0xf]
        %v715 = vld [vmem:[%s662 + $0x78] sm:$0xf]
        %v716 = vld [vmem:[%s662 + $0x7c] sm:$0xf]
        %v717 = vld [vmem:[%s662 + $0x80] sm:$0xf]
        %v718 = vld [vmem:[%s662 + $0x84] sm:$0xf]
        %v719 = vld [vmem:[%s662 + $0x88] sm:$0xf]
        %v720 = vld [vmem:[%s662 + $0x8c] sm:$0xf]
        %v721 = vld [vmem:[%s662 + $0x90] sm:$0xf]
        %v722 = vld [vmem:[%s662 + $0x94] sm:$0xf]
        %v723 = vld [vmem:[%s662 + $0x98] sm:$0xf]
        %v724 = vld [vmem:[%s662 + $0x9c] sm:$0xf]
        %v725 = vld [vmem:[%s662 + $0xa0] sm:$0xf]
        %v726 = vld [vmem:[%s662 + $0xa4] sm:$0xf]
        %v727 = vld [vmem:[%s662 + $0xa8] sm:$0xf]
        %v728 = vld [vmem:[%s662 + $0xac] sm:$0xf]
        %v729 = vld [vmem:[%s662 + $0xb0] sm:$0xf]
        %v730 = vld [vmem:[%s662 + $0xb4] sm:$0xf]
        %v731 = vld [vmem:[%s662 + $0xb8] sm:$0xf]
        %v732 = vld [vmem:[%s662 + $0xbc] sm:$0xf]
        %v733 = vld [vmem:[%s662 + $0xc0] sm:$0xf]
        %v734 = vld [vmem:[%s662 + $0xc4] sm:$0xf]
        %v735 = vld [vmem:[%s662 + $0xc8] sm:$0xf]
        %v736 = vld [vmem:[%s662 + $0xcc] sm:$0xf]
        %v737 = vld [vmem:[%s662 + $0xd0] sm:$0xf]
        %v738 = vld [vmem:[%s662 + $0xd4] sm:$0xf]
        %v739 = vld [vmem:[%s662 + $0xd8] sm:$0xf]
        %v740 = vld [vmem:[%s662 + $0xdc] sm:$0xf]
        %v741 = vld [vmem:[%s662 + $0xe0] sm:$0xf]
        %v742 = vld [vmem:[%s662 + $0xe4] sm:$0xf]
        %v743 = vld [vmem:[%s662 + $0xe8] sm:$0xf]
        %v744 = vld [vmem:[%s662 + $0xec] sm:$0xf]
        %v745 = vld [vmem:[%s662 + $0xf0] sm:$0xf]
        %v746 = vld [vmem:[%s662 + $0xf4] sm:$0xf]
        %v747 = vld [vmem:[%s662 + $0xf8] sm:$0xf]
        %v748 = vld [vmem:[%s662 + $0xfc] sm:$0xf]
        %v749 = vld [vmem:[%s662 + $0x100] sm:$0xf]
        %v750 = vld [vmem:[%s662 + $0x104] sm:$0xf]
        %v751 = vld [vmem:[%s662 + $0x108] sm:$0xf]
        %v752 = vld [vmem:[%s662 + $0x10c] sm:$0xf]
        %v753 = vld [vmem:[%s662 + $0x110] sm:$0xf]
        %v754 = vld [vmem:[%s662 + $0x114] sm:$0xf]
        %v755 = vld [vmem:[%s662 + $0x118] sm:$0xf]
        %v756 = vld [vmem:[%s662 + $0x11c] sm:$0xf]
        %v757 = vld [vmem:[%s662 + $0x120] sm:$0xf]
        %v758 = vld [vmem:[%s662 + $0x124] sm:$0xf]
        %v759 = vld [vmem:[%s662 + $0x128] sm:$0xf]
        %v760 = vld [vmem:[%s662 + $0x12c] sm:$0xf]
        %v761 = vld [vmem:[%s662 + $0x130] sm:$0xf]
        %v762 = vld [vmem:[%s662 + $0x134] sm:$0xf]
        %v763 = vld [vmem:[%s662 + $0x138] sm:$0xf]
        %v764 = vld [vmem:[%s662 + $0x13c] sm:$0xf]
        %v765 = vld [vmem:[%s662 + $0x140] sm:$0xf]
        %v766 = vld [vmem:[%s662 + $0x144] sm:$0xf]
        %v767 = vld [vmem:[%s662 + $0x148] sm:$0xf]
        %v768 = vld [vmem:[%s662 + $0x14c] sm:$0xf]
        %v769 = vld [vmem:[%s662 + $0x150] sm:$0xf]
        %v770 = vld [vmem:[%s662 + $0x154] sm:$0xf]
        %v771 = vld [vmem:[%s662 + $0x158] sm:$0xf]
        %v772 = vld [vmem:[%s662 + $0x15c] sm:$0xf]
        %v773 = vld [vmem:[%s662 + $0x160] sm:$0xf]
        %v774 = vld [vmem:[%s662 + $0x164] sm:$0xf]
        %v775 = vld [vmem:[%s662 + $0x168] sm:$0xf]
        %v776 = vld [vmem:[%s662 + $0x16c] sm:$0xf]
        %v777 = vld [vmem:[%s662 + $0x170] sm:$0xf]
        %v778 = vld [vmem:[%s662 + $0x174] sm:$0xf]
        %v779 = vld [vmem:[%s662 + $0x178] sm:$0xf]
        %v780 = vld [vmem:[%s662 + $0x17c] sm:$0xf]
        %v781 = vld [vmem:[%s662 + $0x180] sm:$0xf]
        %v782 = vld [vmem:[%s662 + $0x184] sm:$0xf]
        %v783 = vld [vmem:[%s662 + $0x188] sm:$0xf]
        %v784 = vld [vmem:[%s662 + $0x18c] sm:$0xf]
        %v785 = vld [vmem:[%s662 + $0x190] sm:$0xf]
        %v786 = vld [vmem:[%s662 + $0x194] sm:$0xf]
        %v787 = vld [vmem:[%s662 + $0x198] sm:$0xf]
        %v788 = vld [vmem:[%s662 + $0x19c] sm:$0xf]
        %v789 = vld [vmem:[%s662 + $0x1a0] sm:$0xf]
        %v790 = vld [vmem:[%s662 + $0x1a4] sm:$0xf]
        %v791 = vld [vmem:[%s662 + $0x1a8] sm:$0xf]
        %v792 = vld [vmem:[%s662 + $0x1ac] sm:$0xf]
        %v793 = vld [vmem:[%s662 + $0x1b0] sm:$0xf]
        %v794 = vld [vmem:[%s662 + $0x1b4] sm:$0xf]
        %v795 = vld [vmem:[%s662 + $0x1b8] sm:$0xf]
        %v796 = vld [vmem:[%s662 + $0x1bc] sm:$0xf]
        %v797 = vld [vmem:[%s662 + $0x1c0] sm:$0xf]
        %v798 = vld [vmem:[%s662 + $0x1c4] sm:$0xf]
        %v799 = vld [vmem:[%s662 + $0x1c8] sm:$0xf]
        %v800 = vld [vmem:[%s662 + $0x1cc] sm:$0xf]
        %v801 = vld [vmem:[%s662 + $0x1d0] sm:$0xf]
        %v802 = vld [vmem:[%s662 + $0x1d4] sm:$0xf]
        %v803 = vld [vmem:[%s662 + $0x1d8] sm:$0xf]
        %v804 = vld [vmem:[%s662 + $0x1dc] sm:$0xf]
        %v805 = vld [vmem:[%s662 + $0x1e0] sm:$0xf]
        %v806 = vld [vmem:[%s662 + $0x1e4] sm:$0xf]
        %v807 = vld [vmem:[%s662 + $0x1e8] sm:$0xf]
        %v808 = vld [vmem:[%s662 + $0x1ec] sm:$0xf]
        %v809 = vld [vmem:[%s662 + $0x1f0] sm:$0xf]
        %v810 = vld [vmem:[%s662 + $0x1f4] sm:$0xf]
        %v811 = vld [vmem:[%s662 + $0x1f8] sm:$0xf]
        %v812 = vld [vmem:[%s662 + $0x1fc] sm:$0xf]
        %v813 = vld [vmem:[%s662 + $0x200] sm:$0xf]
        %v814 = vld [vmem:[%s662 + $0x204] sm:$0xf]
        %v815 = vld [vmem:[%s662 + $0x208] sm:$0xf]
        %v816 = vld [vmem:[%s662 + $0x20c] sm:$0xf]
        %v817 = vld [vmem:[%s662 + $0x210] sm:$0xf]
        %v818 = vld [vmem:[%s662 + $0x214] sm:$0xf]
        %v819 = vld [vmem:[%s662 + $0x218] sm:$0xf]
        %v820 = vld [vmem:[%s662 + $0x21c] sm:$0xf]
        %v821 = vld [vmem:[%s662 + $0x220] sm:$0xf]
        %v822 = vld [vmem:[%s662 + $0x224] sm:$0xf]
        %v823 = vld [vmem:[%s662 + $0x228] sm:$0xf]
        %v824 = vld [vmem:[%s662 + $0x22c] sm:$0xf]
        %v825 = vld [vmem:[%s662 + $0x230] sm:$0xf]
        %v826 = vld [vmem:[%s662 + $0x234] sm:$0xf]
        %v827 = vld [vmem:[%s662 + $0x238] sm:$0xf]
        %v828 = vld [vmem:[%s662 + $0x23c] sm:$0xf]
        %v829 = vld [vmem:[%s662 + $0x240] sm:$0xf]
        %v830 = vld [vmem:[%s662 + $0x244] sm:$0xf]
        %v831 = vld [vmem:[%s662 + $0x248] sm:$0xf]
        %v832 = vld [vmem:[%s662 + $0x24c] sm:$0xf]
        %v833 = vld [vmem:[%s662 + $0x250] sm:$0xf]
        %v834 = vld [vmem:[%s662 + $0x254] sm:$0xf]
        %v835 = vld [vmem:[%s662 + $0x258] sm:$0xf]
        %v836 = vld [vmem:[%s662 + $0x25c] sm:$0xf]
        %v837 = vld [vmem:[%s662 + $0x260] sm:$0xf]
        %v838 = vld [vmem:[%s662 + $0x264] sm:$0xf]
        %v839 = vld [vmem:[%s662 + $0x268] sm:$0xf]
        %v840 = vld [vmem:[%s662 + $0x26c] sm:$0xf]
        %v841 = vld [vmem:[%s662 + $0x270] sm:$0xf]
        %v842 = vld [vmem:[%s662 + $0x274] sm:$0xf]
        %v843 = vld [vmem:[%s662 + $0x278] sm:$0xf]
        %v844 = vld [vmem:[%s662 + $0x27c] sm:$0xf]
        %v845 = vld [vmem:[%s662 + $0x280] sm:$0xf]
        %v846 = vld [vmem:[%s662 + $0x284] sm:$0xf]
        %v847 = vld [vmem:[%s662 + $0x288] sm:$0xf]
        %v848 = vld [vmem:[%s662 + $0x28c] sm:$0xf]
        %v849 = vld [vmem:[%s662 + $0x290] sm:$0xf]
        %v850 = vld [vmem:[%s662 + $0x294] sm:$0xf]
        %v851 = vld [vmem:[%s662 + $0x298] sm:$0xf]
        %v852 = vld [vmem:[%s662 + $0x29c] sm:$0xf]
        %v853 = vld [vmem:[%s662 + $0x2a0] sm:$0xf]
        %v854 = vld [vmem:[%s662 + $0x2a4] sm:$0xf]
        %v855 = vld [vmem:[%s662 + $0x2a8] sm:$0xf]
        %v856 = vld [vmem:[%s662 + $0x2ac] sm:$0xf]
        %v857 = vld [vmem:[%s662 + $0x2b0] sm:$0xf]
        %v858 = vld [vmem:[%s662 + $0x2b4] sm:$0xf]
        %v859 = vld [vmem:[%s662 + $0x2b8] sm:$0xf]
        %v860 = vld [vmem:[%s662 + $0x2bc] sm:$0xf]
        %v861 = vld [vmem:[%s662 + $0x2c0] sm:$0xf]
        %v862 = vld [vmem:[%s662 + $0x2c4] sm:$0xf]
        %v863 = vld [vmem:[%s662 + $0x2c8] sm:$0xf]
        %v864 = vld [vmem:[%s662 + $0x2cc] sm:$0xf]
        %v865 = vld [vmem:[%s662 + $0x2d0] sm:$0xf]
        %v866 = vld [vmem:[%s662 + $0x2d4] sm:$0xf]
        %v867 = vld [vmem:[%s662 + $0x2d8] sm:$0xf]
        %v868 = vld [vmem:[%s662 + $0x2dc] sm:$0xf]
        %v869 = vld [vmem:[%s662 + $0x2e0] sm:$0xf]
        %v870 = vld [vmem:[%s662 + $0x2e4] sm:$0xf]
        %v871 = vld [vmem:[%s662 + $0x2e8] sm:$0xf]
        %v872 = vld [vmem:[%s662 + $0x2ec] sm:$0xf]
        %v873 = vld [vmem:[%s662 + $0x2f0] sm:$0xf]
        %v874 = vld [vmem:[%s662 + $0x2f4] sm:$0xf]
        %v875 = vld [vmem:[%s662 + $0x2f8] sm:$0xf]
        %v876 = vld [vmem:[%s662 + $0x2fc] sm:$0xf]
        %v877 = vld [vmem:[%s662 + $0x300] sm:$0xf]
        %v878 = vld [vmem:[%s662 + $0x304] sm:$0xf]
        %v879 = vld [vmem:[%s662 + $0x308] sm:$0xf]
        %v880 = vld [vmem:[%s662 + $0x30c] sm:$0xf]
        %v881 = vld [vmem:[%s662 + $0x310] sm:$0xf]
        %v882 = vld [vmem:[%s662 + $0x314] sm:$0xf]
        %v883 = vld [vmem:[%s662 + $0x318] sm:$0xf]
        %v884 = vld [vmem:[%s662 + $0x31c] sm:$0xf]
        %v885 = vld [vmem:[%s662 + $0x320] sm:$0xf]
        %v886 = vld [vmem:[%s662 + $0x324] sm:$0xf]
        %v887 = vld [vmem:[%s662 + $0x328] sm:$0xf]
        %v888 = vld [vmem:[%s662 + $0x32c] sm:$0xf]
        %v889 = vld [vmem:[%s662 + $0x330] sm:$0xf]
        %v890 = vld [vmem:[%s662 + $0x334] sm:$0xf]
        %v891 = vld [vmem:[%s662 + $0x338] sm:$0xf]
        %v892 = vld [vmem:[%s662 + $0x33c] sm:$0xf]
        %v893 = vld [vmem:[%s662 + $0x340] sm:$0xf]
        %v894 = vld [vmem:[%s662 + $0x344] sm:$0xf]
        %v895 = vld [vmem:[%s662 + $0x348] sm:$0xf]
        %v896 = vld [vmem:[%s662 + $0x34c] sm:$0xf]
        %v897 = vld [vmem:[%s662 + $0x350] sm:$0xf]
        %v898 = vld [vmem:[%s662 + $0x354] sm:$0xf]
        %v899 = vld [vmem:[%s662 + $0x358] sm:$0xf]
        %v900 = vld [vmem:[%s662 + $0x35c] sm:$0xf]
        %v901 = vld [vmem:[%s662 + $0x360] sm:$0xf]
        %v902 = vld [vmem:[%s662 + $0x364] sm:$0xf]
        %v903 = vld [vmem:[%s662 + $0x368] sm:$0xf]
        %v904 = vld [vmem:[%s662 + $0x36c] sm:$0xf]
        %v905 = vld [vmem:[%s662 + $0x370] sm:$0xf]
        %v906 = vld [vmem:[%s662 + $0x374] sm:$0xf]
        %v907 = vld [vmem:[%s662 + $0x378] sm:$0xf]
        %v908 = vld [vmem:[%s662 + $0x37c] sm:$0xf]
        %v909 = vld [vmem:[%s662 + $0x380] sm:$0xf]
        %v910 = vld [vmem:[%s662 + $0x384] sm:$0xf]
        %v911 = vld [vmem:[%s662 + $0x388] sm:$0xf]
        %v912 = vld [vmem:[%s662 + $0x38c] sm:$0xf]
        %v913 = vld [vmem:[%s662 + $0x390] sm:$0xf]
        %v914 = vld [vmem:[%s662 + $0x394] sm:$0xf]
        %v915 = vld [vmem:[%s662 + $0x398] sm:$0xf]
        %v916 = vld [vmem:[%s662 + $0x39c] sm:$0xf]
        %v917 = vld [vmem:[%s662 + $0x3a0] sm:$0xf]
        %v918 = vld [vmem:[%s662 + $0x3a4] sm:$0xf]
        %v919 = vld [vmem:[%s662 + $0x3a8] sm:$0xf]
        %v920 = vld [vmem:[%s662 + $0x3ac] sm:$0xf]
        %v921 = vld [vmem:[%s662 + $0x3b0] sm:$0xf]
        %v922 = vld [vmem:[%s662 + $0x3b4] sm:$0xf]
        %v923 = vld [vmem:[%s662 + $0x3b8] sm:$0xf]
        %v924 = vld [vmem:[%s662 + $0x3bc] sm:$0xf]
        %v925 = vld [vmem:[%s662 + $0x3c0] sm:$0xf]
        %v926 = vld [vmem:[%s662 + $0x3c4] sm:$0xf]
        %v927 = vld [vmem:[%s662 + $0x3c8] sm:$0xf]
        %v928 = vld [vmem:[%s662 + $0x3cc] sm:$0xf]
        %v929 = vld [vmem:[%s662 + $0x3d0] sm:$0xf]
        %v930 = vld [vmem:[%s662 + $0x3d4] sm:$0xf]
        %v931 = vld [vmem:[%s662 + $0x3d8] sm:$0xf]
        %v932 = vld [vmem:[%s662 + $0x3dc] sm:$0xf]
        %v933 = vld [vmem:[%s662 + $0x3e0] sm:$0xf]
        %v934 = vld [vmem:[%s662 + $0x3e4] sm:$0xf]
        %v935 = vld [vmem:[%s662 + $0x3e8] sm:$0xf]
        %v936 = vld [vmem:[%s662 + $0x3ec] sm:$0xf]
        %v937 = vld [vmem:[%s662 + $0x3f0] sm:$0xf]
        %v938 = vld [vmem:[%s662 + $0x3f4] sm:$0xf]
        %v939 = vld [vmem:[%s662 + $0x3f8] sm:$0xf]
        %v940 = vld [vmem:[%s662 + $0x3fc] sm:$0xf]
        %v941 = vld [vmem:[%s662 + $0x400] sm:$0xf]
        %v942 = vld [vmem:[%s662 + $0x404] sm:$0xf]
        %v943 = vld [vmem:[%s662 + $0x408] sm:$0xf]
        %v944 = vld [vmem:[%s662 + $0x40c] sm:$0xf]
        %v945 = vld [vmem:[%s662 + $0x410] sm:$0xf]
        %v946 = vld [vmem:[%s662 + $0x414] sm:$0xf]
        %v947 = vld [vmem:[%s662 + $0x418] sm:$0xf]
        %v948 = vld [vmem:[%s662 + $0x41c] sm:$0xf]
        %v949 = vld [vmem:[%s662 + $0x420] sm:$0xf]
        %v950 = vld [vmem:[%s662 + $0x424] sm:$0xf]
        %v951 = vld [vmem:[%s662 + $0x428] sm:$0xf]
        %v952 = vld [vmem:[%s662 + $0x42c] sm:$0xf]
        %v953 = vld [vmem:[%s662 + $0x430] sm:$0xf]
        %v954 = vld [vmem:[%s662 + $0x434] sm:$0xf]
        %v955 = vld [vmem:[%s662 + $0x438] sm:$0xf]
        %v956 = vld [vmem:[%s662 + $0x43c] sm:$0xf]
        %v957 = vld [vmem:[%s662 + $0x440] sm:$0xf]
        %v958 = vld [vmem:[%s662 + $0x444] sm:$0xf]
        %v959 = vld [vmem:[%s662 + $0x448] sm:$0xf]
        %v960 = vld [vmem:[%s662 + $0x44c] sm:$0xf]
        %v961 = vld [vmem:[%s662 + $0x450] sm:$0xf]
        %v962 = vld [vmem:[%s662 + $0x454] sm:$0xf]
        %v963 = vld [vmem:[%s662 + $0x458] sm:$0xf]
        %v964 = vld [vmem:[%s662 + $0x45c] sm:$0xf]
        %v965 = vld [vmem:[%s662 + $0x460] sm:$0xf]
        %v966 = vld [vmem:[%s662 + $0x464] sm:$0xf]
        %v967 = vld [vmem:[%s662 + $0x468] sm:$0xf]
        %v968 = vld [vmem:[%s662 + $0x46c] sm:$0xf]
        %v969 = vld [vmem:[%s662 + $0x470] sm:$0xf]
        %v970 = vld [vmem:[%s662 + $0x474] sm:$0xf]
        %v971 = vld [vmem:[%s662 + $0x478] sm:$0xf]
        %v972 = vld [vmem:[%s662 + $0x47c] sm:$0xf]
        %v973 = vld [vmem:[%s662 + $0x480] sm:$0xf]
        %v974 = vld [vmem:[%s662 + $0x484] sm:$0xf]
        %v975 = vld [vmem:[%s662 + $0x488] sm:$0xf]
        %v976 = vld [vmem:[%s662 + $0x48c] sm:$0xf]
        %v977 = vld [vmem:[%s662 + $0x490] sm:$0xf]
        %v978 = vld [vmem:[%s662 + $0x494] sm:$0xf]
        %v979 = vld [vmem:[%s662 + $0x498] sm:$0xf]
        %v980 = vld [vmem:[%s662 + $0x49c] sm:$0xf]
        %v981 = vld [vmem:[%s662 + $0x4a0] sm:$0xf]
        %v982 = vld [vmem:[%s662 + $0x4a4] sm:$0xf]
        %v983 = vld [vmem:[%s662 + $0x4a8] sm:$0xf]
        %v984 = vld [vmem:[%s662 + $0x4ac] sm:$0xf]
        %v985 = vld [vmem:[%s662 + $0x4b0] sm:$0xf]
        %v986 = vld [vmem:[%s662 + $0x4b4] sm:$0xf]
        %v987 = vld [vmem:[%s662 + $0x4b8] sm:$0xf]
        %v988 = vld [vmem:[%s662 + $0x4bc] sm:$0xf]
        %v989 = vld [vmem:[%s662 + $0x4c0] sm:$0xf]
        %v990 = vld [vmem:[%s662 + $0x4c4] sm:$0xf]
        %v991 = vld [vmem:[%s662 + $0x4c8] sm:$0xf]
        %v992 = vld [vmem:[%s662 + $0x4cc] sm:$0xf]
        %v993 = vld [vmem:[%s662 + $0x4d0] sm:$0xf]
        %v994 = vld [vmem:[%s662 + $0x4d4] sm:$0xf]
        %v995 = vld [vmem:[%s662 + $0x4d8] sm:$0xf]
        %v996 = vld [vmem:[%s662 + $0x4dc] sm:$0xf]
        %v997 = vld [vmem:[%s662 + $0x4e0] sm:$0xf]
        %v998 = vld [vmem:[%s662 + $0x4e4] sm:$0xf]
        %v999 = vld [vmem:[%s662 + $0x4e8] sm:$0xf]
        %v1000 = vld [vmem:[%s662 + $0x4ec] sm:$0xf]
        %v1001 = vld [vmem:[%s662 + $0x4f0] sm:$0xf]
        %v1002 = vld [vmem:[%s662 + $0x4f4] sm:$0xf]
        %v1003 = vld [vmem:[%s662 + $0x4f8] sm:$0xf]
        %v1004 = vld [vmem:[%s662 + $0x4fc] sm:$0xf]
        %v1005 = vld [vmem:[%s662 + $0x500] sm:$0xf]
        %v1006 = vld [vmem:[%s662 + $0x504] sm:$0xf]
        %v1007 = vld [vmem:[%s662 + $0x508] sm:$0xf]
        %v1008 = vld [vmem:[%s662 + $0x50c] sm:$0xf]
        %v1009 = vld [vmem:[%s662 + $0x510] sm:$0xf]
        %v1010 = vld [vmem:[%s662 + $0x514] sm:$0xf]
        %v1011 = vld [vmem:[%s662 + $0x518] sm:$0xf]
        %v1012 = vld [vmem:[%s662 + $0x51c] sm:$0xf]
        %v1013 = vld [vmem:[%s662 + $0x520] sm:$0xf]
        %v1014 = vld [vmem:[%s662 + $0x524] sm:$0xf]
        %v1015 = vld [vmem:[%s662 + $0x528] sm:$0xf]
        %v1016 = vld [vmem:[%s662 + $0x52c] sm:$0xf]
        %v1017 = vld [vmem:[%s662 + $0x530] sm:$0xf]
        %v1018 = vld [vmem:[%s662 + $0x534] sm:$0xf]
        %v1019 = vld [vmem:[%s662 + $0x538] sm:$0xf]
        %v1020 = vld [vmem:[%s662 + $0x53c] sm:$0xf]
        %v1021 = vld [vmem:[%s662 + $0x540] sm:$0xf]
        %v1022 = vld [vmem:[%s662 + $0x544] sm:$0xf]
        %v1023 = vld [vmem:[%s662 + $0x548] sm:$0xf]
        %v1024 = vld [vmem:[%s662 + $0x54c] sm:$0xf]
        %v1025 = vld [vmem:[%s662 + $0x550] sm:$0xf]
        %v1026 = vld [vmem:[%s662 + $0x554] sm:$0xf]
        %v1027 = vld [vmem:[%s662 + $0x558] sm:$0xf]
        %v1028 = vld [vmem:[%s662 + $0x55c] sm:$0xf]
        %v1029 = vld [vmem:[%s662 + $0x560] sm:$0xf]
        %v1030 = vld [vmem:[%s662 + $0x564] sm:$0xf]
        %v1031 = vld [vmem:[%s662 + $0x568] sm:$0xf]
        %v1032 = vld [vmem:[%s662 + $0x56c] sm:$0xf]
        %v1033 = vld [vmem:[%s662 + $0x570] sm:$0xf]
        %v1034 = vld [vmem:[%s662 + $0x574] sm:$0xf]
        %v1035 = vld [vmem:[%s662 + $0x578] sm:$0xf]
        %v1036 = vld [vmem:[%s662 + $0x57c] sm:$0xf]
        %v1037 = vld [vmem:[%s662 + $0x580] sm:$0xf]
        %v1038 = vld [vmem:[%s662 + $0x584] sm:$0xf]
        %v1039 = vld [vmem:[%s662 + $0x588] sm:$0xf]
        %v1040 = vld [vmem:[%s662 + $0x58c] sm:$0xf]
        %v1041 = vld [vmem:[%s662 + $0x590] sm:$0xf]
        %v1042 = vld [vmem:[%s662 + $0x594] sm:$0xf]
        %v1043 = vld [vmem:[%s662 + $0x598] sm:$0xf]
        %v1044 = vld [vmem:[%s662 + $0x59c] sm:$0xf]
        %v1045 = vld [vmem:[%s662 + $0x5a0] sm:$0xf]
        %v1046 = vld [vmem:[%s662 + $0x5a4] sm:$0xf]
        %v1047 = vld [vmem:[%s662 + $0x5a8] sm:$0xf]
        %v1048 = vld [vmem:[%s662 + $0x5ac] sm:$0xf]
        %v1049 = vld [vmem:[%s662 + $0x5b0] sm:$0xf]
        %v1050 = vld [vmem:[%s662 + $0x5b4] sm:$0xf]
        %v1051 = vld [vmem:[%s662 + $0x5b8] sm:$0xf]
        %v1052 = vld [vmem:[%s662 + $0x5bc] sm:$0xf]
        %v1053 = vld [vmem:[%s662 + $0x5c0] sm:$0xf]
        %v1054 = vld [vmem:[%s662 + $0x5c4] sm:$0xf]
        %v1055 = vld [vmem:[%s662 + $0x5c8] sm:$0xf]
        %v1056 = vld [vmem:[%s662 + $0x5cc] sm:$0xf]
        %v1057 = vld [vmem:[%s662 + $0x5d0] sm:$0xf]
        %v1058 = vld [vmem:[%s662 + $0x5d4] sm:$0xf]
        %v1059 = vld [vmem:[%s662 + $0x5d8] sm:$0xf]
        %v1060 = vld [vmem:[%s662 + $0x5dc] sm:$0xf]
        %v1061 = vld [vmem:[%s662 + $0x5e0] sm:$0xf]
        %v1062 = vld [vmem:[%s662 + $0x5e4] sm:$0xf]
        %v1063 = vld [vmem:[%s662 + $0x5e8] sm:$0xf]
        %v1064 = vld [vmem:[%s662 + $0x5ec] sm:$0xf]
        %v1065 = vld [vmem:[%s662 + $0x5f0] sm:$0xf]
        %v1066 = vld [vmem:[%s662 + $0x5f4] sm:$0xf]
        %v1067 = vld [vmem:[%s662 + $0x5f8] sm:$0xf]
        %v1068 = vld [vmem:[%s662 + $0x5fc] sm:$0xf]
        %v1069 = vld [vmem:[%s662 + $0x600] sm:$0xf]
        %v1070 = vld [vmem:[%s662 + $0x604] sm:$0xf]
        %v1071 = vld [vmem:[%s662 + $0x608] sm:$0xf]
        %v1072 = vld [vmem:[%s662 + $0x60c] sm:$0xf]
        %v1073 = vld [vmem:[%s662 + $0x610] sm:$0xf]
        %v1074 = vld [vmem:[%s662 + $0x614] sm:$0xf]
        %v1075 = vld [vmem:[%s662 + $0x618] sm:$0xf]
        %v1076 = vld [vmem:[%s662 + $0x61c] sm:$0xf]
        %v1077 = vld [vmem:[%s662 + $0x620] sm:$0xf]
        %v1078 = vld [vmem:[%s662 + $0x624] sm:$0xf]
        %v1079 = vld [vmem:[%s662 + $0x628] sm:$0xf]
        %v1080 = vld [vmem:[%s662 + $0x62c] sm:$0xf]
        %v1081 = vld [vmem:[%s662 + $0x630] sm:$0xf]
        %v1082 = vld [vmem:[%s662 + $0x634] sm:$0xf]
        %v1083 = vld [vmem:[%s662 + $0x638] sm:$0xf]
        %v1084 = vld [vmem:[%s662 + $0x63c] sm:$0xf]
        %v1085 = vld [vmem:[%s662 + $0x640] sm:$0xf]
        %v1086 = vld [vmem:[%s662 + $0x644] sm:$0xf]
        %v1087 = vld [vmem:[%s662 + $0x648] sm:$0xf]
        %v1088 = vld [vmem:[%s662 + $0x64c] sm:$0xf]
        %v1089 = vld [vmem:[%s662 + $0x650] sm:$0xf]
        %v1090 = vld [vmem:[%s662 + $0x654] sm:$0xf]
        %v1091 = vld [vmem:[%s662 + $0x658] sm:$0xf]
        %v1092 = vld [vmem:[%s662 + $0x65c] sm:$0xf]
        %v1093 = vld [vmem:[%s662 + $0x660] sm:$0xf]
        %v1094 = vld [vmem:[%s662 + $0x664] sm:$0xf]
        %v1095 = vld [vmem:[%s662 + $0x668] sm:$0xf]
        %v1096 = vld [vmem:[%s662 + $0x66c] sm:$0xf]
        %v1097 = vld [vmem:[%s662 + $0x670] sm:$0xf]
        %v1098 = vld [vmem:[%s662 + $0x674] sm:$0xf]
        %v1099 = vld [vmem:[%s662 + $0x678] sm:$0xf]
        %v1100 = vld [vmem:[%s662 + $0x67c] sm:$0xf]
        %v1101 = vld [vmem:[%s662 + $0x680] sm:$0xf]
        %v1102 = vld [vmem:[%s662 + $0x684] sm:$0xf]
        %v1103 = vld [vmem:[%s662 + $0x688] sm:$0xf]
        %v1104 = vld [vmem:[%s662 + $0x68c] sm:$0xf]
        %v1105 = vld [vmem:[%s662 + $0x690] sm:$0xf]
        %v1106 = vld [vmem:[%s662 + $0x694] sm:$0xf]
        %v1107 = vld [vmem:[%s662 + $0x698] sm:$0xf]
        %v1108 = vld [vmem:[%s662 + $0x69c] sm:$0xf]
        %v1109 = vld [vmem:[%s662 + $0x6a0] sm:$0xf]
        %v1110 = vld [vmem:[%s662 + $0x6a4] sm:$0xf]
        %v1111 = vld [vmem:[%s662 + $0x6a8] sm:$0xf]
        %v1112 = vld [vmem:[%s662 + $0x6ac] sm:$0xf]
        %v1113 = vld [vmem:[%s662 + $0x6b0] sm:$0xf]
        %v1114 = vld [vmem:[%s662 + $0x6b4] sm:$0xf]
        %v1115 = vld [vmem:[%s662 + $0x6b8] sm:$0xf]
        %v1116 = vld [vmem:[%s662 + $0x6bc] sm:$0xf]
        %v1117 = vld [vmem:[%s662 + $0x6c0] sm:$0xf]
        %v1118 = vld [vmem:[%s662 + $0x6c4] sm:$0xf]
        %v1119 = vld [vmem:[%s662 + $0x6c8] sm:$0xf]
        %v1120 = vld [vmem:[%s662 + $0x6cc] sm:$0xf]
        %v1121 = vld [vmem:[%s662 + $0x6d0] sm:$0xf]
        %v1122 = vld [vmem:[%s662 + $0x6d4] sm:$0xf]
        %v1123 = vld [vmem:[%s662 + $0x6d8] sm:$0xf]
        %v1124 = vld [vmem:[%s662 + $0x6dc] sm:$0xf]
        %v1125 = vld [vmem:[%s662 + $0x6e0] sm:$0xf]
        %v1126 = vld [vmem:[%s662 + $0x6e4] sm:$0xf]
        %v1127 = vld [vmem:[%s662 + $0x6e8] sm:$0xf]
        %v1128 = vld [vmem:[%s662 + $0x6ec] sm:$0xf]
        %v1129 = vld [vmem:[%s662 + $0x6f0] sm:$0xf]
        %v1130 = vld [vmem:[%s662 + $0x6f4] sm:$0xf]
        %v1131 = vld [vmem:[%s662 + $0x6f8] sm:$0xf]
        %v1132 = vld [vmem:[%s662 + $0x6fc] sm:$0xf]
        %v1133 = vld [vmem:[%s662 + $0x700] sm:$0xf]
        %v1134 = vld [vmem:[%s662 + $0x704] sm:$0xf]
        %v1135 = vld [vmem:[%s662 + $0x708] sm:$0xf]
        %v1136 = vld [vmem:[%s662 + $0x70c] sm:$0xf]
        %v1137 = vld [vmem:[%s662 + $0x710] sm:$0xf]
        %v1138 = vld [vmem:[%s662 + $0x714] sm:$0xf]
        %v1139 = vld [vmem:[%s662 + $0x718] sm:$0xf]
        %v1140 = vld [vmem:[%s662 + $0x71c] sm:$0xf]
        %v1141 = vld [vmem:[%s662 + $0x720] sm:$0xf]
        %v1142 = vld [vmem:[%s662 + $0x724] sm:$0xf]
        %v1143 = vld [vmem:[%s662 + $0x728] sm:$0xf]
        %v1144 = vld [vmem:[%s662 + $0x72c] sm:$0xf]
        %v1145 = vld [vmem:[%s662 + $0x730] sm:$0xf]
        %v1146 = vld [vmem:[%s662 + $0x734] sm:$0xf]
        %v1147 = vld [vmem:[%s662 + $0x738] sm:$0xf]
        %v1148 = vld [vmem:[%s662 + $0x73c] sm:$0xf]
        %v1149 = vld [vmem:[%s662 + $0x740] sm:$0xf]
        %v1150 = vld [vmem:[%s662 + $0x744] sm:$0xf]
        %v1151 = vld [vmem:[%s662 + $0x748] sm:$0xf]
        %v1152 = vld [vmem:[%s662 + $0x74c] sm:$0xf]
        %v1153 = vld [vmem:[%s662 + $0x750] sm:$0xf]
        %v1154 = vld [vmem:[%s662 + $0x754] sm:$0xf]
        %v1155 = vld [vmem:[%s662 + $0x758] sm:$0xf]
        %v1156 = vld [vmem:[%s662 + $0x75c] sm:$0xf]
        %v1157 = vld [vmem:[%s662 + $0x760] sm:$0xf]
        %v1158 = vld [vmem:[%s662 + $0x764] sm:$0xf]
        %v1159 = vld [vmem:[%s662 + $0x768] sm:$0xf]
        %v1160 = vld [vmem:[%s662 + $0x76c] sm:$0xf]
        %v1161 = vld [vmem:[%s662 + $0x770] sm:$0xf]
        %v1162 = vld [vmem:[%s662 + $0x774] sm:$0xf]
        %v1163 = vld [vmem:[%s662 + $0x778] sm:$0xf]
        %v1164 = vld [vmem:[%s662 + $0x77c] sm:$0xf]
        %v1165 = vld [vmem:[%s662 + $0x780] sm:$0xf]
        %v1166 = vld [vmem:[%s662 + $0x784] sm:$0xf]
        %v1167 = vld [vmem:[%s662 + $0x788] sm:$0xf]
        %v1168 = vld [vmem:[%s662 + $0x78c] sm:$0xf]
        %v1169 = vld [vmem:[%s662 + $0x790] sm:$0xf]
        %v1170 = vld [vmem:[%s662 + $0x794] sm:$0xf]
        %v1171 = vld [vmem:[%s662 + $0x798] sm:$0xf]
        %v1172 = vld [vmem:[%s662 + $0x79c] sm:$0xf]
        %v1173 = vld [vmem:[%s662 + $0x7a0] sm:$0xf]
        %v1174 = vld [vmem:[%s662 + $0x7a4] sm:$0xf]
        %v1175 = vld [vmem:[%s662 + $0x7a8] sm:$0xf]
        %v1176 = vld [vmem:[%s662 + $0x7ac] sm:$0xf]
        %v1177 = vld [vmem:[%s662 + $0x7b0] sm:$0xf]
        %v1178 = vld [vmem:[%s662 + $0x7b4] sm:$0xf]
        %v1179 = vld [vmem:[%s662 + $0x7b8] sm:$0xf]
        %v1180 = vld [vmem:[%s662 + $0x7bc] sm:$0xf]
        %v1181 = vld [vmem:[%s662 + $0x7c0] sm:$0xf]
        %v1182 = vld [vmem:[%s662 + $0x7c4] sm:$0xf]
        %v1183 = vld [vmem:[%s662 + $0x7c8] sm:$0xf]
        %v1184 = vld [vmem:[%s662 + $0x7cc] sm:$0xf]
        %v1185 = vld [vmem:[%s662 + $0x7d0] sm:$0xf]
        %v1186 = vld [vmem:[%s662 + $0x7d4] sm:$0xf]
        %v1187 = vld [vmem:[%s662 + $0x7d8] sm:$0xf]
        %v1188 = vld [vmem:[%s662 + $0x7dc] sm:$0xf]
        %v1189 = vld [vmem:[%s662 + $0x7e0] sm:$0xf]
        %v1190 = vld [vmem:[%s662 + $0x7e4] sm:$0xf]
        %v1191 = vld [vmem:[%s662 + $0x7e8] sm:$0xf]
        %v1192 = vld [vmem:[%s662 + $0x7ec] sm:$0xf]
        %v1193 = vld [vmem:[%s662 + $0x7f0] sm:$0xf]
        %v1194 = vld [vmem:[%s662 + $0x7f4] sm:$0xf]
        %v1195 = vld [vmem:[%s662 + $0x7f8] sm:$0xf]
        %v1196 = vld [vmem:[%s662 + $0x7fc] sm:$0xf]
        %v1197 = vld [vmem:[%s662 + $0x800] sm:$0xf]
        %v1198 = vld [vmem:[%s662 + $0x804] sm:$0xf]
        %v1199 = vld [vmem:[%s662 + $0x808] sm:$0xf]
        %v1200 = vld [vmem:[%s662 + $0x80c] sm:$0xf]
        %v1201 = vld [vmem:[%s662 + $0x810] sm:$0xf]
        %v1202 = vld [vmem:[%s662 + $0x814] sm:$0xf]
        %v1203 = vld [vmem:[%s662 + $0x818] sm:$0xf]
        %v1204 = vld [vmem:[%s662 + $0x81c] sm:$0xf]
        %v1205 = vld [vmem:[%s662 + $0x820] sm:$0xf]
        %v1206 = vld [vmem:[%s662 + $0x824] sm:$0xf]
        %v1207 = vld [vmem:[%s662 + $0x828] sm:$0xf]
        %v1208 = vld [vmem:[%s662 + $0x82c] sm:$0xf]
        %v1209 = vld [vmem:[%s662 + $0x830] sm:$0xf]
        %v1210 = vld [vmem:[%s662 + $0x834] sm:$0xf]
        %v1211 = vld [vmem:[%s662 + $0x838] sm:$0xf]
        %v1212 = vld [vmem:[%s662 + $0x83c] sm:$0xf]
        %v1213 = vld [vmem:[%s662 + $0x840] sm:$0xf]
        %v1214 = vld [vmem:[%s662 + $0x844] sm:$0xf]
        %v1215 = vld [vmem:[%s662 + $0x848] sm:$0xf]
        %v1216 = vld [vmem:[%s662 + $0x84c] sm:$0xf]
        %v1217 = vld [vmem:[%s662 + $0x850] sm:$0xf]
        %v1218 = vld [vmem:[%s662 + $0x854] sm:$0xf]
        %v1219 = vld [vmem:[%s662 + $0x858] sm:$0xf]
        %v1220 = vld [vmem:[%s662 + $0x85c] sm:$0xf]
        %v1221 = vld [vmem:[%s662 + $0x860] sm:$0xf]
        %v1222 = vld [vmem:[%s662 + $0x864] sm:$0xf]
        %v1223 = vld [vmem:[%s662 + $0x868] sm:$0xf]
        %v1224 = vld [vmem:[%s662 + $0x86c] sm:$0xf]
        %v1225 = vld [vmem:[%s662 + $0x870] sm:$0xf]
        %v1226 = vld [vmem:[%s662 + $0x874] sm:$0xf]
        %v1227 = vld [vmem:[%s662 + $0x878] sm:$0xf]
        %v1228 = vld [vmem:[%s662 + $0x87c] sm:$0xf]
        %v1229 = vld [vmem:[%s662 + $0x880] sm:$0xf]
        %v1230 = vld [vmem:[%s662 + $0x884] sm:$0xf]
        %v1231 = vld [vmem:[%s662 + $0x888] sm:$0xf]
        %v1232 = vld [vmem:[%s662 + $0x88c] sm:$0xf]
        %v1233 = vld [vmem:[%s662 + $0x890] sm:$0xf]
        %v1234 = vld [vmem:[%s662 + $0x894] sm:$0xf]
        %v1235 = vld [vmem:[%s662 + $0x898] sm:$0xf]
        %v1236 = vld [vmem:[%s662 + $0x89c] sm:$0xf]
        %v1237 = vld [vmem:[%s662 + $0x8a0] sm:$0xf]
        %v1238 = vld [vmem:[%s662 + $0x8a4] sm:$0xf]
        %v1239 = vld [vmem:[%s662 + $0x8a8] sm:$0xf]
        %v1240 = vld [vmem:[%s662 + $0x8ac] sm:$0xf]
        %v1241 = vld [vmem:[%s662 + $0x8b0] sm:$0xf]
        %v1242 = vld [vmem:[%s662 + $0x8b4] sm:$0xf]
        %v1243 = vld [vmem:[%s662 + $0x8b8] sm:$0xf]
        %v1244 = vld [vmem:[%s662 + $0x8bc] sm:$0xf]
        %v1245 = vld [vmem:[%s662 + $0x8c0] sm:$0xf]
        %v1246 = vld [vmem:[%s662 + $0x8c4] sm:$0xf]
        %v1247 = vld [vmem:[%s662 + $0x8c8] sm:$0xf]
        %v1248 = vld [vmem:[%s662 + $0x8cc] sm:$0xf]
        %v1249 = vld [vmem:[%s662 + $0x8d0] sm:$0xf]
        %v1250 = vld [vmem:[%s662 + $0x8d4] sm:$0xf]
        %v1251 = vld [vmem:[%s662 + $0x8d8] sm:$0xf]
        %v1252 = vld [vmem:[%s662 + $0x8dc] sm:$0xf]
        %v1253 = vld [vmem:[%s662 + $0x8e0] sm:$0xf]
        %v1254 = vld [vmem:[%s662 + $0x8e4] sm:$0xf]
        %v1255 = vld [vmem:[%s662 + $0x8e8] sm:$0xf]
        %v1256 = vld [vmem:[%s662 + $0x8ec] sm:$0xf]
        %v1257 = vld [vmem:[%s662 + $0x8f0] sm:$0xf]
        %v1258 = vld [vmem:[%s662 + $0x8f4] sm:$0xf]
        %v1259 = vld [vmem:[%s662 + $0x8f8] sm:$0xf]
        %v1260 = vld [vmem:[%s662 + $0x8fc] sm:$0xf]
        %v1261 = vld [vmem:[%s662 + $0x900] sm:$0xf]
        %v1262 = vld [vmem:[%s662 + $0x904] sm:$0xf]
        %v1263 = vld [vmem:[%s662 + $0x908] sm:$0xf]
        %v1264 = vld [vmem:[%s662 + $0x90c] sm:$0xf]
        %v1265 = vld [vmem:[%s662 + $0x910] sm:$0xf]
        %v1266 = vld [vmem:[%s662 + $0x914] sm:$0xf]
        %v1267 = vld [vmem:[%s662 + $0x918] sm:$0xf]
        %v1268 = vld [vmem:[%s662 + $0x91c] sm:$0xf]
        %v1269 = vld [vmem:[%s662 + $0x920] sm:$0xf]
        %v1270 = vld [vmem:[%s662 + $0x924] sm:$0xf]
        %v1271 = vld [vmem:[%s662 + $0x928] sm:$0xf]
        %v1272 = vld [vmem:[%s662 + $0x92c] sm:$0xf]
        %v1273 = vld [vmem:[%s662 + $0x930] sm:$0xf]
        %v1274 = vld [vmem:[%s662 + $0x934] sm:$0xf]
        %v1275 = vld [vmem:[%s662 + $0x938] sm:$0xf]
        %v1276 = vld [vmem:[%s662 + $0x93c] sm:$0xf]
        %v1277 = vld [vmem:[%s662 + $0x940] sm:$0xf]
        %v1278 = vld [vmem:[%s662 + $0x944] sm:$0xf]
        %v1279 = vld [vmem:[%s662 + $0x948] sm:$0xf]
        %v1280 = vld [vmem:[%s662 + $0x94c] sm:$0xf]
        %v1281 = vld [vmem:[%s662 + $0x950] sm:$0xf]
        %v1282 = vld [vmem:[%s662 + $0x954] sm:$0xf]
        %v1283 = vld [vmem:[%s662 + $0x958] sm:$0xf]
        %v1284 = vld [vmem:[%s662 + $0x95c] sm:$0xf]
        %v1285 = vld [vmem:[%s662 + $0x960] sm:$0xf]
        %v1286 = vld [vmem:[%s662 + $0x964] sm:$0xf]
        %v1287 = vld [vmem:[%s662 + $0x968] sm:$0xf]
        %v1288 = vld [vmem:[%s662 + $0x96c] sm:$0xf]
        %v1289 = vld [vmem:[%s662 + $0x970] sm:$0xf]
        %v1290 = vld [vmem:[%s662 + $0x974] sm:$0xf]
        %v1291 = vld [vmem:[%s662 + $0x978] sm:$0xf]
        %v1292 = vld [vmem:[%s662 + $0x97c] sm:$0xf]
        %v1293 = vld [vmem:[%s662 + $0x980] sm:$0xf]
        %v1294 = vld [vmem:[%s662 + $0x984] sm:$0xf]
        %v1295 = vld [vmem:[%s662 + $0x988] sm:$0xf]
        %v1296 = vld [vmem:[%s662 + $0x98c] sm:$0xf]
        %v1297 = vld [vmem:[%s662 + $0x990] sm:$0xf]
        %v1298 = vld [vmem:[%s662 + $0x994] sm:$0xf]
        %v1299 = vld [vmem:[%s662 + $0x998] sm:$0xf]
        %v1300 = vld [vmem:[%s662 + $0x99c] sm:$0xf]
        %v1301 = vld [vmem:[%s662 + $0x9a0] sm:$0xf]
        %v1302 = vld [vmem:[%s662 + $0x9a4] sm:$0xf]
        %v1303 = vld [vmem:[%s662 + $0x9a8] sm:$0xf]
        %v1304 = vld [vmem:[%s662 + $0x9ac] sm:$0xf]
        %v1305 = vld [vmem:[%s662 + $0x9b0] sm:$0xf]
        %v1306 = vld [vmem:[%s662 + $0x9b4] sm:$0xf]
        %v1307 = vld [vmem:[%s662 + $0x9b8] sm:$0xf]
        %v1308 = vld [vmem:[%s662 + $0x9bc] sm:$0xf]
        %v1309 = vld [vmem:[%s662 + $0x9c0] sm:$0xf]
        %v1310 = vld [vmem:[%s662 + $0x9c4] sm:$0xf]
        %v1311 = vld [vmem:[%s662 + $0x9c8] sm:$0xf]
        %v1312 = vld [vmem:[%s662 + $0x9cc] sm:$0xf]
        %v1313 = vld [vmem:[%s662 + $0x9d0] sm:$0xf]
        %v1314 = vld [vmem:[%s662 + $0x9d4] sm:$0xf]
        %v1315 = vld [vmem:[%s662 + $0x9d8] sm:$0xf]
        %v1316 = vld [vmem:[%s662 + $0x9dc] sm:$0xf]
        %v1317 = vld [vmem:[%s662 + $0x9e0] sm:$0xf]
        %v1318 = vld [vmem:[%s662 + $0x9e4] sm:$0xf]
        %v1319 = vld [vmem:[%s662 + $0x9e8] sm:$0xf]
        %v1320 = vld [vmem:[%s662 + $0x9ec] sm:$0xf]
        %v1321 = vld [vmem:[%s662 + $0x9f0] sm:$0xf]
        %v1322 = vld [vmem:[%s662 + $0x9f4] sm:$0xf]
        %v1323 = vld [vmem:[%s662 + $0x9f8] sm:$0xf]
        %v1324 = vld [vmem:[%s662 + $0x9fc] sm:$0xf]
        %v1325 = vld [vmem:[%s662 + $0xa00] sm:$0xf]
        %v1326 = vld [vmem:[%s662 + $0xa04] sm:$0xf]
        %v1327 = vld [vmem:[%s662 + $0xa08] sm:$0xf]
        %v1328 = vld [vmem:[%s662 + $0xa0c] sm:$0xf]
        %v1329 = vld [vmem:[%s662 + $0xa10] sm:$0xf]
        %v1330 = vld [vmem:[%s662 + $0xa14] sm:$0xf]
        %v1331 = vld [vmem:[%s662 + $0xa18] sm:$0xf]
        %v1332 = vld [vmem:[%s662 + $0xa1c] sm:$0xf]
        %v1333 = vld [vmem:[%s662 + $0xa20] sm:$0xf]
        %v1334 = vld [vmem:[%s662 + $0xa24] sm:$0xf]
        %v1335 = vld [vmem:[%s662 + $0xa28] sm:$0xf]
        %v1336 = vld [vmem:[%s662 + $0xa2c] sm:$0xf]
        %v1337 = vld [vmem:[%s662 + $0xa30] sm:$0xf]
        %v1338 = vld [vmem:[%s662 + $0xa34] sm:$0xf]
        %v1339 = vld [vmem:[%s662 + $0xa38] sm:$0xf]
        %v1340 = vld [vmem:[%s662 + $0xa3c] sm:$0xf]
        %v1341 = vld [vmem:[%s662 + $0xa40] sm:$0xf]
        %v1342 = vld [vmem:[%s662 + $0xa44] sm:$0xf]
        %v1343 = vld [vmem:[%s662 + $0xa48] sm:$0xf]
        %v1344 = vld [vmem:[%s662 + $0xa4c] sm:$0xf]
        %v1345 = vld [vmem:[%s662 + $0xa50] sm:$0xf]
        %v1346 = vld [vmem:[%s662 + $0xa54] sm:$0xf]
        %v1347 = vld [vmem:[%s662 + $0xa58] sm:$0xf]
        %v1348 = vld [vmem:[%s662 + $0xa5c] sm:$0xf]
        %v1349 = vld [vmem:[%s662 + $0xa60] sm:$0xf]
        %v1350 = vld [vmem:[%s662 + $0xa64] sm:$0xf]
        %v1351 = vld [vmem:[%s662 + $0xa68] sm:$0xf]
        %v1352 = vld [vmem:[%s662 + $0xa6c] sm:$0xf]
        %v1353 = vld [vmem:[%s662 + $0xa70] sm:$0xf]
        %v1354 = vld [vmem:[%s662 + $0xa74] sm:$0xf]
        %v1355 = vld [vmem:[%s662 + $0xa78] sm:$0xf]
        %v1356 = vld [vmem:[%s662 + $0xa7c] sm:$0xf]
        %v1357 = vld [vmem:[%s662 + $0xa80] sm:$0xf]
        %v1358 = vld [vmem:[%s662 + $0xa84] sm:$0xf]
        %v1359 = vld [vmem:[%s662 + $0xa88] sm:$0xf]
        %v1360 = vld [vmem:[%s662 + $0xa8c] sm:$0xf]
        %v1361 = vld [vmem:[%s662 + $0xa90] sm:$0xf]
        %v1362 = vld [vmem:[%s662 + $0xa94] sm:$0xf]
        %v1363 = vld [vmem:[%s662 + $0xa98] sm:$0xf]
        %v1364 = vld [vmem:[%s662 + $0xa9c] sm:$0xf]
        %v1365 = vld [vmem:[%s662 + $0xaa0] sm:$0xf]
        %v1366 = vld [vmem:[%s662 + $0xaa4] sm:$0xf]
        %v1367 = vld [vmem:[%s662 + $0xaa8] sm:$0xf]
        %v1368 = vld [vmem:[%s662 + $0xaac] sm:$0xf]
        %v1369 = vld [vmem:[%s662 + $0xab0] sm:$0xf]
        %v1370 = vld [vmem:[%s662 + $0xab4] sm:$0xf]
        %v1371 = vld [vmem:[%s662 + $0xab8] sm:$0xf]
        %v1372 = vld [vmem:[%s662 + $0xabc] sm:$0xf]
        %v1373 = vld [vmem:[%s662 + $0xac0] sm:$0xf]
        %v1374 = vld [vmem:[%s662 + $0xac4] sm:$0xf]
        %v1375 = vld [vmem:[%s662 + $0xac8] sm:$0xf]
        %v1376 = vld [vmem:[%s662 + $0xacc] sm:$0xf]
        %v1377 = vld [vmem:[%s662 + $0xad0] sm:$0xf]
        %v1378 = vld [vmem:[%s662 + $0xad4] sm:$0xf]
        %v1379 = vld [vmem:[%s662 + $0xad8] sm:$0xf]
        %v1380 = vld [vmem:[%s662 + $0xadc] sm:$0xf]
        %v1381 = vld [vmem:[%s662 + $0xae0] sm:$0xf]
        %v1382 = vld [vmem:[%s662 + $0xae4] sm:$0xf]
        %v1383 = vld [vmem:[%s662 + $0xae8] sm:$0xf]
        %v1384 = vld [vmem:[%s662 + $0xaec] sm:$0xf]
        %v1385 = vld [vmem:[%s662 + $0xaf0] sm:$0xf]
        %v1386 = vld [vmem:[%s662 + $0xaf4] sm:$0xf]
        %v1387 = vld [vmem:[%s662 + $0xaf8] sm:$0xf]
        %v1388 = vld [vmem:[%s662 + $0xafc] sm:$0xf]
        %v1389 = vld [vmem:[%s662 + $0xb00] sm:$0xf]
        %v1390 = vld [vmem:[%s662 + $0xb04] sm:$0xf]
        %v1391 = vld [vmem:[%s662 + $0xb08] sm:$0xf]
        %v1392 = vld [vmem:[%s662 + $0xb0c] sm:$0xf]
        %v1393 = vld [vmem:[%s662 + $0xb10] sm:$0xf]
        %v1394 = vld [vmem:[%s662 + $0xb14] sm:$0xf]
        %v1395 = vld [vmem:[%s662 + $0xb18] sm:$0xf]
        %v1396 = vld [vmem:[%s662 + $0xb1c] sm:$0xf]
        %v1397 = vld [vmem:[%s662 + $0xb20] sm:$0xf]
        %v1398 = vld [vmem:[%s662 + $0xb24] sm:$0xf]
        %v1399 = vld [vmem:[%s662 + $0xb28] sm:$0xf]
        %v1400 = vld [vmem:[%s662 + $0xb2c] sm:$0xf]
        %v1401 = vld [vmem:[%s662 + $0xb30] sm:$0xf]
        %v1402 = vld [vmem:[%s662 + $0xb34] sm:$0xf]
        %v1403 = vld [vmem:[%s662 + $0xb38] sm:$0xf]
        %v1404 = vld [vmem:[%s662 + $0xb3c] sm:$0xf]
        %v1405 = vld [vmem:[%s662 + $0xb40] sm:$0xf]
        %v1406 = vld [vmem:[%s662 + $0xb44] sm:$0xf]
        %v1407 = vld [vmem:[%s662 + $0xb48] sm:$0xf]
        %v1408 = vld [vmem:[%s662 + $0xb4c] sm:$0xf]
        %v1409 = vld [vmem:[%s662 + $0xb50] sm:$0xf]
        %v1410 = vld [vmem:[%s662 + $0xb54] sm:$0xf]
        %v1411 = vld [vmem:[%s662 + $0xb58] sm:$0xf]
        %v1412 = vld [vmem:[%s662 + $0xb5c] sm:$0xf]
        %v1413 = vld [vmem:[%s662 + $0xb60] sm:$0xf]
        %v1414 = vld [vmem:[%s662 + $0xb64] sm:$0xf]
        %v1415 = vld [vmem:[%s662 + $0xb68] sm:$0xf]
        %v1416 = vld [vmem:[%s662 + $0xb6c] sm:$0xf]
        %v1417 = vld [vmem:[%s662 + $0xb70] sm:$0xf]
        %v1418 = vld [vmem:[%s662 + $0xb74] sm:$0xf]
        %v1419 = vld [vmem:[%s662 + $0xb78] sm:$0xf]
        %v1420 = vld [vmem:[%s662 + $0xb7c] sm:$0xf]
        %v1421 = vld [vmem:[%s662 + $0xb80] sm:$0xf]
        %v1422 = vld [vmem:[%s662 + $0xb84] sm:$0xf]
        %v1423 = vld [vmem:[%s662 + $0xb88] sm:$0xf]
        %v1424 = vld [vmem:[%s662 + $0xb8c] sm:$0xf]
        %v1425 = vld [vmem:[%s662 + $0xb90] sm:$0xf]
        %v1426 = vld [vmem:[%s662 + $0xb94] sm:$0xf]
        %v1427 = vld [vmem:[%s662 + $0xb98] sm:$0xf]
        %v1428 = vld [vmem:[%s662 + $0xb9c] sm:$0xf]
        %v1429 = vld [vmem:[%s662 + $0xba0] sm:$0xf]
        %v1430 = vld [vmem:[%s662 + $0xba4] sm:$0xf]
        %v1431 = vld [vmem:[%s662 + $0xba8] sm:$0xf]
        %v1432 = vld [vmem:[%s662 + $0xbac] sm:$0xf]
        %v1433 = vld [vmem:[%s662 + $0xbb0] sm:$0xf]
        %v1434 = vld [vmem:[%s662 + $0xbb4] sm:$0xf]
        %v1435 = vld [vmem:[%s662 + $0xbb8] sm:$0xf]
        %v1436 = vld [vmem:[%s662 + $0xbbc] sm:$0xf]
        %v1437 = vld [vmem:[%s662 + $0xbc0] sm:$0xf]
        %v1438 = vld [vmem:[%s662 + $0xbc4] sm:$0xf]
        %v1439 = vld [vmem:[%s662 + $0xbc8] sm:$0xf]
        %v1440 = vld [vmem:[%s662 + $0xbcc] sm:$0xf]
        %v1441 = vld [vmem:[%s662 + $0xbd0] sm:$0xf]
        %v1442 = vld [vmem:[%s662 + $0xbd4] sm:$0xf]
        %v1443 = vld [vmem:[%s662 + $0xbd8] sm:$0xf]
        %v1444 = vld [vmem:[%s662 + $0xbdc] sm:$0xf]
        %v1445 = vld [vmem:[%s662 + $0xbe0] sm:$0xf]
        %v1446 = vld [vmem:[%s662 + $0xbe4] sm:$0xf]
        %v1447 = vld [vmem:[%s662 + $0xbe8] sm:$0xf]
        %v1448 = vld [vmem:[%s662 + $0xbec] sm:$0xf]
        %v1449 = vld [vmem:[%s662 + $0xbf0] sm:$0xf]
        %v1450 = vld [vmem:[%s662 + $0xbf4] sm:$0xf]
        %v1451 = vld [vmem:[%s662 + $0xbf8] sm:$0xf]
        %v1452 = vld [vmem:[%s662 + $0xbfc] sm:$0xf]
        %v1453 = vld [vmem:[%s662 + $0xc00] sm:$0xf]
        %v1454 = vld [vmem:[%s662 + $0xc04] sm:$0xf]
        %v1455 = vld [vmem:[%s662 + $0xc08] sm:$0xf]
        %v1456 = vld [vmem:[%s662 + $0xc0c] sm:$0xf]
        %v1457 = vld [vmem:[%s662 + $0xc10] sm:$0xf]
        %v1458 = vld [vmem:[%s662 + $0xc14] sm:$0xf]
        %v1459 = vld [vmem:[%s662 + $0xc18] sm:$0xf]
        %v1460 = vld [vmem:[%s662 + $0xc1c] sm:$0xf]
        %v1461 = vld [vmem:[%s662 + $0xc20] sm:$0xf]
        %v1462 = vld [vmem:[%s662 + $0xc24] sm:$0xf]
        %v1463 = vld [vmem:[%s662 + $0xc28] sm:$0xf]
        %v1464 = vld [vmem:[%s662 + $0xc2c] sm:$0xf]
        %v1465 = vld [vmem:[%s662 + $0xc30] sm:$0xf]
        %v1466 = vld [vmem:[%s662 + $0xc34] sm:$0xf]
        %v1467 = vld [vmem:[%s662 + $0xc38] sm:$0xf]
        %v1468 = vld [vmem:[%s662 + $0xc3c] sm:$0xf]
        %v1469 = vld [vmem:[%s662 + $0xc40] sm:$0xf]
        %v1470 = vld [vmem:[%s662 + $0xc44] sm:$0xf]
        %v1471 = vld [vmem:[%s662 + $0xc48] sm:$0xf]
        %v1472 = vld [vmem:[%s662 + $0xc4c] sm:$0xf]
        %v1473 = vld [vmem:[%s662 + $0xc50] sm:$0xf]
        %v1474 = vld [vmem:[%s662 + $0xc54] sm:$0xf]
        %v1475 = vld [vmem:[%s662 + $0xc58] sm:$0xf]
        %v1476 = vld [vmem:[%s662 + $0xc5c] sm:$0xf]
        %v1477 = vld [vmem:[%s662 + $0xc60] sm:$0xf]
        %v1478 = vld [vmem:[%s662 + $0xc64] sm:$0xf]
        %v1479 = vld [vmem:[%s662 + $0xc68] sm:$0xf]
        %v1480 = vld [vmem:[%s662 + $0xc6c] sm:$0xf]
        %v1481 = vld [vmem:[%s662 + $0xc70] sm:$0xf]
        %v1482 = vld [vmem:[%s662 + $0xc74] sm:$0xf]
        %v1483 = vld [vmem:[%s662 + $0xc78] sm:$0xf]
        %v1484 = vld [vmem:[%s662 + $0xc7c] sm:$0xf]
        %v1485 = vld [vmem:[%s662 + $0xc80] sm:$0xf]
        %v1486 = vld [vmem:[%s662 + $0xc84] sm:$0xf]
        %v1487 = vld [vmem:[%s662 + $0xc88] sm:$0xf]
        %v1488 = vld [vmem:[%s662 + $0xc8c] sm:$0xf]
        %v1489 = vld [vmem:[%s662 + $0xc90] sm:$0xf]
        %v1490 = vld [vmem:[%s662 + $0xc94] sm:$0xf]
        %v1491 = vld [vmem:[%s662 + $0xc98] sm:$0xf]
        %v1492 = vld [vmem:[%s662 + $0xc9c] sm:$0xf]
        %v1493 = vld [vmem:[%s662 + $0xca0] sm:$0xf]
        %v1494 = vld [vmem:[%s662 + $0xca4] sm:$0xf]
        %v1495 = vld [vmem:[%s662 + $0xca8] sm:$0xf]
        %v1496 = vld [vmem:[%s662 + $0xcac] sm:$0xf]
        %v1497 = vld [vmem:[%s662 + $0xcb0] sm:$0xf]
        %v1498 = vld [vmem:[%s662 + $0xcb4] sm:$0xf]
        %v1499 = vld [vmem:[%s662 + $0xcb8] sm:$0xf]
        %v1500 = vld [vmem:[%s662 + $0xcbc] sm:$0xf]
        %v1501 = vld [vmem:[%s662 + $0xcc0] sm:$0xf]
        %v1502 = vld [vmem:[%s662 + $0xcc4] sm:$0xf]
        %v1503 = vld [vmem:[%s662 + $0xcc8] sm:$0xf]
        %v1504 = vld [vmem:[%s662 + $0xccc] sm:$0xf]
        %v1505 = vld [vmem:[%s662 + $0xcd0] sm:$0xf]
        %v1506 = vld [vmem:[%s662 + $0xcd4] sm:$0xf]
        %v1507 = vld [vmem:[%s662 + $0xcd8] sm:$0xf]
        %v1508 = vld [vmem:[%s662 + $0xcdc] sm:$0xf]
        %v1509 = vld [vmem:[%s662 + $0xce0] sm:$0xf]
        %v1510 = vld [vmem:[%s662 + $0xce4] sm:$0xf]
        %v1511 = vld [vmem:[%s662 + $0xce8] sm:$0xf]
        %v1512 = vld [vmem:[%s662 + $0xcec] sm:$0xf]
        %v1513 = vld [vmem:[%s662 + $0xcf0] sm:$0xf]
        %v1514 = vld [vmem:[%s662 + $0xcf4] sm:$0xf]
        %v1515 = vld [vmem:[%s662 + $0xcf8] sm:$0xf]
        %v1516 = vld [vmem:[%s662 + $0xcfc] sm:$0xf]
        %v1517 = vld [vmem:[%s662 + $0xd00] sm:$0xf]
        %v1518 = vld [vmem:[%s662 + $0xd04] sm:$0xf]
        %v1519 = vld [vmem:[%s662 + $0xd08] sm:$0xf]
        %v1520 = vld [vmem:[%s662 + $0xd0c] sm:$0xf]
        %v1521 = vld [vmem:[%s662 + $0xd10] sm:$0xf]
        %v1522 = vld [vmem:[%s662 + $0xd14] sm:$0xf]
        %v1523 = vld [vmem:[%s662 + $0xd18] sm:$0xf]
        %v1524 = vld [vmem:[%s662 + $0xd1c] sm:$0xf]
        %v1525 = vld [vmem:[%s662 + $0xd20] sm:$0xf]
        %v1526 = vld [vmem:[%s662 + $0xd24] sm:$0xf]
        %v1527 = vld [vmem:[%s662 + $0xd28] sm:$0xf]
        %v1528 = vld [vmem:[%s662 + $0xd2c] sm:$0xf]
        %v1529 = vld [vmem:[%s662 + $0xd30] sm:$0xf]
        %v1530 = vld [vmem:[%s662 + $0xd34] sm:$0xf]
        %v1531 = vld [vmem:[%s662 + $0xd38] sm:$0xf]
        %v1532 = vld [vmem:[%s662 + $0xd3c] sm:$0xf]
        %v1533 = vld [vmem:[%s662 + $0xd40] sm:$0xf]
        %v1534 = vld [vmem:[%s662 + $0xd44] sm:$0xf]
        %v1535 = vld [vmem:[%s662 + $0xd48] sm:$0xf]
        %v1536 = vld [vmem:[%s662 + $0xd4c] sm:$0xf]
        %v1537 = vld [vmem:[%s662 + $0xd50] sm:$0xf]
        %v1538 = vld [vmem:[%s662 + $0xd54] sm:$0xf]
        %v1539 = vld [vmem:[%s662 + $0xd58] sm:$0xf]
        %v1540 = vld [vmem:[%s662 + $0xd5c] sm:$0xf]
        %v1541 = vld [vmem:[%s662 + $0xd60] sm:$0xf]
        %v1542 = vld [vmem:[%s662 + $0xd64] sm:$0xf]
        %v1543 = vld [vmem:[%s662 + $0xd68] sm:$0xf]
        %v1544 = vld [vmem:[%s662 + $0xd6c] sm:$0xf]
        %v1545 = vld [vmem:[%s662 + $0xd70] sm:$0xf]
        %v1546 = vld [vmem:[%s662 + $0xd74] sm:$0xf]
        %v1547 = vld [vmem:[%s662 + $0xd78] sm:$0xf]
        %v1548 = vld [vmem:[%s662 + $0xd7c] sm:$0xf]
        %v1549 = vld [vmem:[%s662 + $0xd80] sm:$0xf]
        %v1550 = vld [vmem:[%s662 + $0xd84] sm:$0xf]
        %v1551 = vld [vmem:[%s662 + $0xd88] sm:$0xf]
        %v1552 = vld [vmem:[%s662 + $0xd8c] sm:$0xf]
        %v1553 = vld [vmem:[%s662 + $0xd90] sm:$0xf]
        %v1554 = vld [vmem:[%s662 + $0xd94] sm:$0xf]
        %v1555 = vld [vmem:[%s662 + $0xd98] sm:$0xf]
        %v1556 = vld [vmem:[%s662 + $0xd9c] sm:$0xf]
        %v1557 = vld [vmem:[%s662 + $0xda0] sm:$0xf]
        %v1558 = vld [vmem:[%s662 + $0xda4] sm:$0xf]
        %v1559 = vld [vmem:[%s662 + $0xda8] sm:$0xf]
        %v1560 = vld [vmem:[%s662 + $0xdac] sm:$0xf]
        %v1561 = vld [vmem:[%s662 + $0xdb0] sm:$0xf]
        %v1562 = vld [vmem:[%s662 + $0xdb4] sm:$0xf]
        %v1563 = vld [vmem:[%s662 + $0xdb8] sm:$0xf]
        %v1564 = vld [vmem:[%s662 + $0xdbc] sm:$0xf]
        %v1565 = vld [vmem:[%s662 + $0xdc0] sm:$0xf]
        %v1566 = vld [vmem:[%s662 + $0xdc4] sm:$0xf]
        %v1567 = vld [vmem:[%s662 + $0xdc8] sm:$0xf]
        %v1568 = vld [vmem:[%s662 + $0xdcc] sm:$0xf]
        %v1569 = vld [vmem:[%s662 + $0xdd0] sm:$0xf]
        %v1570 = vld [vmem:[%s662 + $0xdd4] sm:$0xf]
        %v1571 = vld [vmem:[%s662 + $0xdd8] sm:$0xf]
        %v1572 = vld [vmem:[%s662 + $0xddc] sm:$0xf]
        %v1573 = vld [vmem:[%s662 + $0xde0] sm:$0xf]
        %v1574 = vld [vmem:[%s662 + $0xde4] sm:$0xf]
        %v1575 = vld [vmem:[%s662 + $0xde8] sm:$0xf]
        %v1576 = vld [vmem:[%s662 + $0xdec] sm:$0xf]
        %v1577 = vld [vmem:[%s662 + $0xdf0] sm:$0xf]
        %v1578 = vld [vmem:[%s662 + $0xdf4] sm:$0xf]
        %v1579 = vld [vmem:[%s662 + $0xdf8] sm:$0xf]
        %v1580 = vld [vmem:[%s662 + $0xdfc] sm:$0xf]
        %v1581 = vld [vmem:[%s662 + $0xe00] sm:$0xf]
        %v1582 = vld [vmem:[%s662 + $0xe04] sm:$0xf]
        %v1583 = vld [vmem:[%s662 + $0xe08] sm:$0xf]
        %v1584 = vld [vmem:[%s662 + $0xe0c] sm:$0xf]
        %v1585 = vld [vmem:[%s662 + $0xe10] sm:$0xf]
        %v1586 = vld [vmem:[%s662 + $0xe14] sm:$0xf]
        %v1587 = vld [vmem:[%s662 + $0xe18] sm:$0xf]
        %v1588 = vld [vmem:[%s662 + $0xe1c] sm:$0xf]
        %v1589 = vld [vmem:[%s662 + $0xe20] sm:$0xf]
        %v1590 = vld [vmem:[%s662 + $0xe24] sm:$0xf]
        %v1591 = vld [vmem:[%s662 + $0xe28] sm:$0xf]
        %v1592 = vld [vmem:[%s662 + $0xe2c] sm:$0xf]
        %v1593 = vld [vmem:[%s662 + $0xe30] sm:$0xf]
        %v1594 = vld [vmem:[%s662 + $0xe34] sm:$0xf]
        %v1595 = vld [vmem:[%s662 + $0xe38] sm:$0xf]
        %v1596 = vld [vmem:[%s662 + $0xe3c] sm:$0xf]
        %v1597 = vld [vmem:[%s662 + $0xe40] sm:$0xf]
        %v1598 = vld [vmem:[%s662 + $0xe44] sm:$0xf]
        %v1599 = vld [vmem:[%s662 + $0xe48] sm:$0xf]
        %v1600 = vld [vmem:[%s662 + $0xe4c] sm:$0xf]
        %v1601 = vld [vmem:[%s662 + $0xe50] sm:$0xf]
        %v1602 = vld [vmem:[%s662 + $0xe54] sm:$0xf]
        %v1603 = vld [vmem:[%s662 + $0xe58] sm:$0xf]
        %v1604 = vld [vmem:[%s662 + $0xe5c] sm:$0xf]
        %v1605 = vld [vmem:[%s662 + $0xe60] sm:$0xf]
        %v1606 = vld [vmem:[%s662 + $0xe64] sm:$0xf]
        %v1607 = vld [vmem:[%s662 + $0xe68] sm:$0xf]
        %v1608 = vld [vmem:[%s662 + $0xe6c] sm:$0xf]
        %v1609 = vld [vmem:[%s662 + $0xe70] sm:$0xf]
        %v1610 = vld [vmem:[%s662 + $0xe74] sm:$0xf]
        %v1611 = vld [vmem:[%s662 + $0xe78] sm:$0xf]
        %v1612 = vld [vmem:[%s662 + $0xe7c] sm:$0xf]
        %v1613 = vld [vmem:[%s662 + $0xe80] sm:$0xf]
        %v1614 = vld [vmem:[%s662 + $0xe84] sm:$0xf]
        %v1615 = vld [vmem:[%s662 + $0xe88] sm:$0xf]
        %v1616 = vld [vmem:[%s662 + $0xe8c] sm:$0xf]
        %v1617 = vld [vmem:[%s662 + $0xe90] sm:$0xf]
        %v1618 = vld [vmem:[%s662 + $0xe94] sm:$0xf]
        %v1619 = vld [vmem:[%s662 + $0xe98] sm:$0xf]
        %v1620 = vld [vmem:[%s662 + $0xe9c] sm:$0xf]
        %v1621 = vld [vmem:[%s662 + $0xea0] sm:$0xf]
        %v1622 = vld [vmem:[%s662 + $0xea4] sm:$0xf]
        %v1623 = vld [vmem:[%s662 + $0xea8] sm:$0xf]
        %v1624 = vld [vmem:[%s662 + $0xeac] sm:$0xf]
        %v1625 = vld [vmem:[%s662 + $0xeb0] sm:$0xf]
        %v1626 = vld [vmem:[%s662 + $0xeb4] sm:$0xf]
        %v1627 = vld [vmem:[%s662 + $0xeb8] sm:$0xf]
        %v1628 = vld [vmem:[%s662 + $0xebc] sm:$0xf]
        %v1629 = vld [vmem:[%s662 + $0xec0] sm:$0xf]
        %v1630 = vld [vmem:[%s662 + $0xec4] sm:$0xf]
        %v1631 = vld [vmem:[%s662 + $0xec8] sm:$0xf]
        %v1632 = vld [vmem:[%s662 + $0xecc] sm:$0xf]
        %v1633 = vld [vmem:[%s662 + $0xed0] sm:$0xf]
        %v1634 = vld [vmem:[%s662 + $0xed4] sm:$0xf]
        %v1635 = vld [vmem:[%s662 + $0xed8] sm:$0xf]
        %v1636 = vld [vmem:[%s662 + $0xedc] sm:$0xf]
        %v1637 = vld [vmem:[%s662 + $0xee0] sm:$0xf]
        %v1638 = vld [vmem:[%s662 + $0xee4] sm:$0xf]
        %v1639 = vld [vmem:[%s662 + $0xee8] sm:$0xf]
        %v1640 = vld [vmem:[%s662 + $0xeec] sm:$0xf]
        %v1641 = vld [vmem:[%s662 + $0xef0] sm:$0xf]
        %v1642 = vld [vmem:[%s662 + $0xef4] sm:$0xf]
        %v1643 = vld [vmem:[%s662 + $0xef8] sm:$0xf]
        %v1644 = vld [vmem:[%s662 + $0xefc] sm:$0xf]
        %v1645 = vld [vmem:[%s662 + $0xf00] sm:$0xf]
        %v1646 = vld [vmem:[%s662 + $0xf04] sm:$0xf]
        %v1647 = vld [vmem:[%s662 + $0xf08] sm:$0xf]
        %v1648 = vld [vmem:[%s662 + $0xf0c] sm:$0xf]
        %v1649 = vld [vmem:[%s662 + $0xf10] sm:$0xf]
        %v1650 = vld [vmem:[%s662 + $0xf14] sm:$0xf]
        %v1651 = vld [vmem:[%s662 + $0xf18] sm:$0xf]
        %v1652 = vld [vmem:[%s662 + $0xf1c] sm:$0xf]
        %v1653 = vld [vmem:[%s662 + $0xf20] sm:$0xf]
        %v1654 = vld [vmem:[%s662 + $0xf24] sm:$0xf]
        %v1655 = vld [vmem:[%s662 + $0xf28] sm:$0xf]
        %v1656 = vld [vmem:[%s662 + $0xf2c] sm:$0xf]
        %v1657 = vld [vmem:[%s662 + $0xf30] sm:$0xf]
        %v1658 = vld [vmem:[%s662 + $0xf34] sm:$0xf]
        %v1659 = vld [vmem:[%s662 + $0xf38] sm:$0xf]
        %v1660 = vld [vmem:[%s662 + $0xf3c] sm:$0xf]
        %v1661 = vld [vmem:[%s662 + $0xf40] sm:$0xf]
        %v1662 = vld [vmem:[%s662 + $0xf44] sm:$0xf]
        %v1663 = vld [vmem:[%s662 + $0xf48] sm:$0xf]
        %v1664 = vld [vmem:[%s662 + $0xf4c] sm:$0xf]
        %v1665 = vld [vmem:[%s662 + $0xf50] sm:$0xf]
        %v1666 = vld [vmem:[%s662 + $0xf54] sm:$0xf]
        %v1667 = vld [vmem:[%s662 + $0xf58] sm:$0xf]
        %v1668 = vld [vmem:[%s662 + $0xf5c] sm:$0xf]
        %v1669 = vld [vmem:[%s662 + $0xf60] sm:$0xf]
        %v1670 = vld [vmem:[%s662 + $0xf64] sm:$0xf]
        %v1671 = vld [vmem:[%s662 + $0xf68] sm:$0xf]
        %v1672 = vld [vmem:[%s662 + $0xf6c] sm:$0xf]
        %v1673 = vld [vmem:[%s662 + $0xf70] sm:$0xf]
        %v1674 = vld [vmem:[%s662 + $0xf74] sm:$0xf]
        %v1675 = vld [vmem:[%s662 + $0xf78] sm:$0xf]
        %v1676 = vld [vmem:[%s662 + $0xf7c] sm:$0xf]
        %v1677 = vld [vmem:[%s662 + $0xf80] sm:$0xf]
        %v1678 = vld [vmem:[%s662 + $0xf84] sm:$0xf]
        %v1679 = vld [vmem:[%s662 + $0xf88] sm:$0xf]
        %v1680 = vld [vmem:[%s662 + $0xf8c] sm:$0xf]
        %v1681 = vld [vmem:[%s662 + $0xf90] sm:$0xf]
        %v1682 = vld [vmem:[%s662 + $0xf94] sm:$0xf]
        %v1683 = vld [vmem:[%s662 + $0xf98] sm:$0xf]
        %v1684 = vld [vmem:[%s662 + $0xf9c] sm:$0xf]
        %v1685 = vld [vmem:[%s662 + $0xfa0] sm:$0xf]
        %v1686 = vld [vmem:[%s662 + $0xfa4] sm:$0xf]
        %v1687 = vld [vmem:[%s662 + $0xfa8] sm:$0xf]
        %v1688 = vld [vmem:[%s662 + $0xfac] sm:$0xf]
        %v1689 = vld [vmem:[%s662 + $0xfb0] sm:$0xf]
        %v1690 = vld [vmem:[%s662 + $0xfb4] sm:$0xf]
        %v1691 = vld [vmem:[%s662 + $0xfb8] sm:$0xf]
        %v1692 = vld [vmem:[%s662 + $0xfbc] sm:$0xf]
        %v1693 = vld [vmem:[%s662 + $0xfc0] sm:$0xf]
        %v1694 = vld [vmem:[%s662 + $0xfc4] sm:$0xf]
        %v1695 = vld [vmem:[%s662 + $0xfc8] sm:$0xf]
        %v1696 = vld [vmem:[%s662 + $0xfcc] sm:$0xf]
        %v1697 = vld [vmem:[%s662 + $0xfd0] sm:$0xf]
        %v1698 = vld [vmem:[%s662 + $0xfd4] sm:$0xf]
        %v1699 = vld [vmem:[%s662 + $0xfd8] sm:$0xf]
        %v1700 = vld [vmem:[%s662 + $0xfdc] sm:$0xf]
        %v1701 = vld [vmem:[%s662 + $0xfe0] sm:$0xf]
        %v1702 = vld [vmem:[%s662 + $0xfe4] sm:$0xf]
        %v1703 = vld [vmem:[%s662 + $0xfe8] sm:$0xf]
        %v1704 = vld [vmem:[%s662 + $0xfec] sm:$0xf]
        %v1705 = vld [vmem:[%s662 + $0xff0] sm:$0xf]
        %v1706 = vld [vmem:[%s662 + $0xff4] sm:$0xf]
        %v1707 = vld [vmem:[%s662 + $0xff8] sm:$0xf]
        %v1708 = vld [vmem:[%s662 + $0xffc] sm:$0xf]
        %v1709 = vld [vmem:[%s662 + $0x1000] sm:$0xf]
        %v1710 = vld [vmem:[%s662 + $0x1004] sm:$0xf]
        %v1711 = vld [vmem:[%s662 + $0x1008] sm:$0xf]
        %v1712 = vld [vmem:[%s662 + $0x100c] sm:$0xf]
        %v1713 = vld [vmem:[%s662 + $0x1010] sm:$0xf]
        %v1714 = vld [vmem:[%s662 + $0x1014] sm:$0xf]
        %v1715 = vld [vmem:[%s662 + $0x1018] sm:$0xf]
        %v1716 = vld [vmem:[%s662 + $0x101c] sm:$0xf]
        %v1717 = vld [vmem:[%s662 + $0x1020] sm:$0xf]
        %v1718 = vld [vmem:[%s662 + $0x1024] sm:$0xf]
        %v1719 = vld [vmem:[%s662 + $0x1028] sm:$0xf]
        %v1720 = vld [vmem:[%s662 + $0x102c] sm:$0xf]
        %v1721 = vld [vmem:[%s662 + $0x1030] sm:$0xf]
        %v1722 = vld [vmem:[%s662 + $0x1034] sm:$0xf]
        %v1723 = vld [vmem:[%s662 + $0x1038] sm:$0xf]
        %v1724 = vld [vmem:[%s662 + $0x103c] sm:$0xf]
        %v1725 = vld [vmem:[%s662 + $0x1040] sm:$0xf]
        %v1726 = vld [vmem:[%s662 + $0x1044] sm:$0xf]
        %v1727 = vld [vmem:[%s662 + $0x1048] sm:$0xf]
        %v1728 = vld [vmem:[%s662 + $0x104c] sm:$0xf]
        %v1729 = vld [vmem:[%s662 + $0x1050] sm:$0xf]
        %v1730 = vld [vmem:[%s662 + $0x1054] sm:$0xf]
        %v1731 = vld [vmem:[%s662 + $0x1058] sm:$0xf]
        %v1732 = vld [vmem:[%s662 + $0x105c] sm:$0xf]
        %v1733 = vld [vmem:[%s662 + $0x1060] sm:$0xf]
        %v1734 = vld [vmem:[%s662 + $0x1064] sm:$0xf]
        %v1735 = vld [vmem:[%s662 + $0x1068] sm:$0xf]
        %v1736 = vld [vmem:[%s662 + $0x106c] sm:$0xf]
        %v1737 = vld [vmem:[%s662 + $0x1070] sm:$0xf]
        %v1738 = vld [vmem:[%s662 + $0x1074] sm:$0xf]
        %v1739 = vld [vmem:[%s662 + $0x1078] sm:$0xf]
        %v1740 = vld [vmem:[%s662 + $0x107c] sm:$0xf]
        %v1741 = vld [vmem:[%s662 + $0x1080] sm:$0xf]
        %v1742 = vld [vmem:[%s662 + $0x1084] sm:$0xf]
        %v1743 = vld [vmem:[%s662 + $0x1088] sm:$0xf]
        %v1744 = vld [vmem:[%s662 + $0x108c] sm:$0xf]
        %v1745 = vld [vmem:[%s662 + $0x1090] sm:$0xf]
        %v1746 = vld [vmem:[%s662 + $0x1094] sm:$0xf]
        %v1747 = vld [vmem:[%s662 + $0x1098] sm:$0xf]
        %v1748 = vld [vmem:[%s662 + $0x109c] sm:$0xf]
        %v1749 = vld [vmem:[%s662 + $0x10a0] sm:$0xf]
        %v1750 = vld [vmem:[%s662 + $0x10a4] sm:$0xf]
        %v1751 = vld [vmem:[%s662 + $0x10a8] sm:$0xf]
        %v1752 = vld [vmem:[%s662 + $0x10ac] sm:$0xf]
        %v1753 = vld [vmem:[%s662 + $0x10b0] sm:$0xf]
        %v1754 = vld [vmem:[%s662 + $0x10b4] sm:$0xf]
        %v1755 = vld [vmem:[%s662 + $0x10b8] sm:$0xf]
        %v1756 = vld [vmem:[%s662 + $0x10bc] sm:$0xf]
        %v1757 = vld [vmem:[%s662 + $0x10c0] sm:$0xf]
        %v1758 = vld [vmem:[%s662 + $0x10c4] sm:$0xf]
        %v1759 = vld [vmem:[%s662 + $0x10c8] sm:$0xf]
        %v1760 = vld [vmem:[%s662 + $0x10cc] sm:$0xf]
        %v1761 = vld [vmem:[%s662 + $0x10d0] sm:$0xf]
        %v1762 = vld [vmem:[%s662 + $0x10d4] sm:$0xf]
        %v1763 = vld [vmem:[%s662 + $0x10d8] sm:$0xf]
        %v1764 = vld [vmem:[%s662 + $0x10dc] sm:$0xf]
        %v1765 = vld [vmem:[%s662 + $0x10e0] sm:$0xf]
        %v1766 = vld [vmem:[%s662 + $0x10e4] sm:$0xf]
        %v1767 = vld [vmem:[%s662 + $0x10e8] sm:$0xf]
        %v1768 = vld [vmem:[%s662 + $0x10ec] sm:$0xf]
        %v1769 = vld [vmem:[%s662 + $0x10f0] sm:$0xf]
        %v1770 = vld [vmem:[%s662 + $0x10f4] sm:$0xf]
        %v1771 = vld [vmem:[%s662 + $0x10f8] sm:$0xf]
        %v1772 = vld [vmem:[%s662 + $0x10fc] sm:$0xf]
        %v1773 = vld [vmem:[%s662 + $0x1100] sm:$0xf]
        %v1774 = vld [vmem:[%s662 + $0x1104] sm:$0xf]
        %v1775 = vld [vmem:[%s662 + $0x1108] sm:$0xf]
        %v1776 = vld [vmem:[%s662 + $0x110c] sm:$0xf]
        %v1777 = vld [vmem:[%s662 + $0x1110] sm:$0xf]
        %v1778 = vld [vmem:[%s662 + $0x1114] sm:$0xf]
        %v1779 = vld [vmem:[%s662 + $0x1118] sm:$0xf]
        %v1780 = vld [vmem:[%s662 + $0x111c] sm:$0xf]
        %v1781 = vld [vmem:[%s662 + $0x1120] sm:$0xf]
        %v1782 = vld [vmem:[%s662 + $0x1124] sm:$0xf]
        %v1783 = vld [vmem:[%s662 + $0x1128] sm:$0xf]
        %v1784 = vld [vmem:[%s662 + $0x112c] sm:$0xf]
        %v1785 = vld [vmem:[%s662 + $0x1130] sm:$0xf]
        %v1786 = vld [vmem:[%s662 + $0x1134] sm:$0xf]
        %v1787 = vld [vmem:[%s662 + $0x1138] sm:$0xf]
        %v1788 = vld [vmem:[%s662 + $0x113c] sm:$0xf]
        %v1789 = vld [vmem:[%s662 + $0x1140] sm:$0xf]
        %v1790 = vld [vmem:[%s662 + $0x1144] sm:$0xf]
        %v1791 = vld [vmem:[%s662 + $0x1148] sm:$0xf]
        %v1792 = vld [vmem:[%s662 + $0x114c] sm:$0xf]
        %v1793 = vld [vmem:[%s662 + $0x1150] sm:$0xf]
        %v1794 = vld [vmem:[%s662 + $0x1154] sm:$0xf]
        %v1795 = vld [vmem:[%s662 + $0x1158] sm:$0xf]
        %v1796 = vld [vmem:[%s662 + $0x115c] sm:$0xf]
        %v1797 = vld [vmem:[%s662 + $0x1160] sm:$0xf]
        %v1798 = vld [vmem:[%s662 + $0x1164] sm:$0xf]
        %v1799 = vld [vmem:[%s662 + $0x1168] sm:$0xf]
        %v1800 = vld [vmem:[%s662 + $0x116c] sm:$0xf]
        %v1801 = vld [vmem:[%s662 + $0x1170] sm:$0xf]
        %v1802 = vld [vmem:[%s662 + $0x1174] sm:$0xf]
        %v1803 = vld [vmem:[%s662 + $0x1178] sm:$0xf]
        %v1804 = vld [vmem:[%s662 + $0x117c] sm:$0xf]
        %v1805 = vld [vmem:[%s662 + $0x1180] sm:$0xf]
        %v1806 = vld [vmem:[%s662 + $0x1184] sm:$0xf]
        %v1807 = vld [vmem:[%s662 + $0x1188] sm:$0xf]
        %v1808 = vld [vmem:[%s662 + $0x118c] sm:$0xf]
        %v1809 = vld [vmem:[%s662 + $0x1190] sm:$0xf]
        %v1810 = vld [vmem:[%s662 + $0x1194] sm:$0xf]
        %v1811 = vld [vmem:[%s662 + $0x1198] sm:$0xf]
        %v1812 = vld [vmem:[%s662 + $0x119c] sm:$0xf]
        %v1813 = vld [vmem:[%s662 + $0x11a0] sm:$0xf]
        %v1814 = vld [vmem:[%s662 + $0x11a4] sm:$0xf]
        %v1815 = vld [vmem:[%s662 + $0x11a8] sm:$0xf]
        %v1816 = vld [vmem:[%s662 + $0x11ac] sm:$0xf]
        %v1817 = vld [vmem:[%s662 + $0x11b0] sm:$0xf]
        %v1818 = vld [vmem:[%s662 + $0x11b4] sm:$0xf]
        %v1819 = vld [vmem:[%s662 + $0x11b8] sm:$0xf]
        %v1820 = vld [vmem:[%s662 + $0x11bc] sm:$0xf]
        %v1821 = vld [vmem:[%s662 + $0x11c0] sm:$0xf]
        %v1822 = vld [vmem:[%s662 + $0x11c4] sm:$0xf]
        %v1823 = vld [vmem:[%s662 + $0x11c8] sm:$0xf]
        %v1824 = vld [vmem:[%s662 + $0x11cc] sm:$0xf]
        %v1825 = vld [vmem:[%s662 + $0x11d0] sm:$0xf]
        %v1826 = vld [vmem:[%s662 + $0x11d4] sm:$0xf]
        %v1827 = vld [vmem:[%s662 + $0x11d8] sm:$0xf]
        %v1828 = vld [vmem:[%s662 + $0x11dc] sm:$0xf]
        %v1829 = vld [vmem:[%s662 + $0x11e0] sm:$0xf]
        %v1830 = vld [vmem:[%s662 + $0x11e4] sm:$0xf]
        %v1831 = vld [vmem:[%s662 + $0x11e8] sm:$0xf]
        %v1832 = vld [vmem:[%s662 + $0x11ec] sm:$0xf]
        %v1833 = vld [vmem:[%s662 + $0x11f0] sm:$0xf]
        %v1834 = vld [vmem:[%s662 + $0x11f4] sm:$0xf]
        %v1835 = vld [vmem:[%s662 + $0x11f8] sm:$0xf]
        %v1836 = vld [vmem:[%s662 + $0x11fc] sm:$0xf]
        %v1837 = vld [vmem:[%s662 + $0x1200] sm:$0xf]
        %v1838 = vld [vmem:[%s662 + $0x1204] sm:$0xf]
        %v1839 = vld [vmem:[%s662 + $0x1208] sm:$0xf]
        %v1840 = vld [vmem:[%s662 + $0x120c] sm:$0xf]
        %v1841 = vld [vmem:[%s662 + $0x1210] sm:$0xf]
        %v1842 = vld [vmem:[%s662 + $0x1214] sm:$0xf]
        %v1843 = vld [vmem:[%s662 + $0x1218] sm:$0xf]
        %v1844 = vld [vmem:[%s662 + $0x121c] sm:$0xf]
        %v1845 = vld [vmem:[%s662 + $0x1220] sm:$0xf]
        %v1846 = vld [vmem:[%s662 + $0x1224] sm:$0xf]
        %v1847 = vld [vmem:[%s662 + $0x1228] sm:$0xf]
        %v1848 = vld [vmem:[%s662 + $0x122c] sm:$0xf]
        %v1849 = vld [vmem:[%s662 + $0x1230] sm:$0xf]
        %v1850 = vld [vmem:[%s662 + $0x1234] sm:$0xf]
        %v1851 = vld [vmem:[%s662 + $0x1238] sm:$0xf]
        %v1852 = vld [vmem:[%s662 + $0x123c] sm:$0xf]
        %v1853 = vld [vmem:[%s662 + $0x1240] sm:$0xf]
        %v1854 = vld [vmem:[%s662 + $0x1244] sm:$0xf]
        %v1855 = vld [vmem:[%s662 + $0x1248] sm:$0xf]
        %v1856 = vld [vmem:[%s662 + $0x124c] sm:$0xf]
        %v1857 = vld [vmem:[%s662 + $0x1250] sm:$0xf]
        %v1858 = vld [vmem:[%s662 + $0x1254] sm:$0xf]
        %v1859 = vld [vmem:[%s662 + $0x1258] sm:$0xf]
        %v1860 = vld [vmem:[%s662 + $0x125c] sm:$0xf]
        %v1861 = vld [vmem:[%s662 + $0x1260] sm:$0xf]
        %v1862 = vld [vmem:[%s662 + $0x1264] sm:$0xf]
        %v1863 = vld [vmem:[%s662 + $0x1268] sm:$0xf]
        %v1864 = vld [vmem:[%s662 + $0x126c] sm:$0xf]
        %v1865 = vld [vmem:[%s662 + $0x1270] sm:$0xf]
        %v1866 = vld [vmem:[%s662 + $0x1274] sm:$0xf]
        %v1867 = vld [vmem:[%s662 + $0x1278] sm:$0xf]
        %v1868 = vld [vmem:[%s662 + $0x127c] sm:$0xf]
        %v1869 = vld [vmem:[%s662 + $0x1280] sm:$0xf]
        %v1870 = vld [vmem:[%s662 + $0x1284] sm:$0xf]
        %v1871 = vld [vmem:[%s662 + $0x1288] sm:$0xf]
        %v1872 = vld [vmem:[%s662 + $0x128c] sm:$0xf]
        %v1873 = vld [vmem:[%s662 + $0x1290] sm:$0xf]
        %v1874 = vld [vmem:[%s662 + $0x1294] sm:$0xf]
        %v1875 = vld [vmem:[%s662 + $0x1298] sm:$0xf]
        %v1876 = vld [vmem:[%s662 + $0x129c] sm:$0xf]
        %v1877 = vld [vmem:[%s662 + $0x12a0] sm:$0xf]
        %v1878 = vld [vmem:[%s662 + $0x12a4] sm:$0xf]
        %v1879 = vld [vmem:[%s662 + $0x12a8] sm:$0xf]
        %v1880 = vld [vmem:[%s662 + $0x12ac] sm:$0xf]
        %v1881 = vld [vmem:[%s662 + $0x12b0] sm:$0xf]
        %v1882 = vld [vmem:[%s662 + $0x12b4] sm:$0xf]
        %v1883 = vld [vmem:[%s662 + $0x12b8] sm:$0xf]
        %v1884 = vld [vmem:[%s662 + $0x12bc] sm:$0xf]
        %v1885 = vld [vmem:[%s662 + $0x12c0] sm:$0xf]
        %v1886 = vld [vmem:[%s662 + $0x12c4] sm:$0xf]
        %v1887 = vld [vmem:[%s662 + $0x12c8] sm:$0xf]
        %v1888 = vld [vmem:[%s662 + $0x12cc] sm:$0xf]
        %v1889 = vld [vmem:[%s662 + $0x12d0] sm:$0xf]
        %v1890 = vld [vmem:[%s662 + $0x12d4] sm:$0xf]
        %v1891 = vld [vmem:[%s662 + $0x12d8] sm:$0xf]
        %v1892 = vld [vmem:[%s662 + $0x12dc] sm:$0xf]
        %v1893 = vld [vmem:[%s662 + $0x12e0] sm:$0xf]
        %v1894 = vld [vmem:[%s662 + $0x12e4] sm:$0xf]
        %v1895 = vld [vmem:[%s662 + $0x12e8] sm:$0xf]
        %v1896 = vld [vmem:[%s662 + $0x12ec] sm:$0xf]
        %v1897 = vld [vmem:[%s662 + $0x12f0] sm:$0xf]
        %v1898 = vld [vmem:[%s662 + $0x12f4] sm:$0xf]
        %v1899 = vld [vmem:[%s662 + $0x12f8] sm:$0xf]
        %v1900 = vld [vmem:[%s662 + $0x12fc] sm:$0xf]
        %v1901 = vld [vmem:[%s662 + $0x1300] sm:$0xf]
        %v1902 = vld [vmem:[%s662 + $0x1304] sm:$0xf]
        %v1903 = vld [vmem:[%s662 + $0x1308] sm:$0xf]
        %v1904 = vld [vmem:[%s662 + $0x130c] sm:$0xf]
        %v1905 = vld [vmem:[%s662 + $0x1310] sm:$0xf]
        %v1906 = vld [vmem:[%s662 + $0x1314] sm:$0xf]
        %v1907 = vld [vmem:[%s662 + $0x1318] sm:$0xf]
        %v1908 = vld [vmem:[%s662 + $0x131c] sm:$0xf]
        %v1909 = vld [vmem:[%s662 + $0x1320] sm:$0xf]
        %v1910 = vld [vmem:[%s662 + $0x1324] sm:$0xf]
        %v1911 = vld [vmem:[%s662 + $0x1328] sm:$0xf]
        %v1912 = vld [vmem:[%s662 + $0x132c] sm:$0xf]
        %v1913 = vld [vmem:[%s662 + $0x1330] sm:$0xf]
        %v1914 = vld [vmem:[%s662 + $0x1334] sm:$0xf]
        %v1915 = vld [vmem:[%s662 + $0x1338] sm:$0xf]
        %v1916 = vld [vmem:[%s662 + $0x133c] sm:$0xf]
        %v1917 = vld [vmem:[%s662 + $0x1340] sm:$0xf]
        %v1918 = vld [vmem:[%s662 + $0x1344] sm:$0xf]
        %v1919 = vld [vmem:[%s662 + $0x1348] sm:$0xf]
        %v1920 = vld [vmem:[%s662 + $0x134c] sm:$0xf]
        %v1921 = vld [vmem:[%s662 + $0x1350] sm:$0xf]
        %v1922 = vld [vmem:[%s662 + $0x1354] sm:$0xf]
        %v1923 = vld [vmem:[%s662 + $0x1358] sm:$0xf]
        %v1924 = vld [vmem:[%s662 + $0x135c] sm:$0xf]
        %v1925 = vld [vmem:[%s662 + $0x1360] sm:$0xf]
        %v1926 = vld [vmem:[%s662 + $0x1364] sm:$0xf]
        %v1927 = vld [vmem:[%s662 + $0x1368] sm:$0xf]
        %v1928 = vld [vmem:[%s662 + $0x136c] sm:$0xf]
        %v1929 = vld [vmem:[%s662 + $0x1370] sm:$0xf]
        %v1930 = vld [vmem:[%s662 + $0x1374] sm:$0xf]
        %v1931 = vld [vmem:[%s662 + $0x1378] sm:$0xf]
        %v1932 = vld [vmem:[%s662 + $0x137c] sm:$0xf]
        %v1933 = vld [vmem:[%s662 + $0x1380] sm:$0xf]
        %v1934 = vld [vmem:[%s662 + $0x1384] sm:$0xf]
        %v1935 = vld [vmem:[%s662 + $0x1388] sm:$0xf]
        %v1936 = vld [vmem:[%s662 + $0x138c] sm:$0xf]
        %v1937 = vld [vmem:[%s662 + $0x1390] sm:$0xf]
        %v1938 = vld [vmem:[%s662 + $0x1394] sm:$0xf]
        %v1939 = vld [vmem:[%s662 + $0x1398] sm:$0xf]
        %v1940 = vld [vmem:[%s662 + $0x139c] sm:$0xf]
        %v1941 = vld [vmem:[%s662 + $0x13a0] sm:$0xf]
        %v1942 = vld [vmem:[%s662 + $0x13a4] sm:$0xf]
        %v1943 = vld [vmem:[%s662 + $0x13a8] sm:$0xf]
        %v1944 = vld [vmem:[%s662 + $0x13ac] sm:$0xf]
        %v1945 = vld [vmem:[%s662 + $0x13b0] sm:$0xf]
        %v1946 = vld [vmem:[%s662 + $0x13b4] sm:$0xf]
        %v1947 = vld [vmem:[%s662 + $0x13b8] sm:$0xf]
        %v1948 = vld [vmem:[%s662 + $0x13bc] sm:$0xf]
        %v1949 = vld [vmem:[%s662 + $0x13c0] sm:$0xf]
        %v1950 = vld [vmem:[%s662 + $0x13c4] sm:$0xf]
        %v1951 = vld [vmem:[%s662 + $0x13c8] sm:$0xf]
        %v1952 = vld [vmem:[%s662 + $0x13cc] sm:$0xf]
        %v1953 = vld [vmem:[%s662 + $0x13d0] sm:$0xf]
        %v1954 = vld [vmem:[%s662 + $0x13d4] sm:$0xf]
        %v1955 = vld [vmem:[%s662 + $0x13d8] sm:$0xf]
        %v1956 = vld [vmem:[%s662 + $0x13dc] sm:$0xf]
        %v1957 = vld [vmem:[%s662 + $0x13e0] sm:$0xf]
        %v1958 = vld [vmem:[%s662 + $0x13e4] sm:$0xf]
        %v1959 = vld [vmem:[%s662 + $0x13e8] sm:$0xf]
        %v1960 = vld [vmem:[%s662 + $0x13ec] sm:$0xf]
        %v1961 = vld [vmem:[%s662 + $0x13f0] sm:$0xf]
        %v1962 = vld [vmem:[%s662 + $0x13f4] sm:$0xf]
        %v1963 = vld [vmem:[%s662 + $0x13f8] sm:$0xf]
        %v1964 = vld [vmem:[%s662 + $0x13fc] sm:$0xf]
        %v1965 = vld [vmem:[%s662 + $0x1400] sm:$0xf]
        %v1966 = vld [vmem:[%s662 + $0x1404] sm:$0xf]
        %v1967 = vld [vmem:[%s662 + $0x1408] sm:$0xf]
        %v1968 = vld [vmem:[%s662 + $0x140c] sm:$0xf]
        %v1969 = vld [vmem:[%s662 + $0x1410] sm:$0xf]
        %v1970 = vld [vmem:[%s662 + $0x1414] sm:$0xf]
        %v1971 = vld [vmem:[%s662 + $0x1418] sm:$0xf]
        %v1972 = vld [vmem:[%s662 + $0x141c] sm:$0xf]
        %v1973 = vld [vmem:[%s662 + $0x1420] sm:$0xf]
        %v1974 = vld [vmem:[%s662 + $0x1424] sm:$0xf]
        %v1975 = vld [vmem:[%s662 + $0x1428] sm:$0xf]
        %v1976 = vld [vmem:[%s662 + $0x142c] sm:$0xf]
        %v1977 = vld [vmem:[%s662 + $0x1430] sm:$0xf]
        %v1978 = vld [vmem:[%s662 + $0x1434] sm:$0xf]
        %v1979 = vld [vmem:[%s662 + $0x1438] sm:$0xf]
        %v1980 = vld [vmem:[%s662 + $0x143c] sm:$0xf]
        %v1981 = vld [vmem:[%s662 + $0x1440] sm:$0xf]
        %v1982 = vld [vmem:[%s662 + $0x1444] sm:$0xf]
        %v1983 = vld [vmem:[%s662 + $0x1448] sm:$0xf]
        %v1984 = vld [vmem:[%s662 + $0x144c] sm:$0xf]
        %v1985 = vld [vmem:[%s662 + $0x1450] sm:$0xf]
        %v1986 = vld [vmem:[%s662 + $0x1454] sm:$0xf]
        %v1987 = vld [vmem:[%s662 + $0x1458] sm:$0xf]
        %v1988 = vld [vmem:[%s662 + $0x145c] sm:$0xf]
        %v1989 = vld [vmem:[%s662 + $0x1460] sm:$0xf]
        %v1990 = vld [vmem:[%s662 + $0x1464] sm:$0xf]
        %v1991 = vld [vmem:[%s662 + $0x1468] sm:$0xf]
        %v1992 = vld [vmem:[%s662 + $0x146c] sm:$0xf]
        %v1993 = vld [vmem:[%s662 + $0x1470] sm:$0xf]
        %v1994 = vld [vmem:[%s662 + $0x1474] sm:$0xf]
        %v1995 = vld [vmem:[%s662 + $0x1478] sm:$0xf]
        %v1996 = vld [vmem:[%s662 + $0x147c] sm:$0xf]
        %v1997 = vld [vmem:[%s662 + $0x1480] sm:$0xf]
        %v1998 = vld [vmem:[%s662 + $0x1484] sm:$0xf]
        %v1999 = vld [vmem:[%s662 + $0x1488] sm:$0xf]
        %v2000 = vld [vmem:[%s662 + $0x148c] sm:$0xf]
        %v2001 = vld [vmem:[%s662 + $0x1490] sm:$0xf]
        %v2002 = vld [vmem:[%s662 + $0x1494] sm:$0xf]
        %v2003 = vld [vmem:[%s662 + $0x1498] sm:$0xf]
        %v2004 = vld [vmem:[%s662 + $0x149c] sm:$0xf]
        %v2005 = vld [vmem:[%s662 + $0x14a0] sm:$0xf]
        %v2006 = vld [vmem:[%s662 + $0x14a4] sm:$0xf]
        %v2007 = vld [vmem:[%s662 + $0x14a8] sm:$0xf]
        %v2008 = vld [vmem:[%s662 + $0x14ac] sm:$0xf]
        %v2009 = vld [vmem:[%s662 + $0x14b0] sm:$0xf]
        %v2010 = vld [vmem:[%s662 + $0x14b4] sm:$0xf]
        %v2011 = vld [vmem:[%s662 + $0x14b8] sm:$0xf]
        %v2012 = vld [vmem:[%s662 + $0x14bc] sm:$0xf]
        %v2013 = vld [vmem:[%s662 + $0x14c0] sm:$0xf]
        %v2014 = vld [vmem:[%s662 + $0x14c4] sm:$0xf]
        %v2015 = vld [vmem:[%s662 + $0x14c8] sm:$0xf]
        %v2016 = vld [vmem:[%s662 + $0x14cc] sm:$0xf]
        %v2017 = vld [vmem:[%s662 + $0x14d0] sm:$0xf]
        %v2018 = vld [vmem:[%s662 + $0x14d4] sm:$0xf]
        %v2019 = vld [vmem:[%s662 + $0x14d8] sm:$0xf]
        %v2020 = vld [vmem:[%s662 + $0x14dc] sm:$0xf]
        %v2021 = vld [vmem:[%s662 + $0x14e0] sm:$0xf]
        %v2022 = vld [vmem:[%s662 + $0x14e4] sm:$0xf]
        %v2023 = vld [vmem:[%s662 + $0x14e8] sm:$0xf]
        %v2024 = vld [vmem:[%s662 + $0x14ec] sm:$0xf]
        %v2025 = vld [vmem:[%s662 + $0x14f0] sm:$0xf]
        %v2026 = vld [vmem:[%s662 + $0x14f4] sm:$0xf]
        %v2027 = vld [vmem:[%s662 + $0x14f8] sm:$0xf]
        %v2028 = vld [vmem:[%s662 + $0x14fc] sm:$0xf]
        %v2029 = vld [vmem:[%s662 + $0x1500] sm:$0xf]
        %v2030 = vld [vmem:[%s662 + $0x1504] sm:$0xf]
        %v2031 = vld [vmem:[%s662 + $0x1508] sm:$0xf]
        %v2032 = vld [vmem:[%s662 + $0x150c] sm:$0xf]
        %v2033 = vld [vmem:[%s662 + $0x1510] sm:$0xf]
        %v2034 = vld [vmem:[%s662 + $0x1514] sm:$0xf]
        %v2035 = vld [vmem:[%s662 + $0x1518] sm:$0xf]
        %v2036 = vld [vmem:[%s662 + $0x151c] sm:$0xf]
        %v2037 = vld [vmem:[%s662 + $0x1520] sm:$0xf]
        %v2038 = vld [vmem:[%s662 + $0x1524] sm:$0xf]
        %v2039 = vld [vmem:[%s662 + $0x1528] sm:$0xf]
        %v2040 = vld [vmem:[%s662 + $0x152c] sm:$0xf]
        %v2041 = vld [vmem:[%s662 + $0x1530] sm:$0xf]
        %v2042 = vld [vmem:[%s662 + $0x1534] sm:$0xf]
        %v2043 = vld [vmem:[%s662 + $0x1538] sm:$0xf]
        %v2044 = vld [vmem:[%s662 + $0x153c] sm:$0xf]
        %v2045 = vld [vmem:[%s662 + $0x1540] sm:$0xf]
        %v2046 = vld [vmem:[%s662 + $0x1544] sm:$0xf]
        %v2047 = vld [vmem:[%s662 + $0x1548] sm:$0xf]
        %v2048 = vld [vmem:[%s662 + $0x154c] sm:$0xf]
        %v2049 = vld [vmem:[%s662 + $0x1550] sm:$0xf]
        %v2050 = vld [vmem:[%s662 + $0x1554] sm:$0xf]
        %v2051 = vld [vmem:[%s662 + $0x1558] sm:$0xf]
        %v2052 = vld [vmem:[%s662 + $0x155c] sm:$0xf]
        %v2053 = vld [vmem:[%s662 + $0x1560] sm:$0xf]
        %v2054 = vld [vmem:[%s662 + $0x1564] sm:$0xf]
        %v2055 = vld [vmem:[%s662 + $0x1568] sm:$0xf]
        %v2056 = vld [vmem:[%s662 + $0x156c] sm:$0xf]
        %v2057 = vld [vmem:[%s662 + $0x1570] sm:$0xf]
        %v2058 = vld [vmem:[%s662 + $0x1574] sm:$0xf]
        %v2059 = vld [vmem:[%s662 + $0x1578] sm:$0xf]
        %v2060 = vld [vmem:[%s662 + $0x157c] sm:$0xf]
        %v2061 = vld [vmem:[%s662 + $0x1580] sm:$0xf]
        %v2062 = vld [vmem:[%s662 + $0x1584] sm:$0xf]
        %v2063 = vld [vmem:[%s662 + $0x1588] sm:$0xf]
        %v2064 = vld [vmem:[%s662 + $0x158c] sm:$0xf]
        %v2065 = vld [vmem:[%s662 + $0x1590] sm:$0xf]
        %v2066 = vld [vmem:[%s662 + $0x1594] sm:$0xf]
        %v2067 = vld [vmem:[%s662 + $0x1598] sm:$0xf]
        %v2068 = vld [vmem:[%s662 + $0x159c] sm:$0xf]
        %v2069 = vld [vmem:[%s662 + $0x15a0] sm:$0xf]
        %v2070 = vld [vmem:[%s662 + $0x15a4] sm:$0xf]
        %v2071 = vld [vmem:[%s662 + $0x15a8] sm:$0xf]
        %v2072 = vld [vmem:[%s662 + $0x15ac] sm:$0xf]
        %v2073 = vld [vmem:[%s662 + $0x15b0] sm:$0xf]
        %v2074 = vld [vmem:[%s662 + $0x15b4] sm:$0xf]
        %v2075 = vld [vmem:[%s662 + $0x15b8] sm:$0xf]
        %v2076 = vld [vmem:[%s662 + $0x15bc] sm:$0xf]
        %v2077 = vld [vmem:[%s662 + $0x15c0] sm:$0xf]
        %v2078 = vld [vmem:[%s662 + $0x15c4] sm:$0xf]
        %v2079 = vld [vmem:[%s662 + $0x15c8] sm:$0xf]
        %v2080 = vld [vmem:[%s662 + $0x15cc] sm:$0xf]
        %v2081 = vld [vmem:[%s662 + $0x15d0] sm:$0xf]
        %v2082 = vld [vmem:[%s662 + $0x15d4] sm:$0xf]
        %v2083 = vld [vmem:[%s662 + $0x15d8] sm:$0xf]
        %v2084 = vld [vmem:[%s662 + $0x15dc] sm:$0xf]
        %v2085 = vld [vmem:[%s662 + $0x15e0] sm:$0xf]
        %v2086 = vld [vmem:[%s662 + $0x15e4] sm:$0xf]
        %v2087 = vld [vmem:[%s662 + $0x15e8] sm:$0xf]
        %v2088 = vld [vmem:[%s662 + $0x15ec] sm:$0xf]
        %v2089 = vld [vmem:[%s662 + $0x15f0] sm:$0xf]
        %v2090 = vld [vmem:[%s662 + $0x15f4] sm:$0xf]
        %v2091 = vld [vmem:[%s662 + $0x15f8] sm:$0xf]
        %v2092 = vld [vmem:[%s662 + $0x15fc] sm:$0xf]
        %v2093 = vld [vmem:[%s662 + $0x1600] sm:$0xf]
        %v2094 = vld [vmem:[%s662 + $0x1604] sm:$0xf]
        %v2095 = vld [vmem:[%s662 + $0x1608] sm:$0xf]
        %v2096 = vld [vmem:[%s662 + $0x160c] sm:$0xf]
        %v2097 = vld [vmem:[%s662 + $0x1610] sm:$0xf]
        %v2098 = vld [vmem:[%s662 + $0x1614] sm:$0xf]
        %v2099 = vld [vmem:[%s662 + $0x1618] sm:$0xf]
        %v2100 = vld [vmem:[%s662 + $0x161c] sm:$0xf]
        %v2101 = vld [vmem:[%s662 + $0x1620] sm:$0xf]
        %v2102 = vld [vmem:[%s662 + $0x1624] sm:$0xf]
        %v2103 = vld [vmem:[%s662 + $0x1628] sm:$0xf]
        %v2104 = vld [vmem:[%s662 + $0x162c] sm:$0xf]
        %v2105 = vld [vmem:[%s662 + $0x1630] sm:$0xf]
        %v2106 = vld [vmem:[%s662 + $0x1634] sm:$0xf]
        %v2107 = vld [vmem:[%s662 + $0x1638] sm:$0xf]
        %v2108 = vld [vmem:[%s662 + $0x163c] sm:$0xf]
        %v2109 = vld [vmem:[%s662 + $0x1640] sm:$0xf]
        %v2110 = vld [vmem:[%s662 + $0x1644] sm:$0xf]
        %v2111 = vld [vmem:[%s662 + $0x1648] sm:$0xf]
        %v2112 = vld [vmem:[%s662 + $0x164c] sm:$0xf]
        %v2113 = vld [vmem:[%s662 + $0x1650] sm:$0xf]
        %v2114 = vld [vmem:[%s662 + $0x1654] sm:$0xf]
        %v2115 = vld [vmem:[%s662 + $0x1658] sm:$0xf]
        %v2116 = vld [vmem:[%s662 + $0x165c] sm:$0xf]
        %v2117 = vld [vmem:[%s662 + $0x1660] sm:$0xf]
        %v2118 = vld [vmem:[%s662 + $0x1664] sm:$0xf]
        %v2119 = vld [vmem:[%s662 + $0x1668] sm:$0xf]
        %v2120 = vld [vmem:[%s662 + $0x166c] sm:$0xf]
        %v2121 = vld [vmem:[%s662 + $0x1670] sm:$0xf]
        %v2122 = vld [vmem:[%s662 + $0x1674] sm:$0xf]
        %v2123 = vld [vmem:[%s662 + $0x1678] sm:$0xf]
        %v2124 = vld [vmem:[%s662 + $0x167c] sm:$0xf]
        %v2125 = vld [vmem:[%s662 + $0x1680] sm:$0xf]
        %v2126 = vld [vmem:[%s662 + $0x1684] sm:$0xf]
        %v2127 = vld [vmem:[%s662 + $0x1688] sm:$0xf]
        %v2128 = vld [vmem:[%s662 + $0x168c] sm:$0xf]
        %v2129 = vld [vmem:[%s662 + $0x1690] sm:$0xf]
        %v2130 = vld [vmem:[%s662 + $0x1694] sm:$0xf]
        %v2131 = vld [vmem:[%s662 + $0x1698] sm:$0xf]
        %v2132 = vld [vmem:[%s662 + $0x169c] sm:$0xf]
        %v2133 = vld [vmem:[%s662 + $0x16a0] sm:$0xf]
        %v2134 = vld [vmem:[%s662 + $0x16a4] sm:$0xf]
        %v2135 = vld [vmem:[%s662 + $0x16a8] sm:$0xf]
        %v2136 = vld [vmem:[%s662 + $0x16ac] sm:$0xf]
        %v2137 = vld [vmem:[%s662 + $0x16b0] sm:$0xf]
        %v2138 = vld [vmem:[%s662 + $0x16b4] sm:$0xf]
        %v2139 = vld [vmem:[%s662 + $0x16b8] sm:$0xf]
        %v2140 = vld [vmem:[%s662 + $0x16bc] sm:$0xf]
        %v2141 = vld [vmem:[%s662 + $0x16c0] sm:$0xf]
        %v2142 = vld [vmem:[%s662 + $0x16c4] sm:$0xf]
        %v2143 = vld [vmem:[%s662 + $0x16c8] sm:$0xf]
        %v2144 = vld [vmem:[%s662 + $0x16cc] sm:$0xf]
        %v2145 = vld [vmem:[%s662 + $0x16d0] sm:$0xf]
        %v2146 = vld [vmem:[%s662 + $0x16d4] sm:$0xf]
        %v2147 = vld [vmem:[%s662 + $0x16d8] sm:$0xf]
        %v2148 = vld [vmem:[%s662 + $0x16dc] sm:$0xf]
        %v2149 = vld [vmem:[%s662 + $0x16e0] sm:$0xf]
        %v2150 = vld [vmem:[%s662 + $0x16e4] sm:$0xf]
        %v2151 = vld [vmem:[%s662 + $0x16e8] sm:$0xf]
        %v2152 = vld [vmem:[%s662 + $0x16ec] sm:$0xf]
        %v2153 = vld [vmem:[%s662 + $0x16f0] sm:$0xf]
        %v2154 = vld [vmem:[%s662 + $0x16f4] sm:$0xf]
        %v2155 = vld [vmem:[%s662 + $0x16f8] sm:$0xf]
        %v2156 = vld [vmem:[%s662 + $0x16fc] sm:$0xf]
        %v2157 = vld [vmem:[%s662 + $0x1700] sm:$0xf]
        %v2158 = vld [vmem:[%s662 + $0x1704] sm:$0xf]
        %v2159 = vld [vmem:[%s662 + $0x1708] sm:$0xf]
        %v2160 = vld [vmem:[%s662 + $0x170c] sm:$0xf]
        %v2161 = vld [vmem:[%s662 + $0x1710] sm:$0xf]
        %v2162 = vld [vmem:[%s662 + $0x1714] sm:$0xf]
        %v2163 = vld [vmem:[%s662 + $0x1718] sm:$0xf]
        %v2164 = vld [vmem:[%s662 + $0x171c] sm:$0xf]
        %v2165 = vld [vmem:[%s662 + $0x1720] sm:$0xf]
        %v2166 = vld [vmem:[%s662 + $0x1724] sm:$0xf]
        %v2167 = vld [vmem:[%s662 + $0x1728] sm:$0xf]
        %v2168 = vld [vmem:[%s662 + $0x172c] sm:$0xf]
        %v2169 = vld [vmem:[%s662 + $0x1730] sm:$0xf]
        %v2170 = vld [vmem:[%s662 + $0x1734] sm:$0xf]
        %v2171 = vld [vmem:[%s662 + $0x1738] sm:$0xf]
        %v2172 = vld [vmem:[%s662 + $0x173c] sm:$0xf]
        %v2173 = vld [vmem:[%s662 + $0x1740] sm:$0xf]
        %v2174 = vld [vmem:[%s662 + $0x1744] sm:$0xf]
        %v2175 = vld [vmem:[%s662 + $0x1748] sm:$0xf]
        %v2176 = vld [vmem:[%s662 + $0x174c] sm:$0xf]
        %v2177 = vld [vmem:[%s662 + $0x1750] sm:$0xf]
        %v2178 = vld [vmem:[%s662 + $0x1754] sm:$0xf]
        %v2179 = vld [vmem:[%s662 + $0x1758] sm:$0xf]
        %v2180 = vld [vmem:[%s662 + $0x175c] sm:$0xf]
        %v2181 = vld [vmem:[%s662 + $0x1760] sm:$0xf]
        %v2182 = vld [vmem:[%s662 + $0x1764] sm:$0xf]
        %v2183 = vld [vmem:[%s662 + $0x1768] sm:$0xf]
        %v2184 = vld [vmem:[%s662 + $0x176c] sm:$0xf]
        %v2185 = vld [vmem:[%s662 + $0x1770] sm:$0xf]
        %v2186 = vld [vmem:[%s662 + $0x1774] sm:$0xf]
        %v2187 = vld [vmem:[%s662 + $0x1778] sm:$0xf]
        %v2188 = vld [vmem:[%s662 + $0x177c] sm:$0xf]
        %v2189 = vld [vmem:[%s662 + $0x1780] sm:$0xf]
        %v2190 = vld [vmem:[%s662 + $0x1784] sm:$0xf]
        %v2191 = vld [vmem:[%s662 + $0x1788] sm:$0xf]
        %v2192 = vld [vmem:[%s662 + $0x178c] sm:$0xf]
        %v2193 = vld [vmem:[%s662 + $0x1790] sm:$0xf]
        %v2194 = vld [vmem:[%s662 + $0x1794] sm:$0xf]
        %v2195 = vld [vmem:[%s662 + $0x1798] sm:$0xf]
        %v2196 = vld [vmem:[%s662 + $0x179c] sm:$0xf]
        %v2197 = vld [vmem:[%s662 + $0x17a0] sm:$0xf]
        %v2198 = vld [vmem:[%s662 + $0x17a4] sm:$0xf]
        %v2199 = vld [vmem:[%s662 + $0x17a8] sm:$0xf]
        %v2200 = vld [vmem:[%s662 + $0x17ac] sm:$0xf]
        %v2201 = vld [vmem:[%s662 + $0x17b0] sm:$0xf]
        %v2202 = vld [vmem:[%s662 + $0x17b4] sm:$0xf]
        %v2203 = vld [vmem:[%s662 + $0x17b8] sm:$0xf]
        %v2204 = vld [vmem:[%s662 + $0x17bc] sm:$0xf]
        %v2205 = vld [vmem:[%s662 + $0x17c0] sm:$0xf]
        %v2206 = vld [vmem:[%s662 + $0x17c4] sm:$0xf]
        %v2207 = vld [vmem:[%s662 + $0x17c8] sm:$0xf]
        %v2208 = vld [vmem:[%s662 + $0x17cc] sm:$0xf]
        %v2209 = vld [vmem:[%s662 + $0x17d0] sm:$0xf]
        %v2210 = vld [vmem:[%s662 + $0x17d4] sm:$0xf]
        %v2211 = vld [vmem:[%s662 + $0x17d8] sm:$0xf]
        %v2212 = vld [vmem:[%s662 + $0x17dc] sm:$0xf]
        %v2213 = vld [vmem:[%s662 + $0x17e0] sm:$0xf]
        %v2214 = vld [vmem:[%s662 + $0x17e4] sm:$0xf]
        %v2215 = vld [vmem:[%s662 + $0x17e8] sm:$0xf]
        %v2216 = vld [vmem:[%s662 + $0x17ec] sm:$0xf]
        %v2217 = vld [vmem:[%s662 + $0x17f0] sm:$0xf]
        %v2218 = vld [vmem:[%s662 + $0x17f4] sm:$0xf]
        %v2219 = vld [vmem:[%s662 + $0x17f8] sm:$0xf]
        %v2220 = vld [vmem:[%s662 + $0x17fc] sm:$0xf]
        %v2221 = vld [vmem:[%s662 + $0x1800] sm:$0xf]
        %v2222 = vld [vmem:[%s662 + $0x1804] sm:$0xf]
        %v2223 = vld [vmem:[%s662 + $0x1808] sm:$0xf]
        %v2224 = vld [vmem:[%s662 + $0x180c] sm:$0xf]
        %v2225 = vld [vmem:[%s662 + $0x1810] sm:$0xf]
        %v2226 = vld [vmem:[%s662 + $0x1814] sm:$0xf]
        %v2227 = vld [vmem:[%s662 + $0x1818] sm:$0xf]
        %v2228 = vld [vmem:[%s662 + $0x181c] sm:$0xf]
        %v2229 = vld [vmem:[%s662 + $0x1820] sm:$0xf]
        %v2230 = vld [vmem:[%s662 + $0x1824] sm:$0xf]
        %v2231 = vld [vmem:[%s662 + $0x1828] sm:$0xf]
        %v2232 = vld [vmem:[%s662 + $0x182c] sm:$0xf]
        %v2233 = vld [vmem:[%s662 + $0x1830] sm:$0xf]
        %v2234 = vld [vmem:[%s662 + $0x1834] sm:$0xf]
        %v2235 = vld [vmem:[%s662 + $0x1838] sm:$0xf]
        %v2236 = vld [vmem:[%s662 + $0x183c] sm:$0xf]
        %v2237 = vld [vmem:[%s662 + $0x1840] sm:$0xf]
        %v2238 = vld [vmem:[%s662 + $0x1844] sm:$0xf]
        %v2239 = vld [vmem:[%s662 + $0x1848] sm:$0xf]
        %v2240 = vld [vmem:[%s662 + $0x184c] sm:$0xf]
        %v2241 = vld [vmem:[%s662 + $0x1850] sm:$0xf]
        %v2242 = vld [vmem:[%s662 + $0x1854] sm:$0xf]
        %v2243 = vld [vmem:[%s662 + $0x1858] sm:$0xf]
        %v2244 = vld [vmem:[%s662 + $0x185c] sm:$0xf]
        %v2245 = vld [vmem:[%s662 + $0x1860] sm:$0xf]
        %v2246 = vld [vmem:[%s662 + $0x1864] sm:$0xf]
        %v2247 = vld [vmem:[%s662 + $0x1868] sm:$0xf]
        %v2248 = vld [vmem:[%s662 + $0x186c] sm:$0xf]
        %v2249 = vld [vmem:[%s662 + $0x1870] sm:$0xf]
        %v2250 = vld [vmem:[%s662 + $0x1874] sm:$0xf]
        %v2251 = vld [vmem:[%s662 + $0x1878] sm:$0xf]
        %v2252 = vld [vmem:[%s662 + $0x187c] sm:$0xf]
        %v2266 = vcombine.high %v672, %v672
        %v2268 = vunpack.c.l.s4 1966171168
        %v2269 = vunpack.c.0.s8 %v2268
        %v2270 = vlaneseq
        %v2271 = vshrl.u32 %v2270, 7
        %v2272 = vsub.s32 %v2269, %v2271
        %v2273 = vrot.slane %v672, %v2272
        %v2275 = vunpack.c.l.s4 1966171168
        %v2276 = vunpack.c.0.s8 %v2275
        %v2277 = vlaneseq
        %v2278 = vshrl.u32 %v2277, 7
        %v2279 = vsub.s32 %v2276, %v2278
        %v2280 = vrot.slane %v2266, %v2279
        %v2281 = vcombine.high %v2273, %v2273
        %v2282 = vcombine.high %v2280, %v2280
        %v2284 = vunpack.c.l.s4 1966171168
        %v2285 = vunpack.c.0.s8 %v2284
        %v2286 = vlaneseq
        %v2287 = vshrl.u32 %v2286, 7
        %v2288 = vsub.s32 %v2285, %v2287
        %v2289 = vrot.slane %v2273, %v2288
        %v2291 = vunpack.c.l.s4 1966171168
        %v2292 = vunpack.c.0.s8 %v2291
        %v2293 = vlaneseq
        %v2294 = vshrl.u32 %v2293, 7
        %v2295 = vsub.s32 %v2292, %v2294
        %v2296 = vrot.slane %v2280, %v2295
        %v2298 = vunpack.c.l.s4 1966171168
        %v2299 = vunpack.c.0.s8 %v2298
        %v2300 = vlaneseq
        %v2301 = vshrl.u32 %v2300, 7
        %v2302 = vsub.s32 %v2299, %v2301
        %v2303 = vrot.slane %v2281, %v2302
        %v2305 = vunpack.c.l.s4 1966171168
        %v2306 = vunpack.c.0.s8 %v2305
        %v2307 = vlaneseq
        %v2308 = vshrl.u32 %v2307, 7
        %v2309 = vsub.s32 %v2306, %v2308
        %v2310 = vrot.slane %v2282, %v2309
        %v2311 = vcombine.high %v2289, %v2289
        %v2312 = vcombine.high %v2296, %v2296
        %v2313 = vcombine.high %v2303, %v2303
        %v2314 = vcombine.high %v2310, %v2310
        %v2315 = vcombine.high %v673, %v673
        %v2317 = vunpack.c.l.s4 1966171168
        %v2318 = vunpack.c.0.s8 %v2317
        %v2319 = vlaneseq
        %v2320 = vshrl.u32 %v2319, 7
        %v2321 = vsub.s32 %v2318, %v2320
        %v2322 = vrot.slane %v673, %v2321
        %v2324 = vunpack.c.l.s4 1966171168
        %v2325 = vunpack.c.0.s8 %v2324
        %v2326 = vlaneseq
        %v2327 = vshrl.u32 %v2326, 7
        %v2328 = vsub.s32 %v2325, %v2327
        %v2329 = vrot.slane %v2315, %v2328
        %v2330 = vcombine.high %v2322, %v2322
        %v2331 = vcombine.high %v2329, %v2329
        %v2333 = vunpack.c.l.s4 1966171168
        %v2334 = vunpack.c.0.s8 %v2333
        %v2335 = vlaneseq
        %v2336 = vshrl.u32 %v2335, 7
        %v2337 = vsub.s32 %v2334, %v2336
        %v2338 = vrot.slane %v2322, %v2337
        %v2340 = vunpack.c.l.s4 1966171168
        %v2341 = vunpack.c.0.s8 %v2340
        %v2342 = vlaneseq
        %v2343 = vshrl.u32 %v2342, 7
        %v2344 = vsub.s32 %v2341, %v2343
        %v2345 = vrot.slane %v2329, %v2344
        %v2347 = vunpack.c.l.s4 1966171168
        %v2348 = vunpack.c.0.s8 %v2347
        %v2349 = vlaneseq
        %v2350 = vshrl.u32 %v2349, 7
        %v2351 = vsub.s32 %v2348, %v2350
        %v2352 = vrot.slane %v2330, %v2351
        %v2354 = vunpack.c.l.s4 1966171168
        %v2355 = vunpack.c.0.s8 %v2354
        %v2356 = vlaneseq
        %v2357 = vshrl.u32 %v2356, 7
        %v2358 = vsub.s32 %v2355, %v2357
        %v2359 = vrot.slane %v2331, %v2358
        %v2360 = vcombine.high %v2338, %v2338
        %v2361 = vcombine.high %v2345, %v2345
        %v2362 = vcombine.high %v2352, %v2352
        %v2363 = vcombine.high %v2359, %v2359
        %v2364 = vcombine.high %v674, %v674
        %v2366 = vunpack.c.l.s4 1966171168
        %v2367 = vunpack.c.0.s8 %v2366
        %v2368 = vlaneseq
        %v2369 = vshrl.u32 %v2368, 7
        %v2370 = vsub.s32 %v2367, %v2369
        %v2371 = vrot.slane %v674, %v2370
        %v2373 = vunpack.c.l.s4 1966171168
        %v2374 = vunpack.c.0.s8 %v2373
        %v2375 = vlaneseq
        %v2376 = vshrl.u32 %v2375, 7
        %v2377 = vsub.s32 %v2374, %v2376
        %v2378 = vrot.slane %v2364, %v2377
        %v2379 = vcombine.high %v2371, %v2371
        %v2380 = vcombine.high %v2378, %v2378
        %v2382 = vunpack.c.l.s4 1966171168
        %v2383 = vunpack.c.0.s8 %v2382
        %v2384 = vlaneseq
        %v2385 = vshrl.u32 %v2384, 7
        %v2386 = vsub.s32 %v2383, %v2385
        %v2387 = vrot.slane %v2371, %v2386
        %v2389 = vunpack.c.l.s4 1966171168
        %v2390 = vunpack.c.0.s8 %v2389
        %v2391 = vlaneseq
        %v2392 = vshrl.u32 %v2391, 7
        %v2393 = vsub.s32 %v2390, %v2392
        %v2394 = vrot.slane %v2378, %v2393
        %v2396 = vunpack.c.l.s4 1966171168
        %v2397 = vunpack.c.0.s8 %v2396
        %v2398 = vlaneseq
        %v2399 = vshrl.u32 %v2398, 7
        %v2400 = vsub.s32 %v2397, %v2399
        %v2401 = vrot.slane %v2379, %v2400
        %v2403 = vunpack.c.l.s4 1966171168
        %v2404 = vunpack.c.0.s8 %v2403
        %v2405 = vlaneseq
        %v2406 = vshrl.u32 %v2405, 7
        %v2407 = vsub.s32 %v2404, %v2406
        %v2408 = vrot.slane %v2380, %v2407
        %v2409 = vcombine.high %v2387, %v2387
        %v2410 = vcombine.high %v2394, %v2394
        %v2411 = vcombine.high %v2401, %v2401
        %v2412 = vcombine.high %v2408, %v2408
        %v2413 = vcombine.high %v675, %v675
        %v2415 = vunpack.c.l.s4 1966171168
        %v2416 = vunpack.c.0.s8 %v2415
        %v2417 = vlaneseq
        %v2418 = vshrl.u32 %v2417, 7
        %v2419 = vsub.s32 %v2416, %v2418
        %v2420 = vrot.slane %v675, %v2419
        %v2422 = vunpack.c.l.s4 1966171168
        %v2423 = vunpack.c.0.s8 %v2422
        %v2424 = vlaneseq
        %v2425 = vshrl.u32 %v2424, 7
        %v2426 = vsub.s32 %v2423, %v2425
        %v2427 = vrot.slane %v2413, %v2426
        %v2428 = vcombine.high %v2420, %v2420
        %v2429 = vcombine.high %v2427, %v2427
        %v2431 = vunpack.c.l.s4 1966171168
        %v2432 = vunpack.c.0.s8 %v2431
        %v2433 = vlaneseq
        %v2434 = vshrl.u32 %v2433, 7
        %v2435 = vsub.s32 %v2432, %v2434
        %v2436 = vrot.slane %v2420, %v2435
        %v2438 = vunpack.c.l.s4 1966171168
        %v2439 = vunpack.c.0.s8 %v2438
        %v2440 = vlaneseq
        %v2441 = vshrl.u32 %v2440, 7
        %v2442 = vsub.s32 %v2439, %v2441
        %v2443 = vrot.slane %v2427, %v2442
        %v2445 = vunpack.c.l.s4 1966171168
        %v2446 = vunpack.c.0.s8 %v2445
        %v2447 = vlaneseq
        %v2448 = vshrl.u32 %v2447, 7
        %v2449 = vsub.s32 %v2446, %v2448
        %v2450 = vrot.slane %v2428, %v2449
        %v2452 = vunpack.c.l.s4 1966171168
        %v2453 = vunpack.c.0.s8 %v2452
        %v2454 = vlaneseq
        %v2455 = vshrl.u32 %v2454, 7
        %v2456 = vsub.s32 %v2453, %v2455
        %v2457 = vrot.slane %v2429, %v2456
        %v2458 = vcombine.high %v2436, %v2436
        %v2459 = vcombine.high %v2443, %v2443
        %v2460 = vcombine.high %v2450, %v2450
        %v2461 = vcombine.high %v2457, %v2457
        %v2462 = vcombine.high %v676, %v676
        %v2464 = vunpack.c.l.s4 1966171168
        %v2465 = vunpack.c.0.s8 %v2464
        %v2466 = vlaneseq
        %v2467 = vshrl.u32 %v2466, 7
        %v2468 = vsub.s32 %v2465, %v2467
        %v2469 = vrot.slane %v676, %v2468
        %v2471 = vunpack.c.l.s4 1966171168
        %v2472 = vunpack.c.0.s8 %v2471
        %v2473 = vlaneseq
        %v2474 = vshrl.u32 %v2473, 7
        %v2475 = vsub.s32 %v2472, %v2474
        %v2476 = vrot.slane %v2462, %v2475
        %v2477 = vcombine.high %v2469, %v2469
        %v2478 = vcombine.high %v2476, %v2476
        %v2480 = vunpack.c.l.s4 1966171168
        %v2481 = vunpack.c.0.s8 %v2480
        %v2482 = vlaneseq
        %v2483 = vshrl.u32 %v2482, 7
        %v2484 = vsub.s32 %v2481, %v2483
        %v2485 = vrot.slane %v2469, %v2484
        %v2487 = vunpack.c.l.s4 1966171168
        %v2488 = vunpack.c.0.s8 %v2487
        %v2489 = vlaneseq
        %v2490 = vshrl.u32 %v2489, 7
        %v2491 = vsub.s32 %v2488, %v2490
        %v2492 = vrot.slane %v2476, %v2491
        %v2494 = vunpack.c.l.s4 1966171168
        %v2495 = vunpack.c.0.s8 %v2494
        %v2496 = vlaneseq
        %v2497 = vshrl.u32 %v2496, 7
        %v2498 = vsub.s32 %v2495, %v2497
        %v2499 = vrot.slane %v2477, %v2498
        %v2501 = vunpack.c.l.s4 1966171168
        %v2502 = vunpack.c.0.s8 %v2501
        %v2503 = vlaneseq
        %v2504 = vshrl.u32 %v2503, 7
        %v2505 = vsub.s32 %v2502, %v2504
        %v2506 = vrot.slane %v2478, %v2505
        %v2507 = vcombine.high %v2485, %v2485
        %v2508 = vcombine.high %v2492, %v2492
        %v2509 = vcombine.high %v2499, %v2499
        %v2510 = vcombine.high %v2506, %v2506
        %v2511 = vcombine.high %v677, %v677
        %v2513 = vunpack.c.l.s4 1966171168
        %v2514 = vunpack.c.0.s8 %v2513
        %v2515 = vlaneseq
        %v2516 = vshrl.u32 %v2515, 7
        %v2517 = vsub.s32 %v2514, %v2516
        %v2518 = vrot.slane %v677, %v2517
        %v2520 = vunpack.c.l.s4 1966171168
        %v2521 = vunpack.c.0.s8 %v2520
        %v2522 = vlaneseq
        %v2523 = vshrl.u32 %v2522, 7
        %v2524 = vsub.s32 %v2521, %v2523
        %v2525 = vrot.slane %v2511, %v2524
        %v2526 = vcombine.high %v2518, %v2518
        %v2527 = vcombine.high %v2525, %v2525
        %v2529 = vunpack.c.l.s4 1966171168
        %v2530 = vunpack.c.0.s8 %v2529
        %v2531 = vlaneseq
        %v2532 = vshrl.u32 %v2531, 7
        %v2533 = vsub.s32 %v2530, %v2532
        %v2534 = vrot.slane %v2518, %v2533
        %v2536 = vunpack.c.l.s4 1966171168
        %v2537 = vunpack.c.0.s8 %v2536
        %v2538 = vlaneseq
        %v2539 = vshrl.u32 %v2538, 7
        %v2540 = vsub.s32 %v2537, %v2539
        %v2541 = vrot.slane %v2525, %v2540
        %v2543 = vunpack.c.l.s4 1966171168
        %v2544 = vunpack.c.0.s8 %v2543
        %v2545 = vlaneseq
        %v2546 = vshrl.u32 %v2545, 7
        %v2547 = vsub.s32 %v2544, %v2546
        %v2548 = vrot.slane %v2526, %v2547
        %v2550 = vunpack.c.l.s4 1966171168
        %v2551 = vunpack.c.0.s8 %v2550
        %v2552 = vlaneseq
        %v2553 = vshrl.u32 %v2552, 7
        %v2554 = vsub.s32 %v2551, %v2553
        %v2555 = vrot.slane %v2527, %v2554
        %v2556 = vcombine.high %v2534, %v2534
        %v2557 = vcombine.high %v2541, %v2541
        %v2558 = vcombine.high %v2548, %v2548
        %v2559 = vcombine.high %v2555, %v2555
        %v2560 = vcombine.high %v678, %v678
        %v2562 = vunpack.c.l.s4 1966171168
        %v2563 = vunpack.c.0.s8 %v2562
        %v2564 = vlaneseq
        %v2565 = vshrl.u32 %v2564, 7
        %v2566 = vsub.s32 %v2563, %v2565
        %v2567 = vrot.slane %v678, %v2566
        %v2569 = vunpack.c.l.s4 1966171168
        %v2570 = vunpack.c.0.s8 %v2569
        %v2571 = vlaneseq
        %v2572 = vshrl.u32 %v2571, 7
        %v2573 = vsub.s32 %v2570, %v2572
        %v2574 = vrot.slane %v2560, %v2573
        %v2575 = vcombine.high %v2567, %v2567
        %v2576 = vcombine.high %v2574, %v2574
        %v2578 = vunpack.c.l.s4 1966171168
        %v2579 = vunpack.c.0.s8 %v2578
        %v2580 = vlaneseq
        %v2581 = vshrl.u32 %v2580, 7
        %v2582 = vsub.s32 %v2579, %v2581
        %v2583 = vrot.slane %v2567, %v2582
        %v2585 = vunpack.c.l.s4 1966171168
        %v2586 = vunpack.c.0.s8 %v2585
        %v2587 = vlaneseq
        %v2588 = vshrl.u32 %v2587, 7
        %v2589 = vsub.s32 %v2586, %v2588
        %v2590 = vrot.slane %v2574, %v2589
        %v2592 = vunpack.c.l.s4 1966171168
        %v2593 = vunpack.c.0.s8 %v2592
        %v2594 = vlaneseq
        %v2595 = vshrl.u32 %v2594, 7
        %v2596 = vsub.s32 %v2593, %v2595
        %v2597 = vrot.slane %v2575, %v2596
        %v2599 = vunpack.c.l.s4 1966171168
        %v2600 = vunpack.c.0.s8 %v2599
        %v2601 = vlaneseq
        %v2602 = vshrl.u32 %v2601, 7
        %v2603 = vsub.s32 %v2600, %v2602
        %v2604 = vrot.slane %v2576, %v2603
        %v2605 = vcombine.high %v2583, %v2583
        %v2606 = vcombine.high %v2590, %v2590
        %v2607 = vcombine.high %v2597, %v2597
        %v2608 = vcombine.high %v2604, %v2604
        %v2609 = vcombine.high %v679, %v679
        %v2611 = vunpack.c.l.s4 1966171168
        %v2612 = vunpack.c.0.s8 %v2611
        %v2613 = vlaneseq
        %v2614 = vshrl.u32 %v2613, 7
        %v2615 = vsub.s32 %v2612, %v2614
        %v2616 = vrot.slane %v679, %v2615
        %v2618 = vunpack.c.l.s4 1966171168
        %v2619 = vunpack.c.0.s8 %v2618
        %v2620 = vlaneseq
        %v2621 = vshrl.u32 %v2620, 7
        %v2622 = vsub.s32 %v2619, %v2621
        %v2623 = vrot.slane %v2609, %v2622
        %v2624 = vcombine.high %v2616, %v2616
        %v2625 = vcombine.high %v2623, %v2623
        %v2627 = vunpack.c.l.s4 1966171168
        %v2628 = vunpack.c.0.s8 %v2627
        %v2629 = vlaneseq
        %v2630 = vshrl.u32 %v2629, 7
        %v2631 = vsub.s32 %v2628, %v2630
        %v2632 = vrot.slane %v2616, %v2631
        %v2634 = vunpack.c.l.s4 1966171168
        %v2635 = vunpack.c.0.s8 %v2634
        %v2636 = vlaneseq
        %v2637 = vshrl.u32 %v2636, 7
        %v2638 = vsub.s32 %v2635, %v2637
        %v2639 = vrot.slane %v2623, %v2638
        %v2641 = vunpack.c.l.s4 1966171168
        %v2642 = vunpack.c.0.s8 %v2641
        %v2643 = vlaneseq
        %v2644 = vshrl.u32 %v2643, 7
        %v2645 = vsub.s32 %v2642, %v2644
        %v2646 = vrot.slane %v2624, %v2645
        %v2648 = vunpack.c.l.s4 1966171168
        %v2649 = vunpack.c.0.s8 %v2648
        %v2650 = vlaneseq
        %v2651 = vshrl.u32 %v2650, 7
        %v2652 = vsub.s32 %v2649, %v2651
        %v2653 = vrot.slane %v2625, %v2652
        %v2654 = vcombine.high %v2632, %v2632
        %v2655 = vcombine.high %v2639, %v2639
        %v2656 = vcombine.high %v2646, %v2646
        %v2657 = vcombine.high %v2653, %v2653
        %v2658 = vcombine.high %v680, %v680
        %v2660 = vunpack.c.l.s4 1966171168
        %v2661 = vunpack.c.0.s8 %v2660
        %v2662 = vlaneseq
        %v2663 = vshrl.u32 %v2662, 7
        %v2664 = vsub.s32 %v2661, %v2663
        %v2665 = vrot.slane %v680, %v2664
        %v2667 = vunpack.c.l.s4 1966171168
        %v2668 = vunpack.c.0.s8 %v2667
        %v2669 = vlaneseq
        %v2670 = vshrl.u32 %v2669, 7
        %v2671 = vsub.s32 %v2668, %v2670
        %v2672 = vrot.slane %v2658, %v2671
        %v2673 = vcombine.high %v2665, %v2665
        %v2674 = vcombine.high %v2672, %v2672
        %v2676 = vunpack.c.l.s4 1966171168
        %v2677 = vunpack.c.0.s8 %v2676
        %v2678 = vlaneseq
        %v2679 = vshrl.u32 %v2678, 7
        %v2680 = vsub.s32 %v2677, %v2679
        %v2681 = vrot.slane %v2665, %v2680
        %v2683 = vunpack.c.l.s4 1966171168
        %v2684 = vunpack.c.0.s8 %v2683
        %v2685 = vlaneseq
        %v2686 = vshrl.u32 %v2685, 7
        %v2687 = vsub.s32 %v2684, %v2686
        %v2688 = vrot.slane %v2672, %v2687
        %v2690 = vunpack.c.l.s4 1966171168
        %v2691 = vunpack.c.0.s8 %v2690
        %v2692 = vlaneseq
        %v2693 = vshrl.u32 %v2692, 7
        %v2694 = vsub.s32 %v2691, %v2693
        %v2695 = vrot.slane %v2673, %v2694
        %v2697 = vunpack.c.l.s4 1966171168
        %v2698 = vunpack.c.0.s8 %v2697
        %v2699 = vlaneseq
        %v2700 = vshrl.u32 %v2699, 7
        %v2701 = vsub.s32 %v2698, %v2700
        %v2702 = vrot.slane %v2674, %v2701
        %v2703 = vcombine.high %v2681, %v2681
        %v2704 = vcombine.high %v2688, %v2688
        %v2705 = vcombine.high %v2695, %v2695
        %v2706 = vcombine.high %v2702, %v2702
        %v2707 = vcombine.high %v681, %v681
        %v2709 = vunpack.c.l.s4 1966171168
        %v2710 = vunpack.c.0.s8 %v2709
        %v2711 = vlaneseq
        %v2712 = vshrl.u32 %v2711, 7
        %v2713 = vsub.s32 %v2710, %v2712
        %v2714 = vrot.slane %v681, %v2713
        %v2716 = vunpack.c.l.s4 1966171168
        %v2717 = vunpack.c.0.s8 %v2716
        %v2718 = vlaneseq
        %v2719 = vshrl.u32 %v2718, 7
        %v2720 = vsub.s32 %v2717, %v2719
        %v2721 = vrot.slane %v2707, %v2720
        %v2722 = vcombine.high %v2714, %v2714
        %v2723 = vcombine.high %v2721, %v2721
        %v2725 = vunpack.c.l.s4 1966171168
        %v2726 = vunpack.c.0.s8 %v2725
        %v2727 = vlaneseq
        %v2728 = vshrl.u32 %v2727, 7
        %v2729 = vsub.s32 %v2726, %v2728
        %v2730 = vrot.slane %v2714, %v2729
        %v2732 = vunpack.c.l.s4 1966171168
        %v2733 = vunpack.c.0.s8 %v2732
        %v2734 = vlaneseq
        %v2735 = vshrl.u32 %v2734, 7
        %v2736 = vsub.s32 %v2733, %v2735
        %v2737 = vrot.slane %v2721, %v2736
        %v2739 = vunpack.c.l.s4 1966171168
        %v2740 = vunpack.c.0.s8 %v2739
        %v2741 = vlaneseq
        %v2742 = vshrl.u32 %v2741, 7
        %v2743 = vsub.s32 %v2740, %v2742
        %v2744 = vrot.slane %v2722, %v2743
        %v2746 = vunpack.c.l.s4 1966171168
        %v2747 = vunpack.c.0.s8 %v2746
        %v2748 = vlaneseq
        %v2749 = vshrl.u32 %v2748, 7
        %v2750 = vsub.s32 %v2747, %v2749
        %v2751 = vrot.slane %v2723, %v2750
        %v2752 = vcombine.high %v2730, %v2730
        %v2753 = vcombine.high %v2737, %v2737
        %v2754 = vcombine.high %v2744, %v2744
        %v2755 = vcombine.high %v2751, %v2751
        %v2756 = vcombine.high %v682, %v682
        %v2758 = vunpack.c.l.s4 1966171168
        %v2759 = vunpack.c.0.s8 %v2758
        %v2760 = vlaneseq
        %v2761 = vshrl.u32 %v2760, 7
        %v2762 = vsub.s32 %v2759, %v2761
        %v2763 = vrot.slane %v682, %v2762
        %v2765 = vunpack.c.l.s4 1966171168
        %v2766 = vunpack.c.0.s8 %v2765
        %v2767 = vlaneseq
        %v2768 = vshrl.u32 %v2767, 7
        %v2769 = vsub.s32 %v2766, %v2768
        %v2770 = vrot.slane %v2756, %v2769
        %v2771 = vcombine.high %v2763, %v2763
        %v2772 = vcombine.high %v2770, %v2770
        %v2774 = vunpack.c.l.s4 1966171168
        %v2775 = vunpack.c.0.s8 %v2774
        %v2776 = vlaneseq
        %v2777 = vshrl.u32 %v2776, 7
        %v2778 = vsub.s32 %v2775, %v2777
        %v2779 = vrot.slane %v2763, %v2778
        %v2781 = vunpack.c.l.s4 1966171168
        %v2782 = vunpack.c.0.s8 %v2781
        %v2783 = vlaneseq
        %v2784 = vshrl.u32 %v2783, 7
        %v2785 = vsub.s32 %v2782, %v2784
        %v2786 = vrot.slane %v2770, %v2785
        %v2788 = vunpack.c.l.s4 1966171168
        %v2789 = vunpack.c.0.s8 %v2788
        %v2790 = vlaneseq
        %v2791 = vshrl.u32 %v2790, 7
        %v2792 = vsub.s32 %v2789, %v2791
        %v2793 = vrot.slane %v2771, %v2792
        %v2795 = vunpack.c.l.s4 1966171168
        %v2796 = vunpack.c.0.s8 %v2795
        %v2797 = vlaneseq
        %v2798 = vshrl.u32 %v2797, 7
        %v2799 = vsub.s32 %v2796, %v2798
        %v2800 = vrot.slane %v2772, %v2799
        %v2801 = vcombine.high %v2779, %v2779
        %v2802 = vcombine.high %v2786, %v2786
        %v2803 = vcombine.high %v2793, %v2793
        %v2804 = vcombine.high %v2800, %v2800
        %v2805 = vcombine.high %v683, %v683
        %v2807 = vunpack.c.l.s4 1966171168
        %v2808 = vunpack.c.0.s8 %v2807
        %v2809 = vlaneseq
        %v2810 = vshrl.u32 %v2809, 7
        %v2811 = vsub.s32 %v2808, %v2810
        %v2812 = vrot.slane %v683, %v2811
        %v2814 = vunpack.c.l.s4 1966171168
        %v2815 = vunpack.c.0.s8 %v2814
        %v2816 = vlaneseq
        %v2817 = vshrl.u32 %v2816, 7
        %v2818 = vsub.s32 %v2815, %v2817
        %v2819 = vrot.slane %v2805, %v2818
        %v2820 = vcombine.high %v2812, %v2812
        %v2821 = vcombine.high %v2819, %v2819
        %v2823 = vunpack.c.l.s4 1966171168
        %v2824 = vunpack.c.0.s8 %v2823
        %v2825 = vlaneseq
        %v2826 = vshrl.u32 %v2825, 7
        %v2827 = vsub.s32 %v2824, %v2826
        %v2828 = vrot.slane %v2812, %v2827
        %v2830 = vunpack.c.l.s4 1966171168
        %v2831 = vunpack.c.0.s8 %v2830
        %v2832 = vlaneseq
        %v2833 = vshrl.u32 %v2832, 7
        %v2834 = vsub.s32 %v2831, %v2833
        %v2835 = vrot.slane %v2819, %v2834
        %v2837 = vunpack.c.l.s4 1966171168
        %v2838 = vunpack.c.0.s8 %v2837
        %v2839 = vlaneseq
        %v2840 = vshrl.u32 %v2839, 7
        %v2841 = vsub.s32 %v2838, %v2840
        %v2842 = vrot.slane %v2820, %v2841
        %v2844 = vunpack.c.l.s4 1966171168
        %v2845 = vunpack.c.0.s8 %v2844
        %v2846 = vlaneseq
        %v2847 = vshrl.u32 %v2846, 7
        %v2848 = vsub.s32 %v2845, %v2847
        %v2849 = vrot.slane %v2821, %v2848
        %v2850 = vcombine.high %v2828, %v2828
        %v2851 = vcombine.high %v2835, %v2835
        %v2852 = vcombine.high %v2842, %v2842
        %v2853 = vcombine.high %v2849, %v2849
        %v2855 = vunpack.c.l.s4 1966171168
        %v2856 = vunpack.c.0.s8 %v2855
        %v2857 = vlaneseq
        %v2858 = vshrl.u32 %v2857, 7
        %v2859 = vsub.s32 %v2856, %v2858
        %v2860 = vrot.slane %v684, %v2859
        %v2861 = vcombine.high %v2860, %v2860
        %v2863 = vunpack.c.l.s4 1966171168
        %v2864 = vunpack.c.0.s8 %v2863
        %v2865 = vlaneseq
        %v2866 = vshrl.u32 %v2865, 7
        %v2867 = vsub.s32 %v2864, %v2866
        %v2868 = vrot.slane %v2860, %v2867
        %v2870 = vunpack.c.l.s4 1966171168
        %v2871 = vunpack.c.0.s8 %v2870
        %v2872 = vlaneseq
        %v2873 = vshrl.u32 %v2872, 7
        %v2874 = vsub.s32 %v2871, %v2873
        %v2875 = vrot.slane %v2861, %v2874
        %v4542 = vunpack.c.l.b16 %v685
        %v4543 = vunpack.c.l.b16 %v686
        %v4544 = vunpack.c.l.b16 %v687
        %v4545 = vunpack.c.l.b16 %v688
        %v4546 = vunpack.c.l.b16 %v689
        %v4547 = vunpack.c.l.b16 %v690
        %v4548 = vunpack.c.l.b16 %v691
        %v4549 = vunpack.c.l.b16 %v692
        %v4550 = vunpack.c.l.b16 %v693
        %v4551 = vunpack.c.l.b16 %v694
        %v4552 = vunpack.c.l.b16 %v695
        %v4553 = vunpack.c.l.b16 %v696
        %v4554 = vunpack.c.l.b16 %v697
        %v4555 = vunpack.c.l.b16 %v698
        %v4556 = vunpack.c.l.b16 %v699
        %v4557 = vunpack.c.l.b16 %v700
        %v4558 = vunpack.c.l.b16 %v701
        %v4559 = vunpack.c.l.b16 %v702
        %v4560 = vunpack.c.l.b16 %v703
        %v4561 = vunpack.c.l.b16 %v704
        %v4562 = vunpack.c.l.b16 %v705
        %v4563 = vunpack.c.l.b16 %v706
        %v4564 = vunpack.c.l.b16 %v707
        %v4565 = vunpack.c.l.b16 %v708
        %v4566 = vunpack.c.l.b16 %v709
        %v4567 = vunpack.c.l.b16 %v710
        %v4568 = vunpack.c.l.b16 %v711
        %v4569 = vunpack.c.l.b16 %v712
        %v4570 = vunpack.c.l.b16 %v713
        %v4571 = vunpack.c.l.b16 %v714
        %v4572 = vunpack.c.l.b16 %v715
        %v4573 = vunpack.c.l.b16 %v716
        %v4574 = vunpack.c.l.b16 %v717
        %v4575 = vunpack.c.l.b16 %v718
        %v4576 = vunpack.c.l.b16 %v719
        %v4577 = vunpack.c.l.b16 %v720
        %v4578 = vunpack.c.l.b16 %v721
        %v4579 = vunpack.c.l.b16 %v722
        %v4580 = vunpack.c.l.b16 %v723
        %v4581 = vunpack.c.l.b16 %v724
        %v4582 = vunpack.c.l.b16 %v725
        %v4583 = vunpack.c.l.b16 %v726
        %v4584 = vunpack.c.l.b16 %v727
        %v4585 = vunpack.c.l.b16 %v728
        %v4586 = vunpack.c.l.b16 %v729
        %v4587 = vunpack.c.l.b16 %v730
        %v4588 = vunpack.c.l.b16 %v731
        %v4589 = vunpack.c.l.b16 %v732
        %v4590 = vunpack.c.l.b16 %v733
        %v4591 = vunpack.c.l.b16 %v734
        %v4592 = vunpack.c.l.b16 %v735
        %v4593 = vunpack.c.l.b16 %v736
        %v4594 = vunpack.c.l.b16 %v737
        %v4595 = vunpack.c.l.b16 %v738
        %v4596 = vunpack.c.l.b16 %v739
        %v4597 = vunpack.c.l.b16 %v740
        %v4598 = vunpack.c.l.b16 %v741
        %v4599 = vunpack.c.l.b16 %v742
        %v4600 = vunpack.c.l.b16 %v743
        %v4601 = vunpack.c.l.b16 %v744
        %v4602 = vunpack.c.l.b16 %v745
        %v4603 = vunpack.c.l.b16 %v746
        %v4604 = vunpack.c.l.b16 %v747
        %v4605 = vunpack.c.l.b16 %v748
        %v4606 = vunpack.c.l.b16 %v749
        %v4607 = vunpack.c.l.b16 %v750
        %v4608 = vunpack.c.l.b16 %v751
        %v4609 = vunpack.c.l.b16 %v752
        %v4610 = vunpack.c.l.b16 %v753
        %v4611 = vunpack.c.l.b16 %v754
        %v4612 = vunpack.c.l.b16 %v755
        %v4613 = vunpack.c.l.b16 %v756
        %v4614 = vunpack.c.l.b16 %v757
        %v4615 = vunpack.c.l.b16 %v758
        %v4616 = vunpack.c.l.b16 %v759
        %v4617 = vunpack.c.l.b16 %v760
        %v4618 = vunpack.c.l.b16 %v761
        %v4619 = vunpack.c.l.b16 %v762
        %v4620 = vunpack.c.l.b16 %v763
        %v4621 = vunpack.c.l.b16 %v764
        %v4622 = vunpack.c.l.b16 %v765
        %v4623 = vunpack.c.l.b16 %v766
        %v4624 = vunpack.c.l.b16 %v767
        %v4625 = vunpack.c.l.b16 %v768
        %v4626 = vunpack.c.l.b16 %v769
        %v4627 = vunpack.c.l.b16 %v770
        %v4628 = vunpack.c.l.b16 %v771
        %v4629 = vunpack.c.l.b16 %v772
        %v4630 = vunpack.c.l.b16 %v773
        %v4631 = vunpack.c.l.b16 %v774
        %v4632 = vunpack.c.l.b16 %v775
        %v4633 = vunpack.c.l.b16 %v776
        %v4634 = vunpack.c.l.b16 %v777
        %v4635 = vunpack.c.l.b16 %v778
        %v4636 = vunpack.c.l.b16 %v779
        %v4637 = vunpack.c.l.b16 %v780
        %v4638 = vunpack.c.l.b16 %v781
        %v4639 = vunpack.c.l.b16 %v782
        %v4640 = vunpack.c.l.b16 %v783
        %v4641 = vunpack.c.l.b16 %v784
        %v4642 = vunpack.c.l.b16 %v785
        %v4643 = vunpack.c.l.b16 %v786
        %v4644 = vunpack.c.l.b16 %v787
        %v4645 = vunpack.c.l.b16 %v788
        %v4646 = vunpack.c.l.b16 %v789
        %v4647 = vunpack.c.l.b16 %v790
        %v4648 = vunpack.c.l.b16 %v791
        %v4649 = vunpack.c.l.b16 %v792
        %v4650 = vunpack.c.l.b16 %v793
        %v4651 = vunpack.c.l.b16 %v794
        %v4652 = vunpack.c.l.b16 %v795
        %v4653 = vunpack.c.l.b16 %v796
        %v4654 = vunpack.c.l.b16 %v797
        %v4655 = vunpack.c.l.b16 %v798
        %v4656 = vunpack.c.l.b16 %v799
        %v4657 = vunpack.c.l.b16 %v800
        %v4658 = vunpack.c.l.b16 %v801
        %v4659 = vunpack.c.l.b16 %v802
        %v4660 = vunpack.c.l.b16 %v803
        %v4661 = vunpack.c.l.b16 %v804
        %v4662 = vunpack.c.l.b16 %v805
        %v4663 = vunpack.c.l.b16 %v806
        %v4664 = vunpack.c.l.b16 %v807
        %v4665 = vunpack.c.l.b16 %v808
        %v4666 = vunpack.c.l.b16 %v809
        %v4667 = vunpack.c.l.b16 %v810
        %v4668 = vunpack.c.l.b16 %v811
        %v4669 = vunpack.c.l.b16 %v812
        %v4670 = vunpack.c.l.b16 %v813
        %v4671 = vunpack.c.l.b16 %v814
        %v4672 = vunpack.c.l.b16 %v815
        %v4673 = vunpack.c.l.b16 %v816
        %v4674 = vunpack.c.l.b16 %v817
        %v4675 = vunpack.c.l.b16 %v818
        %v4676 = vunpack.c.l.b16 %v819
        %v4677 = vunpack.c.l.b16 %v820
        %v4678 = vunpack.c.l.b16 %v821
        %v4679 = vunpack.c.l.b16 %v822
        %v4680 = vunpack.c.l.b16 %v823
        %v4681 = vunpack.c.l.b16 %v824
        %v4682 = vunpack.c.l.b16 %v825
        %v4683 = vunpack.c.l.b16 %v826
        %v4684 = vunpack.c.l.b16 %v827
        %v4685 = vunpack.c.l.b16 %v828
        %v4686 = vunpack.c.l.b16 %v829
        %v4687 = vunpack.c.l.b16 %v830
        %v4688 = vunpack.c.l.b16 %v831
        %v4689 = vunpack.c.l.b16 %v832
        %v4690 = vunpack.c.l.b16 %v833
        %v4691 = vunpack.c.l.b16 %v834
        %v4692 = vunpack.c.l.b16 %v835
        %v4693 = vunpack.c.l.b16 %v836
        %v4694 = vunpack.c.l.b16 %v837
        %v4695 = vunpack.c.l.b16 %v838
        %v4696 = vunpack.c.l.b16 %v839
        %v4697 = vunpack.c.l.b16 %v840
        %v4698 = vunpack.c.l.b16 %v841
        %v4699 = vunpack.c.l.b16 %v842
        %v4700 = vunpack.c.l.b16 %v843
        %v4701 = vunpack.c.l.b16 %v844
        %v4702 = vunpack.c.l.b16 %v845
        %v4703 = vunpack.c.l.b16 %v846
        %v4704 = vunpack.c.l.b16 %v847
        %v4705 = vunpack.c.l.b16 %v848
        %v4706 = vunpack.c.l.b16 %v849
        %v4707 = vunpack.c.l.b16 %v850
        %v4708 = vunpack.c.l.b16 %v851
        %v4709 = vunpack.c.l.b16 %v852
        %v4710 = vunpack.c.l.b16 %v853
        %v4711 = vunpack.c.l.b16 %v854
        %v4712 = vunpack.c.l.b16 %v855
        %v4713 = vunpack.c.l.b16 %v856
        %v4714 = vunpack.c.l.b16 %v857
        %v4715 = vunpack.c.l.b16 %v858
        %v4716 = vunpack.c.l.b16 %v859
        %v4717 = vunpack.c.l.b16 %v860
        %v4718 = vunpack.c.l.b16 %v861
        %v4719 = vunpack.c.l.b16 %v862
        %v4720 = vunpack.c.l.b16 %v863
        %v4721 = vunpack.c.l.b16 %v864
        %v4722 = vunpack.c.l.b16 %v865
        %v4723 = vunpack.c.l.b16 %v866
        %v4724 = vunpack.c.l.b16 %v867
        %v4725 = vunpack.c.l.b16 %v868
        %v4726 = vunpack.c.l.b16 %v869
        %v4727 = vunpack.c.l.b16 %v870
        %v4728 = vunpack.c.l.b16 %v871
        %v4729 = vunpack.c.l.b16 %v872
        %v4730 = vunpack.c.l.b16 %v873
        %v4731 = vunpack.c.l.b16 %v874
        %v4732 = vunpack.c.l.b16 %v875
        %v4733 = vunpack.c.l.b16 %v876
        %v4734 = vunpack.c.l.b16 %v877
        %v4735 = vunpack.c.l.b16 %v878
        %v4736 = vunpack.c.l.b16 %v879
        %v4737 = vunpack.c.l.b16 %v880
        %v4738 = vunpack.c.l.b16 %v881
        %v4739 = vunpack.c.l.b16 %v882
        %v4740 = vunpack.c.l.b16 %v883
        %v4741 = vunpack.c.l.b16 %v884
        %v4742 = vunpack.c.l.b16 %v885
        %v4743 = vunpack.c.l.b16 %v886
        %v4744 = vunpack.c.l.b16 %v887
        %v4745 = vunpack.c.l.b16 %v888
        %v4746 = vunpack.c.l.b16 %v889
        %v4747 = vunpack.c.l.b16 %v890
        %v4748 = vunpack.c.l.b16 %v891
        %v4749 = vunpack.c.l.b16 %v892
        %v4750 = vunpack.c.l.b16 %v893
        %v4751 = vunpack.c.l.b16 %v894
        %v4752 = vunpack.c.l.b16 %v895
        %v4753 = vunpack.c.l.b16 %v896
        %v4754 = vunpack.c.l.b16 %v897
        %v4755 = vunpack.c.l.b16 %v898
        %v4756 = vunpack.c.l.b16 %v899
        %v4757 = vunpack.c.l.b16 %v900
        %v4758 = vunpack.c.l.b16 %v901
        %v4759 = vunpack.c.l.b16 %v902
        %v4760 = vunpack.c.l.b16 %v903
        %v4761 = vunpack.c.l.b16 %v904
        %v4762 = vunpack.c.l.b16 %v905
        %v4763 = vunpack.c.l.b16 %v906
        %v4764 = vunpack.c.l.b16 %v907
        %v4765 = vunpack.c.l.b16 %v908
        %v4766 = vunpack.c.l.b16 %v909
        %v4767 = vunpack.c.l.b16 %v910
        %v4768 = vunpack.c.l.b16 %v911
        %v4769 = vunpack.c.l.b16 %v912
        %v4770 = vunpack.c.l.b16 %v913
        %v4771 = vunpack.c.l.b16 %v914
        %v4772 = vunpack.c.l.b16 %v915
        %v4773 = vunpack.c.l.b16 %v916
        %v4774 = vunpack.c.l.b16 %v917
        %v4775 = vunpack.c.l.b16 %v918
        %v4776 = vunpack.c.l.b16 %v919
        %v4777 = vunpack.c.l.b16 %v920
        %v4778 = vunpack.c.l.b16 %v921
        %v4779 = vunpack.c.l.b16 %v922
        %v4780 = vunpack.c.l.b16 %v923
        %v4781 = vunpack.c.l.b16 %v924
        %v4782 = vunpack.c.l.b16 %v925
        %v4783 = vunpack.c.l.b16 %v926
        %v4784 = vunpack.c.l.b16 %v927
        %v4785 = vunpack.c.l.b16 %v928
        %v4786 = vunpack.c.l.b16 %v929
        %v4787 = vunpack.c.l.b16 %v930
        %v4788 = vunpack.c.l.b16 %v931
        %v4789 = vunpack.c.l.b16 %v932
        %v4790 = vunpack.c.l.b16 %v933
        %v4791 = vunpack.c.l.b16 %v934
        %v4792 = vunpack.c.l.b16 %v935
        %v4793 = vunpack.c.l.b16 %v936
        %v4794 = vunpack.c.l.b16 %v937
        %v4795 = vunpack.c.l.b16 %v938
        %v4796 = vunpack.c.l.b16 %v939
        %v4797 = vunpack.c.l.b16 %v940
        %v4798 = vunpack.c.l.b16 %v941
        %v4799 = vunpack.c.l.b16 %v942
        %v4800 = vunpack.c.l.b16 %v943
        %v4801 = vunpack.c.l.b16 %v944
        %v4802 = vunpack.c.l.b16 %v945
        %v4803 = vunpack.c.l.b16 %v946
        %v4804 = vunpack.c.l.b16 %v947
        %v4805 = vunpack.c.l.b16 %v948
        %v4806 = vunpack.c.l.b16 %v949
        %v4807 = vunpack.c.l.b16 %v950
        %v4808 = vunpack.c.l.b16 %v951
        %v4809 = vunpack.c.l.b16 %v952
        %v4810 = vunpack.c.l.b16 %v953
        %v4811 = vunpack.c.l.b16 %v954
        %v4812 = vunpack.c.l.b16 %v955
        %v4813 = vunpack.c.l.b16 %v956
        %v4814 = vunpack.c.l.b16 %v957
        %v4815 = vunpack.c.l.b16 %v958
        %v4816 = vunpack.c.l.b16 %v959
        %v4817 = vunpack.c.l.b16 %v960
        %v4818 = vunpack.c.l.b16 %v961
        %v4819 = vunpack.c.l.b16 %v962
        %v4820 = vunpack.c.l.b16 %v963
        %v4821 = vunpack.c.l.b16 %v964
        %v4822 = vunpack.c.l.b16 %v965
        %v4823 = vunpack.c.l.b16 %v966
        %v4824 = vunpack.c.l.b16 %v967
        %v4825 = vunpack.c.l.b16 %v968
        %v4826 = vunpack.c.l.b16 %v969
        %v4827 = vunpack.c.l.b16 %v970
        %v4828 = vunpack.c.l.b16 %v971
        %v4829 = vunpack.c.l.b16 %v972
        %v4830 = vunpack.c.l.b16 %v973
        %v4831 = vunpack.c.l.b16 %v974
        %v4832 = vunpack.c.l.b16 %v975
        %v4833 = vunpack.c.l.b16 %v976
        %v4834 = vunpack.c.l.b16 %v977
        %v4835 = vunpack.c.l.b16 %v978
        %v4836 = vunpack.c.l.b16 %v979
        %v4837 = vunpack.c.l.b16 %v980
        %v4838 = vunpack.c.l.b16 %v981
        %v4839 = vunpack.c.l.b16 %v982
        %v4840 = vunpack.c.l.b16 %v983
        %v4841 = vunpack.c.l.b16 %v984
        %v4842 = vunpack.c.l.b16 %v985
        %v4843 = vunpack.c.l.b16 %v986
        %v4844 = vunpack.c.l.b16 %v987
        %v4845 = vunpack.c.l.b16 %v988
        %v4846 = vunpack.c.l.b16 %v989
        %v4847 = vunpack.c.l.b16 %v990
        %v4848 = vunpack.c.l.b16 %v991
        %v4849 = vunpack.c.l.b16 %v992
        %v4850 = vunpack.c.l.b16 %v993
        %v4851 = vunpack.c.l.b16 %v994
        %v4852 = vunpack.c.l.b16 %v995
        %v4853 = vunpack.c.l.b16 %v996
        %v4854 = vunpack.c.l.b16 %v997
        %v4855 = vunpack.c.l.b16 %v998
        %v4856 = vunpack.c.l.b16 %v999
        %v4857 = vunpack.c.l.b16 %v1000
        %v4858 = vunpack.c.l.b16 %v1001
        %v4859 = vunpack.c.l.b16 %v1002
        %v4860 = vunpack.c.l.b16 %v1003
        %v4861 = vunpack.c.l.b16 %v1004
        %v4862 = vunpack.c.l.b16 %v1005
        %v4863 = vunpack.c.l.b16 %v1006
        %v4864 = vunpack.c.l.b16 %v1007
        %v4865 = vunpack.c.l.b16 %v1008
        %v4866 = vunpack.c.l.b16 %v1009
        %v4867 = vunpack.c.l.b16 %v1010
        %v4868 = vunpack.c.l.b16 %v1011
        %v4869 = vunpack.c.l.b16 %v1012
        %v4870 = vunpack.c.l.b16 %v1013
        %v4871 = vunpack.c.l.b16 %v1014
        %v4872 = vunpack.c.l.b16 %v1015
        %v4873 = vunpack.c.l.b16 %v1016
        %v4874 = vunpack.c.l.b16 %v1017
        %v4875 = vunpack.c.l.b16 %v1018
        %v4876 = vunpack.c.l.b16 %v1019
        %v4877 = vunpack.c.l.b16 %v1020
        %v4878 = vunpack.c.l.b16 %v1021
        %v4879 = vunpack.c.l.b16 %v1022
        %v4880 = vunpack.c.l.b16 %v1023
        %v4881 = vunpack.c.l.b16 %v1024
        %v4882 = vunpack.c.l.b16 %v1025
        %v4883 = vunpack.c.l.b16 %v1026
        %v4884 = vunpack.c.l.b16 %v1027
        %v4885 = vunpack.c.l.b16 %v1028
        %v4886 = vunpack.c.l.b16 %v1029
        %v4887 = vunpack.c.l.b16 %v1030
        %v4888 = vunpack.c.l.b16 %v1031
        %v4889 = vunpack.c.l.b16 %v1032
        %v4890 = vunpack.c.l.b16 %v1033
        %v4891 = vunpack.c.l.b16 %v1034
        %v4892 = vunpack.c.l.b16 %v1035
        %v4893 = vunpack.c.l.b16 %v1036
        %v4894 = vunpack.c.l.b16 %v1037
        %v4895 = vunpack.c.l.b16 %v1038
        %v4896 = vunpack.c.l.b16 %v1039
        %v4897 = vunpack.c.l.b16 %v1040
        %v4898 = vunpack.c.l.b16 %v1041
        %v4899 = vunpack.c.l.b16 %v1042
        %v4900 = vunpack.c.l.b16 %v1043
        %v4901 = vunpack.c.l.b16 %v1044
        %v4902 = vunpack.c.l.b16 %v1045
        %v4903 = vunpack.c.l.b16 %v1046
        %v4904 = vunpack.c.l.b16 %v1047
        %v4905 = vunpack.c.l.b16 %v1048
        %v4906 = vunpack.c.l.b16 %v1049
        %v4907 = vunpack.c.l.b16 %v1050
        %v4908 = vunpack.c.l.b16 %v1051
        %v4909 = vunpack.c.l.b16 %v1052
        %v4910 = vunpack.c.l.b16 %v1053
        %v4911 = vunpack.c.l.b16 %v1054
        %v4912 = vunpack.c.l.b16 %v1055
        %v4913 = vunpack.c.l.b16 %v1056
        %v4914 = vunpack.c.l.b16 %v1057
        %v4915 = vunpack.c.l.b16 %v1058
        %v4916 = vunpack.c.l.b16 %v1059
        %v4917 = vunpack.c.l.b16 %v1060
        %v4918 = vunpack.c.l.b16 %v1061
        %v4919 = vunpack.c.l.b16 %v1062
        %v4920 = vunpack.c.l.b16 %v1063
        %v4921 = vunpack.c.l.b16 %v1064
        %v4922 = vunpack.c.l.b16 %v1065
        %v4923 = vunpack.c.l.b16 %v1066
        %v4924 = vunpack.c.l.b16 %v1067
        %v4925 = vunpack.c.l.b16 %v1068
        %v4926 = vunpack.c.l.b16 %v1069
        %v4927 = vunpack.c.l.b16 %v1070
        %v4928 = vunpack.c.l.b16 %v1071
        %v4929 = vunpack.c.l.b16 %v1072
        %v4930 = vunpack.c.l.b16 %v1073
        %v4931 = vunpack.c.l.b16 %v1074
        %v4932 = vunpack.c.l.b16 %v1075
        %v4933 = vunpack.c.l.b16 %v1076
        %v4934 = vunpack.c.l.b16 %v1077
        %v4935 = vunpack.c.l.b16 %v1078
        %v4936 = vunpack.c.l.b16 %v1079
        %v4937 = vunpack.c.l.b16 %v1080
        %v4938 = vunpack.c.l.b16 %v1081
        %v4939 = vunpack.c.l.b16 %v1082
        %v4940 = vunpack.c.l.b16 %v1083
        %v4941 = vunpack.c.l.b16 %v1084
        %v4942 = vunpack.c.l.b16 %v1085
        %v4943 = vunpack.c.l.b16 %v1086
        %v4944 = vunpack.c.l.b16 %v1087
        %v4945 = vunpack.c.l.b16 %v1088
        %v4946 = vunpack.c.l.b16 %v1089
        %v4947 = vunpack.c.l.b16 %v1090
        %v4948 = vunpack.c.l.b16 %v1091
        %v4949 = vunpack.c.l.b16 %v1092
        %v4950 = vunpack.c.l.b16 %v1093
        %v4951 = vunpack.c.l.b16 %v1094
        %v4952 = vunpack.c.l.b16 %v1095
        %v4953 = vunpack.c.l.b16 %v1096
        %v4954 = vunpack.c.l.b16 %v1097
        %v4955 = vunpack.c.l.b16 %v1098
        %v4956 = vunpack.c.l.b16 %v1099
        %v4957 = vunpack.c.l.b16 %v1100
        %v4958 = vunpack.c.l.b16 %v1101
        %v4959 = vunpack.c.l.b16 %v1102
        %v4960 = vunpack.c.l.b16 %v1103
        %v4961 = vunpack.c.l.b16 %v1104
        %v4962 = vunpack.c.l.b16 %v1105
        %v4963 = vunpack.c.l.b16 %v1106
        %v4964 = vunpack.c.l.b16 %v1107
        %v4965 = vunpack.c.l.b16 %v1108
        %v4966 = vunpack.c.l.b16 %v1109
        %v4967 = vunpack.c.l.b16 %v1110
        %v4968 = vunpack.c.l.b16 %v1111
        %v4969 = vunpack.c.l.b16 %v1112
        %v4970 = vunpack.c.l.b16 %v1113
        %v4971 = vunpack.c.l.b16 %v1114
        %v4972 = vunpack.c.l.b16 %v1115
        %v4973 = vunpack.c.l.b16 %v1116
        %v4974 = vunpack.c.l.b16 %v1117
        %v4975 = vunpack.c.l.b16 %v1118
        %v4976 = vunpack.c.l.b16 %v1119
        %v4977 = vunpack.c.l.b16 %v1120
        %v4978 = vunpack.c.l.b16 %v1121
        %v4979 = vunpack.c.l.b16 %v1122
        %v4980 = vunpack.c.l.b16 %v1123
        %v4981 = vunpack.c.l.b16 %v1124
        %v4982 = vunpack.c.l.b16 %v1125
        %v4983 = vunpack.c.l.b16 %v1126
        %v4984 = vunpack.c.l.b16 %v1127
        %v4985 = vunpack.c.l.b16 %v1128
        %v4986 = vunpack.c.l.b16 %v1129
        %v4987 = vunpack.c.l.b16 %v1130
        %v4988 = vunpack.c.l.b16 %v1131
        %v4989 = vunpack.c.l.b16 %v1132
        %v4990 = vunpack.c.l.b16 %v1133
        %v4991 = vunpack.c.l.b16 %v1134
        %v4992 = vunpack.c.l.b16 %v1135
        %v4993 = vunpack.c.l.b16 %v1136
        %v4994 = vunpack.c.l.b16 %v1137
        %v4995 = vunpack.c.l.b16 %v1138
        %v4996 = vunpack.c.l.b16 %v1139
        %v4997 = vunpack.c.l.b16 %v1140
        %v4998 = vunpack.c.l.b16 %v1141
        %v4999 = vunpack.c.l.b16 %v1142
        %v5000 = vunpack.c.l.b16 %v1143
        %v5001 = vunpack.c.l.b16 %v1144
        %v5002 = vunpack.c.l.b16 %v1145
        %v5003 = vunpack.c.l.b16 %v1146
        %v5004 = vunpack.c.l.b16 %v1147
        %v5005 = vunpack.c.l.b16 %v1148
        %v5006 = vunpack.c.l.b16 %v1149
        %v5007 = vunpack.c.l.b16 %v1150
        %v5008 = vunpack.c.l.b16 %v1151
        %v5009 = vunpack.c.l.b16 %v1152
        %v5010 = vunpack.c.l.b16 %v1153
        %v5011 = vunpack.c.l.b16 %v1154
        %v5012 = vunpack.c.l.b16 %v1155
        %v5013 = vunpack.c.l.b16 %v1156
        %v5014 = vunpack.c.l.b16 %v1157
        %v5015 = vunpack.c.l.b16 %v1158
        %v5016 = vunpack.c.l.b16 %v1159
        %v5017 = vunpack.c.l.b16 %v1160
        %v5018 = vunpack.c.l.b16 %v1161
        %v5019 = vunpack.c.l.b16 %v1162
        %v5020 = vunpack.c.l.b16 %v1163
        %v5021 = vunpack.c.l.b16 %v1164
        %v5022 = vunpack.c.l.b16 %v1165
        %v5023 = vunpack.c.l.b16 %v1166
        %v5024 = vunpack.c.l.b16 %v1167
        %v5025 = vunpack.c.l.b16 %v1168
        %v5026 = vunpack.c.l.b16 %v1169
        %v5027 = vunpack.c.l.b16 %v1170
        %v5028 = vunpack.c.l.b16 %v1171
        %v5029 = vunpack.c.l.b16 %v1172
        %v5030 = vunpack.c.l.b16 %v1173
        %v5031 = vunpack.c.l.b16 %v1174
        %v5032 = vunpack.c.l.b16 %v1175
        %v5033 = vunpack.c.l.b16 %v1176
        %v5034 = vunpack.c.l.b16 %v1177
        %v5035 = vunpack.c.l.b16 %v1178
        %v5036 = vunpack.c.l.b16 %v1179
        %v5037 = vunpack.c.l.b16 %v1180
        %v5038 = vunpack.c.l.b16 %v1181
        %v5039 = vunpack.c.l.b16 %v1182
        %v5040 = vunpack.c.l.b16 %v1183
        %v5041 = vunpack.c.l.b16 %v1184
        %v5042 = vunpack.c.l.b16 %v1185
        %v5043 = vunpack.c.l.b16 %v1186
        %v5044 = vunpack.c.l.b16 %v1187
        %v5045 = vunpack.c.l.b16 %v1188
        %v5046 = vunpack.c.l.b16 %v1189
        %v5047 = vunpack.c.l.b16 %v1190
        %v5048 = vunpack.c.l.b16 %v1191
        %v5049 = vunpack.c.l.b16 %v1192
        %v5050 = vunpack.c.l.b16 %v1193
        %v5051 = vunpack.c.l.b16 %v1194
        %v5052 = vunpack.c.l.b16 %v1195
        %v5053 = vunpack.c.l.b16 %v1196
        %v5054 = vunpack.c.l.b16 %v1197
        %v5055 = vunpack.c.l.b16 %v1198
        %v5056 = vunpack.c.l.b16 %v1199
        %v5057 = vunpack.c.l.b16 %v1200
        %v5058 = vunpack.c.l.b16 %v1201
        %v5059 = vunpack.c.l.b16 %v1202
        %v5060 = vunpack.c.l.b16 %v1203
        %v5061 = vunpack.c.l.b16 %v1204
        %v5062 = vunpack.c.l.b16 %v1205
        %v5063 = vunpack.c.l.b16 %v1206
        %v5064 = vunpack.c.l.b16 %v1207
        %v5065 = vunpack.c.l.b16 %v1208
        %v5066 = vunpack.c.l.b16 %v1209
        %v5067 = vunpack.c.l.b16 %v1210
        %v5068 = vunpack.c.l.b16 %v1211
        %v5069 = vunpack.c.l.b16 %v1212
        %v5070 = vunpack.c.l.b16 %v1213
        %v5071 = vunpack.c.l.b16 %v1214
        %v5072 = vunpack.c.l.b16 %v1215
        %v5073 = vunpack.c.l.b16 %v1216
        %v5074 = vunpack.c.l.b16 %v1217
        %v5075 = vunpack.c.l.b16 %v1218
        %v5076 = vunpack.c.l.b16 %v1219
        %v5077 = vunpack.c.l.b16 %v1220
        %v5078 = vunpack.c.l.b16 %v1221
        %v5079 = vunpack.c.l.b16 %v1222
        %v5080 = vunpack.c.l.b16 %v1223
        %v5081 = vunpack.c.l.b16 %v1224
        %v5082 = vunpack.c.l.b16 %v1225
        %v5083 = vunpack.c.l.b16 %v1226
        %v5084 = vunpack.c.l.b16 %v1227
        %v5085 = vunpack.c.l.b16 %v1228
        %v5086 = vunpack.c.l.b16 %v1229
        %v5087 = vunpack.c.l.b16 %v1230
        %v5088 = vunpack.c.l.b16 %v1231
        %v5089 = vunpack.c.l.b16 %v1232
        %v5090 = vunpack.c.l.b16 %v1233
        %v5091 = vunpack.c.l.b16 %v1234
        %v5092 = vunpack.c.l.b16 %v1235
        %v5093 = vunpack.c.l.b16 %v1236
        %v5094 = vunpack.c.l.b16 %v1237
        %v5095 = vunpack.c.l.b16 %v1238
        %v5096 = vunpack.c.l.b16 %v1239
        %v5097 = vunpack.c.l.b16 %v1240
        %v5098 = vunpack.c.l.b16 %v1241
        %v5099 = vunpack.c.l.b16 %v1242
        %v5100 = vunpack.c.l.b16 %v1243
        %v5101 = vunpack.c.l.b16 %v1244
        %v5102 = vunpack.c.l.b16 %v1245
        %v5103 = vunpack.c.l.b16 %v1246
        %v5104 = vunpack.c.l.b16 %v1247
        %v5105 = vunpack.c.l.b16 %v1248
        %v5106 = vunpack.c.l.b16 %v1249
        %v5107 = vunpack.c.l.b16 %v1250
        %v5108 = vunpack.c.l.b16 %v1251
        %v5109 = vunpack.c.l.b16 %v1252
        %v5110 = vunpack.c.l.b16 %v1253
        %v5111 = vunpack.c.l.b16 %v1254
        %v5112 = vunpack.c.l.b16 %v1255
        %v5113 = vunpack.c.l.b16 %v1256
        %v5114 = vunpack.c.l.b16 %v1257
        %v5115 = vunpack.c.l.b16 %v1258
        %v5116 = vunpack.c.l.b16 %v1259
        %v5117 = vunpack.c.l.b16 %v1260
        %v5118 = vunpack.c.l.b16 %v1261
        %v5119 = vunpack.c.l.b16 %v1262
        %v5120 = vunpack.c.l.b16 %v1263
        %v5121 = vunpack.c.l.b16 %v1264
        %v5122 = vunpack.c.l.b16 %v1265
        %v5123 = vunpack.c.l.b16 %v1266
        %v5124 = vunpack.c.l.b16 %v1267
        %v5125 = vunpack.c.l.b16 %v1268
        %v5126 = vunpack.c.l.b16 %v1269
        %v5127 = vunpack.c.l.b16 %v1270
        %v5128 = vunpack.c.l.b16 %v1271
        %v5129 = vunpack.c.l.b16 %v1272
        %v5130 = vunpack.c.l.b16 %v1273
        %v5131 = vunpack.c.l.b16 %v1274
        %v5132 = vunpack.c.l.b16 %v1275
        %v5133 = vunpack.c.l.b16 %v1276
        %v5134 = vunpack.c.l.b16 %v1277
        %v5135 = vunpack.c.l.b16 %v1278
        %v5136 = vunpack.c.l.b16 %v1279
        %v5137 = vunpack.c.l.b16 %v1280
        %v5138 = vunpack.c.l.b16 %v1281
        %v5139 = vunpack.c.l.b16 %v1282
        %v5140 = vunpack.c.l.b16 %v1283
        %v5141 = vunpack.c.l.b16 %v1284
        %v5142 = vunpack.c.l.b16 %v1285
        %v5143 = vunpack.c.l.b16 %v1286
        %v5144 = vunpack.c.l.b16 %v1287
        %v5145 = vunpack.c.l.b16 %v1288
        %v5146 = vunpack.c.l.b16 %v1289
        %v5147 = vunpack.c.l.b16 %v1290
        %v5148 = vunpack.c.l.b16 %v1291
        %v5149 = vunpack.c.l.b16 %v1292
        %v5150 = vunpack.c.l.b16 %v1293
        %v5151 = vunpack.c.l.b16 %v1294
        %v5152 = vunpack.c.l.b16 %v1295
        %v5153 = vunpack.c.l.b16 %v1296
        %v5154 = vunpack.c.l.b16 %v1297
        %v5155 = vunpack.c.l.b16 %v1298
        %v5156 = vunpack.c.l.b16 %v1299
        %v5157 = vunpack.c.l.b16 %v1300
        %v5158 = vunpack.c.l.b16 %v1301
        %v5159 = vunpack.c.l.b16 %v1302
        %v5160 = vunpack.c.l.b16 %v1303
        %v5161 = vunpack.c.l.b16 %v1304
        %v5162 = vunpack.c.l.b16 %v1305
        %v5163 = vunpack.c.l.b16 %v1306
        %v5164 = vunpack.c.l.b16 %v1307
        %v5165 = vunpack.c.l.b16 %v1308
        %v5166 = vunpack.c.l.b16 %v1309
        %v5167 = vunpack.c.l.b16 %v1310
        %v5168 = vunpack.c.l.b16 %v1311
        %v5169 = vunpack.c.l.b16 %v1312
        %v5170 = vunpack.c.l.b16 %v1313
        %v5171 = vunpack.c.l.b16 %v1314
        %v5172 = vunpack.c.l.b16 %v1315
        %v5173 = vunpack.c.l.b16 %v1316
        %v5174 = vunpack.c.l.b16 %v1317
        %v5175 = vunpack.c.l.b16 %v1318
        %v5176 = vunpack.c.l.b16 %v1319
        %v5177 = vunpack.c.l.b16 %v1320
        %v5178 = vunpack.c.l.b16 %v1321
        %v5179 = vunpack.c.l.b16 %v1322
        %v5180 = vunpack.c.l.b16 %v1323
        %v5181 = vunpack.c.l.b16 %v1324
        %v5182 = vunpack.c.l.b16 %v1325
        %v5183 = vunpack.c.l.b16 %v1326
        %v5184 = vunpack.c.l.b16 %v1327
        %v5185 = vunpack.c.l.b16 %v1328
        %v5186 = vunpack.c.l.b16 %v1329
        %v5187 = vunpack.c.l.b16 %v1330
        %v5188 = vunpack.c.l.b16 %v1331
        %v5189 = vunpack.c.l.b16 %v1332
        %v5190 = vunpack.c.l.b16 %v1333
        %v5191 = vunpack.c.l.b16 %v1334
        %v5192 = vunpack.c.l.b16 %v1335
        %v5193 = vunpack.c.l.b16 %v1336
        %v5194 = vunpack.c.l.b16 %v1337
        %v5195 = vunpack.c.l.b16 %v1338
        %v5196 = vunpack.c.l.b16 %v1339
        %v5197 = vunpack.c.l.b16 %v1340
        %v5198 = vunpack.c.l.b16 %v1341
        %v5199 = vunpack.c.l.b16 %v1342
        %v5200 = vunpack.c.l.b16 %v1343
        %v5201 = vunpack.c.l.b16 %v1344
        %v5202 = vunpack.c.l.b16 %v1345
        %v5203 = vunpack.c.l.b16 %v1346
        %v5204 = vunpack.c.l.b16 %v1347
        %v5205 = vunpack.c.l.b16 %v1348
        %v5206 = vunpack.c.l.b16 %v1349
        %v5207 = vunpack.c.l.b16 %v1350
        %v5208 = vunpack.c.l.b16 %v1351
        %v5209 = vunpack.c.l.b16 %v1352
        %v5210 = vunpack.c.l.b16 %v1353
        %v5211 = vunpack.c.l.b16 %v1354
        %v5212 = vunpack.c.l.b16 %v1355
        %v5213 = vunpack.c.l.b16 %v1356
        %v5214 = vunpack.c.l.b16 %v1357
        %v5215 = vunpack.c.l.b16 %v1358
        %v5216 = vunpack.c.l.b16 %v1359
        %v5217 = vunpack.c.l.b16 %v1360
        %v5218 = vunpack.c.l.b16 %v1361
        %v5219 = vunpack.c.l.b16 %v1362
        %v5220 = vunpack.c.l.b16 %v1363
        %v5221 = vunpack.c.l.b16 %v1364
        %v5222 = vunpack.c.l.b16 %v1365
        %v5223 = vunpack.c.l.b16 %v1366
        %v5224 = vunpack.c.l.b16 %v1367
        %v5225 = vunpack.c.l.b16 %v1368
        %v5226 = vunpack.c.l.b16 %v1369
        %v5227 = vunpack.c.l.b16 %v1370
        %v5228 = vunpack.c.l.b16 %v1371
        %v5229 = vunpack.c.l.b16 %v1372
        %v5230 = vunpack.c.l.b16 %v1373
        %v5231 = vunpack.c.l.b16 %v1374
        %v5232 = vunpack.c.l.b16 %v1375
        %v5233 = vunpack.c.l.b16 %v1376
        %v5234 = vunpack.c.l.b16 %v1377
        %v5235 = vunpack.c.l.b16 %v1378
        %v5236 = vunpack.c.l.b16 %v1379
        %v5237 = vunpack.c.l.b16 %v1380
        %v5238 = vunpack.c.l.b16 %v1381
        %v5239 = vunpack.c.l.b16 %v1382
        %v5240 = vunpack.c.l.b16 %v1383
        %v5241 = vunpack.c.l.b16 %v1384
        %v5242 = vunpack.c.l.b16 %v1385
        %v5243 = vunpack.c.l.b16 %v1386
        %v5244 = vunpack.c.l.b16 %v1387
        %v5245 = vunpack.c.l.b16 %v1388
        %v5246 = vunpack.c.l.b16 %v1389
        %v5247 = vunpack.c.l.b16 %v1390
        %v5248 = vunpack.c.l.b16 %v1391
        %v5249 = vunpack.c.l.b16 %v1392
        %v5250 = vunpack.c.l.b16 %v1393
        %v5251 = vunpack.c.l.b16 %v1394
        %v5252 = vunpack.c.l.b16 %v1395
        %v5253 = vunpack.c.l.b16 %v1396
        %v5254 = vunpack.c.l.b16 %v1397
        %v5255 = vunpack.c.l.b16 %v1398
        %v5256 = vunpack.c.l.b16 %v1399
        %v5257 = vunpack.c.l.b16 %v1400
        %v5258 = vunpack.c.l.b16 %v1401
        %v5259 = vunpack.c.l.b16 %v1402
        %v5260 = vunpack.c.l.b16 %v1403
        %v5261 = vunpack.c.l.b16 %v1404
        %v5262 = vunpack.c.l.b16 %v1405
        %v5263 = vunpack.c.l.b16 %v1406
        %v5264 = vunpack.c.l.b16 %v1407
        %v5265 = vunpack.c.l.b16 %v1408
        %v5266 = vunpack.c.l.b16 %v1409
        %v5267 = vunpack.c.l.b16 %v1410
        %v5268 = vunpack.c.l.b16 %v1411
        %v5269 = vunpack.c.l.b16 %v1412
        %v5270 = vunpack.c.l.b16 %v1413
        %v5271 = vunpack.c.l.b16 %v1414
        %v5272 = vunpack.c.l.b16 %v1415
        %v5273 = vunpack.c.l.b16 %v1416
        %v5274 = vunpack.c.l.b16 %v1417
        %v5275 = vunpack.c.l.b16 %v1418
        %v5276 = vunpack.c.l.b16 %v1419
        %v5277 = vunpack.c.l.b16 %v1420
        %v5278 = vunpack.c.l.b16 %v1421
        %v5279 = vunpack.c.l.b16 %v1422
        %v5280 = vunpack.c.l.b16 %v1423
        %v5281 = vunpack.c.l.b16 %v1424
        %v5282 = vunpack.c.l.b16 %v1425
        %v5283 = vunpack.c.l.b16 %v1426
        %v5284 = vunpack.c.l.b16 %v1427
        %v5285 = vunpack.c.l.b16 %v1428
        %v5286 = vunpack.c.l.b16 %v1429
        %v5287 = vunpack.c.l.b16 %v1430
        %v5288 = vunpack.c.l.b16 %v1431
        %v5289 = vunpack.c.l.b16 %v1432
        %v5290 = vunpack.c.l.b16 %v1433
        %v5291 = vunpack.c.l.b16 %v1434
        %v5292 = vunpack.c.l.b16 %v1435
        %v5293 = vunpack.c.l.b16 %v1436
        %v5294 = vunpack.c.l.b16 %v1437
        %v5295 = vunpack.c.l.b16 %v1438
        %v5296 = vunpack.c.l.b16 %v1439
        %v5297 = vunpack.c.l.b16 %v1440
        %v5298 = vunpack.c.l.b16 %v1441
        %v5299 = vunpack.c.l.b16 %v1442
        %v5300 = vunpack.c.l.b16 %v1443
        %v5301 = vunpack.c.l.b16 %v1444
        %v5302 = vunpack.c.l.b16 %v1445
        %v5303 = vunpack.c.l.b16 %v1446
        %v5304 = vunpack.c.l.b16 %v1447
        %v5305 = vunpack.c.l.b16 %v1448
        %v5306 = vunpack.c.l.b16 %v1449
        %v5307 = vunpack.c.l.b16 %v1450
        %v5308 = vunpack.c.l.b16 %v1451
        %v5309 = vunpack.c.l.b16 %v1452
        %v5310 = vunpack.c.l.b16 %v1453
        %v5311 = vunpack.c.l.b16 %v1454
        %v5312 = vunpack.c.l.b16 %v1455
        %v5313 = vunpack.c.l.b16 %v1456
        %v5314 = vunpack.c.l.b16 %v1457
        %v5315 = vunpack.c.l.b16 %v1458
        %v5316 = vunpack.c.l.b16 %v1459
        %v5317 = vunpack.c.l.b16 %v1460
        %v5318 = vunpack.c.l.b16 %v1461
        %v5319 = vunpack.c.l.b16 %v1462
        %v5320 = vunpack.c.l.b16 %v1463
        %v5321 = vunpack.c.l.b16 %v1464
        %v5322 = vunpack.c.l.b16 %v1465
        %v5323 = vunpack.c.l.b16 %v1466
        %v5324 = vunpack.c.l.b16 %v1467
        %v5325 = vunpack.c.l.b16 %v1468
        %v5326 = vunpack.c.l.b16 %v1469
        %v5327 = vunpack.c.l.b16 %v1470
        %v5328 = vunpack.c.l.b16 %v1471
        %v5329 = vunpack.c.l.b16 %v1472
        %v5330 = vunpack.c.l.b16 %v1473
        %v5331 = vunpack.c.l.b16 %v1474
        %v5332 = vunpack.c.l.b16 %v1475
        %v5333 = vunpack.c.l.b16 %v1476
        %v5334 = vunpack.c.l.b16 %v1477
        %v5335 = vunpack.c.l.b16 %v1478
        %v5336 = vunpack.c.l.b16 %v1479
        %v5337 = vunpack.c.l.b16 %v1480
        %v5338 = vunpack.c.l.b16 %v1481
        %v5339 = vunpack.c.l.b16 %v1482
        %v5340 = vunpack.c.l.b16 %v1483
        %v5341 = vunpack.c.l.b16 %v1484
        %v5342 = vunpack.c.l.b16 %v1485
        %v5343 = vunpack.c.l.b16 %v1486
        %v5344 = vunpack.c.l.b16 %v1487
        %v5345 = vunpack.c.l.b16 %v1488
        %v5346 = vunpack.c.l.b16 %v1489
        %v5347 = vunpack.c.l.b16 %v1490
        %v5348 = vunpack.c.l.b16 %v1491
        %v5349 = vunpack.c.l.b16 %v1492
        %v5350 = vunpack.c.l.b16 %v1493
        %v5351 = vunpack.c.l.b16 %v1494
        %v5352 = vunpack.c.l.b16 %v1495
        %v5353 = vunpack.c.l.b16 %v1496
        %v5354 = vunpack.c.l.b16 %v1497
        %v5355 = vunpack.c.l.b16 %v1498
        %v5356 = vunpack.c.l.b16 %v1499
        %v5357 = vunpack.c.l.b16 %v1500
        %v5358 = vunpack.c.l.b16 %v1501
        %v5359 = vunpack.c.l.b16 %v1502
        %v5360 = vunpack.c.l.b16 %v1503
        %v5361 = vunpack.c.l.b16 %v1504
        %v5362 = vunpack.c.l.b16 %v1505
        %v5363 = vunpack.c.l.b16 %v1506
        %v5364 = vunpack.c.l.b16 %v1507
        %v5365 = vunpack.c.l.b16 %v1508
        %v5366 = vunpack.c.l.b16 %v1509
        %v5367 = vunpack.c.l.b16 %v1510
        %v5368 = vunpack.c.l.b16 %v1511
        %v5369 = vunpack.c.l.b16 %v1512
        %v5370 = vunpack.c.l.b16 %v1513
        %v5371 = vunpack.c.l.b16 %v1514
        %v5372 = vunpack.c.l.b16 %v1515
        %v5373 = vunpack.c.l.b16 %v1516
        %v5374 = vunpack.c.l.b16 %v1517
        %v5375 = vunpack.c.l.b16 %v1518
        %v5376 = vunpack.c.l.b16 %v1519
        %v5377 = vunpack.c.l.b16 %v1520
        %v5378 = vunpack.c.l.b16 %v1521
        %v5379 = vunpack.c.l.b16 %v1522
        %v5380 = vunpack.c.l.b16 %v1523
        %v5381 = vunpack.c.l.b16 %v1524
        %v5382 = vunpack.c.l.b16 %v1525
        %v5383 = vunpack.c.l.b16 %v1526
        %v5384 = vunpack.c.l.b16 %v1527
        %v5385 = vunpack.c.l.b16 %v1528
        %v5386 = vunpack.c.l.b16 %v1529
        %v5387 = vunpack.c.l.b16 %v1530
        %v5388 = vunpack.c.l.b16 %v1531
        %v5389 = vunpack.c.l.b16 %v1532
        %v5390 = vunpack.c.l.b16 %v1533
        %v5391 = vunpack.c.l.b16 %v1534
        %v5392 = vunpack.c.l.b16 %v1535
        %v5393 = vunpack.c.l.b16 %v1536
        %v5394 = vunpack.c.l.b16 %v1537
        %v5395 = vunpack.c.l.b16 %v1538
        %v5396 = vunpack.c.l.b16 %v1539
        %v5397 = vunpack.c.l.b16 %v1540
        %v5398 = vunpack.c.l.b16 %v1541
        %v5399 = vunpack.c.l.b16 %v1542
        %v5400 = vunpack.c.l.b16 %v1543
        %v5401 = vunpack.c.l.b16 %v1544
        %v5402 = vunpack.c.l.b16 %v1545
        %v5403 = vunpack.c.l.b16 %v1546
        %v5404 = vunpack.c.l.b16 %v1547
        %v5405 = vunpack.c.l.b16 %v1548
        %v5406 = vunpack.c.l.b16 %v1549
        %v5407 = vunpack.c.l.b16 %v1550
        %v5408 = vunpack.c.l.b16 %v1551
        %v5409 = vunpack.c.l.b16 %v1552
        %v5410 = vunpack.c.l.b16 %v1553
        %v5411 = vunpack.c.l.b16 %v1554
        %v5412 = vunpack.c.l.b16 %v1555
        %v5413 = vunpack.c.l.b16 %v1556
        %v5414 = vunpack.c.l.b16 %v1557
        %v5415 = vunpack.c.l.b16 %v1558
        %v5416 = vunpack.c.l.b16 %v1559
        %v5417 = vunpack.c.l.b16 %v1560
        %v5418 = vunpack.c.l.b16 %v1561
        %v5419 = vunpack.c.l.b16 %v1562
        %v5420 = vunpack.c.l.b16 %v1563
        %v5421 = vunpack.c.l.b16 %v1564
        %v5422 = vunpack.c.l.b16 %v1565
        %v5423 = vunpack.c.l.b16 %v1566
        %v5424 = vunpack.c.l.b16 %v1567
        %v5425 = vunpack.c.l.b16 %v1568
        %v5426 = vunpack.c.l.b16 %v1569
        %v5427 = vunpack.c.l.b16 %v1570
        %v5428 = vunpack.c.l.b16 %v1571
        %v5429 = vunpack.c.l.b16 %v1572
        %v5430 = vunpack.c.l.b16 %v1573
        %v5431 = vunpack.c.l.b16 %v1574
        %v5432 = vunpack.c.l.b16 %v1575
        %v5433 = vunpack.c.l.b16 %v1576
        %v5434 = vunpack.c.l.b16 %v1577
        %v5435 = vunpack.c.l.b16 %v1578
        %v5436 = vunpack.c.l.b16 %v1579
        %v5437 = vunpack.c.l.b16 %v1580
        %v5438 = vunpack.c.l.b16 %v1581
        %v5439 = vunpack.c.l.b16 %v1582
        %v5440 = vunpack.c.l.b16 %v1583
        %v5441 = vunpack.c.l.b16 %v1584
        %v5442 = vunpack.c.l.b16 %v1585
        %v5443 = vunpack.c.l.b16 %v1586
        %v5444 = vunpack.c.l.b16 %v1587
        %v5445 = vunpack.c.l.b16 %v1588
        %v5446 = vunpack.c.l.b16 %v1589
        %v5447 = vunpack.c.l.b16 %v1590
        %v5448 = vunpack.c.l.b16 %v1591
        %v5449 = vunpack.c.l.b16 %v1592
        %v5450 = vunpack.c.l.b16 %v1593
        %v5451 = vunpack.c.l.b16 %v1594
        %v5452 = vunpack.c.l.b16 %v1595
        %v5453 = vunpack.c.l.b16 %v1596
        %v5454 = vunpack.c.l.b16 %v1597
        %v5455 = vunpack.c.l.b16 %v1598
        %v5456 = vunpack.c.l.b16 %v1599
        %v5457 = vunpack.c.l.b16 %v1600
        %v5458 = vunpack.c.l.b16 %v1601
        %v5459 = vunpack.c.l.b16 %v1602
        %v5460 = vunpack.c.l.b16 %v1603
        %v5461 = vunpack.c.l.b16 %v1604
        %v5462 = vunpack.c.l.b16 %v1605
        %v5463 = vunpack.c.l.b16 %v1606
        %v5464 = vunpack.c.l.b16 %v1607
        %v5465 = vunpack.c.l.b16 %v1608
        %v5466 = vunpack.c.l.b16 %v1609
        %v5467 = vunpack.c.l.b16 %v1610
        %v5468 = vunpack.c.l.b16 %v1611
        %v5469 = vunpack.c.l.b16 %v1612
        %v5470 = vunpack.c.l.b16 %v1613
        %v5471 = vunpack.c.l.b16 %v1614
        %v5472 = vunpack.c.l.b16 %v1615
        %v5473 = vunpack.c.l.b16 %v1616
        %v5474 = vunpack.c.l.b16 %v1617
        %v5475 = vunpack.c.l.b16 %v1618
        %v5476 = vunpack.c.l.b16 %v1619
        %v5477 = vunpack.c.l.b16 %v1620
        %v5478 = vunpack.c.l.b16 %v1621
        %v5479 = vunpack.c.l.b16 %v1622
        %v5480 = vunpack.c.l.b16 %v1623
        %v5481 = vunpack.c.l.b16 %v1624
        %v5482 = vunpack.c.l.b16 %v1625
        %v5483 = vunpack.c.l.b16 %v1626
        %v5484 = vunpack.c.l.b16 %v1627
        %v5485 = vunpack.c.l.b16 %v1628
        %v5486 = vunpack.c.l.b16 %v1629
        %v5487 = vunpack.c.l.b16 %v1630
        %v5488 = vunpack.c.l.b16 %v1631
        %v5489 = vunpack.c.l.b16 %v1632
        %v5490 = vunpack.c.l.b16 %v1633
        %v5491 = vunpack.c.l.b16 %v1634
        %v5492 = vunpack.c.l.b16 %v1635
        %v5493 = vunpack.c.l.b16 %v1636
        %v5494 = vunpack.c.l.b16 %v1637
        %v5495 = vunpack.c.l.b16 %v1638
        %v5496 = vunpack.c.l.b16 %v1639
        %v5497 = vunpack.c.l.b16 %v1640
        %v5498 = vunpack.c.l.b16 %v1641
        %v5499 = vunpack.c.l.b16 %v1642
        %v5500 = vunpack.c.l.b16 %v1643
        %v5501 = vunpack.c.l.b16 %v1644
        %v5502 = vunpack.c.l.b16 %v1645
        %v5503 = vunpack.c.l.b16 %v1646
        %v5504 = vunpack.c.l.b16 %v1647
        %v5505 = vunpack.c.l.b16 %v1648
        %v5506 = vunpack.c.l.b16 %v1649
        %v5507 = vunpack.c.l.b16 %v1650
        %v5508 = vunpack.c.l.b16 %v1651
        %v5509 = vunpack.c.l.b16 %v1652
        %v5510 = vunpack.c.l.b16 %v1653
        %v5511 = vunpack.c.l.b16 %v1654
        %v5512 = vunpack.c.l.b16 %v1655
        %v5513 = vunpack.c.l.b16 %v1656
        %v5514 = vunpack.c.l.b16 %v1657
        %v5515 = vunpack.c.l.b16 %v1658
        %v5516 = vunpack.c.l.b16 %v1659
        %v5517 = vunpack.c.l.b16 %v1660
        %v5518 = vunpack.c.l.b16 %v1661
        %v5519 = vunpack.c.l.b16 %v1662
        %v5520 = vunpack.c.l.b16 %v1663
        %v5521 = vunpack.c.l.b16 %v1664
        %v5522 = vunpack.c.l.b16 %v1665
        %v5523 = vunpack.c.l.b16 %v1666
        %v5524 = vunpack.c.l.b16 %v1667
        %v5525 = vunpack.c.l.b16 %v1668
        %v5526 = vunpack.c.l.b16 %v1669
        %v5527 = vunpack.c.l.b16 %v1670
        %v5528 = vunpack.c.l.b16 %v1671
        %v5529 = vunpack.c.l.b16 %v1672
        %v5530 = vunpack.c.l.b16 %v1673
        %v5531 = vunpack.c.l.b16 %v1674
        %v5532 = vunpack.c.l.b16 %v1675
        %v5533 = vunpack.c.l.b16 %v1676
        %v5534 = vunpack.c.l.b16 %v1677
        %v5535 = vunpack.c.l.b16 %v1678
        %v5536 = vunpack.c.l.b16 %v1679
        %v5537 = vunpack.c.l.b16 %v1680
        %v5538 = vunpack.c.l.b16 %v1681
        %v5539 = vunpack.c.l.b16 %v1682
        %v5540 = vunpack.c.l.b16 %v1683
        %v5541 = vunpack.c.l.b16 %v1684
        %v5542 = vunpack.c.l.b16 %v1685
        %v5543 = vunpack.c.l.b16 %v1686
        %v5544 = vunpack.c.l.b16 %v1687
        %v5545 = vunpack.c.l.b16 %v1688
        %v5546 = vunpack.c.l.b16 %v1689
        %v5547 = vunpack.c.l.b16 %v1690
        %v5548 = vunpack.c.l.b16 %v1691
        %v5549 = vunpack.c.l.b16 %v1692
        %v5550 = vunpack.c.l.b16 %v1693
        %v5551 = vunpack.c.l.b16 %v1694
        %v5552 = vunpack.c.l.b16 %v1695
        %v5553 = vunpack.c.l.b16 %v1696
        %v5554 = vunpack.c.l.b16 %v1697
        %v5555 = vunpack.c.l.b16 %v1698
        %v5556 = vunpack.c.l.b16 %v1699
        %v5557 = vunpack.c.l.b16 %v1700
        %v5558 = vunpack.c.l.b16 %v1701
        %v5559 = vunpack.c.l.b16 %v1702
        %v5560 = vunpack.c.l.b16 %v1703
        %v5561 = vunpack.c.l.b16 %v1704
        %v5562 = vunpack.c.l.b16 %v1705
        %v5563 = vunpack.c.l.b16 %v1706
        %v5564 = vunpack.c.l.b16 %v1707
        %v5565 = vunpack.c.l.b16 %v1708
        %v5566 = vunpack.c.l.b16 %v1709
        %v5567 = vunpack.c.l.b16 %v1710
        %v5568 = vunpack.c.l.b16 %v1711
        %v5569 = vunpack.c.l.b16 %v1712
        %v5570 = vunpack.c.l.b16 %v1713
        %v5571 = vunpack.c.l.b16 %v1714
        %v5572 = vunpack.c.l.b16 %v1715
        %v5573 = vunpack.c.l.b16 %v1716
        %v5574 = vunpack.c.l.b16 %v1717
        %v5575 = vunpack.c.l.b16 %v1718
        %v5576 = vunpack.c.l.b16 %v1719
        %v5577 = vunpack.c.l.b16 %v1720
        %v5578 = vunpack.c.l.b16 %v1721
        %v5579 = vunpack.c.l.b16 %v1722
        %v5580 = vunpack.c.l.b16 %v1723
        %v5581 = vunpack.c.l.b16 %v1724
        %v5582 = vunpack.c.l.b16 %v1725
        %v5583 = vunpack.c.l.b16 %v1726
        %v5584 = vunpack.c.l.b16 %v1727
        %v5585 = vunpack.c.l.b16 %v1728
        %v5586 = vunpack.c.l.b16 %v1729
        %v5587 = vunpack.c.l.b16 %v1730
        %v5588 = vunpack.c.l.b16 %v1731
        %v5589 = vunpack.c.l.b16 %v1732
        %v5590 = vunpack.c.l.b16 %v1733
        %v5591 = vunpack.c.l.b16 %v1734
        %v5592 = vunpack.c.l.b16 %v1735
        %v5593 = vunpack.c.l.b16 %v1736
        %v5594 = vunpack.c.l.b16 %v1737
        %v5595 = vunpack.c.l.b16 %v1738
        %v5596 = vunpack.c.l.b16 %v1739
        %v5597 = vunpack.c.l.b16 %v1740
        %v5598 = vunpack.c.l.b16 %v1741
        %v5599 = vunpack.c.l.b16 %v1742
        %v5600 = vunpack.c.l.b16 %v1743
        %v5601 = vunpack.c.l.b16 %v1744
        %v5602 = vunpack.c.l.b16 %v1745
        %v5603 = vunpack.c.l.b16 %v1746
        %v5604 = vunpack.c.l.b16 %v1747
        %v5605 = vunpack.c.l.b16 %v1748
        %v5606 = vunpack.c.l.b16 %v1749
        %v5607 = vunpack.c.l.b16 %v1750
        %v5608 = vunpack.c.l.b16 %v1751
        %v5609 = vunpack.c.l.b16 %v1752
        %v5610 = vunpack.c.l.b16 %v1753
        %v5611 = vunpack.c.l.b16 %v1754
        %v5612 = vunpack.c.l.b16 %v1755
        %v5613 = vunpack.c.l.b16 %v1756
        %v5614 = vunpack.c.l.b16 %v1757
        %v5615 = vunpack.c.l.b16 %v1758
        %v5616 = vunpack.c.l.b16 %v1759
        %v5617 = vunpack.c.l.b16 %v1760
        %v5618 = vunpack.c.l.b16 %v1761
        %v5619 = vunpack.c.l.b16 %v1762
        %v5620 = vunpack.c.l.b16 %v1763
        %v5621 = vunpack.c.l.b16 %v1764
        %v5622 = vunpack.c.l.b16 %v1765
        %v5623 = vunpack.c.l.b16 %v1766
        %v5624 = vunpack.c.l.b16 %v1767
        %v5625 = vunpack.c.l.b16 %v1768
        %v5626 = vunpack.c.l.b16 %v1769
        %v5627 = vunpack.c.l.b16 %v1770
        %v5628 = vunpack.c.l.b16 %v1771
        %v5629 = vunpack.c.l.b16 %v1772
        %v5630 = vunpack.c.l.b16 %v1773
        %v5631 = vunpack.c.l.b16 %v1774
        %v5632 = vunpack.c.l.b16 %v1775
        %v5633 = vunpack.c.l.b16 %v1776
        %v5634 = vunpack.c.l.b16 %v1777
        %v5635 = vunpack.c.l.b16 %v1778
        %v5636 = vunpack.c.l.b16 %v1779
        %v5637 = vunpack.c.l.b16 %v1780
        %v5638 = vunpack.c.l.b16 %v1781
        %v5639 = vunpack.c.l.b16 %v1782
        %v5640 = vunpack.c.l.b16 %v1783
        %v5641 = vunpack.c.l.b16 %v1784
        %v5642 = vunpack.c.l.b16 %v1785
        %v5643 = vunpack.c.l.b16 %v1786
        %v5644 = vunpack.c.l.b16 %v1787
        %v5645 = vunpack.c.l.b16 %v1788
        %v5646 = vunpack.c.l.b16 %v1789
        %v5647 = vunpack.c.l.b16 %v1790
        %v5648 = vunpack.c.l.b16 %v1791
        %v5649 = vunpack.c.l.b16 %v1792
        %v5650 = vunpack.c.l.b16 %v1793
        %v5651 = vunpack.c.l.b16 %v1794
        %v5652 = vunpack.c.l.b16 %v1795
        %v5653 = vunpack.c.l.b16 %v1796
        %v5654 = vunpack.c.l.b16 %v1797
        %v5655 = vunpack.c.l.b16 %v1798
        %v5656 = vunpack.c.l.b16 %v1799
        %v5657 = vunpack.c.l.b16 %v1800
        %v5658 = vunpack.c.l.b16 %v1801
        %v5659 = vunpack.c.l.b16 %v1802
        %v5660 = vunpack.c.l.b16 %v1803
        %v5661 = vunpack.c.l.b16 %v1804
        %v5662 = vunpack.c.l.b16 %v1805
        %v5663 = vunpack.c.l.b16 %v1806
        %v5664 = vunpack.c.l.b16 %v1807
        %v5665 = vunpack.c.l.b16 %v1808
        %v5666 = vunpack.c.l.b16 %v1809
        %v5667 = vunpack.c.l.b16 %v1810
        %v5668 = vunpack.c.l.b16 %v1811
        %v5669 = vunpack.c.l.b16 %v1812
        %v5670 = vunpack.c.l.b16 %v1813
        %v5671 = vunpack.c.l.b16 %v1814
        %v5672 = vunpack.c.l.b16 %v1815
        %v5673 = vunpack.c.l.b16 %v1816
        %v5674 = vunpack.c.l.b16 %v1817
        %v5675 = vunpack.c.l.b16 %v1818
        %v5676 = vunpack.c.l.b16 %v1819
        %v5677 = vunpack.c.l.b16 %v1820
        %v5678 = vunpack.c.l.b16 %v1821
        %v5679 = vunpack.c.l.b16 %v1822
        %v5680 = vunpack.c.l.b16 %v1823
        %v5681 = vunpack.c.l.b16 %v1824
        %v5682 = vunpack.c.l.b16 %v1825
        %v5683 = vunpack.c.l.b16 %v1826
        %v5684 = vunpack.c.l.b16 %v1827
        %v5685 = vunpack.c.l.b16 %v1828
        %v5686 = vunpack.c.l.b16 %v1829
        %v5687 = vunpack.c.l.b16 %v1830
        %v5688 = vunpack.c.l.b16 %v1831
        %v5689 = vunpack.c.l.b16 %v1832
        %v5690 = vunpack.c.l.b16 %v1833
        %v5691 = vunpack.c.l.b16 %v1834
        %v5692 = vunpack.c.l.b16 %v1835
        %v5693 = vunpack.c.l.b16 %v1836
        %v5694 = vunpack.c.l.b16 %v1837
        %v5695 = vunpack.c.l.b16 %v1838
        %v5696 = vunpack.c.l.b16 %v1839
        %v5697 = vunpack.c.l.b16 %v1840
        %v5698 = vunpack.c.l.b16 %v1841
        %v5699 = vunpack.c.l.b16 %v1842
        %v5700 = vunpack.c.l.b16 %v1843
        %v5701 = vunpack.c.l.b16 %v1844
        %v5702 = vunpack.c.l.b16 %v1845
        %v5703 = vunpack.c.l.b16 %v1846
        %v5704 = vunpack.c.l.b16 %v1847
        %v5705 = vunpack.c.l.b16 %v1848
        %v5706 = vunpack.c.l.b16 %v1849
        %v5707 = vunpack.c.l.b16 %v1850
        %v5708 = vunpack.c.l.b16 %v1851
        %v5709 = vunpack.c.l.b16 %v1852
        %v5710 = vunpack.c.l.b16 %v1853
        %v5711 = vunpack.c.l.b16 %v1854
        %v5712 = vunpack.c.l.b16 %v1855
        %v5713 = vunpack.c.l.b16 %v1856
        %v5714 = vunpack.c.l.b16 %v1857
        %v5715 = vunpack.c.l.b16 %v1858
        %v5716 = vunpack.c.l.b16 %v1859
        %v5717 = vunpack.c.l.b16 %v1860
        %v5718 = vunpack.c.l.b16 %v1861
        %v5719 = vunpack.c.l.b16 %v1862
        %v5720 = vunpack.c.l.b16 %v1863
        %v5721 = vunpack.c.l.b16 %v1864
        %v5722 = vunpack.c.l.b16 %v1865
        %v5723 = vunpack.c.l.b16 %v1866
        %v5724 = vunpack.c.l.b16 %v1867
        %v5725 = vunpack.c.l.b16 %v1868
        %v5726 = vunpack.c.l.b16 %v1869
        %v5727 = vunpack.c.l.b16 %v1870
        %v5728 = vunpack.c.l.b16 %v1871
        %v5729 = vunpack.c.l.b16 %v1872
        %v5730 = vunpack.c.l.b16 %v1873
        %v5731 = vunpack.c.l.b16 %v1874
        %v5732 = vunpack.c.l.b16 %v1875
        %v5733 = vunpack.c.l.b16 %v1876
        %v5734 = vunpack.c.l.b16 %v1877
        %v5735 = vunpack.c.l.b16 %v1878
        %v5736 = vunpack.c.l.b16 %v1879
        %v5737 = vunpack.c.l.b16 %v1880
        %v5738 = vunpack.c.l.b16 %v1881
        %v5739 = vunpack.c.l.b16 %v1882
        %v5740 = vunpack.c.l.b16 %v1883
        %v5741 = vunpack.c.l.b16 %v1884
        %v5742 = vunpack.c.l.b16 %v1885
        %v5743 = vunpack.c.l.b16 %v1886
        %v5744 = vunpack.c.l.b16 %v1887
        %v5745 = vunpack.c.l.b16 %v1888
        %v5746 = vunpack.c.l.b16 %v1889
        %v5747 = vunpack.c.l.b16 %v1890
        %v5748 = vunpack.c.l.b16 %v1891
        %v5749 = vunpack.c.l.b16 %v1892
        %v5750 = vunpack.c.l.b16 %v1893
        %v5751 = vunpack.c.l.b16 %v1894
        %v5752 = vunpack.c.l.b16 %v1895
        %v5753 = vunpack.c.l.b16 %v1896
        %v5754 = vunpack.c.l.b16 %v1897
        %v5755 = vunpack.c.l.b16 %v1898
        %v5756 = vunpack.c.l.b16 %v1899
        %v5757 = vunpack.c.l.b16 %v1900
        %v5758 = vunpack.c.l.b16 %v1901
        %v5759 = vunpack.c.l.b16 %v1902
        %v5760 = vunpack.c.l.b16 %v1903
        %v5761 = vunpack.c.l.b16 %v1904
        %v5762 = vunpack.c.l.b16 %v1905
        %v5763 = vunpack.c.l.b16 %v1906
        %v5764 = vunpack.c.l.b16 %v1907
        %v5765 = vunpack.c.l.b16 %v1908
        %v5766 = vunpack.c.l.b16 %v1909
        %v5767 = vunpack.c.l.b16 %v1910
        %v5768 = vunpack.c.l.b16 %v1911
        %v5769 = vunpack.c.l.b16 %v1912
        %v5770 = vunpack.c.l.b16 %v1913
        %v5771 = vunpack.c.l.b16 %v1914
        %v5772 = vunpack.c.l.b16 %v1915
        %v5773 = vunpack.c.l.b16 %v1916
        %v5774 = vunpack.c.l.b16 %v1917
        %v5775 = vunpack.c.l.b16 %v1918
        %v5776 = vunpack.c.l.b16 %v1919
        %v5777 = vunpack.c.l.b16 %v1920
        %v5778 = vunpack.c.l.b16 %v1921
        %v5779 = vunpack.c.l.b16 %v1922
        %v5780 = vunpack.c.l.b16 %v1923
        %v5781 = vunpack.c.l.b16 %v1924
        %v5782 = vunpack.c.l.b16 %v1925
        %v5783 = vunpack.c.l.b16 %v1926
        %v5784 = vunpack.c.l.b16 %v1927
        %v5785 = vunpack.c.l.b16 %v1928
        %v5786 = vunpack.c.l.b16 %v1929
        %v5787 = vunpack.c.l.b16 %v1930
        %v5788 = vunpack.c.l.b16 %v1931
        %v5789 = vunpack.c.l.b16 %v1932
        %v5790 = vunpack.c.l.b16 %v1933
        %v5791 = vunpack.c.l.b16 %v1934
        %v5792 = vunpack.c.l.b16 %v1935
        %v5793 = vunpack.c.l.b16 %v1936
        %v5794 = vunpack.c.l.b16 %v1937
        %v5795 = vunpack.c.l.b16 %v1938
        %v5796 = vunpack.c.l.b16 %v1939
        %v5797 = vunpack.c.l.b16 %v1940
        %v5798 = vunpack.c.l.b16 %v1941
        %v5799 = vunpack.c.l.b16 %v1942
        %v5800 = vunpack.c.l.b16 %v1943
        %v5801 = vunpack.c.l.b16 %v1944
        %v5802 = vunpack.c.l.b16 %v1945
        %v5803 = vunpack.c.l.b16 %v1946
        %v5804 = vunpack.c.l.b16 %v1947
        %v5805 = vunpack.c.l.b16 %v1948
        %v5806 = vunpack.c.l.b16 %v1949
        %v5807 = vunpack.c.l.b16 %v1950
        %v5808 = vunpack.c.l.b16 %v1951
        %v5809 = vunpack.c.l.b16 %v1952
        %v5810 = vunpack.c.l.b16 %v1953
        %v5811 = vunpack.c.l.b16 %v1954
        %v5812 = vunpack.c.l.b16 %v1955
        %v5813 = vunpack.c.l.b16 %v1956
        %v5814 = vunpack.c.l.b16 %v1957
        %v5815 = vunpack.c.l.b16 %v1958
        %v5816 = vunpack.c.l.b16 %v1959
        %v5817 = vunpack.c.l.b16 %v1960
        %v5818 = vunpack.c.l.b16 %v1961
        %v5819 = vunpack.c.l.b16 %v1962
        %v5820 = vunpack.c.l.b16 %v1963
        %v5821 = vunpack.c.l.b16 %v1964
        %v5822 = vunpack.c.l.b16 %v1965
        %v5823 = vunpack.c.l.b16 %v1966
        %v5824 = vunpack.c.l.b16 %v1967
        %v5825 = vunpack.c.l.b16 %v1968
        %v5826 = vunpack.c.l.b16 %v1969
        %v5827 = vunpack.c.l.b16 %v1970
        %v5828 = vunpack.c.l.b16 %v1971
        %v5829 = vunpack.c.l.b16 %v1972
        %v5830 = vunpack.c.l.b16 %v1973
        %v5831 = vunpack.c.l.b16 %v1974
        %v5832 = vunpack.c.l.b16 %v1975
        %v5833 = vunpack.c.l.b16 %v1976
        %v5834 = vunpack.c.l.b16 %v1977
        %v5835 = vunpack.c.l.b16 %v1978
        %v5836 = vunpack.c.l.b16 %v1979
        %v5837 = vunpack.c.l.b16 %v1980
        %v5838 = vunpack.c.l.b16 %v1981
        %v5839 = vunpack.c.l.b16 %v1982
        %v5840 = vunpack.c.l.b16 %v1983
        %v5841 = vunpack.c.l.b16 %v1984
        %v5842 = vunpack.c.l.b16 %v1985
        %v5843 = vunpack.c.l.b16 %v1986
        %v5844 = vunpack.c.l.b16 %v1987
        %v5845 = vunpack.c.l.b16 %v1988
        %v5846 = vunpack.c.l.b16 %v1989
        %v5847 = vunpack.c.l.b16 %v1990
        %v5848 = vunpack.c.l.b16 %v1991
        %v5849 = vunpack.c.l.b16 %v1992
        %v5850 = vunpack.c.l.b16 %v1993
        %v5851 = vunpack.c.l.b16 %v1994
        %v5852 = vunpack.c.l.b16 %v1995
        %v5853 = vunpack.c.l.b16 %v1996
        %v5854 = vunpack.c.l.b16 %v1997
        %v5855 = vunpack.c.l.b16 %v1998
        %v5856 = vunpack.c.l.b16 %v1999
        %v5857 = vunpack.c.l.b16 %v2000
        %v5858 = vunpack.c.l.b16 %v2001
        %v5859 = vunpack.c.l.b16 %v2002
        %v5860 = vunpack.c.l.b16 %v2003
        %v5861 = vunpack.c.l.b16 %v2004
        %v5862 = vunpack.c.l.b16 %v2005
        %v5863 = vunpack.c.l.b16 %v2006
        %v5864 = vunpack.c.l.b16 %v2007
        %v5865 = vunpack.c.l.b16 %v2008
        %v5866 = vunpack.c.l.b16 %v2009
        %v5867 = vunpack.c.l.b16 %v2010
        %v5868 = vunpack.c.l.b16 %v2011
        %v5869 = vunpack.c.l.b16 %v2012
        %v5870 = vunpack.c.l.b16 %v2013
        %v5871 = vunpack.c.l.b16 %v2014
        %v5872 = vunpack.c.l.b16 %v2015
        %v5873 = vunpack.c.l.b16 %v2016
        %v5874 = vunpack.c.l.b16 %v2017
        %v5875 = vunpack.c.l.b16 %v2018
        %v5876 = vunpack.c.l.b16 %v2019
        %v5877 = vunpack.c.l.b16 %v2020
        %v5878 = vunpack.c.l.b16 %v2021
        %v5879 = vunpack.c.l.b16 %v2022
        %v5880 = vunpack.c.l.b16 %v2023
        %v5881 = vunpack.c.l.b16 %v2024
        %v5882 = vunpack.c.l.b16 %v2025
        %v5883 = vunpack.c.l.b16 %v2026
        %v5884 = vunpack.c.l.b16 %v2027
        %v5885 = vunpack.c.l.b16 %v2028
        %v5886 = vunpack.c.l.b16 %v2029
        %v5887 = vunpack.c.l.b16 %v2030
        %v5888 = vunpack.c.l.b16 %v2031
        %v5889 = vunpack.c.l.b16 %v2032
        %v5890 = vunpack.c.l.b16 %v2033
        %v5891 = vunpack.c.l.b16 %v2034
        %v5892 = vunpack.c.l.b16 %v2035
        %v5893 = vunpack.c.l.b16 %v2036
        %v5894 = vunpack.c.l.b16 %v2037
        %v5895 = vunpack.c.l.b16 %v2038
        %v5896 = vunpack.c.l.b16 %v2039
        %v5897 = vunpack.c.l.b16 %v2040
        %v5898 = vunpack.c.l.b16 %v2041
        %v5899 = vunpack.c.l.b16 %v2042
        %v5900 = vunpack.c.l.b16 %v2043
        %v5901 = vunpack.c.l.b16 %v2044
        %v5902 = vunpack.c.l.b16 %v2045
        %v5903 = vunpack.c.l.b16 %v2046
        %v5904 = vunpack.c.l.b16 %v2047
        %v5905 = vunpack.c.l.b16 %v2048
        %v5906 = vunpack.c.l.b16 %v2049
        %v5907 = vunpack.c.l.b16 %v2050
        %v5908 = vunpack.c.l.b16 %v2051
        %v5909 = vunpack.c.l.b16 %v2052
        %v5910 = vunpack.c.l.b16 %v2053
        %v5911 = vunpack.c.l.b16 %v2054
        %v5912 = vunpack.c.l.b16 %v2055
        %v5913 = vunpack.c.l.b16 %v2056
        %v5914 = vunpack.c.l.b16 %v2057
        %v5915 = vunpack.c.l.b16 %v2058
        %v5916 = vunpack.c.l.b16 %v2059
        %v5917 = vunpack.c.l.b16 %v2060
        %v5918 = vunpack.c.l.b16 %v2061
        %v5919 = vunpack.c.l.b16 %v2062
        %v5920 = vunpack.c.l.b16 %v2063
        %v5921 = vunpack.c.l.b16 %v2064
        %v5922 = vunpack.c.l.b16 %v2065
        %v5923 = vunpack.c.l.b16 %v2066
        %v5924 = vunpack.c.l.b16 %v2067
        %v5925 = vunpack.c.l.b16 %v2068
        %v5926 = vunpack.c.l.b16 %v2069
        %v5927 = vunpack.c.l.b16 %v2070
        %v5928 = vunpack.c.l.b16 %v2071
        %v5929 = vunpack.c.l.b16 %v2072
        %v5930 = vunpack.c.l.b16 %v2073
        %v5931 = vunpack.c.l.b16 %v2074
        %v5932 = vunpack.c.l.b16 %v2075
        %v5933 = vunpack.c.l.b16 %v2076
        %v5934 = vunpack.c.l.b16 %v2077
        %v5935 = vunpack.c.l.b16 %v2078
        %v5936 = vunpack.c.l.b16 %v2079
        %v5937 = vunpack.c.l.b16 %v2080
        %v5938 = vunpack.c.l.b16 %v2081
        %v5939 = vunpack.c.l.b16 %v2082
        %v5940 = vunpack.c.l.b16 %v2083
        %v5941 = vunpack.c.l.b16 %v2084
        %v5942 = vunpack.c.l.b16 %v2085
        %v5943 = vunpack.c.l.b16 %v2086
        %v5944 = vunpack.c.l.b16 %v2087
        %v5945 = vunpack.c.l.b16 %v2088
        %v5946 = vunpack.c.l.b16 %v2089
        %v5947 = vunpack.c.l.b16 %v2090
        %v5948 = vunpack.c.l.b16 %v2091
        %v5949 = vunpack.c.l.b16 %v2092
        %v5950 = vunpack.c.l.b16 %v2093
        %v5951 = vunpack.c.l.b16 %v2094
        %v5952 = vunpack.c.l.b16 %v2095
        %v5953 = vunpack.c.l.b16 %v2096
        %v5954 = vunpack.c.l.b16 %v2097
        %v5955 = vunpack.c.l.b16 %v2098
        %v5956 = vunpack.c.l.b16 %v2099
        %v5957 = vunpack.c.l.b16 %v2100
        %v5958 = vunpack.c.l.b16 %v2101
        %v5959 = vunpack.c.l.b16 %v2102
        %v5960 = vunpack.c.l.b16 %v2103
        %v5961 = vunpack.c.l.b16 %v2104
        %v5962 = vunpack.c.l.b16 %v2105
        %v5963 = vunpack.c.l.b16 %v2106
        %v5964 = vunpack.c.l.b16 %v2107
        %v5965 = vunpack.c.l.b16 %v2108
        %v5966 = vunpack.c.l.b16 %v2109
        %v5967 = vunpack.c.l.b16 %v2110
        %v5968 = vunpack.c.l.b16 %v2111
        %v5969 = vunpack.c.l.b16 %v2112
        %v5970 = vunpack.c.l.b16 %v2113
        %v5971 = vunpack.c.l.b16 %v2114
        %v5972 = vunpack.c.l.b16 %v2115
        %v5973 = vunpack.c.l.b16 %v2116
        %v5974 = vunpack.c.l.b16 %v2117
        %v5975 = vunpack.c.l.b16 %v2118
        %v5976 = vunpack.c.l.b16 %v2119
        %v5977 = vunpack.c.l.b16 %v2120
        %v5978 = vunpack.c.l.b16 %v2121
        %v5979 = vunpack.c.l.b16 %v2122
        %v5980 = vunpack.c.l.b16 %v2123
        %v5981 = vunpack.c.l.b16 %v2124
        %v5982 = vunpack.c.l.b16 %v2125
        %v5983 = vunpack.c.l.b16 %v2126
        %v5984 = vunpack.c.l.b16 %v2127
        %v5985 = vunpack.c.l.b16 %v2128
        %v5986 = vunpack.c.l.b16 %v2129
        %v5987 = vunpack.c.l.b16 %v2130
        %v5988 = vunpack.c.l.b16 %v2131
        %v5989 = vunpack.c.l.b16 %v2132
        %v5990 = vunpack.c.l.b16 %v2133
        %v5991 = vunpack.c.l.b16 %v2134
        %v5992 = vunpack.c.l.b16 %v2135
        %v5993 = vunpack.c.l.b16 %v2136
        %v5994 = vunpack.c.l.b16 %v2137
        %v5995 = vunpack.c.l.b16 %v2138
        %v5996 = vunpack.c.l.b16 %v2139
        %v5997 = vunpack.c.l.b16 %v2140
        %v5998 = vunpack.c.l.b16 %v2141
        %v5999 = vunpack.c.l.b16 %v2142
        %v6000 = vunpack.c.l.b16 %v2143
        %v6001 = vunpack.c.l.b16 %v2144
        %v6002 = vunpack.c.l.b16 %v2145
        %v6003 = vunpack.c.l.b16 %v2146
        %v6004 = vunpack.c.l.b16 %v2147
        %v6005 = vunpack.c.l.b16 %v2148
        %v6006 = vunpack.c.l.b16 %v2149
        %v6007 = vunpack.c.l.b16 %v2150
        %v6008 = vunpack.c.l.b16 %v2151
        %v6009 = vunpack.c.l.b16 %v2152
        %v6010 = vunpack.c.l.b16 %v2153
        %v6011 = vunpack.c.l.b16 %v2154
        %v6012 = vunpack.c.l.b16 %v2155
        %v6013 = vunpack.c.l.b16 %v2156
        %v6014 = vunpack.c.l.b16 %v2157
        %v6015 = vunpack.c.l.b16 %v2158
        %v6016 = vunpack.c.l.b16 %v2159
        %v6017 = vunpack.c.l.b16 %v2160
        %v6018 = vunpack.c.l.b16 %v2161
        %v6019 = vunpack.c.l.b16 %v2162
        %v6020 = vunpack.c.l.b16 %v2163
        %v6021 = vunpack.c.l.b16 %v2164
        %v6022 = vunpack.c.l.b16 %v2165
        %v6023 = vunpack.c.l.b16 %v2166
        %v6024 = vunpack.c.l.b16 %v2167
        %v6025 = vunpack.c.l.b16 %v2168
        %v6026 = vunpack.c.l.b16 %v2169
        %v6027 = vunpack.c.l.b16 %v2170
        %v6028 = vunpack.c.l.b16 %v2171
        %v6029 = vunpack.c.l.b16 %v2172
        %v6030 = vunpack.c.l.b16 %v2173
        %v6031 = vunpack.c.l.b16 %v2174
        %v6032 = vunpack.c.l.b16 %v2175
        %v6033 = vunpack.c.l.b16 %v2176
        %v6034 = vunpack.c.l.b16 %v2177
        %v6035 = vunpack.c.l.b16 %v2178
        %v6036 = vunpack.c.l.b16 %v2179
        %v6037 = vunpack.c.l.b16 %v2180
        %v6038 = vunpack.c.l.b16 %v2181
        %v6039 = vunpack.c.l.b16 %v2182
        %v6040 = vunpack.c.l.b16 %v2183
        %v6041 = vunpack.c.l.b16 %v2184
        %v6042 = vunpack.c.l.b16 %v2185
        %v6043 = vunpack.c.l.b16 %v2186
        %v6044 = vunpack.c.l.b16 %v2187
        %v6045 = vunpack.c.l.b16 %v2188
        %v6046 = vunpack.c.l.b16 %v2189
        %v6047 = vunpack.c.l.b16 %v2190
        %v6048 = vunpack.c.l.b16 %v2191
        %v6049 = vunpack.c.l.b16 %v2192
        %v6050 = vunpack.c.l.b16 %v2193
        %v6051 = vunpack.c.l.b16 %v2194
        %v6052 = vunpack.c.l.b16 %v2195
        %v6053 = vunpack.c.l.b16 %v2196
        %v6054 = vunpack.c.l.b16 %v2197
        %v6055 = vunpack.c.l.b16 %v2198
        %v6056 = vunpack.c.l.b16 %v2199
        %v6057 = vunpack.c.l.b16 %v2200
        %v6058 = vunpack.c.l.b16 %v2201
        %v6059 = vunpack.c.l.b16 %v2202
        %v6060 = vunpack.c.l.b16 %v2203
        %v6061 = vunpack.c.l.b16 %v2204
        %v6062 = vunpack.c.l.b16 %v2205
        %v6063 = vunpack.c.l.b16 %v2206
        %v6064 = vunpack.c.l.b16 %v2207
        %v6065 = vunpack.c.l.b16 %v2208
        %v6066 = vunpack.c.l.b16 %v2209
        %v6067 = vunpack.c.l.b16 %v2210
        %v6068 = vunpack.c.l.b16 %v2211
        %v6069 = vunpack.c.l.b16 %v2212
        %v6070 = vunpack.c.l.b16 %v2213
        %v6071 = vunpack.c.l.b16 %v2214
        %v6072 = vunpack.c.l.b16 %v2215
        %v6073 = vunpack.c.l.b16 %v2216
        %v6074 = vunpack.c.l.b16 %v2217
        %v6075 = vunpack.c.l.b16 %v2218
        %v6076 = vunpack.c.l.b16 %v2219
        %v6077 = vunpack.c.l.b16 %v2220
        %v6078 = vunpack.c.l.b16 %v2221
        %v6079 = vunpack.c.l.b16 %v2222
        %v6080 = vunpack.c.l.b16 %v2223
        %v6081 = vunpack.c.l.b16 %v2224
        %v6082 = vunpack.c.l.b16 %v2225
        %v6083 = vunpack.c.l.b16 %v2226
        %v6084 = vunpack.c.l.b16 %v2227
        %v6085 = vunpack.c.l.b16 %v2228
        %v6086 = vunpack.c.l.b16 %v2229
        %v6087 = vunpack.c.l.b16 %v2230
        %v6088 = vunpack.c.l.b16 %v2231
        %v6089 = vunpack.c.l.b16 %v2232
        %v6090 = vunpack.c.l.b16 %v2233
        %v6091 = vunpack.c.l.b16 %v2234
        %v6092 = vunpack.c.l.b16 %v2235
        %v6093 = vunpack.c.l.b16 %v2236
        %v6094 = vunpack.c.l.b16 %v2237
        %v6095 = vunpack.c.l.b16 %v2238
        %v6096 = vunpack.c.l.b16 %v2239
        %v6097 = vunpack.c.l.b16 %v2240
        %v6098 = vunpack.c.l.b16 %v2241
        %v6099 = vunpack.c.l.b16 %v2242
        %v6100 = vunpack.c.l.b16 %v2243
        %v6101 = vunpack.c.l.b16 %v2244
        %v6102 = vunpack.c.l.b16 %v2245
        %v6103 = vunpack.c.l.b16 %v2246
        %v6104 = vunpack.c.l.b16 %v2247
        %v6105 = vunpack.c.l.b16 %v2248
        %v6106 = vunpack.c.l.b16 %v2249
        %v6107 = vunpack.c.l.b16 %v2250
        %v6108 = vunpack.c.l.b16 %v2251
        %v6109 = vunpack.c.l.b16 %v2252
        %v6110 = vpack.c.b16 %v4543, %v4542
        %v6111 = vpack.c.b16 %v4545, %v4544
        %v6112 = vpack.c.b16 %v4547, %v4546
        %v6113 = vpack.c.b16 %v4549, %v4548
        %v6114 = vpack.c.b16 %v4551, %v4550
        %v6115 = vpack.c.b16 %v4553, %v4552
        %v6116 = vpack.c.b16 %v4555, %v4554
        %v6117 = vpack.c.b16 %v4557, %v4556
        %v6118 = vpack.c.b16 %v4559, %v4558
        %v6119 = vpack.c.b16 %v4561, %v4560
        %v6120 = vpack.c.b16 %v4563, %v4562
        %v6121 = vpack.c.b16 %v4565, %v4564
        %v6122 = vpack.c.b16 %v4567, %v4566
        %v6123 = vpack.c.b16 %v4569, %v4568
        %v6124 = vpack.c.b16 %v4571, %v4570
        %v6125 = vpack.c.b16 %v4573, %v4572
        %v6126 = vpack.c.b16 %v4575, %v4574
        %v6127 = vpack.c.b16 %v4577, %v4576
        %v6128 = vpack.c.b16 %v4579, %v4578
        %v6129 = vpack.c.b16 %v4581, %v4580
        %v6130 = vpack.c.b16 %v4583, %v4582
        %v6131 = vpack.c.b16 %v4585, %v4584
        %v6132 = vpack.c.b16 %v4587, %v4586
        %v6133 = vpack.c.b16 %v4589, %v4588
        %v6134 = vpack.c.b16 %v4591, %v4590
        %v6135 = vpack.c.b16 %v4593, %v4592
        %v6136 = vpack.c.b16 %v4595, %v4594
        %v6137 = vpack.c.b16 %v4597, %v4596
        %v6138 = vpack.c.b16 %v4599, %v4598
        %v6139 = vpack.c.b16 %v4601, %v4600
        %v6140 = vpack.c.b16 %v4603, %v4602
        %v6141 = vpack.c.b16 %v4605, %v4604
        %v6142 = vpack.c.b16 %v4607, %v4606
        %v6143 = vpack.c.b16 %v4609, %v4608
        %v6144 = vpack.c.b16 %v4611, %v4610
        %v6145 = vpack.c.b16 %v4613, %v4612
        %v6146 = vpack.c.b16 %v4615, %v4614
        %v6147 = vpack.c.b16 %v4617, %v4616
        %v6148 = vpack.c.b16 %v4619, %v4618
        %v6149 = vpack.c.b16 %v4621, %v4620
        %v6150 = vpack.c.b16 %v4623, %v4622
        %v6151 = vpack.c.b16 %v4625, %v4624
        %v6152 = vpack.c.b16 %v4627, %v4626
        %v6153 = vpack.c.b16 %v4629, %v4628
        %v6154 = vpack.c.b16 %v4631, %v4630
        %v6155 = vpack.c.b16 %v4633, %v4632
        %v6156 = vpack.c.b16 %v4635, %v4634
        %v6157 = vpack.c.b16 %v4637, %v4636
        %v6158 = vpack.c.b16 %v4639, %v4638
        %v6159 = vpack.c.b16 %v4641, %v4640
        %v6160 = vpack.c.b16 %v4643, %v4642
        %v6161 = vpack.c.b16 %v4645, %v4644
        %v6162 = vpack.c.b16 %v4647, %v4646
        %v6163 = vpack.c.b16 %v4649, %v4648
        %v6164 = vpack.c.b16 %v4651, %v4650
        %v6165 = vpack.c.b16 %v4653, %v4652
        %v6166 = vpack.c.b16 %v4655, %v4654
        %v6167 = vpack.c.b16 %v4657, %v4656
        %v6168 = vpack.c.b16 %v4659, %v4658
        %v6169 = vpack.c.b16 %v4661, %v4660
        %v6170 = vpack.c.b16 %v4663, %v4662
        %v6171 = vpack.c.b16 %v4665, %v4664
        %v6172 = vpack.c.b16 %v4667, %v4666
        %v6173 = vpack.c.b16 %v4669, %v4668
        %v6174 = vpack.c.b16 %v4671, %v4670
        %v6175 = vpack.c.b16 %v4673, %v4672
        %v6176 = vpack.c.b16 %v4675, %v4674
        %v6177 = vpack.c.b16 %v4677, %v4676
        %v6178 = vpack.c.b16 %v4679, %v4678
        %v6179 = vpack.c.b16 %v4681, %v4680
        %v6180 = vpack.c.b16 %v4683, %v4682
        %v6181 = vpack.c.b16 %v4685, %v4684
        %v6182 = vpack.c.b16 %v4687, %v4686
        %v6183 = vpack.c.b16 %v4689, %v4688
        %v6184 = vpack.c.b16 %v4691, %v4690
        %v6185 = vpack.c.b16 %v4693, %v4692
        %v6186 = vpack.c.b16 %v4695, %v4694
        %v6187 = vpack.c.b16 %v4697, %v4696
        %v6188 = vpack.c.b16 %v4699, %v4698
        %v6189 = vpack.c.b16 %v4701, %v4700
        %v6190 = vpack.c.b16 %v4703, %v4702
        %v6191 = vpack.c.b16 %v4705, %v4704
        %v6192 = vpack.c.b16 %v4707, %v4706
        %v6193 = vpack.c.b16 %v4709, %v4708
        %v6194 = vpack.c.b16 %v4711, %v4710
        %v6195 = vpack.c.b16 %v4713, %v4712
        %v6196 = vpack.c.b16 %v4715, %v4714
        %v6197 = vpack.c.b16 %v4717, %v4716
        %v6198 = vpack.c.b16 %v4719, %v4718
        %v6199 = vpack.c.b16 %v4721, %v4720
        %v6200 = vpack.c.b16 %v4723, %v4722
        %v6201 = vpack.c.b16 %v4725, %v4724
        %v6202 = vpack.c.b16 %v4727, %v4726
        %v6203 = vpack.c.b16 %v4729, %v4728
        %v6204 = vpack.c.b16 %v4731, %v4730
        %v6205 = vpack.c.b16 %v4733, %v4732
        %v6206 = vpack.c.b16 %v4735, %v4734
        %v6207 = vpack.c.b16 %v4737, %v4736
        %v6208 = vpack.c.b16 %v4739, %v4738
        %v6209 = vpack.c.b16 %v4741, %v4740
        %v6210 = vpack.c.b16 %v4743, %v4742
        %v6211 = vpack.c.b16 %v4745, %v4744
        %v6212 = vpack.c.b16 %v4747, %v4746
        %v6213 = vpack.c.b16 %v4749, %v4748
        %v6214 = vpack.c.b16 %v4751, %v4750
        %v6215 = vpack.c.b16 %v4753, %v4752
        %v6216 = vpack.c.b16 %v4755, %v4754
        %v6217 = vpack.c.b16 %v4757, %v4756
        %v6218 = vpack.c.b16 %v4759, %v4758
        %v6219 = vpack.c.b16 %v4761, %v4760
        %v6220 = vpack.c.b16 %v4763, %v4762
        %v6221 = vpack.c.b16 %v4765, %v4764
        %v6222 = vpack.c.b16 %v4767, %v4766
        %v6223 = vpack.c.b16 %v4769, %v4768
        %v6224 = vpack.c.b16 %v4771, %v4770
        %v6225 = vpack.c.b16 %v4773, %v4772
        %v6226 = vpack.c.b16 %v4775, %v4774
        %v6227 = vpack.c.b16 %v4777, %v4776
        %v6228 = vpack.c.b16 %v4779, %v4778
        %v6229 = vpack.c.b16 %v4781, %v4780
        %v6230 = vpack.c.b16 %v4783, %v4782
        %v6231 = vpack.c.b16 %v4785, %v4784
        %v6232 = vpack.c.b16 %v4787, %v4786
        %v6233 = vpack.c.b16 %v4789, %v4788
        %v6234 = vpack.c.b16 %v4791, %v4790
        %v6235 = vpack.c.b16 %v4793, %v4792
        %v6236 = vpack.c.b16 %v4795, %v4794
        %v6237 = vpack.c.b16 %v4797, %v4796
        %v6238 = vpack.c.b16 %v4799, %v4798
        %v6239 = vpack.c.b16 %v4801, %v4800
        %v6240 = vpack.c.b16 %v4803, %v4802
        %v6241 = vpack.c.b16 %v4805, %v4804
        %v6242 = vpack.c.b16 %v4807, %v4806
        %v6243 = vpack.c.b16 %v4809, %v4808
        %v6244 = vpack.c.b16 %v4811, %v4810
        %v6245 = vpack.c.b16 %v4813, %v4812
        %v6246 = vpack.c.b16 %v4815, %v4814
        %v6247 = vpack.c.b16 %v4817, %v4816
        %v6248 = vpack.c.b16 %v4819, %v4818
        %v6249 = vpack.c.b16 %v4821, %v4820
        %v6250 = vpack.c.b16 %v4823, %v4822
        %v6251 = vpack.c.b16 %v4825, %v4824
        %v6252 = vpack.c.b16 %v4827, %v4826
        %v6253 = vpack.c.b16 %v4829, %v4828
        %v6254 = vpack.c.b16 %v4831, %v4830
        %v6255 = vpack.c.b16 %v4833, %v4832
        %v6256 = vpack.c.b16 %v4835, %v4834
        %v6257 = vpack.c.b16 %v4837, %v4836
        %v6258 = vpack.c.b16 %v4839, %v4838
        %v6259 = vpack.c.b16 %v4841, %v4840
        %v6260 = vpack.c.b16 %v4843, %v4842
        %v6261 = vpack.c.b16 %v4845, %v4844
        %v6262 = vpack.c.b16 %v4847, %v4846
        %v6263 = vpack.c.b16 %v4849, %v4848
        %v6264 = vpack.c.b16 %v4851, %v4850
        %v6265 = vpack.c.b16 %v4853, %v4852
        %v6266 = vpack.c.b16 %v4855, %v4854
        %v6267 = vpack.c.b16 %v4857, %v4856
        %v6268 = vpack.c.b16 %v4859, %v4858
        %v6269 = vpack.c.b16 %v4861, %v4860
        %v6270 = vpack.c.b16 %v4863, %v4862
        %v6271 = vpack.c.b16 %v4865, %v4864
        %v6272 = vpack.c.b16 %v4867, %v4866
        %v6273 = vpack.c.b16 %v4869, %v4868
        %v6274 = vpack.c.b16 %v4871, %v4870
        %v6275 = vpack.c.b16 %v4873, %v4872
        %v6276 = vpack.c.b16 %v4875, %v4874
        %v6277 = vpack.c.b16 %v4877, %v4876
        %v6278 = vpack.c.b16 %v4879, %v4878
        %v6279 = vpack.c.b16 %v4881, %v4880
        %v6280 = vpack.c.b16 %v4883, %v4882
        %v6281 = vpack.c.b16 %v4885, %v4884
        %v6282 = vpack.c.b16 %v4887, %v4886
        %v6283 = vpack.c.b16 %v4889, %v4888
        %v6284 = vpack.c.b16 %v4891, %v4890
        %v6285 = vpack.c.b16 %v4893, %v4892
        %v6286 = vpack.c.b16 %v4895, %v4894
        %v6287 = vpack.c.b16 %v4897, %v4896
        %v6288 = vpack.c.b16 %v4899, %v4898
        %v6289 = vpack.c.b16 %v4901, %v4900
        %v6290 = vpack.c.b16 %v4903, %v4902
        %v6291 = vpack.c.b16 %v4905, %v4904
        %v6292 = vpack.c.b16 %v4907, %v4906
        %v6293 = vpack.c.b16 %v4909, %v4908
        %v6294 = vpack.c.b16 %v4911, %v4910
        %v6295 = vpack.c.b16 %v4913, %v4912
        %v6296 = vpack.c.b16 %v4915, %v4914
        %v6297 = vpack.c.b16 %v4917, %v4916
        %v6298 = vpack.c.b16 %v4919, %v4918
        %v6299 = vpack.c.b16 %v4921, %v4920
        %v6300 = vpack.c.b16 %v4923, %v4922
        %v6301 = vpack.c.b16 %v4925, %v4924
        %v6302 = vpack.c.b16 %v4927, %v4926
        %v6303 = vpack.c.b16 %v4929, %v4928
        %v6304 = vpack.c.b16 %v4931, %v4930
        %v6305 = vpack.c.b16 %v4933, %v4932
        %v6306 = vpack.c.b16 %v4935, %v4934
        %v6307 = vpack.c.b16 %v4937, %v4936
        %v6308 = vpack.c.b16 %v4939, %v4938
        %v6309 = vpack.c.b16 %v4941, %v4940
        %v6310 = vpack.c.b16 %v4943, %v4942
        %v6311 = vpack.c.b16 %v4945, %v4944
        %v6312 = vpack.c.b16 %v4947, %v4946
        %v6313 = vpack.c.b16 %v4949, %v4948
        %v6314 = vpack.c.b16 %v4951, %v4950
        %v6315 = vpack.c.b16 %v4953, %v4952
        %v6316 = vpack.c.b16 %v4955, %v4954
        %v6317 = vpack.c.b16 %v4957, %v4956
        %v6318 = vpack.c.b16 %v4959, %v4958
        %v6319 = vpack.c.b16 %v4961, %v4960
        %v6320 = vpack.c.b16 %v4963, %v4962
        %v6321 = vpack.c.b16 %v4965, %v4964
        %v6322 = vpack.c.b16 %v4967, %v4966
        %v6323 = vpack.c.b16 %v4969, %v4968
        %v6324 = vpack.c.b16 %v4971, %v4970
        %v6325 = vpack.c.b16 %v4973, %v4972
        %v6326 = vpack.c.b16 %v4975, %v4974
        %v6327 = vpack.c.b16 %v4977, %v4976
        %v6328 = vpack.c.b16 %v4979, %v4978
        %v6329 = vpack.c.b16 %v4981, %v4980
        %v6330 = vpack.c.b16 %v4983, %v4982
        %v6331 = vpack.c.b16 %v4985, %v4984
        %v6332 = vpack.c.b16 %v4987, %v4986
        %v6333 = vpack.c.b16 %v4989, %v4988
        %v6334 = vpack.c.b16 %v4991, %v4990
        %v6335 = vpack.c.b16 %v4993, %v4992
        %v6336 = vpack.c.b16 %v4995, %v4994
        %v6337 = vpack.c.b16 %v4997, %v4996
        %v6338 = vpack.c.b16 %v4999, %v4998
        %v6339 = vpack.c.b16 %v5001, %v5000
        %v6340 = vpack.c.b16 %v5003, %v5002
        %v6341 = vpack.c.b16 %v5005, %v5004
        %v6342 = vpack.c.b16 %v5007, %v5006
        %v6343 = vpack.c.b16 %v5009, %v5008
        %v6344 = vpack.c.b16 %v5011, %v5010
        %v6345 = vpack.c.b16 %v5013, %v5012
        %v6346 = vpack.c.b16 %v5015, %v5014
        %v6347 = vpack.c.b16 %v5017, %v5016
        %v6348 = vpack.c.b16 %v5019, %v5018
        %v6349 = vpack.c.b16 %v5021, %v5020
        %v6350 = vpack.c.b16 %v5023, %v5022
        %v6351 = vpack.c.b16 %v5025, %v5024
        %v6352 = vpack.c.b16 %v5027, %v5026
        %v6353 = vpack.c.b16 %v5029, %v5028
        %v6354 = vpack.c.b16 %v5031, %v5030
        %v6355 = vpack.c.b16 %v5033, %v5032
        %v6356 = vpack.c.b16 %v5035, %v5034
        %v6357 = vpack.c.b16 %v5037, %v5036
        %v6358 = vpack.c.b16 %v5039, %v5038
        %v6359 = vpack.c.b16 %v5041, %v5040
        %v6360 = vpack.c.b16 %v5043, %v5042
        %v6361 = vpack.c.b16 %v5045, %v5044
        %v6362 = vpack.c.b16 %v5047, %v5046
        %v6363 = vpack.c.b16 %v5049, %v5048
        %v6364 = vpack.c.b16 %v5051, %v5050
        %v6365 = vpack.c.b16 %v5053, %v5052
        %v6366 = vpack.c.b16 %v5055, %v5054
        %v6367 = vpack.c.b16 %v5057, %v5056
        %v6368 = vpack.c.b16 %v5059, %v5058
        %v6369 = vpack.c.b16 %v5061, %v5060
        %v6370 = vpack.c.b16 %v5063, %v5062
        %v6371 = vpack.c.b16 %v5065, %v5064
        %v6372 = vpack.c.b16 %v5067, %v5066
        %v6373 = vpack.c.b16 %v5069, %v5068
        %v6374 = vpack.c.b16 %v5071, %v5070
        %v6375 = vpack.c.b16 %v5073, %v5072
        %v6376 = vpack.c.b16 %v5075, %v5074
        %v6377 = vpack.c.b16 %v5077, %v5076
        %v6378 = vpack.c.b16 %v5079, %v5078
        %v6379 = vpack.c.b16 %v5081, %v5080
        %v6380 = vpack.c.b16 %v5083, %v5082
        %v6381 = vpack.c.b16 %v5085, %v5084
        %v6382 = vpack.c.b16 %v5087, %v5086
        %v6383 = vpack.c.b16 %v5089, %v5088
        %v6384 = vpack.c.b16 %v5091, %v5090
        %v6385 = vpack.c.b16 %v5093, %v5092
        %v6386 = vpack.c.b16 %v5095, %v5094
        %v6387 = vpack.c.b16 %v5097, %v5096
        %v6388 = vpack.c.b16 %v5099, %v5098
        %v6389 = vpack.c.b16 %v5101, %v5100
        %v6390 = vpack.c.b16 %v5103, %v5102
        %v6391 = vpack.c.b16 %v5105, %v5104
        %v6392 = vpack.c.b16 %v5107, %v5106
        %v6393 = vpack.c.b16 %v5109, %v5108
        %v6394 = vpack.c.b16 %v5111, %v5110
        %v6395 = vpack.c.b16 %v5113, %v5112
        %v6396 = vpack.c.b16 %v5115, %v5114
        %v6397 = vpack.c.b16 %v5117, %v5116
        %v6398 = vpack.c.b16 %v5119, %v5118
        %v6399 = vpack.c.b16 %v5121, %v5120
        %v6400 = vpack.c.b16 %v5123, %v5122
        %v6401 = vpack.c.b16 %v5125, %v5124
        %v6402 = vpack.c.b16 %v5127, %v5126
        %v6403 = vpack.c.b16 %v5129, %v5128
        %v6404 = vpack.c.b16 %v5131, %v5130
        %v6405 = vpack.c.b16 %v5133, %v5132
        %v6406 = vpack.c.b16 %v5135, %v5134
        %v6407 = vpack.c.b16 %v5137, %v5136
        %v6408 = vpack.c.b16 %v5139, %v5138
        %v6409 = vpack.c.b16 %v5141, %v5140
        %v6410 = vpack.c.b16 %v5143, %v5142
        %v6411 = vpack.c.b16 %v5145, %v5144
        %v6412 = vpack.c.b16 %v5147, %v5146
        %v6413 = vpack.c.b16 %v5149, %v5148
        %v6414 = vpack.c.b16 %v5151, %v5150
        %v6415 = vpack.c.b16 %v5153, %v5152
        %v6416 = vpack.c.b16 %v5155, %v5154
        %v6417 = vpack.c.b16 %v5157, %v5156
        %v6418 = vpack.c.b16 %v5159, %v5158
        %v6419 = vpack.c.b16 %v5161, %v5160
        %v6420 = vpack.c.b16 %v5163, %v5162
        %v6421 = vpack.c.b16 %v5165, %v5164
        %v6422 = vpack.c.b16 %v5167, %v5166
        %v6423 = vpack.c.b16 %v5169, %v5168
        %v6424 = vpack.c.b16 %v5171, %v5170
        %v6425 = vpack.c.b16 %v5173, %v5172
        %v6426 = vpack.c.b16 %v5175, %v5174
        %v6427 = vpack.c.b16 %v5177, %v5176
        %v6428 = vpack.c.b16 %v5179, %v5178
        %v6429 = vpack.c.b16 %v5181, %v5180
        %v6430 = vpack.c.b16 %v5183, %v5182
        %v6431 = vpack.c.b16 %v5185, %v5184
        %v6432 = vpack.c.b16 %v5187, %v5186
        %v6433 = vpack.c.b16 %v5189, %v5188
        %v6434 = vpack.c.b16 %v5191, %v5190
        %v6435 = vpack.c.b16 %v5193, %v5192
        %v6436 = vpack.c.b16 %v5195, %v5194
        %v6437 = vpack.c.b16 %v5197, %v5196
        %v6438 = vpack.c.b16 %v5199, %v5198
        %v6439 = vpack.c.b16 %v5201, %v5200
        %v6440 = vpack.c.b16 %v5203, %v5202
        %v6441 = vpack.c.b16 %v5205, %v5204
        %v6442 = vpack.c.b16 %v5207, %v5206
        %v6443 = vpack.c.b16 %v5209, %v5208
        %v6444 = vpack.c.b16 %v5211, %v5210
        %v6445 = vpack.c.b16 %v5213, %v5212
        %v6446 = vpack.c.b16 %v5215, %v5214
        %v6447 = vpack.c.b16 %v5217, %v5216
        %v6448 = vpack.c.b16 %v5219, %v5218
        %v6449 = vpack.c.b16 %v5221, %v5220
        %v6450 = vpack.c.b16 %v5223, %v5222
        %v6451 = vpack.c.b16 %v5225, %v5224
        %v6452 = vpack.c.b16 %v5227, %v5226
        %v6453 = vpack.c.b16 %v5229, %v5228
        %v6454 = vpack.c.b16 %v5231, %v5230
        %v6455 = vpack.c.b16 %v5233, %v5232
        %v6456 = vpack.c.b16 %v5235, %v5234
        %v6457 = vpack.c.b16 %v5237, %v5236
        %v6458 = vpack.c.b16 %v5239, %v5238
        %v6459 = vpack.c.b16 %v5241, %v5240
        %v6460 = vpack.c.b16 %v5243, %v5242
        %v6461 = vpack.c.b16 %v5245, %v5244
        %v6462 = vpack.c.b16 %v5247, %v5246
        %v6463 = vpack.c.b16 %v5249, %v5248
        %v6464 = vpack.c.b16 %v5251, %v5250
        %v6465 = vpack.c.b16 %v5253, %v5252
        %v6466 = vpack.c.b16 %v5255, %v5254
        %v6467 = vpack.c.b16 %v5257, %v5256
        %v6468 = vpack.c.b16 %v5259, %v5258
        %v6469 = vpack.c.b16 %v5261, %v5260
        %v6470 = vpack.c.b16 %v5263, %v5262
        %v6471 = vpack.c.b16 %v5265, %v5264
        %v6472 = vpack.c.b16 %v5267, %v5266
        %v6473 = vpack.c.b16 %v5269, %v5268
        %v6474 = vpack.c.b16 %v5271, %v5270
        %v6475 = vpack.c.b16 %v5273, %v5272
        %v6476 = vpack.c.b16 %v5275, %v5274
        %v6477 = vpack.c.b16 %v5277, %v5276
        %v6478 = vpack.c.b16 %v5279, %v5278
        %v6479 = vpack.c.b16 %v5281, %v5280
        %v6480 = vpack.c.b16 %v5283, %v5282
        %v6481 = vpack.c.b16 %v5285, %v5284
        %v6482 = vpack.c.b16 %v5287, %v5286
        %v6483 = vpack.c.b16 %v5289, %v5288
        %v6484 = vpack.c.b16 %v5291, %v5290
        %v6485 = vpack.c.b16 %v5293, %v5292
        %v6486 = vpack.c.b16 %v5295, %v5294
        %v6487 = vpack.c.b16 %v5297, %v5296
        %v6488 = vpack.c.b16 %v5299, %v5298
        %v6489 = vpack.c.b16 %v5301, %v5300
        %v6490 = vpack.c.b16 %v5303, %v5302
        %v6491 = vpack.c.b16 %v5305, %v5304
        %v6492 = vpack.c.b16 %v5307, %v5306
        %v6493 = vpack.c.b16 %v5309, %v5308
        %v6494 = vpack.c.b16 %v5311, %v5310
        %v6495 = vpack.c.b16 %v5313, %v5312
        %v6496 = vpack.c.b16 %v5315, %v5314
        %v6497 = vpack.c.b16 %v5317, %v5316
        %v6498 = vpack.c.b16 %v5319, %v5318
        %v6499 = vpack.c.b16 %v5321, %v5320
        %v6500 = vpack.c.b16 %v5323, %v5322
        %v6501 = vpack.c.b16 %v5325, %v5324
        %v6502 = vpack.c.b16 %v5327, %v5326
        %v6503 = vpack.c.b16 %v5329, %v5328
        %v6504 = vpack.c.b16 %v5331, %v5330
        %v6505 = vpack.c.b16 %v5333, %v5332
        %v6506 = vpack.c.b16 %v5335, %v5334
        %v6507 = vpack.c.b16 %v5337, %v5336
        %v6508 = vpack.c.b16 %v5339, %v5338
        %v6509 = vpack.c.b16 %v5341, %v5340
        %v6510 = vpack.c.b16 %v5343, %v5342
        %v6511 = vpack.c.b16 %v5345, %v5344
        %v6512 = vpack.c.b16 %v5347, %v5346
        %v6513 = vpack.c.b16 %v5349, %v5348
        %v6514 = vpack.c.b16 %v5351, %v5350
        %v6515 = vpack.c.b16 %v5353, %v5352
        %v6516 = vpack.c.b16 %v5355, %v5354
        %v6517 = vpack.c.b16 %v5357, %v5356
        %v6518 = vpack.c.b16 %v5359, %v5358
        %v6519 = vpack.c.b16 %v5361, %v5360
        %v6520 = vpack.c.b16 %v5363, %v5362
        %v6521 = vpack.c.b16 %v5365, %v5364
        %v6522 = vpack.c.b16 %v5367, %v5366
        %v6523 = vpack.c.b16 %v5369, %v5368
        %v6524 = vpack.c.b16 %v5371, %v5370
        %v6525 = vpack.c.b16 %v5373, %v5372
        %v6526 = vpack.c.b16 %v5375, %v5374
        %v6527 = vpack.c.b16 %v5377, %v5376
        %v6528 = vpack.c.b16 %v5379, %v5378
        %v6529 = vpack.c.b16 %v5381, %v5380
        %v6530 = vpack.c.b16 %v5383, %v5382
        %v6531 = vpack.c.b16 %v5385, %v5384
        %v6532 = vpack.c.b16 %v5387, %v5386
        %v6533 = vpack.c.b16 %v5389, %v5388
        %v6534 = vpack.c.b16 %v5391, %v5390
        %v6535 = vpack.c.b16 %v5393, %v5392
        %v6536 = vpack.c.b16 %v5395, %v5394
        %v6537 = vpack.c.b16 %v5397, %v5396
        %v6538 = vpack.c.b16 %v5399, %v5398
        %v6539 = vpack.c.b16 %v5401, %v5400
        %v6540 = vpack.c.b16 %v5403, %v5402
        %v6541 = vpack.c.b16 %v5405, %v5404
        %v6542 = vpack.c.b16 %v5407, %v5406
        %v6543 = vpack.c.b16 %v5409, %v5408
        %v6544 = vpack.c.b16 %v5411, %v5410
        %v6545 = vpack.c.b16 %v5413, %v5412
        %v6546 = vpack.c.b16 %v5415, %v5414
        %v6547 = vpack.c.b16 %v5417, %v5416
        %v6548 = vpack.c.b16 %v5419, %v5418
        %v6549 = vpack.c.b16 %v5421, %v5420
        %v6550 = vpack.c.b16 %v5423, %v5422
        %v6551 = vpack.c.b16 %v5425, %v5424
        %v6552 = vpack.c.b16 %v5427, %v5426
        %v6553 = vpack.c.b16 %v5429, %v5428
        %v6554 = vpack.c.b16 %v5431, %v5430
        %v6555 = vpack.c.b16 %v5433, %v5432
        %v6556 = vpack.c.b16 %v5435, %v5434
        %v6557 = vpack.c.b16 %v5437, %v5436
        %v6558 = vpack.c.b16 %v5439, %v5438
        %v6559 = vpack.c.b16 %v5441, %v5440
        %v6560 = vpack.c.b16 %v5443, %v5442
        %v6561 = vpack.c.b16 %v5445, %v5444
        %v6562 = vpack.c.b16 %v5447, %v5446
        %v6563 = vpack.c.b16 %v5449, %v5448
        %v6564 = vpack.c.b16 %v5451, %v5450
        %v6565 = vpack.c.b16 %v5453, %v5452
        %v6566 = vpack.c.b16 %v5455, %v5454
        %v6567 = vpack.c.b16 %v5457, %v5456
        %v6568 = vpack.c.b16 %v5459, %v5458
        %v6569 = vpack.c.b16 %v5461, %v5460
        %v6570 = vpack.c.b16 %v5463, %v5462
        %v6571 = vpack.c.b16 %v5465, %v5464
        %v6572 = vpack.c.b16 %v5467, %v5466
        %v6573 = vpack.c.b16 %v5469, %v5468
        %v6574 = vpack.c.b16 %v5471, %v5470
        %v6575 = vpack.c.b16 %v5473, %v5472
        %v6576 = vpack.c.b16 %v5475, %v5474
        %v6577 = vpack.c.b16 %v5477, %v5476
        %v6578 = vpack.c.b16 %v5479, %v5478
        %v6579 = vpack.c.b16 %v5481, %v5480
        %v6580 = vpack.c.b16 %v5483, %v5482
        %v6581 = vpack.c.b16 %v5485, %v5484
        %v6582 = vpack.c.b16 %v5487, %v5486
        %v6583 = vpack.c.b16 %v5489, %v5488
        %v6584 = vpack.c.b16 %v5491, %v5490
        %v6585 = vpack.c.b16 %v5493, %v5492
        %v6586 = vpack.c.b16 %v5495, %v5494
        %v6587 = vpack.c.b16 %v5497, %v5496
        %v6588 = vpack.c.b16 %v5499, %v5498
        %v6589 = vpack.c.b16 %v5501, %v5500
        %v6590 = vpack.c.b16 %v5503, %v5502
        %v6591 = vpack.c.b16 %v5505, %v5504
        %v6592 = vpack.c.b16 %v5507, %v5506
        %v6593 = vpack.c.b16 %v5509, %v5508
        %v6594 = vpack.c.b16 %v5511, %v5510
        %v6595 = vpack.c.b16 %v5513, %v5512
        %v6596 = vpack.c.b16 %v5515, %v5514
        %v6597 = vpack.c.b16 %v5517, %v5516
        %v6598 = vpack.c.b16 %v5519, %v5518
        %v6599 = vpack.c.b16 %v5521, %v5520
        %v6600 = vpack.c.b16 %v5523, %v5522
        %v6601 = vpack.c.b16 %v5525, %v5524
        %v6602 = vpack.c.b16 %v5527, %v5526
        %v6603 = vpack.c.b16 %v5529, %v5528
        %v6604 = vpack.c.b16 %v5531, %v5530
        %v6605 = vpack.c.b16 %v5533, %v5532
        %v6606 = vpack.c.b16 %v5535, %v5534
        %v6607 = vpack.c.b16 %v5537, %v5536
        %v6608 = vpack.c.b16 %v5539, %v5538
        %v6609 = vpack.c.b16 %v5541, %v5540
        %v6610 = vpack.c.b16 %v5543, %v5542
        %v6611 = vpack.c.b16 %v5545, %v5544
        %v6612 = vpack.c.b16 %v5547, %v5546
        %v6613 = vpack.c.b16 %v5549, %v5548
        %v6614 = vpack.c.b16 %v5551, %v5550
        %v6615 = vpack.c.b16 %v5553, %v5552
        %v6616 = vpack.c.b16 %v5555, %v5554
        %v6617 = vpack.c.b16 %v5557, %v5556
        %v6618 = vpack.c.b16 %v5559, %v5558
        %v6619 = vpack.c.b16 %v5561, %v5560
        %v6620 = vpack.c.b16 %v5563, %v5562
        %v6621 = vpack.c.b16 %v5565, %v5564
        %v6622 = vpack.c.b16 %v5567, %v5566
        %v6623 = vpack.c.b16 %v5569, %v5568
        %v6624 = vpack.c.b16 %v5571, %v5570
        %v6625 = vpack.c.b16 %v5573, %v5572
        %v6626 = vpack.c.b16 %v5575, %v5574
        %v6627 = vpack.c.b16 %v5577, %v5576
        %v6628 = vpack.c.b16 %v5579, %v5578
        %v6629 = vpack.c.b16 %v5581, %v5580
        %v6630 = vpack.c.b16 %v5583, %v5582
        %v6631 = vpack.c.b16 %v5585, %v5584
        %v6632 = vpack.c.b16 %v5587, %v5586
        %v6633 = vpack.c.b16 %v5589, %v5588
        %v6634 = vpack.c.b16 %v5591, %v5590
        %v6635 = vpack.c.b16 %v5593, %v5592
        %v6636 = vpack.c.b16 %v5595, %v5594
        %v6637 = vpack.c.b16 %v5597, %v5596
        %v6638 = vpack.c.b16 %v5599, %v5598
        %v6639 = vpack.c.b16 %v5601, %v5600
        %v6640 = vpack.c.b16 %v5603, %v5602
        %v6641 = vpack.c.b16 %v5605, %v5604
        %v6642 = vpack.c.b16 %v5607, %v5606
        %v6643 = vpack.c.b16 %v5609, %v5608
        %v6644 = vpack.c.b16 %v5611, %v5610
        %v6645 = vpack.c.b16 %v5613, %v5612
        %v6646 = vpack.c.b16 %v5615, %v5614
        %v6647 = vpack.c.b16 %v5617, %v5616
        %v6648 = vpack.c.b16 %v5619, %v5618
        %v6649 = vpack.c.b16 %v5621, %v5620
        %v6650 = vpack.c.b16 %v5623, %v5622
        %v6651 = vpack.c.b16 %v5625, %v5624
        %v6652 = vpack.c.b16 %v5627, %v5626
        %v6653 = vpack.c.b16 %v5629, %v5628
        %v6654 = vpack.c.b16 %v5631, %v5630
        %v6655 = vpack.c.b16 %v5633, %v5632
        %v6656 = vpack.c.b16 %v5635, %v5634
        %v6657 = vpack.c.b16 %v5637, %v5636
        %v6658 = vpack.c.b16 %v5639, %v5638
        %v6659 = vpack.c.b16 %v5641, %v5640
        %v6660 = vpack.c.b16 %v5643, %v5642
        %v6661 = vpack.c.b16 %v5645, %v5644
        %v6662 = vpack.c.b16 %v5647, %v5646
        %v6663 = vpack.c.b16 %v5649, %v5648
        %v6664 = vpack.c.b16 %v5651, %v5650
        %v6665 = vpack.c.b16 %v5653, %v5652
        %v6666 = vpack.c.b16 %v5655, %v5654
        %v6667 = vpack.c.b16 %v5657, %v5656
        %v6668 = vpack.c.b16 %v5659, %v5658
        %v6669 = vpack.c.b16 %v5661, %v5660
        %v6670 = vpack.c.b16 %v5663, %v5662
        %v6671 = vpack.c.b16 %v5665, %v5664
        %v6672 = vpack.c.b16 %v5667, %v5666
        %v6673 = vpack.c.b16 %v5669, %v5668
        %v6674 = vpack.c.b16 %v5671, %v5670
        %v6675 = vpack.c.b16 %v5673, %v5672
        %v6676 = vpack.c.b16 %v5675, %v5674
        %v6677 = vpack.c.b16 %v5677, %v5676
        %v6678 = vpack.c.b16 %v5679, %v5678
        %v6679 = vpack.c.b16 %v5681, %v5680
        %v6680 = vpack.c.b16 %v5683, %v5682
        %v6681 = vpack.c.b16 %v5685, %v5684
        %v6682 = vpack.c.b16 %v5687, %v5686
        %v6683 = vpack.c.b16 %v5689, %v5688
        %v6684 = vpack.c.b16 %v5691, %v5690
        %v6685 = vpack.c.b16 %v5693, %v5692
        %v6686 = vpack.c.b16 %v5695, %v5694
        %v6687 = vpack.c.b16 %v5697, %v5696
        %v6688 = vpack.c.b16 %v5699, %v5698
        %v6689 = vpack.c.b16 %v5701, %v5700
        %v6690 = vpack.c.b16 %v5703, %v5702
        %v6691 = vpack.c.b16 %v5705, %v5704
        %v6692 = vpack.c.b16 %v5707, %v5706
        %v6693 = vpack.c.b16 %v5709, %v5708
        %v6694 = vpack.c.b16 %v5711, %v5710
        %v6695 = vpack.c.b16 %v5713, %v5712
        %v6696 = vpack.c.b16 %v5715, %v5714
        %v6697 = vpack.c.b16 %v5717, %v5716
        %v6698 = vpack.c.b16 %v5719, %v5718
        %v6699 = vpack.c.b16 %v5721, %v5720
        %v6700 = vpack.c.b16 %v5723, %v5722
        %v6701 = vpack.c.b16 %v5725, %v5724
        %v6702 = vpack.c.b16 %v5727, %v5726
        %v6703 = vpack.c.b16 %v5729, %v5728
        %v6704 = vpack.c.b16 %v5731, %v5730
        %v6705 = vpack.c.b16 %v5733, %v5732
        %v6706 = vpack.c.b16 %v5735, %v5734
        %v6707 = vpack.c.b16 %v5737, %v5736
        %v6708 = vpack.c.b16 %v5739, %v5738
        %v6709 = vpack.c.b16 %v5741, %v5740
        %v6710 = vpack.c.b16 %v5743, %v5742
        %v6711 = vpack.c.b16 %v5745, %v5744
        %v6712 = vpack.c.b16 %v5747, %v5746
        %v6713 = vpack.c.b16 %v5749, %v5748
        %v6714 = vpack.c.b16 %v5751, %v5750
        %v6715 = vpack.c.b16 %v5753, %v5752
        %v6716 = vpack.c.b16 %v5755, %v5754
        %v6717 = vpack.c.b16 %v5757, %v5756
        %v6718 = vpack.c.b16 %v5759, %v5758
        %v6719 = vpack.c.b16 %v5761, %v5760
        %v6720 = vpack.c.b16 %v5763, %v5762
        %v6721 = vpack.c.b16 %v5765, %v5764
        %v6722 = vpack.c.b16 %v5767, %v5766
        %v6723 = vpack.c.b16 %v5769, %v5768
        %v6724 = vpack.c.b16 %v5771, %v5770
        %v6725 = vpack.c.b16 %v5773, %v5772
        %v6726 = vpack.c.b16 %v5775, %v5774
        %v6727 = vpack.c.b16 %v5777, %v5776
        %v6728 = vpack.c.b16 %v5779, %v5778
        %v6729 = vpack.c.b16 %v5781, %v5780
        %v6730 = vpack.c.b16 %v5783, %v5782
        %v6731 = vpack.c.b16 %v5785, %v5784
        %v6732 = vpack.c.b16 %v5787, %v5786
        %v6733 = vpack.c.b16 %v5789, %v5788
        %v6734 = vpack.c.b16 %v5791, %v5790
        %v6735 = vpack.c.b16 %v5793, %v5792
        %v6736 = vpack.c.b16 %v5795, %v5794
        %v6737 = vpack.c.b16 %v5797, %v5796
        %v6738 = vpack.c.b16 %v5799, %v5798
        %v6739 = vpack.c.b16 %v5801, %v5800
        %v6740 = vpack.c.b16 %v5803, %v5802
        %v6741 = vpack.c.b16 %v5805, %v5804
        %v6742 = vpack.c.b16 %v5807, %v5806
        %v6743 = vpack.c.b16 %v5809, %v5808
        %v6744 = vpack.c.b16 %v5811, %v5810
        %v6745 = vpack.c.b16 %v5813, %v5812
        %v6746 = vpack.c.b16 %v5815, %v5814
        %v6747 = vpack.c.b16 %v5817, %v5816
        %v6748 = vpack.c.b16 %v5819, %v5818
        %v6749 = vpack.c.b16 %v5821, %v5820
        %v6750 = vpack.c.b16 %v5823, %v5822
        %v6751 = vpack.c.b16 %v5825, %v5824
        %v6752 = vpack.c.b16 %v5827, %v5826
        %v6753 = vpack.c.b16 %v5829, %v5828
        %v6754 = vpack.c.b16 %v5831, %v5830
        %v6755 = vpack.c.b16 %v5833, %v5832
        %v6756 = vpack.c.b16 %v5835, %v5834
        %v6757 = vpack.c.b16 %v5837, %v5836
        %v6758 = vpack.c.b16 %v5839, %v5838
        %v6759 = vpack.c.b16 %v5841, %v5840
        %v6760 = vpack.c.b16 %v5843, %v5842
        %v6761 = vpack.c.b16 %v5845, %v5844
        %v6762 = vpack.c.b16 %v5847, %v5846
        %v6763 = vpack.c.b16 %v5849, %v5848
        %v6764 = vpack.c.b16 %v5851, %v5850
        %v6765 = vpack.c.b16 %v5853, %v5852
        %v6766 = vpack.c.b16 %v5855, %v5854
        %v6767 = vpack.c.b16 %v5857, %v5856
        %v6768 = vpack.c.b16 %v5859, %v5858
        %v6769 = vpack.c.b16 %v5861, %v5860
        %v6770 = vpack.c.b16 %v5863, %v5862
        %v6771 = vpack.c.b16 %v5865, %v5864
        %v6772 = vpack.c.b16 %v5867, %v5866
        %v6773 = vpack.c.b16 %v5869, %v5868
        %v6774 = vpack.c.b16 %v5871, %v5870
        %v6775 = vpack.c.b16 %v5873, %v5872
        %v6776 = vpack.c.b16 %v5875, %v5874
        %v6777 = vpack.c.b16 %v5877, %v5876
        %v6778 = vpack.c.b16 %v5879, %v5878
        %v6779 = vpack.c.b16 %v5881, %v5880
        %v6780 = vpack.c.b16 %v5883, %v5882
        %v6781 = vpack.c.b16 %v5885, %v5884
        %v6782 = vpack.c.b16 %v5887, %v5886
        %v6783 = vpack.c.b16 %v5889, %v5888
        %v6784 = vpack.c.b16 %v5891, %v5890
        %v6785 = vpack.c.b16 %v5893, %v5892
        %v6786 = vpack.c.b16 %v5895, %v5894
        %v6787 = vpack.c.b16 %v5897, %v5896
        %v6788 = vpack.c.b16 %v5899, %v5898
        %v6789 = vpack.c.b16 %v5901, %v5900
        %v6790 = vpack.c.b16 %v5903, %v5902
        %v6791 = vpack.c.b16 %v5905, %v5904
        %v6792 = vpack.c.b16 %v5907, %v5906
        %v6793 = vpack.c.b16 %v5909, %v5908
        %v6794 = vpack.c.b16 %v5911, %v5910
        %v6795 = vpack.c.b16 %v5913, %v5912
        %v6796 = vpack.c.b16 %v5915, %v5914
        %v6797 = vpack.c.b16 %v5917, %v5916
        %v6798 = vpack.c.b16 %v5919, %v5918
        %v6799 = vpack.c.b16 %v5921, %v5920
        %v6800 = vpack.c.b16 %v5923, %v5922
        %v6801 = vpack.c.b16 %v5925, %v5924
        %v6802 = vpack.c.b16 %v5927, %v5926
        %v6803 = vpack.c.b16 %v5929, %v5928
        %v6804 = vpack.c.b16 %v5931, %v5930
        %v6805 = vpack.c.b16 %v5933, %v5932
        %v6806 = vpack.c.b16 %v5935, %v5934
        %v6807 = vpack.c.b16 %v5937, %v5936
        %v6808 = vpack.c.b16 %v5939, %v5938
        %v6809 = vpack.c.b16 %v5941, %v5940
        %v6810 = vpack.c.b16 %v5943, %v5942
        %v6811 = vpack.c.b16 %v5945, %v5944
        %v6812 = vpack.c.b16 %v5947, %v5946
        %v6813 = vpack.c.b16 %v5949, %v5948
        %v6814 = vpack.c.b16 %v5951, %v5950
        %v6815 = vpack.c.b16 %v5953, %v5952
        %v6816 = vpack.c.b16 %v5955, %v5954
        %v6817 = vpack.c.b16 %v5957, %v5956
        %v6818 = vpack.c.b16 %v5959, %v5958
        %v6819 = vpack.c.b16 %v5961, %v5960
        %v6820 = vpack.c.b16 %v5963, %v5962
        %v6821 = vpack.c.b16 %v5965, %v5964
        %v6822 = vpack.c.b16 %v5967, %v5966
        %v6823 = vpack.c.b16 %v5969, %v5968
        %v6824 = vpack.c.b16 %v5971, %v5970
        %v6825 = vpack.c.b16 %v5973, %v5972
        %v6826 = vpack.c.b16 %v5975, %v5974
        %v6827 = vpack.c.b16 %v5977, %v5976
        %v6828 = vpack.c.b16 %v5979, %v5978
        %v6829 = vpack.c.b16 %v5981, %v5980
        %v6830 = vpack.c.b16 %v5983, %v5982
        %v6831 = vpack.c.b16 %v5985, %v5984
        %v6832 = vpack.c.b16 %v5987, %v5986
        %v6833 = vpack.c.b16 %v5989, %v5988
        %v6834 = vpack.c.b16 %v5991, %v5990
        %v6835 = vpack.c.b16 %v5993, %v5992
        %v6836 = vpack.c.b16 %v5995, %v5994
        %v6837 = vpack.c.b16 %v5997, %v5996
        %v6838 = vpack.c.b16 %v5999, %v5998
        %v6839 = vpack.c.b16 %v6001, %v6000
        %v6840 = vpack.c.b16 %v6003, %v6002
        %v6841 = vpack.c.b16 %v6005, %v6004
        %v6842 = vpack.c.b16 %v6007, %v6006
        %v6843 = vpack.c.b16 %v6009, %v6008
        %v6844 = vpack.c.b16 %v6011, %v6010
        %v6845 = vpack.c.b16 %v6013, %v6012
        %v6846 = vpack.c.b16 %v6015, %v6014
        %v6847 = vpack.c.b16 %v6017, %v6016
        %v6848 = vpack.c.b16 %v6019, %v6018
        %v6849 = vpack.c.b16 %v6021, %v6020
        %v6850 = vpack.c.b16 %v6023, %v6022
        %v6851 = vpack.c.b16 %v6025, %v6024
        %v6852 = vpack.c.b16 %v6027, %v6026
        %v6853 = vpack.c.b16 %v6029, %v6028
        %v6854 = vpack.c.b16 %v6031, %v6030
        %v6855 = vpack.c.b16 %v6033, %v6032
        %v6856 = vpack.c.b16 %v6035, %v6034
        %v6857 = vpack.c.b16 %v6037, %v6036
        %v6858 = vpack.c.b16 %v6039, %v6038
        %v6859 = vpack.c.b16 %v6041, %v6040
        %v6860 = vpack.c.b16 %v6043, %v6042
        %v6861 = vpack.c.b16 %v6045, %v6044
        %v6862 = vpack.c.b16 %v6047, %v6046
        %v6863 = vpack.c.b16 %v6049, %v6048
        %v6864 = vpack.c.b16 %v6051, %v6050
        %v6865 = vpack.c.b16 %v6053, %v6052
        %v6866 = vpack.c.b16 %v6055, %v6054
        %v6867 = vpack.c.b16 %v6057, %v6056
        %v6868 = vpack.c.b16 %v6059, %v6058
        %v6869 = vpack.c.b16 %v6061, %v6060
        %v6870 = vpack.c.b16 %v6063, %v6062
        %v6871 = vpack.c.b16 %v6065, %v6064
        %v6872 = vpack.c.b16 %v6067, %v6066
        %v6873 = vpack.c.b16 %v6069, %v6068
        %v6874 = vpack.c.b16 %v6071, %v6070
        %v6875 = vpack.c.b16 %v6073, %v6072
        %v6876 = vpack.c.b16 %v6075, %v6074
        %v6877 = vpack.c.b16 %v6077, %v6076
        %v6878 = vpack.c.b16 %v6079, %v6078
        %v6879 = vpack.c.b16 %v6081, %v6080
        %v6880 = vpack.c.b16 %v6083, %v6082
        %v6881 = vpack.c.b16 %v6085, %v6084
        %v6882 = vpack.c.b16 %v6087, %v6086
        %v6883 = vpack.c.b16 %v6089, %v6088
        %v6884 = vpack.c.b16 %v6091, %v6090
        %v6885 = vpack.c.b16 %v6093, %v6092
        %v6886 = vpack.c.b16 %v6095, %v6094
        %v6887 = vpack.c.b16 %v6097, %v6096
        %v6888 = vpack.c.b16 %v6099, %v6098
        %v6889 = vpack.c.b16 %v6101, %v6100
        %v6890 = vpack.c.b16 %v6103, %v6102
        %v6891 = vpack.c.b16 %v6105, %v6104
        %v6892 = vpack.c.b16 %v6107, %v6106
        %v6893 = vpack.c.b16 %v6109, %v6108
        %7678 = vmatprep.subr.bf16.mxu0 0
        %7679 = vmatpush1.bf16.msra.mxu0 %v6117
        %7680 = vmatprep.subr.bf16.mxu0 0
        %7681 = vmatpush1.bf16.msra.mxu0 %v6116
        %7682 = vmatprep.subr.bf16.mxu0 0
        %7683 = vmatpush1.bf16.msra.mxu0 %v6115
        %7684 = vmatprep.subr.bf16.mxu0 0
        %7685 = vmatpush1.bf16.msra.mxu0 %v6114
        %7686 = vmatprep.subr.bf16.mxu0 0
        %7687 = vmatpush1.bf16.msra.mxu0 %v6113
        %7688 = vmatprep.subr.bf16.mxu0 0
        %7689 = vmatpush1.bf16.msra.mxu0 %v6112
        %7690 = vmatprep.subr.bf16.mxu0 0
        %7691 = vmatpush1.bf16.msra.mxu0 %v6111
        %7692 = vmatprep.subr.bf16.mxu0 0
        %7693 = vmatpush1.bf16.msra.mxu0 %v6110
        %7694 = vmatprep.subr.bf16.mxu0 0
        %7695 = vmatpush2.bf16.msra.mxu0 %v6125
        %7696 = vmatprep.subr.bf16.mxu0 0
        %7697 = vmatpush2.bf16.msra.mxu0 %v6124
        %7698 = vmatprep.subr.bf16.mxu0 0
        %7699 = vmatpush2.bf16.msra.mxu0 %v6123
        %7700 = vmatprep.subr.bf16.mxu0 0
        %7701 = vmatpush2.bf16.msra.mxu0 %v6122
        %7702 = vmatprep.subr.bf16.mxu0 0
        %7703 = vmatpush2.bf16.msra.mxu0 %v6121
        %7704 = vmatprep.subr.bf16.mxu0 0
        %7705 = vmatpush2.bf16.msra.mxu0 %v6120
        %7706 = vmatprep.subr.bf16.mxu0 0
        %7707 = vmatpush2.bf16.msra.mxu0 %v6119
        %7708 = vmatprep.subr.bf16.mxu0 0
        %7709 = vmatpush2.bf16.msra.mxu0 %v6118
        %7710 = vmatprep.mubr.bf16.mxu0 %v2303
        %7711 = vmatmul.mubr.bf16.gmra.mxu0 %v2289
        %v7712 = vpop.f32.mrf.mxu0
        %v7713 = vadd.f32 0.0, %v7712
        %v7714 = vpop.f32.mrf.mxu0
        %v7715 = vpop.f32.mrf.mxu0
        %v7716 = vpop.f32.mrf.mxu0
        %7717 = vdwg.mxu0
        %7718 = vmatprep.subr.bf16.mxu0 0
        %7719 = vmatpush1.bf16.msra.mxu0 %v6133
        %7720 = vmatprep.subr.bf16.mxu0 0
        %7721 = vmatpush1.bf16.msra.mxu0 %v6132
        %7722 = vmatprep.subr.bf16.mxu0 0
        %7723 = vmatpush1.bf16.msra.mxu0 %v6131
        %7724 = vmatprep.subr.bf16.mxu0 0
        %7725 = vmatpush1.bf16.msra.mxu0 %v6130
        %7726 = vmatprep.subr.bf16.mxu0 0
        %7727 = vmatpush1.bf16.msra.mxu0 %v6129
        %7728 = vmatprep.subr.bf16.mxu0 0
        %7729 = vmatpush1.bf16.msra.mxu0 %v6128
        %7730 = vmatprep.subr.bf16.mxu0 0
        %7731 = vmatpush1.bf16.msra.mxu0 %v6127
        %7732 = vmatprep.subr.bf16.mxu0 0
        %7733 = vmatpush1.bf16.msra.mxu0 %v6126
        %7734 = vmatprep.subr.bf16.mxu0 0
        %7735 = vmatpush2.bf16.msra.mxu0 %v6141
        %7736 = vmatprep.subr.bf16.mxu0 0
        %7737 = vmatpush2.bf16.msra.mxu0 %v6140
        %7738 = vmatprep.subr.bf16.mxu0 0
        %7739 = vmatpush2.bf16.msra.mxu0 %v6139
        %7740 = vmatprep.subr.bf16.mxu0 0
        %7741 = vmatpush2.bf16.msra.mxu0 %v6138
        %7742 = vmatprep.subr.bf16.mxu0 0
        %7743 = vmatpush2.bf16.msra.mxu0 %v6137
        %7744 = vmatprep.subr.bf16.mxu0 0
        %7745 = vmatpush2.bf16.msra.mxu0 %v6136
        %7746 = vmatprep.subr.bf16.mxu0 0
        %7747 = vmatpush2.bf16.msra.mxu0 %v6135
        %7748 = vmatprep.subr.bf16.mxu0 0
        %7749 = vmatpush2.bf16.msra.mxu0 %v6134
        %7750 = vmatprep.mubr.bf16.mxu0 %v2313
        %7751 = vmatmul.mubr.bf16.gmra.mxu0 %v2311
        %v7752 = vpop.f32.mrf.mxu0
        %v7753 = vadd.f32 %v7713, %v7752
        %v7754 = vpop.f32.mrf.mxu0
        %v7755 = vpop.f32.mrf.mxu0
        %v7756 = vpop.f32.mrf.mxu0
        %7757 = vdwg.mxu0
        %7758 = vmatprep.subr.bf16.mxu0 0
        %7759 = vmatpush1.bf16.msra.mxu0 %v6149
        %7760 = vmatprep.subr.bf16.mxu0 0
        %7761 = vmatpush1.bf16.msra.mxu0 %v6148
        %7762 = vmatprep.subr.bf16.mxu0 0
        %7763 = vmatpush1.bf16.msra.mxu0 %v6147
        %7764 = vmatprep.subr.bf16.mxu0 0
        %7765 = vmatpush1.bf16.msra.mxu0 %v6146
        %7766 = vmatprep.subr.bf16.mxu0 0
        %7767 = vmatpush1.bf16.msra.mxu0 %v6145
        %7768 = vmatprep.subr.bf16.mxu0 0
        %7769 = vmatpush1.bf16.msra.mxu0 %v6144
        %7770 = vmatprep.subr.bf16.mxu0 0
        %7771 = vmatpush1.bf16.msra.mxu0 %v6143
        %7772 = vmatprep.subr.bf16.mxu0 0
        %7773 = vmatpush1.bf16.msra.mxu0 %v6142
        %7774 = vmatprep.subr.bf16.mxu0 0
        %7775 = vmatpush2.bf16.msra.mxu0 %v6157
        %7776 = vmatprep.subr.bf16.mxu0 0
        %7777 = vmatpush2.bf16.msra.mxu0 %v6156
        %7778 = vmatprep.subr.bf16.mxu0 0
        %7779 = vmatpush2.bf16.msra.mxu0 %v6155
        %7780 = vmatprep.subr.bf16.mxu0 0
        %7781 = vmatpush2.bf16.msra.mxu0 %v6154
        %7782 = vmatprep.subr.bf16.mxu0 0
        %7783 = vmatpush2.bf16.msra.mxu0 %v6153
        %7784 = vmatprep.subr.bf16.mxu0 0
        %7785 = vmatpush2.bf16.msra.mxu0 %v6152
        %7786 = vmatprep.subr.bf16.mxu0 0
        %7787 = vmatpush2.bf16.msra.mxu0 %v6151
        %7788 = vmatprep.subr.bf16.mxu0 0
        %7789 = vmatpush2.bf16.msra.mxu0 %v6150
        %7790 = vmatprep.mubr.bf16.mxu0 %v2310
        %7791 = vmatmul.mubr.bf16.gmra.mxu0 %v2296
        %v7792 = vpop.f32.mrf.mxu0
        %v7793 = vadd.f32 %v7753, %v7792
        %v7794 = vpop.f32.mrf.mxu0
        %v7795 = vpop.f32.mrf.mxu0
        %v7796 = vpop.f32.mrf.mxu0
        %7797 = vdwg.mxu0
        %7798 = vmatprep.subr.bf16.mxu0 0
        %7799 = vmatpush1.bf16.msra.mxu0 %v6165
        %7800 = vmatprep.subr.bf16.mxu0 0
        %7801 = vmatpush1.bf16.msra.mxu0 %v6164
        %7802 = vmatprep.subr.bf16.mxu0 0
        %7803 = vmatpush1.bf16.msra.mxu0 %v6163
        %7804 = vmatprep.subr.bf16.mxu0 0
        %7805 = vmatpush1.bf16.msra.mxu0 %v6162
        %7806 = vmatprep.subr.bf16.mxu0 0
        %7807 = vmatpush1.bf16.msra.mxu0 %v6161
        %7808 = vmatprep.subr.bf16.mxu0 0
        %7809 = vmatpush1.bf16.msra.mxu0 %v6160
        %7810 = vmatprep.subr.bf16.mxu0 0
        %7811 = vmatpush1.bf16.msra.mxu0 %v6159
        %7812 = vmatprep.subr.bf16.mxu0 0
        %7813 = vmatpush1.bf16.msra.mxu0 %v6158
        %7814 = vmatprep.subr.bf16.mxu0 0
        %7815 = vmatpush2.bf16.msra.mxu0 %v6173
        %7816 = vmatprep.subr.bf16.mxu0 0
        %7817 = vmatpush2.bf16.msra.mxu0 %v6172
        %7818 = vmatprep.subr.bf16.mxu0 0
        %7819 = vmatpush2.bf16.msra.mxu0 %v6171
        %7820 = vmatprep.subr.bf16.mxu0 0
        %7821 = vmatpush2.bf16.msra.mxu0 %v6170
        %7822 = vmatprep.subr.bf16.mxu0 0
        %7823 = vmatpush2.bf16.msra.mxu0 %v6169
        %7824 = vmatprep.subr.bf16.mxu0 0
        %7825 = vmatpush2.bf16.msra.mxu0 %v6168
        %7826 = vmatprep.subr.bf16.mxu0 0
        %7827 = vmatpush2.bf16.msra.mxu0 %v6167
        %7828 = vmatprep.subr.bf16.mxu0 0
        %7829 = vmatpush2.bf16.msra.mxu0 %v6166
        %7830 = vmatprep.mubr.bf16.mxu0 %v2314
        %7831 = vmatmul.mubr.bf16.gmra.mxu0 %v2312
        %v7832 = vpop.f32.mrf.mxu0
        %v7833 = vadd.f32 %v7793, %v7832
        %v7834 = vpop.f32.mrf.mxu0
        %v7835 = vpop.f32.mrf.mxu0
        %v7836 = vpop.f32.mrf.mxu0
        %7837 = vdwg.mxu0
        %7838 = vmatprep.subr.bf16.mxu0 0
        %7839 = vmatpush1.bf16.msra.mxu0 %v6181
        %7840 = vmatprep.subr.bf16.mxu0 0
        %7841 = vmatpush1.bf16.msra.mxu0 %v6180
        %7842 = vmatprep.subr.bf16.mxu0 0
        %7843 = vmatpush1.bf16.msra.mxu0 %v6179
        %7844 = vmatprep.subr.bf16.mxu0 0
        %7845 = vmatpush1.bf16.msra.mxu0 %v6178
        %7846 = vmatprep.subr.bf16.mxu0 0
        %7847 = vmatpush1.bf16.msra.mxu0 %v6177
        %7848 = vmatprep.subr.bf16.mxu0 0
        %7849 = vmatpush1.bf16.msra.mxu0 %v6176
        %7850 = vmatprep.subr.bf16.mxu0 0
        %7851 = vmatpush1.bf16.msra.mxu0 %v6175
        %7852 = vmatprep.subr.bf16.mxu0 0
        %7853 = vmatpush1.bf16.msra.mxu0 %v6174
        %7854 = vmatprep.subr.bf16.mxu0 0
        %7855 = vmatpush2.bf16.msra.mxu0 %v6189
        %7856 = vmatprep.subr.bf16.mxu0 0
        %7857 = vmatpush2.bf16.msra.mxu0 %v6188
        %7858 = vmatprep.subr.bf16.mxu0 0
        %7859 = vmatpush2.bf16.msra.mxu0 %v6187
        %7860 = vmatprep.subr.bf16.mxu0 0
        %7861 = vmatpush2.bf16.msra.mxu0 %v6186
        %7862 = vmatprep.subr.bf16.mxu0 0
        %7863 = vmatpush2.bf16.msra.mxu0 %v6185
        %7864 = vmatprep.subr.bf16.mxu0 0
        %7865 = vmatpush2.bf16.msra.mxu0 %v6184
        %7866 = vmatprep.subr.bf16.mxu0 0
        %7867 = vmatpush2.bf16.msra.mxu0 %v6183
        %7868 = vmatprep.subr.bf16.mxu0 0
        %7869 = vmatpush2.bf16.msra.mxu0 %v6182
        %7870 = vmatprep.mubr.bf16.mxu0 %v2352
        %7871 = vmatmul.mubr.bf16.gmra.mxu0 %v2338
        %v7872 = vpop.f32.mrf.mxu0
        %v7873 = vadd.f32 %v7833, %v7872
        %v7874 = vpop.f32.mrf.mxu0
        %v7875 = vpop.f32.mrf.mxu0
        %v7876 = vpop.f32.mrf.mxu0
        %7877 = vdwg.mxu0
        %7878 = vmatprep.subr.bf16.mxu0 0
        %7879 = vmatpush1.bf16.msra.mxu0 %v6197
        %7880 = vmatprep.subr.bf16.mxu0 0
        %7881 = vmatpush1.bf16.msra.mxu0 %v6196
        %7882 = vmatprep.subr.bf16.mxu0 0
        %7883 = vmatpush1.bf16.msra.mxu0 %v6195
        %7884 = vmatprep.subr.bf16.mxu0 0
        %7885 = vmatpush1.bf16.msra.mxu0 %v6194
        %7886 = vmatprep.subr.bf16.mxu0 0
        %7887 = vmatpush1.bf16.msra.mxu0 %v6193
        %7888 = vmatprep.subr.bf16.mxu0 0
        %7889 = vmatpush1.bf16.msra.mxu0 %v6192
        %7890 = vmatprep.subr.bf16.mxu0 0
        %7891 = vmatpush1.bf16.msra.mxu0 %v6191
        %7892 = vmatprep.subr.bf16.mxu0 0
        %7893 = vmatpush1.bf16.msra.mxu0 %v6190
        %7894 = vmatprep.subr.bf16.mxu0 0
        %7895 = vmatpush2.bf16.msra.mxu0 %v6205
        %7896 = vmatprep.subr.bf16.mxu0 0
        %7897 = vmatpush2.bf16.msra.mxu0 %v6204
        %7898 = vmatprep.subr.bf16.mxu0 0
        %7899 = vmatpush2.bf16.msra.mxu0 %v6203
        %7900 = vmatprep.subr.bf16.mxu0 0
        %7901 = vmatpush2.bf16.msra.mxu0 %v6202
        %7902 = vmatprep.subr.bf16.mxu0 0
        %7903 = vmatpush2.bf16.msra.mxu0 %v6201
        %7904 = vmatprep.subr.bf16.mxu0 0
        %7905 = vmatpush2.bf16.msra.mxu0 %v6200
        %7906 = vmatprep.subr.bf16.mxu0 0
        %7907 = vmatpush2.bf16.msra.mxu0 %v6199
        %7908 = vmatprep.subr.bf16.mxu0 0
        %7909 = vmatpush2.bf16.msra.mxu0 %v6198
        %7910 = vmatprep.mubr.bf16.mxu0 %v2362
        %7911 = vmatmul.mubr.bf16.gmra.mxu0 %v2360
        %v7912 = vpop.f32.mrf.mxu0
        %v7913 = vadd.f32 %v7873, %v7912
        %v7914 = vpop.f32.mrf.mxu0
        %v7915 = vpop.f32.mrf.mxu0
        %v7916 = vpop.f32.mrf.mxu0
        %7917 = vdwg.mxu0
        %7918 = vmatprep.subr.bf16.mxu0 0
        %7919 = vmatpush1.bf16.msra.mxu0 %v6213
        %7920 = vmatprep.subr.bf16.mxu0 0
        %7921 = vmatpush1.bf16.msra.mxu0 %v6212
        %7922 = vmatprep.subr.bf16.mxu0 0
        %7923 = vmatpush1.bf16.msra.mxu0 %v6211
        %7924 = vmatprep.subr.bf16.mxu0 0
        %7925 = vmatpush1.bf16.msra.mxu0 %v6210
        %7926 = vmatprep.subr.bf16.mxu0 0
        %7927 = vmatpush1.bf16.msra.mxu0 %v6209
        %7928 = vmatprep.subr.bf16.mxu0 0
        %7929 = vmatpush1.bf16.msra.mxu0 %v6208
        %7930 = vmatprep.subr.bf16.mxu0 0
        %7931 = vmatpush1.bf16.msra.mxu0 %v6207
        %7932 = vmatprep.subr.bf16.mxu0 0
        %7933 = vmatpush1.bf16.msra.mxu0 %v6206
        %7934 = vmatprep.subr.bf16.mxu0 0
        %7935 = vmatpush2.bf16.msra.mxu0 %v6221
        %7936 = vmatprep.subr.bf16.mxu0 0
        %7937 = vmatpush2.bf16.msra.mxu0 %v6220
        %7938 = vmatprep.subr.bf16.mxu0 0
        %7939 = vmatpush2.bf16.msra.mxu0 %v6219
        %7940 = vmatprep.subr.bf16.mxu0 0
        %7941 = vmatpush2.bf16.msra.mxu0 %v6218
        %7942 = vmatprep.subr.bf16.mxu0 0
        %7943 = vmatpush2.bf16.msra.mxu0 %v6217
        %7944 = vmatprep.subr.bf16.mxu0 0
        %7945 = vmatpush2.bf16.msra.mxu0 %v6216
        %7946 = vmatprep.subr.bf16.mxu0 0
        %7947 = vmatpush2.bf16.msra.mxu0 %v6215
        %7948 = vmatprep.subr.bf16.mxu0 0
        %7949 = vmatpush2.bf16.msra.mxu0 %v6214
        %7950 = vmatprep.mubr.bf16.mxu0 %v2359
        %7951 = vmatmul.mubr.bf16.gmra.mxu0 %v2345
        %v7952 = vpop.f32.mrf.mxu0
        %v7953 = vadd.f32 %v7913, %v7952
        %v7954 = vpop.f32.mrf.mxu0
        %v7955 = vpop.f32.mrf.mxu0
        %v7956 = vpop.f32.mrf.mxu0
        %7957 = vdwg.mxu0
        %7958 = vmatprep.subr.bf16.mxu0 0
        %7959 = vmatpush1.bf16.msra.mxu0 %v6229
        %7960 = vmatprep.subr.bf16.mxu0 0
        %7961 = vmatpush1.bf16.msra.mxu0 %v6228
        %7962 = vmatprep.subr.bf16.mxu0 0
        %7963 = vmatpush1.bf16.msra.mxu0 %v6227
        %7964 = vmatprep.subr.bf16.mxu0 0
        %7965 = vmatpush1.bf16.msra.mxu0 %v6226
        %7966 = vmatprep.subr.bf16.mxu0 0
        %7967 = vmatpush1.bf16.msra.mxu0 %v6225
        %7968 = vmatprep.subr.bf16.mxu0 0
        %7969 = vmatpush1.bf16.msra.mxu0 %v6224
        %7970 = vmatprep.subr.bf16.mxu0 0
        %7971 = vmatpush1.bf16.msra.mxu0 %v6223
        %7972 = vmatprep.subr.bf16.mxu0 0
        %7973 = vmatpush1.bf16.msra.mxu0 %v6222
        %7974 = vmatprep.subr.bf16.mxu0 0
        %7975 = vmatpush2.bf16.msra.mxu0 %v6237
        %7976 = vmatprep.subr.bf16.mxu0 0
        %7977 = vmatpush2.bf16.msra.mxu0 %v6236
        %7978 = vmatprep.subr.bf16.mxu0 0
        %7979 = vmatpush2.bf16.msra.mxu0 %v6235
        %7980 = vmatprep.subr.bf16.mxu0 0
        %7981 = vmatpush2.bf16.msra.mxu0 %v6234
        %7982 = vmatprep.subr.bf16.mxu0 0
        %7983 = vmatpush2.bf16.msra.mxu0 %v6233
        %7984 = vmatprep.subr.bf16.mxu0 0
        %7985 = vmatpush2.bf16.msra.mxu0 %v6232
        %7986 = vmatprep.subr.bf16.mxu0 0
        %7987 = vmatpush2.bf16.msra.mxu0 %v6231
        %7988 = vmatprep.subr.bf16.mxu0 0
        %7989 = vmatpush2.bf16.msra.mxu0 %v6230
        %7990 = vmatprep.mubr.bf16.mxu0 %v2363
        %7991 = vmatmul.mubr.bf16.gmra.mxu0 %v2361
        %v7992 = vpop.f32.mrf.mxu0
        %v7993 = vadd.f32 %v7953, %v7992
        %v7994 = vpop.f32.mrf.mxu0
        %v7995 = vpop.f32.mrf.mxu0
        %v7996 = vpop.f32.mrf.mxu0
        %7997 = vdwg.mxu0
        %7998 = vmatprep.subr.bf16.mxu0 0
        %7999 = vmatpush1.bf16.msra.mxu0 %v6245
        %8000 = vmatprep.subr.bf16.mxu0 0
        %8001 = vmatpush1.bf16.msra.mxu0 %v6244
        %8002 = vmatprep.subr.bf16.mxu0 0
        %8003 = vmatpush1.bf16.msra.mxu0 %v6243
        %8004 = vmatprep.subr.bf16.mxu0 0
        %8005 = vmatpush1.bf16.msra.mxu0 %v6242
        %8006 = vmatprep.subr.bf16.mxu0 0
        %8007 = vmatpush1.bf16.msra.mxu0 %v6241
        %8008 = vmatprep.subr.bf16.mxu0 0
        %8009 = vmatpush1.bf16.msra.mxu0 %v6240
        %8010 = vmatprep.subr.bf16.mxu0 0
        %8011 = vmatpush1.bf16.msra.mxu0 %v6239
        %8012 = vmatprep.subr.bf16.mxu0 0
        %8013 = vmatpush1.bf16.msra.mxu0 %v6238
        %8014 = vmatprep.subr.bf16.mxu0 0
        %8015 = vmatpush2.bf16.msra.mxu0 %v6253
        %8016 = vmatprep.subr.bf16.mxu0 0
        %8017 = vmatpush2.bf16.msra.mxu0 %v6252
        %8018 = vmatprep.subr.bf16.mxu0 0
        %8019 = vmatpush2.bf16.msra.mxu0 %v6251
        %8020 = vmatprep.subr.bf16.mxu0 0
        %8021 = vmatpush2.bf16.msra.mxu0 %v6250
        %8022 = vmatprep.subr.bf16.mxu0 0
        %8023 = vmatpush2.bf16.msra.mxu0 %v6249
        %8024 = vmatprep.subr.bf16.mxu0 0
        %8025 = vmatpush2.bf16.msra.mxu0 %v6248
        %8026 = vmatprep.subr.bf16.mxu0 0
        %8027 = vmatpush2.bf16.msra.mxu0 %v6247
        %8028 = vmatprep.subr.bf16.mxu0 0
        %8029 = vmatpush2.bf16.msra.mxu0 %v6246
        %8030 = vmatprep.mubr.bf16.mxu0 %v2401
        %8031 = vmatmul.mubr.bf16.gmra.mxu0 %v2387
        %v8032 = vpop.f32.mrf.mxu0
        %v8033 = vadd.f32 %v7993, %v8032
        %v8034 = vpop.f32.mrf.mxu0
        %v8035 = vpop.f32.mrf.mxu0
        %v8036 = vpop.f32.mrf.mxu0
        %8037 = vdwg.mxu0
        %8038 = vmatprep.subr.bf16.mxu0 0
        %8039 = vmatpush1.bf16.msra.mxu0 %v6261
        %8040 = vmatprep.subr.bf16.mxu0 0
        %8041 = vmatpush1.bf16.msra.mxu0 %v6260
        %8042 = vmatprep.subr.bf16.mxu0 0
        %8043 = vmatpush1.bf16.msra.mxu0 %v6259
        %8044 = vmatprep.subr.bf16.mxu0 0
        %8045 = vmatpush1.bf16.msra.mxu0 %v6258
        %8046 = vmatprep.subr.bf16.mxu0 0
        %8047 = vmatpush1.bf16.msra.mxu0 %v6257
        %8048 = vmatprep.subr.bf16.mxu0 0
        %8049 = vmatpush1.bf16.msra.mxu0 %v6256
        %8050 = vmatprep.subr.bf16.mxu0 0
        %8051 = vmatpush1.bf16.msra.mxu0 %v6255
        %8052 = vmatprep.subr.bf16.mxu0 0
        %8053 = vmatpush1.bf16.msra.mxu0 %v6254
        %8054 = vmatprep.subr.bf16.mxu0 0
        %8055 = vmatpush2.bf16.msra.mxu0 %v6269
        %8056 = vmatprep.subr.bf16.mxu0 0
        %8057 = vmatpush2.bf16.msra.mxu0 %v6268
        %8058 = vmatprep.subr.bf16.mxu0 0
        %8059 = vmatpush2.bf16.msra.mxu0 %v6267
        %8060 = vmatprep.subr.bf16.mxu0 0
        %8061 = vmatpush2.bf16.msra.mxu0 %v6266
        %8062 = vmatprep.subr.bf16.mxu0 0
        %8063 = vmatpush2.bf16.msra.mxu0 %v6265
        %8064 = vmatprep.subr.bf16.mxu0 0
        %8065 = vmatpush2.bf16.msra.mxu0 %v6264
        %8066 = vmatprep.subr.bf16.mxu0 0
        %8067 = vmatpush2.bf16.msra.mxu0 %v6263
        %8068 = vmatprep.subr.bf16.mxu0 0
        %8069 = vmatpush2.bf16.msra.mxu0 %v6262
        %8070 = vmatprep.mubr.bf16.mxu0 %v2411
        %8071 = vmatmul.mubr.bf16.gmra.mxu0 %v2409
        %v8072 = vpop.f32.mrf.mxu0
        %v8073 = vadd.f32 %v8033, %v8072
        %v8074 = vpop.f32.mrf.mxu0
        %v8075 = vpop.f32.mrf.mxu0
        %v8076 = vpop.f32.mrf.mxu0
        %8077 = vdwg.mxu0
        %8078 = vmatprep.subr.bf16.mxu0 0
        %8079 = vmatpush1.bf16.msra.mxu0 %v6277
        %8080 = vmatprep.subr.bf16.mxu0 0
        %8081 = vmatpush1.bf16.msra.mxu0 %v6276
        %8082 = vmatprep.subr.bf16.mxu0 0
        %8083 = vmatpush1.bf16.msra.mxu0 %v6275
        %8084 = vmatprep.subr.bf16.mxu0 0
        %8085 = vmatpush1.bf16.msra.mxu0 %v6274
        %8086 = vmatprep.subr.bf16.mxu0 0
        %8087 = vmatpush1.bf16.msra.mxu0 %v6273
        %8088 = vmatprep.subr.bf16.mxu0 0
        %8089 = vmatpush1.bf16.msra.mxu0 %v6272
        %8090 = vmatprep.subr.bf16.mxu0 0
        %8091 = vmatpush1.bf16.msra.mxu0 %v6271
        %8092 = vmatprep.subr.bf16.mxu0 0
        %8093 = vmatpush1.bf16.msra.mxu0 %v6270
        %8094 = vmatprep.subr.bf16.mxu0 0
        %8095 = vmatpush2.bf16.msra.mxu0 %v6285
        %8096 = vmatprep.subr.bf16.mxu0 0
        %8097 = vmatpush2.bf16.msra.mxu0 %v6284
        %8098 = vmatprep.subr.bf16.mxu0 0
        %8099 = vmatpush2.bf16.msra.mxu0 %v6283
        %8100 = vmatprep.subr.bf16.mxu0 0
        %8101 = vmatpush2.bf16.msra.mxu0 %v6282
        %8102 = vmatprep.subr.bf16.mxu0 0
        %8103 = vmatpush2.bf16.msra.mxu0 %v6281
        %8104 = vmatprep.subr.bf16.mxu0 0
        %8105 = vmatpush2.bf16.msra.mxu0 %v6280
        %8106 = vmatprep.subr.bf16.mxu0 0
        %8107 = vmatpush2.bf16.msra.mxu0 %v6279
        %8108 = vmatprep.subr.bf16.mxu0 0
        %8109 = vmatpush2.bf16.msra.mxu0 %v6278
        %8110 = vmatprep.mubr.bf16.mxu0 %v2408
        %8111 = vmatmul.mubr.bf16.gmra.mxu0 %v2394
        %v8112 = vpop.f32.mrf.mxu0
        %v8113 = vadd.f32 %v8073, %v8112
        %v8114 = vpop.f32.mrf.mxu0
        %v8115 = vpop.f32.mrf.mxu0
        %v8116 = vpop.f32.mrf.mxu0
        %8117 = vdwg.mxu0
        %8118 = vmatprep.subr.bf16.mxu0 0
        %8119 = vmatpush1.bf16.msra.mxu0 %v6293
        %8120 = vmatprep.subr.bf16.mxu0 0
        %8121 = vmatpush1.bf16.msra.mxu0 %v6292
        %8122 = vmatprep.subr.bf16.mxu0 0
        %8123 = vmatpush1.bf16.msra.mxu0 %v6291
        %8124 = vmatprep.subr.bf16.mxu0 0
        %8125 = vmatpush1.bf16.msra.mxu0 %v6290
        %8126 = vmatprep.subr.bf16.mxu0 0
        %8127 = vmatpush1.bf16.msra.mxu0 %v6289
        %8128 = vmatprep.subr.bf16.mxu0 0
        %8129 = vmatpush1.bf16.msra.mxu0 %v6288
        %8130 = vmatprep.subr.bf16.mxu0 0
        %8131 = vmatpush1.bf16.msra.mxu0 %v6287
        %8132 = vmatprep.subr.bf16.mxu0 0
        %8133 = vmatpush1.bf16.msra.mxu0 %v6286
        %8134 = vmatprep.subr.bf16.mxu0 0
        %8135 = vmatpush2.bf16.msra.mxu0 %v6301
        %8136 = vmatprep.subr.bf16.mxu0 0
        %8137 = vmatpush2.bf16.msra.mxu0 %v6300
        %8138 = vmatprep.subr.bf16.mxu0 0
        %8139 = vmatpush2.bf16.msra.mxu0 %v6299
        %8140 = vmatprep.subr.bf16.mxu0 0
        %8141 = vmatpush2.bf16.msra.mxu0 %v6298
        %8142 = vmatprep.subr.bf16.mxu0 0
        %8143 = vmatpush2.bf16.msra.mxu0 %v6297
        %8144 = vmatprep.subr.bf16.mxu0 0
        %8145 = vmatpush2.bf16.msra.mxu0 %v6296
        %8146 = vmatprep.subr.bf16.mxu0 0
        %8147 = vmatpush2.bf16.msra.mxu0 %v6295
        %8148 = vmatprep.subr.bf16.mxu0 0
        %8149 = vmatpush2.bf16.msra.mxu0 %v6294
        %8150 = vmatprep.mubr.bf16.mxu0 %v2412
        %8151 = vmatmul.mubr.bf16.gmra.mxu0 %v2410
        %v8152 = vpop.f32.mrf.mxu0
        %v8153 = vadd.f32 %v8113, %v8152
        %v8154 = vpop.f32.mrf.mxu0
        %v8155 = vpop.f32.mrf.mxu0
        %v8156 = vpop.f32.mrf.mxu0
        %8157 = vdwg.mxu0
        %8158 = vmatprep.subr.bf16.mxu0 0
        %8159 = vmatpush1.bf16.msra.mxu0 %v6309
        %8160 = vmatprep.subr.bf16.mxu0 0
        %8161 = vmatpush1.bf16.msra.mxu0 %v6308
        %8162 = vmatprep.subr.bf16.mxu0 0
        %8163 = vmatpush1.bf16.msra.mxu0 %v6307
        %8164 = vmatprep.subr.bf16.mxu0 0
        %8165 = vmatpush1.bf16.msra.mxu0 %v6306
        %8166 = vmatprep.subr.bf16.mxu0 0
        %8167 = vmatpush1.bf16.msra.mxu0 %v6305
        %8168 = vmatprep.subr.bf16.mxu0 0
        %8169 = vmatpush1.bf16.msra.mxu0 %v6304
        %8170 = vmatprep.subr.bf16.mxu0 0
        %8171 = vmatpush1.bf16.msra.mxu0 %v6303
        %8172 = vmatprep.subr.bf16.mxu0 0
        %8173 = vmatpush1.bf16.msra.mxu0 %v6302
        %8174 = vmatprep.subr.bf16.mxu0 0
        %8175 = vmatpush2.bf16.msra.mxu0 %v6317
        %8176 = vmatprep.subr.bf16.mxu0 0
        %8177 = vmatpush2.bf16.msra.mxu0 %v6316
        %8178 = vmatprep.subr.bf16.mxu0 0
        %8179 = vmatpush2.bf16.msra.mxu0 %v6315
        %8180 = vmatprep.subr.bf16.mxu0 0
        %8181 = vmatpush2.bf16.msra.mxu0 %v6314
        %8182 = vmatprep.subr.bf16.mxu0 0
        %8183 = vmatpush2.bf16.msra.mxu0 %v6313
        %8184 = vmatprep.subr.bf16.mxu0 0
        %8185 = vmatpush2.bf16.msra.mxu0 %v6312
        %8186 = vmatprep.subr.bf16.mxu0 0
        %8187 = vmatpush2.bf16.msra.mxu0 %v6311
        %8188 = vmatprep.subr.bf16.mxu0 0
        %8189 = vmatpush2.bf16.msra.mxu0 %v6310
        %8190 = vmatprep.mubr.bf16.mxu0 %v2450
        %8191 = vmatmul.mubr.bf16.gmra.mxu0 %v2436
        %v8192 = vpop.f32.mrf.mxu0
        %v8193 = vadd.f32 %v8153, %v8192
        %v8194 = vpop.f32.mrf.mxu0
        %v8195 = vpop.f32.mrf.mxu0
        %v8196 = vpop.f32.mrf.mxu0
        %8197 = vdwg.mxu0
        %8198 = vmatprep.subr.bf16.mxu0 0
        %8199 = vmatpush1.bf16.msra.mxu0 %v6325
        %8200 = vmatprep.subr.bf16.mxu0 0
        %8201 = vmatpush1.bf16.msra.mxu0 %v6324
        %8202 = vmatprep.subr.bf16.mxu0 0
        %8203 = vmatpush1.bf16.msra.mxu0 %v6323
        %8204 = vmatprep.subr.bf16.mxu0 0
        %8205 = vmatpush1.bf16.msra.mxu0 %v6322
        %8206 = vmatprep.subr.bf16.mxu0 0
        %8207 = vmatpush1.bf16.msra.mxu0 %v6321
        %8208 = vmatprep.subr.bf16.mxu0 0
        %8209 = vmatpush1.bf16.msra.mxu0 %v6320
        %8210 = vmatprep.subr.bf16.mxu0 0
        %8211 = vmatpush1.bf16.msra.mxu0 %v6319
        %8212 = vmatprep.subr.bf16.mxu0 0
        %8213 = vmatpush1.bf16.msra.mxu0 %v6318
        %8214 = vmatprep.subr.bf16.mxu0 0
        %8215 = vmatpush2.bf16.msra.mxu0 %v6333
        %8216 = vmatprep.subr.bf16.mxu0 0
        %8217 = vmatpush2.bf16.msra.mxu0 %v6332
        %8218 = vmatprep.subr.bf16.mxu0 0
        %8219 = vmatpush2.bf16.msra.mxu0 %v6331
        %8220 = vmatprep.subr.bf16.mxu0 0
        %8221 = vmatpush2.bf16.msra.mxu0 %v6330
        %8222 = vmatprep.subr.bf16.mxu0 0
        %8223 = vmatpush2.bf16.msra.mxu0 %v6329
        %8224 = vmatprep.subr.bf16.mxu0 0
        %8225 = vmatpush2.bf16.msra.mxu0 %v6328
        %8226 = vmatprep.subr.bf16.mxu0 0
        %8227 = vmatpush2.bf16.msra.mxu0 %v6327
        %8228 = vmatprep.subr.bf16.mxu0 0
        %8229 = vmatpush2.bf16.msra.mxu0 %v6326
        %8230 = vmatprep.mubr.bf16.mxu0 %v2460
        %8231 = vmatmul.mubr.bf16.gmra.mxu0 %v2458
        %v8232 = vpop.f32.mrf.mxu0
        %v8233 = vadd.f32 %v8193, %v8232
        %v8234 = vpop.f32.mrf.mxu0
        %v8235 = vpop.f32.mrf.mxu0
        %v8236 = vpop.f32.mrf.mxu0
        %8237 = vdwg.mxu0
        %8238 = vmatprep.subr.bf16.mxu0 0
        %8239 = vmatpush1.bf16.msra.mxu0 %v6341
        %8240 = vmatprep.subr.bf16.mxu0 0
        %8241 = vmatpush1.bf16.msra.mxu0 %v6340
        %8242 = vmatprep.subr.bf16.mxu0 0
        %8243 = vmatpush1.bf16.msra.mxu0 %v6339
        %8244 = vmatprep.subr.bf16.mxu0 0
        %8245 = vmatpush1.bf16.msra.mxu0 %v6338
        %8246 = vmatprep.subr.bf16.mxu0 0
        %8247 = vmatpush1.bf16.msra.mxu0 %v6337
        %8248 = vmatprep.subr.bf16.mxu0 0
        %8249 = vmatpush1.bf16.msra.mxu0 %v6336
        %8250 = vmatprep.subr.bf16.mxu0 0
        %8251 = vmatpush1.bf16.msra.mxu0 %v6335
        %8252 = vmatprep.subr.bf16.mxu0 0
        %8253 = vmatpush1.bf16.msra.mxu0 %v6334
        %8254 = vmatprep.subr.bf16.mxu0 0
        %8255 = vmatpush2.bf16.msra.mxu0 %v6349
        %8256 = vmatprep.subr.bf16.mxu0 0
        %8257 = vmatpush2.bf16.msra.mxu0 %v6348
        %8258 = vmatprep.subr.bf16.mxu0 0
        %8259 = vmatpush2.bf16.msra.mxu0 %v6347
        %8260 = vmatprep.subr.bf16.mxu0 0
        %8261 = vmatpush2.bf16.msra.mxu0 %v6346
        %8262 = vmatprep.subr.bf16.mxu0 0
        %8263 = vmatpush2.bf16.msra.mxu0 %v6345
        %8264 = vmatprep.subr.bf16.mxu0 0
        %8265 = vmatpush2.bf16.msra.mxu0 %v6344
        %8266 = vmatprep.subr.bf16.mxu0 0
        %8267 = vmatpush2.bf16.msra.mxu0 %v6343
        %8268 = vmatprep.subr.bf16.mxu0 0
        %8269 = vmatpush2.bf16.msra.mxu0 %v6342
        %8270 = vmatprep.mubr.bf16.mxu0 %v2457
        %8271 = vmatmul.mubr.bf16.gmra.mxu0 %v2443
        %v8272 = vpop.f32.mrf.mxu0
        %v8273 = vadd.f32 %v8233, %v8272
        %v8274 = vpop.f32.mrf.mxu0
        %v8275 = vpop.f32.mrf.mxu0
        %v8276 = vpop.f32.mrf.mxu0
        %8277 = vdwg.mxu0
        %8278 = vmatprep.subr.bf16.mxu0 0
        %8279 = vmatpush1.bf16.msra.mxu0 %v6357
        %8280 = vmatprep.subr.bf16.mxu0 0
        %8281 = vmatpush1.bf16.msra.mxu0 %v6356
        %8282 = vmatprep.subr.bf16.mxu0 0
        %8283 = vmatpush1.bf16.msra.mxu0 %v6355
        %8284 = vmatprep.subr.bf16.mxu0 0
        %8285 = vmatpush1.bf16.msra.mxu0 %v6354
        %8286 = vmatprep.subr.bf16.mxu0 0
        %8287 = vmatpush1.bf16.msra.mxu0 %v6353
        %8288 = vmatprep.subr.bf16.mxu0 0
        %8289 = vmatpush1.bf16.msra.mxu0 %v6352
        %8290 = vmatprep.subr.bf16.mxu0 0
        %8291 = vmatpush1.bf16.msra.mxu0 %v6351
        %8292 = vmatprep.subr.bf16.mxu0 0
        %8293 = vmatpush1.bf16.msra.mxu0 %v6350
        %8294 = vmatprep.subr.bf16.mxu0 0
        %8295 = vmatpush2.bf16.msra.mxu0 %v6365
        %8296 = vmatprep.subr.bf16.mxu0 0
        %8297 = vmatpush2.bf16.msra.mxu0 %v6364
        %8298 = vmatprep.subr.bf16.mxu0 0
        %8299 = vmatpush2.bf16.msra.mxu0 %v6363
        %8300 = vmatprep.subr.bf16.mxu0 0
        %8301 = vmatpush2.bf16.msra.mxu0 %v6362
        %8302 = vmatprep.subr.bf16.mxu0 0
        %8303 = vmatpush2.bf16.msra.mxu0 %v6361
        %8304 = vmatprep.subr.bf16.mxu0 0
        %8305 = vmatpush2.bf16.msra.mxu0 %v6360
        %8306 = vmatprep.subr.bf16.mxu0 0
        %8307 = vmatpush2.bf16.msra.mxu0 %v6359
        %8308 = vmatprep.subr.bf16.mxu0 0
        %8309 = vmatpush2.bf16.msra.mxu0 %v6358
        %8310 = vmatprep.mubr.bf16.mxu0 %v2461
        %8311 = vmatmul.mubr.bf16.gmra.mxu0 %v2459
        %v8312 = vpop.f32.mrf.mxu0
        %v8313 = vadd.f32 %v8273, %v8312
        %v8314 = vpop.f32.mrf.mxu0
        %v8315 = vpop.f32.mrf.mxu0
        %v8316 = vpop.f32.mrf.mxu0
        %8317 = vdwg.mxu0
        %8318 = vmatprep.subr.bf16.mxu0 0
        %8319 = vmatpush1.bf16.msra.mxu0 %v6373
        %8320 = vmatprep.subr.bf16.mxu0 0
        %8321 = vmatpush1.bf16.msra.mxu0 %v6372
        %8322 = vmatprep.subr.bf16.mxu0 0
        %8323 = vmatpush1.bf16.msra.mxu0 %v6371
        %8324 = vmatprep.subr.bf16.mxu0 0
        %8325 = vmatpush1.bf16.msra.mxu0 %v6370
        %8326 = vmatprep.subr.bf16.mxu0 0
        %8327 = vmatpush1.bf16.msra.mxu0 %v6369
        %8328 = vmatprep.subr.bf16.mxu0 0
        %8329 = vmatpush1.bf16.msra.mxu0 %v6368
        %8330 = vmatprep.subr.bf16.mxu0 0
        %8331 = vmatpush1.bf16.msra.mxu0 %v6367
        %8332 = vmatprep.subr.bf16.mxu0 0
        %8333 = vmatpush1.bf16.msra.mxu0 %v6366
        %8334 = vmatprep.subr.bf16.mxu0 0
        %8335 = vmatpush2.bf16.msra.mxu0 %v6381
        %8336 = vmatprep.subr.bf16.mxu0 0
        %8337 = vmatpush2.bf16.msra.mxu0 %v6380
        %8338 = vmatprep.subr.bf16.mxu0 0
        %8339 = vmatpush2.bf16.msra.mxu0 %v6379
        %8340 = vmatprep.subr.bf16.mxu0 0
        %8341 = vmatpush2.bf16.msra.mxu0 %v6378
        %8342 = vmatprep.subr.bf16.mxu0 0
        %8343 = vmatpush2.bf16.msra.mxu0 %v6377
        %8344 = vmatprep.subr.bf16.mxu0 0
        %8345 = vmatpush2.bf16.msra.mxu0 %v6376
        %8346 = vmatprep.subr.bf16.mxu0 0
        %8347 = vmatpush2.bf16.msra.mxu0 %v6375
        %8348 = vmatprep.subr.bf16.mxu0 0
        %8349 = vmatpush2.bf16.msra.mxu0 %v6374
        %8350 = vmatprep.mubr.bf16.mxu0 %v2499
        %8351 = vmatmul.mubr.bf16.gmra.mxu0 %v2485
        %v8352 = vpop.f32.mrf.mxu0
        %v8353 = vadd.f32 %v8313, %v8352
        %v8354 = vpop.f32.mrf.mxu0
        %v8355 = vpop.f32.mrf.mxu0
        %v8356 = vpop.f32.mrf.mxu0
        %8357 = vdwg.mxu0
        %8358 = vmatprep.subr.bf16.mxu0 0
        %8359 = vmatpush1.bf16.msra.mxu0 %v6389
        %8360 = vmatprep.subr.bf16.mxu0 0
        %8361 = vmatpush1.bf16.msra.mxu0 %v6388
        %8362 = vmatprep.subr.bf16.mxu0 0
        %8363 = vmatpush1.bf16.msra.mxu0 %v6387
        %8364 = vmatprep.subr.bf16.mxu0 0
        %8365 = vmatpush1.bf16.msra.mxu0 %v6386
        %8366 = vmatprep.subr.bf16.mxu0 0
        %8367 = vmatpush1.bf16.msra.mxu0 %v6385
        %8368 = vmatprep.subr.bf16.mxu0 0
        %8369 = vmatpush1.bf16.msra.mxu0 %v6384
        %8370 = vmatprep.subr.bf16.mxu0 0
        %8371 = vmatpush1.bf16.msra.mxu0 %v6383
        %8372 = vmatprep.subr.bf16.mxu0 0
        %8373 = vmatpush1.bf16.msra.mxu0 %v6382
        %8374 = vmatprep.subr.bf16.mxu0 0
        %8375 = vmatpush2.bf16.msra.mxu0 %v6397
        %8376 = vmatprep.subr.bf16.mxu0 0
        %8377 = vmatpush2.bf16.msra.mxu0 %v6396
        %8378 = vmatprep.subr.bf16.mxu0 0
        %8379 = vmatpush2.bf16.msra.mxu0 %v6395
        %8380 = vmatprep.subr.bf16.mxu0 0
        %8381 = vmatpush2.bf16.msra.mxu0 %v6394
        %8382 = vmatprep.subr.bf16.mxu0 0
        %8383 = vmatpush2.bf16.msra.mxu0 %v6393
        %8384 = vmatprep.subr.bf16.mxu0 0
        %8385 = vmatpush2.bf16.msra.mxu0 %v6392
        %8386 = vmatprep.subr.bf16.mxu0 0
        %8387 = vmatpush2.bf16.msra.mxu0 %v6391
        %8388 = vmatprep.subr.bf16.mxu0 0
        %8389 = vmatpush2.bf16.msra.mxu0 %v6390
        %8390 = vmatprep.mubr.bf16.mxu0 %v2509
        %8391 = vmatmul.mubr.bf16.gmra.mxu0 %v2507
        %v8392 = vpop.f32.mrf.mxu0
        %v8393 = vadd.f32 %v8353, %v8392
        %v8394 = vpop.f32.mrf.mxu0
        %v8395 = vpop.f32.mrf.mxu0
        %v8396 = vpop.f32.mrf.mxu0
        %8397 = vdwg.mxu0
        %8398 = vmatprep.subr.bf16.mxu0 0
        %8399 = vmatpush1.bf16.msra.mxu0 %v6405
        %8400 = vmatprep.subr.bf16.mxu0 0
        %8401 = vmatpush1.bf16.msra.mxu0 %v6404
        %8402 = vmatprep.subr.bf16.mxu0 0
        %8403 = vmatpush1.bf16.msra.mxu0 %v6403
        %8404 = vmatprep.subr.bf16.mxu0 0
        %8405 = vmatpush1.bf16.msra.mxu0 %v6402
        %8406 = vmatprep.subr.bf16.mxu0 0
        %8407 = vmatpush1.bf16.msra.mxu0 %v6401
        %8408 = vmatprep.subr.bf16.mxu0 0
        %8409 = vmatpush1.bf16.msra.mxu0 %v6400
        %8410 = vmatprep.subr.bf16.mxu0 0
        %8411 = vmatpush1.bf16.msra.mxu0 %v6399
        %8412 = vmatprep.subr.bf16.mxu0 0
        %8413 = vmatpush1.bf16.msra.mxu0 %v6398
        %8414 = vmatprep.subr.bf16.mxu0 0
        %8415 = vmatpush2.bf16.msra.mxu0 %v6413
        %8416 = vmatprep.subr.bf16.mxu0 0
        %8417 = vmatpush2.bf16.msra.mxu0 %v6412
        %8418 = vmatprep.subr.bf16.mxu0 0
        %8419 = vmatpush2.bf16.msra.mxu0 %v6411
        %8420 = vmatprep.subr.bf16.mxu0 0
        %8421 = vmatpush2.bf16.msra.mxu0 %v6410
        %8422 = vmatprep.subr.bf16.mxu0 0
        %8423 = vmatpush2.bf16.msra.mxu0 %v6409
        %8424 = vmatprep.subr.bf16.mxu0 0
        %8425 = vmatpush2.bf16.msra.mxu0 %v6408
        %8426 = vmatprep.subr.bf16.mxu0 0
        %8427 = vmatpush2.bf16.msra.mxu0 %v6407
        %8428 = vmatprep.subr.bf16.mxu0 0
        %8429 = vmatpush2.bf16.msra.mxu0 %v6406
        %8430 = vmatprep.mubr.bf16.mxu0 %v2506
        %8431 = vmatmul.mubr.bf16.gmra.mxu0 %v2492
        %v8432 = vpop.f32.mrf.mxu0
        %v8433 = vadd.f32 %v8393, %v8432
        %v8434 = vpop.f32.mrf.mxu0
        %v8435 = vpop.f32.mrf.mxu0
        %v8436 = vpop.f32.mrf.mxu0
        %8437 = vdwg.mxu0
        %8438 = vmatprep.subr.bf16.mxu0 0
        %8439 = vmatpush1.bf16.msra.mxu0 %v6421
        %8440 = vmatprep.subr.bf16.mxu0 0
        %8441 = vmatpush1.bf16.msra.mxu0 %v6420
        %8442 = vmatprep.subr.bf16.mxu0 0
        %8443 = vmatpush1.bf16.msra.mxu0 %v6419
        %8444 = vmatprep.subr.bf16.mxu0 0
        %8445 = vmatpush1.bf16.msra.mxu0 %v6418
        %8446 = vmatprep.subr.bf16.mxu0 0
        %8447 = vmatpush1.bf16.msra.mxu0 %v6417
        %8448 = vmatprep.subr.bf16.mxu0 0
        %8449 = vmatpush1.bf16.msra.mxu0 %v6416
        %8450 = vmatprep.subr.bf16.mxu0 0
        %8451 = vmatpush1.bf16.msra.mxu0 %v6415
        %8452 = vmatprep.subr.bf16.mxu0 0
        %8453 = vmatpush1.bf16.msra.mxu0 %v6414
        %8454 = vmatprep.subr.bf16.mxu0 0
        %8455 = vmatpush2.bf16.msra.mxu0 %v6429
        %8456 = vmatprep.subr.bf16.mxu0 0
        %8457 = vmatpush2.bf16.msra.mxu0 %v6428
        %8458 = vmatprep.subr.bf16.mxu0 0
        %8459 = vmatpush2.bf16.msra.mxu0 %v6427
        %8460 = vmatprep.subr.bf16.mxu0 0
        %8461 = vmatpush2.bf16.msra.mxu0 %v6426
        %8462 = vmatprep.subr.bf16.mxu0 0
        %8463 = vmatpush2.bf16.msra.mxu0 %v6425
        %8464 = vmatprep.subr.bf16.mxu0 0
        %8465 = vmatpush2.bf16.msra.mxu0 %v6424
        %8466 = vmatprep.subr.bf16.mxu0 0
        %8467 = vmatpush2.bf16.msra.mxu0 %v6423
        %8468 = vmatprep.subr.bf16.mxu0 0
        %8469 = vmatpush2.bf16.msra.mxu0 %v6422
        %8470 = vmatprep.mubr.bf16.mxu0 %v2510
        %8471 = vmatmul.mubr.bf16.gmra.mxu0 %v2508
        %v8472 = vpop.f32.mrf.mxu0
        %v8473 = vadd.f32 %v8433, %v8472
        %v8474 = vpop.f32.mrf.mxu0
        %v8475 = vpop.f32.mrf.mxu0
        %v8476 = vpop.f32.mrf.mxu0
        %8477 = vdwg.mxu0
        %8478 = vmatprep.subr.bf16.mxu0 0
        %8479 = vmatpush1.bf16.msra.mxu0 %v6437
        %8480 = vmatprep.subr.bf16.mxu0 0
        %8481 = vmatpush1.bf16.msra.mxu0 %v6436
        %8482 = vmatprep.subr.bf16.mxu0 0
        %8483 = vmatpush1.bf16.msra.mxu0 %v6435
        %8484 = vmatprep.subr.bf16.mxu0 0
        %8485 = vmatpush1.bf16.msra.mxu0 %v6434
        %8486 = vmatprep.subr.bf16.mxu0 0
        %8487 = vmatpush1.bf16.msra.mxu0 %v6433
        %8488 = vmatprep.subr.bf16.mxu0 0
        %8489 = vmatpush1.bf16.msra.mxu0 %v6432
        %8490 = vmatprep.subr.bf16.mxu0 0
        %8491 = vmatpush1.bf16.msra.mxu0 %v6431
        %8492 = vmatprep.subr.bf16.mxu0 0
        %8493 = vmatpush1.bf16.msra.mxu0 %v6430
        %8494 = vmatprep.subr.bf16.mxu0 0
        %8495 = vmatpush2.bf16.msra.mxu0 %v6445
        %8496 = vmatprep.subr.bf16.mxu0 0
        %8497 = vmatpush2.bf16.msra.mxu0 %v6444
        %8498 = vmatprep.subr.bf16.mxu0 0
        %8499 = vmatpush2.bf16.msra.mxu0 %v6443
        %8500 = vmatprep.subr.bf16.mxu0 0
        %8501 = vmatpush2.bf16.msra.mxu0 %v6442
        %8502 = vmatprep.subr.bf16.mxu0 0
        %8503 = vmatpush2.bf16.msra.mxu0 %v6441
        %8504 = vmatprep.subr.bf16.mxu0 0
        %8505 = vmatpush2.bf16.msra.mxu0 %v6440
        %8506 = vmatprep.subr.bf16.mxu0 0
        %8507 = vmatpush2.bf16.msra.mxu0 %v6439
        %8508 = vmatprep.subr.bf16.mxu0 0
        %8509 = vmatpush2.bf16.msra.mxu0 %v6438
        %8510 = vmatprep.mubr.bf16.mxu0 %v2548
        %8511 = vmatmul.mubr.bf16.gmra.mxu0 %v2534
        %v8512 = vpop.f32.mrf.mxu0
        %v8513 = vadd.f32 %v8473, %v8512
        %v8514 = vpop.f32.mrf.mxu0
        %v8515 = vpop.f32.mrf.mxu0
        %v8516 = vpop.f32.mrf.mxu0
        %8517 = vdwg.mxu0
        %8518 = vmatprep.subr.bf16.mxu0 0
        %8519 = vmatpush1.bf16.msra.mxu0 %v6453
        %8520 = vmatprep.subr.bf16.mxu0 0
        %8521 = vmatpush1.bf16.msra.mxu0 %v6452
        %8522 = vmatprep.subr.bf16.mxu0 0
        %8523 = vmatpush1.bf16.msra.mxu0 %v6451
        %8524 = vmatprep.subr.bf16.mxu0 0
        %8525 = vmatpush1.bf16.msra.mxu0 %v6450
        %8526 = vmatprep.subr.bf16.mxu0 0
        %8527 = vmatpush1.bf16.msra.mxu0 %v6449
        %8528 = vmatprep.subr.bf16.mxu0 0
        %8529 = vmatpush1.bf16.msra.mxu0 %v6448
        %8530 = vmatprep.subr.bf16.mxu0 0
        %8531 = vmatpush1.bf16.msra.mxu0 %v6447
        %8532 = vmatprep.subr.bf16.mxu0 0
        %8533 = vmatpush1.bf16.msra.mxu0 %v6446
        %8534 = vmatprep.subr.bf16.mxu0 0
        %8535 = vmatpush2.bf16.msra.mxu0 %v6461
        %8536 = vmatprep.subr.bf16.mxu0 0
        %8537 = vmatpush2.bf16.msra.mxu0 %v6460
        %8538 = vmatprep.subr.bf16.mxu0 0
        %8539 = vmatpush2.bf16.msra.mxu0 %v6459
        %8540 = vmatprep.subr.bf16.mxu0 0
        %8541 = vmatpush2.bf16.msra.mxu0 %v6458
        %8542 = vmatprep.subr.bf16.mxu0 0
        %8543 = vmatpush2.bf16.msra.mxu0 %v6457
        %8544 = vmatprep.subr.bf16.mxu0 0
        %8545 = vmatpush2.bf16.msra.mxu0 %v6456
        %8546 = vmatprep.subr.bf16.mxu0 0
        %8547 = vmatpush2.bf16.msra.mxu0 %v6455
        %8548 = vmatprep.subr.bf16.mxu0 0
        %8549 = vmatpush2.bf16.msra.mxu0 %v6454
        %8550 = vmatprep.mubr.bf16.mxu0 %v2558
        %8551 = vmatmul.mubr.bf16.gmra.mxu0 %v2556
        %v8552 = vpop.f32.mrf.mxu0
        %v8553 = vadd.f32 %v8513, %v8552
        %v8554 = vpop.f32.mrf.mxu0
        %v8555 = vpop.f32.mrf.mxu0
        %v8556 = vpop.f32.mrf.mxu0
        %8557 = vdwg.mxu0
        %8558 = vmatprep.subr.bf16.mxu0 0
        %8559 = vmatpush1.bf16.msra.mxu0 %v6469
        %8560 = vmatprep.subr.bf16.mxu0 0
        %8561 = vmatpush1.bf16.msra.mxu0 %v6468
        %8562 = vmatprep.subr.bf16.mxu0 0
        %8563 = vmatpush1.bf16.msra.mxu0 %v6467
        %8564 = vmatprep.subr.bf16.mxu0 0
        %8565 = vmatpush1.bf16.msra.mxu0 %v6466
        %8566 = vmatprep.subr.bf16.mxu0 0
        %8567 = vmatpush1.bf16.msra.mxu0 %v6465
        %8568 = vmatprep.subr.bf16.mxu0 0
        %8569 = vmatpush1.bf16.msra.mxu0 %v6464
        %8570 = vmatprep.subr.bf16.mxu0 0
        %8571 = vmatpush1.bf16.msra.mxu0 %v6463
        %8572 = vmatprep.subr.bf16.mxu0 0
        %8573 = vmatpush1.bf16.msra.mxu0 %v6462
        %8574 = vmatprep.subr.bf16.mxu0 0
        %8575 = vmatpush2.bf16.msra.mxu0 %v6477
        %8576 = vmatprep.subr.bf16.mxu0 0
        %8577 = vmatpush2.bf16.msra.mxu0 %v6476
        %8578 = vmatprep.subr.bf16.mxu0 0
        %8579 = vmatpush2.bf16.msra.mxu0 %v6475
        %8580 = vmatprep.subr.bf16.mxu0 0
        %8581 = vmatpush2.bf16.msra.mxu0 %v6474
        %8582 = vmatprep.subr.bf16.mxu0 0
        %8583 = vmatpush2.bf16.msra.mxu0 %v6473
        %8584 = vmatprep.subr.bf16.mxu0 0
        %8585 = vmatpush2.bf16.msra.mxu0 %v6472
        %8586 = vmatprep.subr.bf16.mxu0 0
        %8587 = vmatpush2.bf16.msra.mxu0 %v6471
        %8588 = vmatprep.subr.bf16.mxu0 0
        %8589 = vmatpush2.bf16.msra.mxu0 %v6470
        %8590 = vmatprep.mubr.bf16.mxu0 %v2555
        %8591 = vmatmul.mubr.bf16.gmra.mxu0 %v2541
        %v8592 = vpop.f32.mrf.mxu0
        %v8593 = vadd.f32 %v8553, %v8592
        %v8594 = vpop.f32.mrf.mxu0
        %v8595 = vpop.f32.mrf.mxu0
        %v8596 = vpop.f32.mrf.mxu0
        %8597 = vdwg.mxu0
        %8598 = vmatprep.subr.bf16.mxu0 0
        %8599 = vmatpush1.bf16.msra.mxu0 %v6485
        %8600 = vmatprep.subr.bf16.mxu0 0
        %8601 = vmatpush1.bf16.msra.mxu0 %v6484
        %8602 = vmatprep.subr.bf16.mxu0 0
        %8603 = vmatpush1.bf16.msra.mxu0 %v6483
        %8604 = vmatprep.subr.bf16.mxu0 0
        %8605 = vmatpush1.bf16.msra.mxu0 %v6482
        %8606 = vmatprep.subr.bf16.mxu0 0
        %8607 = vmatpush1.bf16.msra.mxu0 %v6481
        %8608 = vmatprep.subr.bf16.mxu0 0
        %8609 = vmatpush1.bf16.msra.mxu0 %v6480
        %8610 = vmatprep.subr.bf16.mxu0 0
        %8611 = vmatpush1.bf16.msra.mxu0 %v6479
        %8612 = vmatprep.subr.bf16.mxu0 0
        %8613 = vmatpush1.bf16.msra.mxu0 %v6478
        %8614 = vmatprep.subr.bf16.mxu0 0
        %8615 = vmatpush2.bf16.msra.mxu0 %v6493
        %8616 = vmatprep.subr.bf16.mxu0 0
        %8617 = vmatpush2.bf16.msra.mxu0 %v6492
        %8618 = vmatprep.subr.bf16.mxu0 0
        %8619 = vmatpush2.bf16.msra.mxu0 %v6491
        %8620 = vmatprep.subr.bf16.mxu0 0
        %8621 = vmatpush2.bf16.msra.mxu0 %v6490
        %8622 = vmatprep.subr.bf16.mxu0 0
        %8623 = vmatpush2.bf16.msra.mxu0 %v6489
        %8624 = vmatprep.subr.bf16.mxu0 0
        %8625 = vmatpush2.bf16.msra.mxu0 %v6488
        %8626 = vmatprep.subr.bf16.mxu0 0
        %8627 = vmatpush2.bf16.msra.mxu0 %v6487
        %8628 = vmatprep.subr.bf16.mxu0 0
        %8629 = vmatpush2.bf16.msra.mxu0 %v6486
        %8630 = vmatprep.mubr.bf16.mxu0 %v2559
        %8631 = vmatmul.mubr.bf16.gmra.mxu0 %v2557
        %v8632 = vpop.f32.mrf.mxu0
        %v8633 = vadd.f32 %v8593, %v8632
        %v8634 = vpop.f32.mrf.mxu0
        %v8635 = vpop.f32.mrf.mxu0
        %v8636 = vpop.f32.mrf.mxu0
        %8637 = vdwg.mxu0
        %8638 = vmatprep.subr.bf16.mxu0 0
        %8639 = vmatpush1.bf16.msra.mxu0 %v6501
        %8640 = vmatprep.subr.bf16.mxu0 0
        %8641 = vmatpush1.bf16.msra.mxu0 %v6500
        %8642 = vmatprep.subr.bf16.mxu0 0
        %8643 = vmatpush1.bf16.msra.mxu0 %v6499
        %8644 = vmatprep.subr.bf16.mxu0 0
        %8645 = vmatpush1.bf16.msra.mxu0 %v6498
        %8646 = vmatprep.subr.bf16.mxu0 0
        %8647 = vmatpush1.bf16.msra.mxu0 %v6497
        %8648 = vmatprep.subr.bf16.mxu0 0
        %8649 = vmatpush1.bf16.msra.mxu0 %v6496
        %8650 = vmatprep.subr.bf16.mxu0 0
        %8651 = vmatpush1.bf16.msra.mxu0 %v6495
        %8652 = vmatprep.subr.bf16.mxu0 0
        %8653 = vmatpush1.bf16.msra.mxu0 %v6494
        %8654 = vmatprep.subr.bf16.mxu0 0
        %8655 = vmatpush2.bf16.msra.mxu0 %v6509
        %8656 = vmatprep.subr.bf16.mxu0 0
        %8657 = vmatpush2.bf16.msra.mxu0 %v6508
        %8658 = vmatprep.subr.bf16.mxu0 0
        %8659 = vmatpush2.bf16.msra.mxu0 %v6507
        %8660 = vmatprep.subr.bf16.mxu0 0
        %8661 = vmatpush2.bf16.msra.mxu0 %v6506
        %8662 = vmatprep.subr.bf16.mxu0 0
        %8663 = vmatpush2.bf16.msra.mxu0 %v6505
        %8664 = vmatprep.subr.bf16.mxu0 0
        %8665 = vmatpush2.bf16.msra.mxu0 %v6504
        %8666 = vmatprep.subr.bf16.mxu0 0
        %8667 = vmatpush2.bf16.msra.mxu0 %v6503
        %8668 = vmatprep.subr.bf16.mxu0 0
        %8669 = vmatpush2.bf16.msra.mxu0 %v6502
        %8670 = vmatprep.mubr.bf16.mxu0 %v2597
        %8671 = vmatmul.mubr.bf16.gmra.mxu0 %v2583
        %v8672 = vpop.f32.mrf.mxu0
        %v8673 = vadd.f32 %v8633, %v8672
        %v8674 = vpop.f32.mrf.mxu0
        %v8675 = vpop.f32.mrf.mxu0
        %v8676 = vpop.f32.mrf.mxu0
        %8677 = vdwg.mxu0
        %8678 = vmatprep.subr.bf16.mxu0 0
        %8679 = vmatpush1.bf16.msra.mxu0 %v6517
        %8680 = vmatprep.subr.bf16.mxu0 0
        %8681 = vmatpush1.bf16.msra.mxu0 %v6516
        %8682 = vmatprep.subr.bf16.mxu0 0
        %8683 = vmatpush1.bf16.msra.mxu0 %v6515
        %8684 = vmatprep.subr.bf16.mxu0 0
        %8685 = vmatpush1.bf16.msra.mxu0 %v6514
        %8686 = vmatprep.subr.bf16.mxu0 0
        %8687 = vmatpush1.bf16.msra.mxu0 %v6513
        %8688 = vmatprep.subr.bf16.mxu0 0
        %8689 = vmatpush1.bf16.msra.mxu0 %v6512
        %8690 = vmatprep.subr.bf16.mxu0 0
        %8691 = vmatpush1.bf16.msra.mxu0 %v6511
        %8692 = vmatprep.subr.bf16.mxu0 0
        %8693 = vmatpush1.bf16.msra.mxu0 %v6510
        %8694 = vmatprep.subr.bf16.mxu0 0
        %8695 = vmatpush2.bf16.msra.mxu0 %v6525
        %8696 = vmatprep.subr.bf16.mxu0 0
        %8697 = vmatpush2.bf16.msra.mxu0 %v6524
        %8698 = vmatprep.subr.bf16.mxu0 0
        %8699 = vmatpush2.bf16.msra.mxu0 %v6523
        %8700 = vmatprep.subr.bf16.mxu0 0
        %8701 = vmatpush2.bf16.msra.mxu0 %v6522
        %8702 = vmatprep.subr.bf16.mxu0 0
        %8703 = vmatpush2.bf16.msra.mxu0 %v6521
        %8704 = vmatprep.subr.bf16.mxu0 0
        %8705 = vmatpush2.bf16.msra.mxu0 %v6520
        %8706 = vmatprep.subr.bf16.mxu0 0
        %8707 = vmatpush2.bf16.msra.mxu0 %v6519
        %8708 = vmatprep.subr.bf16.mxu0 0
        %8709 = vmatpush2.bf16.msra.mxu0 %v6518
        %8710 = vmatprep.mubr.bf16.mxu0 %v2607
        %8711 = vmatmul.mubr.bf16.gmra.mxu0 %v2605
        %v8712 = vpop.f32.mrf.mxu0
        %v8713 = vadd.f32 %v8673, %v8712
        %v8714 = vpop.f32.mrf.mxu0
        %v8715 = vpop.f32.mrf.mxu0
        %v8716 = vpop.f32.mrf.mxu0
        %8717 = vdwg.mxu0
        %8718 = vmatprep.subr.bf16.mxu0 0
        %8719 = vmatpush1.bf16.msra.mxu0 %v6533
        %8720 = vmatprep.subr.bf16.mxu0 0
        %8721 = vmatpush1.bf16.msra.mxu0 %v6532
        %8722 = vmatprep.subr.bf16.mxu0 0
        %8723 = vmatpush1.bf16.msra.mxu0 %v6531
        %8724 = vmatprep.subr.bf16.mxu0 0
        %8725 = vmatpush1.bf16.msra.mxu0 %v6530
        %8726 = vmatprep.subr.bf16.mxu0 0
        %8727 = vmatpush1.bf16.msra.mxu0 %v6529
        %8728 = vmatprep.subr.bf16.mxu0 0
        %8729 = vmatpush1.bf16.msra.mxu0 %v6528
        %8730 = vmatprep.subr.bf16.mxu0 0
        %8731 = vmatpush1.bf16.msra.mxu0 %v6527
        %8732 = vmatprep.subr.bf16.mxu0 0
        %8733 = vmatpush1.bf16.msra.mxu0 %v6526
        %8734 = vmatprep.subr.bf16.mxu0 0
        %8735 = vmatpush2.bf16.msra.mxu0 %v6541
        %8736 = vmatprep.subr.bf16.mxu0 0
        %8737 = vmatpush2.bf16.msra.mxu0 %v6540
        %8738 = vmatprep.subr.bf16.mxu0 0
        %8739 = vmatpush2.bf16.msra.mxu0 %v6539
        %8740 = vmatprep.subr.bf16.mxu0 0
        %8741 = vmatpush2.bf16.msra.mxu0 %v6538
        %8742 = vmatprep.subr.bf16.mxu0 0
        %8743 = vmatpush2.bf16.msra.mxu0 %v6537
        %8744 = vmatprep.subr.bf16.mxu0 0
        %8745 = vmatpush2.bf16.msra.mxu0 %v6536
        %8746 = vmatprep.subr.bf16.mxu0 0
        %8747 = vmatpush2.bf16.msra.mxu0 %v6535
        %8748 = vmatprep.subr.bf16.mxu0 0
        %8749 = vmatpush2.bf16.msra.mxu0 %v6534
        %8750 = vmatprep.mubr.bf16.mxu0 %v2604
        %8751 = vmatmul.mubr.bf16.gmra.mxu0 %v2590
        %v8752 = vpop.f32.mrf.mxu0
        %v8753 = vadd.f32 %v8713, %v8752
        %v8754 = vpop.f32.mrf.mxu0
        %v8755 = vpop.f32.mrf.mxu0
        %v8756 = vpop.f32.mrf.mxu0
        %8757 = vdwg.mxu0
        %8758 = vmatprep.subr.bf16.mxu0 0
        %8759 = vmatpush1.bf16.msra.mxu0 %v6549
        %8760 = vmatprep.subr.bf16.mxu0 0
        %8761 = vmatpush1.bf16.msra.mxu0 %v6548
        %8762 = vmatprep.subr.bf16.mxu0 0
        %8763 = vmatpush1.bf16.msra.mxu0 %v6547
        %8764 = vmatprep.subr.bf16.mxu0 0
        %8765 = vmatpush1.bf16.msra.mxu0 %v6546
        %8766 = vmatprep.subr.bf16.mxu0 0
        %8767 = vmatpush1.bf16.msra.mxu0 %v6545
        %8768 = vmatprep.subr.bf16.mxu0 0
        %8769 = vmatpush1.bf16.msra.mxu0 %v6544
        %8770 = vmatprep.subr.bf16.mxu0 0
        %8771 = vmatpush1.bf16.msra.mxu0 %v6543
        %8772 = vmatprep.subr.bf16.mxu0 0
        %8773 = vmatpush1.bf16.msra.mxu0 %v6542
        %8774 = vmatprep.subr.bf16.mxu0 0
        %8775 = vmatpush2.bf16.msra.mxu0 %v6557
        %8776 = vmatprep.subr.bf16.mxu0 0
        %8777 = vmatpush2.bf16.msra.mxu0 %v6556
        %8778 = vmatprep.subr.bf16.mxu0 0
        %8779 = vmatpush2.bf16.msra.mxu0 %v6555
        %8780 = vmatprep.subr.bf16.mxu0 0
        %8781 = vmatpush2.bf16.msra.mxu0 %v6554
        %8782 = vmatprep.subr.bf16.mxu0 0
        %8783 = vmatpush2.bf16.msra.mxu0 %v6553
        %8784 = vmatprep.subr.bf16.mxu0 0
        %8785 = vmatpush2.bf16.msra.mxu0 %v6552
        %8786 = vmatprep.subr.bf16.mxu0 0
        %8787 = vmatpush2.bf16.msra.mxu0 %v6551
        %8788 = vmatprep.subr.bf16.mxu0 0
        %8789 = vmatpush2.bf16.msra.mxu0 %v6550
        %8790 = vmatprep.mubr.bf16.mxu0 %v2608
        %8791 = vmatmul.mubr.bf16.gmra.mxu0 %v2606
        %v8792 = vpop.f32.mrf.mxu0
        %v8793 = vadd.f32 %v8753, %v8792
        %v8794 = vpop.f32.mrf.mxu0
        %v8795 = vpop.f32.mrf.mxu0
        %v8796 = vpop.f32.mrf.mxu0
        %8797 = vdwg.mxu0
        %8798 = vmatprep.subr.bf16.mxu0 0
        %8799 = vmatpush1.bf16.msra.mxu0 %v6565
        %8800 = vmatprep.subr.bf16.mxu0 0
        %8801 = vmatpush1.bf16.msra.mxu0 %v6564
        %8802 = vmatprep.subr.bf16.mxu0 0
        %8803 = vmatpush1.bf16.msra.mxu0 %v6563
        %8804 = vmatprep.subr.bf16.mxu0 0
        %8805 = vmatpush1.bf16.msra.mxu0 %v6562
        %8806 = vmatprep.subr.bf16.mxu0 0
        %8807 = vmatpush1.bf16.msra.mxu0 %v6561
        %8808 = vmatprep.subr.bf16.mxu0 0
        %8809 = vmatpush1.bf16.msra.mxu0 %v6560
        %8810 = vmatprep.subr.bf16.mxu0 0
        %8811 = vmatpush1.bf16.msra.mxu0 %v6559
        %8812 = vmatprep.subr.bf16.mxu0 0
        %8813 = vmatpush1.bf16.msra.mxu0 %v6558
        %8814 = vmatprep.subr.bf16.mxu0 0
        %8815 = vmatpush2.bf16.msra.mxu0 %v6573
        %8816 = vmatprep.subr.bf16.mxu0 0
        %8817 = vmatpush2.bf16.msra.mxu0 %v6572
        %8818 = vmatprep.subr.bf16.mxu0 0
        %8819 = vmatpush2.bf16.msra.mxu0 %v6571
        %8820 = vmatprep.subr.bf16.mxu0 0
        %8821 = vmatpush2.bf16.msra.mxu0 %v6570
        %8822 = vmatprep.subr.bf16.mxu0 0
        %8823 = vmatpush2.bf16.msra.mxu0 %v6569
        %8824 = vmatprep.subr.bf16.mxu0 0
        %8825 = vmatpush2.bf16.msra.mxu0 %v6568
        %8826 = vmatprep.subr.bf16.mxu0 0
        %8827 = vmatpush2.bf16.msra.mxu0 %v6567
        %8828 = vmatprep.subr.bf16.mxu0 0
        %8829 = vmatpush2.bf16.msra.mxu0 %v6566
        %8830 = vmatprep.mubr.bf16.mxu0 %v2646
        %8831 = vmatmul.mubr.bf16.gmra.mxu0 %v2632
        %v8832 = vpop.f32.mrf.mxu0
        %v8833 = vadd.f32 %v8793, %v8832
        %v8834 = vpop.f32.mrf.mxu0
        %v8835 = vpop.f32.mrf.mxu0
        %v8836 = vpop.f32.mrf.mxu0
        %8837 = vdwg.mxu0
        %8838 = vmatprep.subr.bf16.mxu0 0
        %8839 = vmatpush1.bf16.msra.mxu0 %v6581
        %8840 = vmatprep.subr.bf16.mxu0 0
        %8841 = vmatpush1.bf16.msra.mxu0 %v6580
        %8842 = vmatprep.subr.bf16.mxu0 0
        %8843 = vmatpush1.bf16.msra.mxu0 %v6579
        %8844 = vmatprep.subr.bf16.mxu0 0
        %8845 = vmatpush1.bf16.msra.mxu0 %v6578
        %8846 = vmatprep.subr.bf16.mxu0 0
        %8847 = vmatpush1.bf16.msra.mxu0 %v6577
        %8848 = vmatprep.subr.bf16.mxu0 0
        %8849 = vmatpush1.bf16.msra.mxu0 %v6576
        %8850 = vmatprep.subr.bf16.mxu0 0
        %8851 = vmatpush1.bf16.msra.mxu0 %v6575
        %8852 = vmatprep.subr.bf16.mxu0 0
        %8853 = vmatpush1.bf16.msra.mxu0 %v6574
        %8854 = vmatprep.subr.bf16.mxu0 0
        %8855 = vmatpush2.bf16.msra.mxu0 %v6589
        %8856 = vmatprep.subr.bf16.mxu0 0
        %8857 = vmatpush2.bf16.msra.mxu0 %v6588
        %8858 = vmatprep.subr.bf16.mxu0 0
        %8859 = vmatpush2.bf16.msra.mxu0 %v6587
        %8860 = vmatprep.subr.bf16.mxu0 0
        %8861 = vmatpush2.bf16.msra.mxu0 %v6586
        %8862 = vmatprep.subr.bf16.mxu0 0
        %8863 = vmatpush2.bf16.msra.mxu0 %v6585
        %8864 = vmatprep.subr.bf16.mxu0 0
        %8865 = vmatpush2.bf16.msra.mxu0 %v6584
        %8866 = vmatprep.subr.bf16.mxu0 0
        %8867 = vmatpush2.bf16.msra.mxu0 %v6583
        %8868 = vmatprep.subr.bf16.mxu0 0
        %8869 = vmatpush2.bf16.msra.mxu0 %v6582
        %8870 = vmatprep.mubr.bf16.mxu0 %v2656
        %8871 = vmatmul.mubr.bf16.gmra.mxu0 %v2654
        %v8872 = vpop.f32.mrf.mxu0
        %v8873 = vadd.f32 %v8833, %v8872
        %v8874 = vpop.f32.mrf.mxu0
        %v8875 = vpop.f32.mrf.mxu0
        %v8876 = vpop.f32.mrf.mxu0
        %8877 = vdwg.mxu0
        %8878 = vmatprep.subr.bf16.mxu0 0
        %8879 = vmatpush1.bf16.msra.mxu0 %v6597
        %8880 = vmatprep.subr.bf16.mxu0 0
        %8881 = vmatpush1.bf16.msra.mxu0 %v6596
        %8882 = vmatprep.subr.bf16.mxu0 0
        %8883 = vmatpush1.bf16.msra.mxu0 %v6595
        %8884 = vmatprep.subr.bf16.mxu0 0
        %8885 = vmatpush1.bf16.msra.mxu0 %v6594
        %8886 = vmatprep.subr.bf16.mxu0 0
        %8887 = vmatpush1.bf16.msra.mxu0 %v6593
        %8888 = vmatprep.subr.bf16.mxu0 0
        %8889 = vmatpush1.bf16.msra.mxu0 %v6592
        %8890 = vmatprep.subr.bf16.mxu0 0
        %8891 = vmatpush1.bf16.msra.mxu0 %v6591
        %8892 = vmatprep.subr.bf16.mxu0 0
        %8893 = vmatpush1.bf16.msra.mxu0 %v6590
        %8894 = vmatprep.subr.bf16.mxu0 0
        %8895 = vmatpush2.bf16.msra.mxu0 %v6605
        %8896 = vmatprep.subr.bf16.mxu0 0
        %8897 = vmatpush2.bf16.msra.mxu0 %v6604
        %8898 = vmatprep.subr.bf16.mxu0 0
        %8899 = vmatpush2.bf16.msra.mxu0 %v6603
        %8900 = vmatprep.subr.bf16.mxu0 0
        %8901 = vmatpush2.bf16.msra.mxu0 %v6602
        %8902 = vmatprep.subr.bf16.mxu0 0
        %8903 = vmatpush2.bf16.msra.mxu0 %v6601
        %8904 = vmatprep.subr.bf16.mxu0 0
        %8905 = vmatpush2.bf16.msra.mxu0 %v6600
        %8906 = vmatprep.subr.bf16.mxu0 0
        %8907 = vmatpush2.bf16.msra.mxu0 %v6599
        %8908 = vmatprep.subr.bf16.mxu0 0
        %8909 = vmatpush2.bf16.msra.mxu0 %v6598
        %8910 = vmatprep.mubr.bf16.mxu0 %v2653
        %8911 = vmatmul.mubr.bf16.gmra.mxu0 %v2639
        %v8912 = vpop.f32.mrf.mxu0
        %v8913 = vadd.f32 %v8873, %v8912
        %v8914 = vpop.f32.mrf.mxu0
        %v8915 = vpop.f32.mrf.mxu0
        %v8916 = vpop.f32.mrf.mxu0
        %8917 = vdwg.mxu0
        %8918 = vmatprep.subr.bf16.mxu0 0
        %8919 = vmatpush1.bf16.msra.mxu0 %v6613
        %8920 = vmatprep.subr.bf16.mxu0 0
        %8921 = vmatpush1.bf16.msra.mxu0 %v6612
        %8922 = vmatprep.subr.bf16.mxu0 0
        %8923 = vmatpush1.bf16.msra.mxu0 %v6611
        %8924 = vmatprep.subr.bf16.mxu0 0
        %8925 = vmatpush1.bf16.msra.mxu0 %v6610
        %8926 = vmatprep.subr.bf16.mxu0 0
        %8927 = vmatpush1.bf16.msra.mxu0 %v6609
        %8928 = vmatprep.subr.bf16.mxu0 0
        %8929 = vmatpush1.bf16.msra.mxu0 %v6608
        %8930 = vmatprep.subr.bf16.mxu0 0
        %8931 = vmatpush1.bf16.msra.mxu0 %v6607
        %8932 = vmatprep.subr.bf16.mxu0 0
        %8933 = vmatpush1.bf16.msra.mxu0 %v6606
        %8934 = vmatprep.subr.bf16.mxu0 0
        %8935 = vmatpush2.bf16.msra.mxu0 %v6621
        %8936 = vmatprep.subr.bf16.mxu0 0
        %8937 = vmatpush2.bf16.msra.mxu0 %v6620
        %8938 = vmatprep.subr.bf16.mxu0 0
        %8939 = vmatpush2.bf16.msra.mxu0 %v6619
        %8940 = vmatprep.subr.bf16.mxu0 0
        %8941 = vmatpush2.bf16.msra.mxu0 %v6618
        %8942 = vmatprep.subr.bf16.mxu0 0
        %8943 = vmatpush2.bf16.msra.mxu0 %v6617
        %8944 = vmatprep.subr.bf16.mxu0 0
        %8945 = vmatpush2.bf16.msra.mxu0 %v6616
        %8946 = vmatprep.subr.bf16.mxu0 0
        %8947 = vmatpush2.bf16.msra.mxu0 %v6615
        %8948 = vmatprep.subr.bf16.mxu0 0
        %8949 = vmatpush2.bf16.msra.mxu0 %v6614
        %8950 = vmatprep.mubr.bf16.mxu0 %v2657
        %8951 = vmatmul.mubr.bf16.gmra.mxu0 %v2655
        %v8952 = vpop.f32.mrf.mxu0
        %v8953 = vadd.f32 %v8913, %v8952
        %v8954 = vpop.f32.mrf.mxu0
        %v8955 = vpop.f32.mrf.mxu0
        %v8956 = vpop.f32.mrf.mxu0
        %8957 = vdwg.mxu0
        %8958 = vmatprep.subr.bf16.mxu0 0
        %8959 = vmatpush1.bf16.msra.mxu0 %v6629
        %8960 = vmatprep.subr.bf16.mxu0 0
        %8961 = vmatpush1.bf16.msra.mxu0 %v6628
        %8962 = vmatprep.subr.bf16.mxu0 0
        %8963 = vmatpush1.bf16.msra.mxu0 %v6627
        %8964 = vmatprep.subr.bf16.mxu0 0
        %8965 = vmatpush1.bf16.msra.mxu0 %v6626
        %8966 = vmatprep.subr.bf16.mxu0 0
        %8967 = vmatpush1.bf16.msra.mxu0 %v6625
        %8968 = vmatprep.subr.bf16.mxu0 0
        %8969 = vmatpush1.bf16.msra.mxu0 %v6624
        %8970 = vmatprep.subr.bf16.mxu0 0
        %8971 = vmatpush1.bf16.msra.mxu0 %v6623
        %8972 = vmatprep.subr.bf16.mxu0 0
        %8973 = vmatpush1.bf16.msra.mxu0 %v6622
        %8974 = vmatprep.subr.bf16.mxu0 0
        %8975 = vmatpush2.bf16.msra.mxu0 %v6637
        %8976 = vmatprep.subr.bf16.mxu0 0
        %8977 = vmatpush2.bf16.msra.mxu0 %v6636
        %8978 = vmatprep.subr.bf16.mxu0 0
        %8979 = vmatpush2.bf16.msra.mxu0 %v6635
        %8980 = vmatprep.subr.bf16.mxu0 0
        %8981 = vmatpush2.bf16.msra.mxu0 %v6634
        %8982 = vmatprep.subr.bf16.mxu0 0
        %8983 = vmatpush2.bf16.msra.mxu0 %v6633
        %8984 = vmatprep.subr.bf16.mxu0 0
        %8985 = vmatpush2.bf16.msra.mxu0 %v6632
        %8986 = vmatprep.subr.bf16.mxu0 0
        %8987 = vmatpush2.bf16.msra.mxu0 %v6631
        %8988 = vmatprep.subr.bf16.mxu0 0
        %8989 = vmatpush2.bf16.msra.mxu0 %v6630
        %8990 = vmatprep.mubr.bf16.mxu0 %v2695
        %8991 = vmatmul.mubr.bf16.gmra.mxu0 %v2681
        %v8992 = vpop.f32.mrf.mxu0
        %v8993 = vadd.f32 %v8953, %v8992
        %v8994 = vpop.f32.mrf.mxu0
        %v8995 = vpop.f32.mrf.mxu0
        %v8996 = vpop.f32.mrf.mxu0
        %8997 = vdwg.mxu0
        %8998 = vmatprep.subr.bf16.mxu0 0
        %8999 = vmatpush1.bf16.msra.mxu0 %v6645
        %9000 = vmatprep.subr.bf16.mxu0 0
        %9001 = vmatpush1.bf16.msra.mxu0 %v6644
        %9002 = vmatprep.subr.bf16.mxu0 0
        %9003 = vmatpush1.bf16.msra.mxu0 %v6643
        %9004 = vmatprep.subr.bf16.mxu0 0
        %9005 = vmatpush1.bf16.msra.mxu0 %v6642
        %9006 = vmatprep.subr.bf16.mxu0 0
        %9007 = vmatpush1.bf16.msra.mxu0 %v6641
        %9008 = vmatprep.subr.bf16.mxu0 0
        %9009 = vmatpush1.bf16.msra.mxu0 %v6640
        %9010 = vmatprep.subr.bf16.mxu0 0
        %9011 = vmatpush1.bf16.msra.mxu0 %v6639
        %9012 = vmatprep.subr.bf16.mxu0 0
        %9013 = vmatpush1.bf16.msra.mxu0 %v6638
        %9014 = vmatprep.subr.bf16.mxu0 0
        %9015 = vmatpush2.bf16.msra.mxu0 %v6653
        %9016 = vmatprep.subr.bf16.mxu0 0
        %9017 = vmatpush2.bf16.msra.mxu0 %v6652
        %9018 = vmatprep.subr.bf16.mxu0 0
        %9019 = vmatpush2.bf16.msra.mxu0 %v6651
        %9020 = vmatprep.subr.bf16.mxu0 0
        %9021 = vmatpush2.bf16.msra.mxu0 %v6650
        %9022 = vmatprep.subr.bf16.mxu0 0
        %9023 = vmatpush2.bf16.msra.mxu0 %v6649
        %9024 = vmatprep.subr.bf16.mxu0 0
        %9025 = vmatpush2.bf16.msra.mxu0 %v6648
        %9026 = vmatprep.subr.bf16.mxu0 0
        %9027 = vmatpush2.bf16.msra.mxu0 %v6647
        %9028 = vmatprep.subr.bf16.mxu0 0
        %9029 = vmatpush2.bf16.msra.mxu0 %v6646
        %9030 = vmatprep.mubr.bf16.mxu0 %v2705
        %9031 = vmatmul.mubr.bf16.gmra.mxu0 %v2703
        %v9032 = vpop.f32.mrf.mxu0
        %v9033 = vadd.f32 %v8993, %v9032
        %v9034 = vpop.f32.mrf.mxu0
        %v9035 = vpop.f32.mrf.mxu0
        %v9036 = vpop.f32.mrf.mxu0
        %9037 = vdwg.mxu0
        %9038 = vmatprep.subr.bf16.mxu0 0
        %9039 = vmatpush1.bf16.msra.mxu0 %v6661
        %9040 = vmatprep.subr.bf16.mxu0 0
        %9041 = vmatpush1.bf16.msra.mxu0 %v6660
        %9042 = vmatprep.subr.bf16.mxu0 0
        %9043 = vmatpush1.bf16.msra.mxu0 %v6659
        %9044 = vmatprep.subr.bf16.mxu0 0
        %9045 = vmatpush1.bf16.msra.mxu0 %v6658
        %9046 = vmatprep.subr.bf16.mxu0 0
        %9047 = vmatpush1.bf16.msra.mxu0 %v6657
        %9048 = vmatprep.subr.bf16.mxu0 0
        %9049 = vmatpush1.bf16.msra.mxu0 %v6656
        %9050 = vmatprep.subr.bf16.mxu0 0
        %9051 = vmatpush1.bf16.msra.mxu0 %v6655
        %9052 = vmatprep.subr.bf16.mxu0 0
        %9053 = vmatpush1.bf16.msra.mxu0 %v6654
        %9054 = vmatprep.subr.bf16.mxu0 0
        %9055 = vmatpush2.bf16.msra.mxu0 %v6669
        %9056 = vmatprep.subr.bf16.mxu0 0
        %9057 = vmatpush2.bf16.msra.mxu0 %v6668
        %9058 = vmatprep.subr.bf16.mxu0 0
        %9059 = vmatpush2.bf16.msra.mxu0 %v6667
        %9060 = vmatprep.subr.bf16.mxu0 0
        %9061 = vmatpush2.bf16.msra.mxu0 %v6666
        %9062 = vmatprep.subr.bf16.mxu0 0
        %9063 = vmatpush2.bf16.msra.mxu0 %v6665
        %9064 = vmatprep.subr.bf16.mxu0 0
        %9065 = vmatpush2.bf16.msra.mxu0 %v6664
        %9066 = vmatprep.subr.bf16.mxu0 0
        %9067 = vmatpush2.bf16.msra.mxu0 %v6663
        %9068 = vmatprep.subr.bf16.mxu0 0
        %9069 = vmatpush2.bf16.msra.mxu0 %v6662
        %9070 = vmatprep.mubr.bf16.mxu0 %v2702
        %9071 = vmatmul.mubr.bf16.gmra.mxu0 %v2688
        %v9072 = vpop.f32.mrf.mxu0
        %v9073 = vadd.f32 %v9033, %v9072
        %v9074 = vpop.f32.mrf.mxu0
        %v9075 = vpop.f32.mrf.mxu0
        %v9076 = vpop.f32.mrf.mxu0
        %9077 = vdwg.mxu0
        %9078 = vmatprep.subr.bf16.mxu0 0
        %9079 = vmatpush1.bf16.msra.mxu0 %v6677
        %9080 = vmatprep.subr.bf16.mxu0 0
        %9081 = vmatpush1.bf16.msra.mxu0 %v6676
        %9082 = vmatprep.subr.bf16.mxu0 0
        %9083 = vmatpush1.bf16.msra.mxu0 %v6675
        %9084 = vmatprep.subr.bf16.mxu0 0
        %9085 = vmatpush1.bf16.msra.mxu0 %v6674
        %9086 = vmatprep.subr.bf16.mxu0 0
        %9087 = vmatpush1.bf16.msra.mxu0 %v6673
        %9088 = vmatprep.subr.bf16.mxu0 0
        %9089 = vmatpush1.bf16.msra.mxu0 %v6672
        %9090 = vmatprep.subr.bf16.mxu0 0
        %9091 = vmatpush1.bf16.msra.mxu0 %v6671
        %9092 = vmatprep.subr.bf16.mxu0 0
        %9093 = vmatpush1.bf16.msra.mxu0 %v6670
        %9094 = vmatprep.subr.bf16.mxu0 0
        %9095 = vmatpush2.bf16.msra.mxu0 %v6685
        %9096 = vmatprep.subr.bf16.mxu0 0
        %9097 = vmatpush2.bf16.msra.mxu0 %v6684
        %9098 = vmatprep.subr.bf16.mxu0 0
        %9099 = vmatpush2.bf16.msra.mxu0 %v6683
        %9100 = vmatprep.subr.bf16.mxu0 0
        %9101 = vmatpush2.bf16.msra.mxu0 %v6682
        %9102 = vmatprep.subr.bf16.mxu0 0
        %9103 = vmatpush2.bf16.msra.mxu0 %v6681
        %9104 = vmatprep.subr.bf16.mxu0 0
        %9105 = vmatpush2.bf16.msra.mxu0 %v6680
        %9106 = vmatprep.subr.bf16.mxu0 0
        %9107 = vmatpush2.bf16.msra.mxu0 %v6679
        %9108 = vmatprep.subr.bf16.mxu0 0
        %9109 = vmatpush2.bf16.msra.mxu0 %v6678
        %9110 = vmatprep.mubr.bf16.mxu0 %v2706
        %9111 = vmatmul.mubr.bf16.gmra.mxu0 %v2704
        %v9112 = vpop.f32.mrf.mxu0
        %v9113 = vadd.f32 %v9073, %v9112
        %v9114 = vpop.f32.mrf.mxu0
        %v9115 = vpop.f32.mrf.mxu0
        %v9116 = vpop.f32.mrf.mxu0
        %9117 = vdwg.mxu0
        %9118 = vmatprep.subr.bf16.mxu0 0
        %9119 = vmatpush1.bf16.msra.mxu0 %v6693
        %9120 = vmatprep.subr.bf16.mxu0 0
        %9121 = vmatpush1.bf16.msra.mxu0 %v6692
        %9122 = vmatprep.subr.bf16.mxu0 0
        %9123 = vmatpush1.bf16.msra.mxu0 %v6691
        %9124 = vmatprep.subr.bf16.mxu0 0
        %9125 = vmatpush1.bf16.msra.mxu0 %v6690
        %9126 = vmatprep.subr.bf16.mxu0 0
        %9127 = vmatpush1.bf16.msra.mxu0 %v6689
        %9128 = vmatprep.subr.bf16.mxu0 0
        %9129 = vmatpush1.bf16.msra.mxu0 %v6688
        %9130 = vmatprep.subr.bf16.mxu0 0
        %9131 = vmatpush1.bf16.msra.mxu0 %v6687
        %9132 = vmatprep.subr.bf16.mxu0 0
        %9133 = vmatpush1.bf16.msra.mxu0 %v6686
        %9134 = vmatprep.subr.bf16.mxu0 0
        %9135 = vmatpush2.bf16.msra.mxu0 %v6701
        %9136 = vmatprep.subr.bf16.mxu0 0
        %9137 = vmatpush2.bf16.msra.mxu0 %v6700
        %9138 = vmatprep.subr.bf16.mxu0 0
        %9139 = vmatpush2.bf16.msra.mxu0 %v6699
        %9140 = vmatprep.subr.bf16.mxu0 0
        %9141 = vmatpush2.bf16.msra.mxu0 %v6698
        %9142 = vmatprep.subr.bf16.mxu0 0
        %9143 = vmatpush2.bf16.msra.mxu0 %v6697
        %9144 = vmatprep.subr.bf16.mxu0 0
        %9145 = vmatpush2.bf16.msra.mxu0 %v6696
        %9146 = vmatprep.subr.bf16.mxu0 0
        %9147 = vmatpush2.bf16.msra.mxu0 %v6695
        %9148 = vmatprep.subr.bf16.mxu0 0
        %9149 = vmatpush2.bf16.msra.mxu0 %v6694
        %9150 = vmatprep.mubr.bf16.mxu0 %v2744
        %9151 = vmatmul.mubr.bf16.gmra.mxu0 %v2730
        %v9152 = vpop.f32.mrf.mxu0
        %v9153 = vadd.f32 %v9113, %v9152
        %v9154 = vpop.f32.mrf.mxu0
        %v9155 = vpop.f32.mrf.mxu0
        %v9156 = vpop.f32.mrf.mxu0
        %9157 = vdwg.mxu0
        %9158 = vmatprep.subr.bf16.mxu0 0
        %9159 = vmatpush1.bf16.msra.mxu0 %v6709
        %9160 = vmatprep.subr.bf16.mxu0 0
        %9161 = vmatpush1.bf16.msra.mxu0 %v6708
        %9162 = vmatprep.subr.bf16.mxu0 0
        %9163 = vmatpush1.bf16.msra.mxu0 %v6707
        %9164 = vmatprep.subr.bf16.mxu0 0
        %9165 = vmatpush1.bf16.msra.mxu0 %v6706
        %9166 = vmatprep.subr.bf16.mxu0 0
        %9167 = vmatpush1.bf16.msra.mxu0 %v6705
        %9168 = vmatprep.subr.bf16.mxu0 0
        %9169 = vmatpush1.bf16.msra.mxu0 %v6704
        %9170 = vmatprep.subr.bf16.mxu0 0
        %9171 = vmatpush1.bf16.msra.mxu0 %v6703
        %9172 = vmatprep.subr.bf16.mxu0 0
        %9173 = vmatpush1.bf16.msra.mxu0 %v6702
        %9174 = vmatprep.subr.bf16.mxu0 0
        %9175 = vmatpush2.bf16.msra.mxu0 %v6717
        %9176 = vmatprep.subr.bf16.mxu0 0
        %9177 = vmatpush2.bf16.msra.mxu0 %v6716
        %9178 = vmatprep.subr.bf16.mxu0 0
        %9179 = vmatpush2.bf16.msra.mxu0 %v6715
        %9180 = vmatprep.subr.bf16.mxu0 0
        %9181 = vmatpush2.bf16.msra.mxu0 %v6714
        %9182 = vmatprep.subr.bf16.mxu0 0
        %9183 = vmatpush2.bf16.msra.mxu0 %v6713
        %9184 = vmatprep.subr.bf16.mxu0 0
        %9185 = vmatpush2.bf16.msra.mxu0 %v6712
        %9186 = vmatprep.subr.bf16.mxu0 0
        %9187 = vmatpush2.bf16.msra.mxu0 %v6711
        %9188 = vmatprep.subr.bf16.mxu0 0
        %9189 = vmatpush2.bf16.msra.mxu0 %v6710
        %9190 = vmatprep.mubr.bf16.mxu0 %v2754
        %9191 = vmatmul.mubr.bf16.gmra.mxu0 %v2752
        %v9192 = vpop.f32.mrf.mxu0
        %v9193 = vadd.f32 %v9153, %v9192
        %v9194 = vpop.f32.mrf.mxu0
        %v9195 = vpop.f32.mrf.mxu0
        %v9196 = vpop.f32.mrf.mxu0
        %9197 = vdwg.mxu0
        %9198 = vmatprep.subr.bf16.mxu0 0
        %9199 = vmatpush1.bf16.msra.mxu0 %v6725
        %9200 = vmatprep.subr.bf16.mxu0 0
        %9201 = vmatpush1.bf16.msra.mxu0 %v6724
        %9202 = vmatprep.subr.bf16.mxu0 0
        %9203 = vmatpush1.bf16.msra.mxu0 %v6723
        %9204 = vmatprep.subr.bf16.mxu0 0
        %9205 = vmatpush1.bf16.msra.mxu0 %v6722
        %9206 = vmatprep.subr.bf16.mxu0 0
        %9207 = vmatpush1.bf16.msra.mxu0 %v6721
        %9208 = vmatprep.subr.bf16.mxu0 0
        %9209 = vmatpush1.bf16.msra.mxu0 %v6720
        %9210 = vmatprep.subr.bf16.mxu0 0
        %9211 = vmatpush1.bf16.msra.mxu0 %v6719
        %9212 = vmatprep.subr.bf16.mxu0 0
        %9213 = vmatpush1.bf16.msra.mxu0 %v6718
        %9214 = vmatprep.subr.bf16.mxu0 0
        %9215 = vmatpush2.bf16.msra.mxu0 %v6733
        %9216 = vmatprep.subr.bf16.mxu0 0
        %9217 = vmatpush2.bf16.msra.mxu0 %v6732
        %9218 = vmatprep.subr.bf16.mxu0 0
        %9219 = vmatpush2.bf16.msra.mxu0 %v6731
        %9220 = vmatprep.subr.bf16.mxu0 0
        %9221 = vmatpush2.bf16.msra.mxu0 %v6730
        %9222 = vmatprep.subr.bf16.mxu0 0
        %9223 = vmatpush2.bf16.msra.mxu0 %v6729
        %9224 = vmatprep.subr.bf16.mxu0 0
        %9225 = vmatpush2.bf16.msra.mxu0 %v6728
        %9226 = vmatprep.subr.bf16.mxu0 0
        %9227 = vmatpush2.bf16.msra.mxu0 %v6727
        %9228 = vmatprep.subr.bf16.mxu0 0
        %9229 = vmatpush2.bf16.msra.mxu0 %v6726
        %9230 = vmatprep.mubr.bf16.mxu0 %v2751
        %9231 = vmatmul.mubr.bf16.gmra.mxu0 %v2737
        %v9232 = vpop.f32.mrf.mxu0
        %v9233 = vadd.f32 %v9193, %v9232
        %v9234 = vpop.f32.mrf.mxu0
        %v9235 = vpop.f32.mrf.mxu0
        %v9236 = vpop.f32.mrf.mxu0
        %9237 = vdwg.mxu0
        %9238 = vmatprep.subr.bf16.mxu0 0
        %9239 = vmatpush1.bf16.msra.mxu0 %v6741
        %9240 = vmatprep.subr.bf16.mxu0 0
        %9241 = vmatpush1.bf16.msra.mxu0 %v6740
        %9242 = vmatprep.subr.bf16.mxu0 0
        %9243 = vmatpush1.bf16.msra.mxu0 %v6739
        %9244 = vmatprep.subr.bf16.mxu0 0
        %9245 = vmatpush1.bf16.msra.mxu0 %v6738
        %9246 = vmatprep.subr.bf16.mxu0 0
        %9247 = vmatpush1.bf16.msra.mxu0 %v6737
        %9248 = vmatprep.subr.bf16.mxu0 0
        %9249 = vmatpush1.bf16.msra.mxu0 %v6736
        %9250 = vmatprep.subr.bf16.mxu0 0
        %9251 = vmatpush1.bf16.msra.mxu0 %v6735
        %9252 = vmatprep.subr.bf16.mxu0 0
        %9253 = vmatpush1.bf16.msra.mxu0 %v6734
        %9254 = vmatprep.subr.bf16.mxu0 0
        %9255 = vmatpush2.bf16.msra.mxu0 %v6749
        %9256 = vmatprep.subr.bf16.mxu0 0
        %9257 = vmatpush2.bf16.msra.mxu0 %v6748
        %9258 = vmatprep.subr.bf16.mxu0 0
        %9259 = vmatpush2.bf16.msra.mxu0 %v6747
        %9260 = vmatprep.subr.bf16.mxu0 0
        %9261 = vmatpush2.bf16.msra.mxu0 %v6746
        %9262 = vmatprep.subr.bf16.mxu0 0
        %9263 = vmatpush2.bf16.msra.mxu0 %v6745
        %9264 = vmatprep.subr.bf16.mxu0 0
        %9265 = vmatpush2.bf16.msra.mxu0 %v6744
        %9266 = vmatprep.subr.bf16.mxu0 0
        %9267 = vmatpush2.bf16.msra.mxu0 %v6743
        %9268 = vmatprep.subr.bf16.mxu0 0
        %9269 = vmatpush2.bf16.msra.mxu0 %v6742
        %9270 = vmatprep.mubr.bf16.mxu0 %v2755
        %9271 = vmatmul.mubr.bf16.gmra.mxu0 %v2753
        %v9272 = vpop.f32.mrf.mxu0
        %v9273 = vadd.f32 %v9233, %v9272
        %v9274 = vpop.f32.mrf.mxu0
        %v9275 = vpop.f32.mrf.mxu0
        %v9276 = vpop.f32.mrf.mxu0
        %9277 = vdwg.mxu0
        %9278 = vmatprep.subr.bf16.mxu0 0
        %9279 = vmatpush1.bf16.msra.mxu0 %v6757
        %9280 = vmatprep.subr.bf16.mxu0 0
        %9281 = vmatpush1.bf16.msra.mxu0 %v6756
        %9282 = vmatprep.subr.bf16.mxu0 0
        %9283 = vmatpush1.bf16.msra.mxu0 %v6755
        %9284 = vmatprep.subr.bf16.mxu0 0
        %9285 = vmatpush1.bf16.msra.mxu0 %v6754
        %9286 = vmatprep.subr.bf16.mxu0 0
        %9287 = vmatpush1.bf16.msra.mxu0 %v6753
        %9288 = vmatprep.subr.bf16.mxu0 0
        %9289 = vmatpush1.bf16.msra.mxu0 %v6752
        %9290 = vmatprep.subr.bf16.mxu0 0
        %9291 = vmatpush1.bf16.msra.mxu0 %v6751
        %9292 = vmatprep.subr.bf16.mxu0 0
        %9293 = vmatpush1.bf16.msra.mxu0 %v6750
        %9294 = vmatprep.subr.bf16.mxu0 0
        %9295 = vmatpush2.bf16.msra.mxu0 %v6765
        %9296 = vmatprep.subr.bf16.mxu0 0
        %9297 = vmatpush2.bf16.msra.mxu0 %v6764
        %9298 = vmatprep.subr.bf16.mxu0 0
        %9299 = vmatpush2.bf16.msra.mxu0 %v6763
        %9300 = vmatprep.subr.bf16.mxu0 0
        %9301 = vmatpush2.bf16.msra.mxu0 %v6762
        %9302 = vmatprep.subr.bf16.mxu0 0
        %9303 = vmatpush2.bf16.msra.mxu0 %v6761
        %9304 = vmatprep.subr.bf16.mxu0 0
        %9305 = vmatpush2.bf16.msra.mxu0 %v6760
        %9306 = vmatprep.subr.bf16.mxu0 0
        %9307 = vmatpush2.bf16.msra.mxu0 %v6759
        %9308 = vmatprep.subr.bf16.mxu0 0
        %9309 = vmatpush2.bf16.msra.mxu0 %v6758
        %9310 = vmatprep.mubr.bf16.mxu0 %v2793
        %9311 = vmatmul.mubr.bf16.gmra.mxu0 %v2779
        %v9312 = vpop.f32.mrf.mxu0
        %v9313 = vadd.f32 %v9273, %v9312
        %v9314 = vpop.f32.mrf.mxu0
        %v9315 = vpop.f32.mrf.mxu0
        %v9316 = vpop.f32.mrf.mxu0
        %9317 = vdwg.mxu0
        %9318 = vmatprep.subr.bf16.mxu0 0
        %9319 = vmatpush1.bf16.msra.mxu0 %v6773
        %9320 = vmatprep.subr.bf16.mxu0 0
        %9321 = vmatpush1.bf16.msra.mxu0 %v6772
        %9322 = vmatprep.subr.bf16.mxu0 0
        %9323 = vmatpush1.bf16.msra.mxu0 %v6771
        %9324 = vmatprep.subr.bf16.mxu0 0
        %9325 = vmatpush1.bf16.msra.mxu0 %v6770
        %9326 = vmatprep.subr.bf16.mxu0 0
        %9327 = vmatpush1.bf16.msra.mxu0 %v6769
        %9328 = vmatprep.subr.bf16.mxu0 0
        %9329 = vmatpush1.bf16.msra.mxu0 %v6768
        %9330 = vmatprep.subr.bf16.mxu0 0
        %9331 = vmatpush1.bf16.msra.mxu0 %v6767
        %9332 = vmatprep.subr.bf16.mxu0 0
        %9333 = vmatpush1.bf16.msra.mxu0 %v6766
        %9334 = vmatprep.subr.bf16.mxu0 0
        %9335 = vmatpush2.bf16.msra.mxu0 %v6781
        %9336 = vmatprep.subr.bf16.mxu0 0
        %9337 = vmatpush2.bf16.msra.mxu0 %v6780
        %9338 = vmatprep.subr.bf16.mxu0 0
        %9339 = vmatpush2.bf16.msra.mxu0 %v6779
        %9340 = vmatprep.subr.bf16.mxu0 0
        %9341 = vmatpush2.bf16.msra.mxu0 %v6778
        %9342 = vmatprep.subr.bf16.mxu0 0
        %9343 = vmatpush2.bf16.msra.mxu0 %v6777
        %9344 = vmatprep.subr.bf16.mxu0 0
        %9345 = vmatpush2.bf16.msra.mxu0 %v6776
        %9346 = vmatprep.subr.bf16.mxu0 0
        %9347 = vmatpush2.bf16.msra.mxu0 %v6775
        %9348 = vmatprep.subr.bf16.mxu0 0
        %9349 = vmatpush2.bf16.msra.mxu0 %v6774
        %9350 = vmatprep.mubr.bf16.mxu0 %v2803
        %9351 = vmatmul.mubr.bf16.gmra.mxu0 %v2801
        %v9352 = vpop.f32.mrf.mxu0
        %v9353 = vadd.f32 %v9313, %v9352
        %v9354 = vpop.f32.mrf.mxu0
        %v9355 = vpop.f32.mrf.mxu0
        %v9356 = vpop.f32.mrf.mxu0
        %9357 = vdwg.mxu0
        %9358 = vmatprep.subr.bf16.mxu0 0
        %9359 = vmatpush1.bf16.msra.mxu0 %v6789
        %9360 = vmatprep.subr.bf16.mxu0 0
        %9361 = vmatpush1.bf16.msra.mxu0 %v6788
        %9362 = vmatprep.subr.bf16.mxu0 0
        %9363 = vmatpush1.bf16.msra.mxu0 %v6787
        %9364 = vmatprep.subr.bf16.mxu0 0
        %9365 = vmatpush1.bf16.msra.mxu0 %v6786
        %9366 = vmatprep.subr.bf16.mxu0 0
        %9367 = vmatpush1.bf16.msra.mxu0 %v6785
        %9368 = vmatprep.subr.bf16.mxu0 0
        %9369 = vmatpush1.bf16.msra.mxu0 %v6784
        %9370 = vmatprep.subr.bf16.mxu0 0
        %9371 = vmatpush1.bf16.msra.mxu0 %v6783
        %9372 = vmatprep.subr.bf16.mxu0 0
        %9373 = vmatpush1.bf16.msra.mxu0 %v6782
        %9374 = vmatprep.subr.bf16.mxu0 0
        %9375 = vmatpush2.bf16.msra.mxu0 %v6797
        %9376 = vmatprep.subr.bf16.mxu0 0
        %9377 = vmatpush2.bf16.msra.mxu0 %v6796
        %9378 = vmatprep.subr.bf16.mxu0 0
        %9379 = vmatpush2.bf16.msra.mxu0 %v6795
        %9380 = vmatprep.subr.bf16.mxu0 0
        %9381 = vmatpush2.bf16.msra.mxu0 %v6794
        %9382 = vmatprep.subr.bf16.mxu0 0
        %9383 = vmatpush2.bf16.msra.mxu0 %v6793
        %9384 = vmatprep.subr.bf16.mxu0 0
        %9385 = vmatpush2.bf16.msra.mxu0 %v6792
        %9386 = vmatprep.subr.bf16.mxu0 0
        %9387 = vmatpush2.bf16.msra.mxu0 %v6791
        %9388 = vmatprep.subr.bf16.mxu0 0
        %9389 = vmatpush2.bf16.msra.mxu0 %v6790
        %9390 = vmatprep.mubr.bf16.mxu0 %v2800
        %9391 = vmatmul.mubr.bf16.gmra.mxu0 %v2786
        %v9392 = vpop.f32.mrf.mxu0
        %v9393 = vadd.f32 %v9353, %v9392
        %v9394 = vpop.f32.mrf.mxu0
        %v9395 = vpop.f32.mrf.mxu0
        %v9396 = vpop.f32.mrf.mxu0
        %9397 = vdwg.mxu0
        %9398 = vmatprep.subr.bf16.mxu0 0
        %9399 = vmatpush1.bf16.msra.mxu0 %v6805
        %9400 = vmatprep.subr.bf16.mxu0 0
        %9401 = vmatpush1.bf16.msra.mxu0 %v6804
        %9402 = vmatprep.subr.bf16.mxu0 0
        %9403 = vmatpush1.bf16.msra.mxu0 %v6803
        %9404 = vmatprep.subr.bf16.mxu0 0
        %9405 = vmatpush1.bf16.msra.mxu0 %v6802
        %9406 = vmatprep.subr.bf16.mxu0 0
        %9407 = vmatpush1.bf16.msra.mxu0 %v6801
        %9408 = vmatprep.subr.bf16.mxu0 0
        %9409 = vmatpush1.bf16.msra.mxu0 %v6800
        %9410 = vmatprep.subr.bf16.mxu0 0
        %9411 = vmatpush1.bf16.msra.mxu0 %v6799
        %9412 = vmatprep.subr.bf16.mxu0 0
        %9413 = vmatpush1.bf16.msra.mxu0 %v6798
        %9414 = vmatprep.subr.bf16.mxu0 0
        %9415 = vmatpush2.bf16.msra.mxu0 %v6813
        %9416 = vmatprep.subr.bf16.mxu0 0
        %9417 = vmatpush2.bf16.msra.mxu0 %v6812
        %9418 = vmatprep.subr.bf16.mxu0 0
        %9419 = vmatpush2.bf16.msra.mxu0 %v6811
        %9420 = vmatprep.subr.bf16.mxu0 0
        %9421 = vmatpush2.bf16.msra.mxu0 %v6810
        %9422 = vmatprep.subr.bf16.mxu0 0
        %9423 = vmatpush2.bf16.msra.mxu0 %v6809
        %9424 = vmatprep.subr.bf16.mxu0 0
        %9425 = vmatpush2.bf16.msra.mxu0 %v6808
        %9426 = vmatprep.subr.bf16.mxu0 0
        %9427 = vmatpush2.bf16.msra.mxu0 %v6807
        %9428 = vmatprep.subr.bf16.mxu0 0
        %9429 = vmatpush2.bf16.msra.mxu0 %v6806
        %9430 = vmatprep.mubr.bf16.mxu0 %v2804
        %9431 = vmatmul.mubr.bf16.gmra.mxu0 %v2802
        %v9432 = vpop.f32.mrf.mxu0
        %v9433 = vadd.f32 %v9393, %v9432
        %v9434 = vpop.f32.mrf.mxu0
        %v9435 = vpop.f32.mrf.mxu0
        %v9436 = vpop.f32.mrf.mxu0
        %9437 = vdwg.mxu0
        %9438 = vmatprep.subr.bf16.mxu0 0
        %9439 = vmatpush1.bf16.msra.mxu0 %v6821
        %9440 = vmatprep.subr.bf16.mxu0 0
        %9441 = vmatpush1.bf16.msra.mxu0 %v6820
        %9442 = vmatprep.subr.bf16.mxu0 0
        %9443 = vmatpush1.bf16.msra.mxu0 %v6819
        %9444 = vmatprep.subr.bf16.mxu0 0
        %9445 = vmatpush1.bf16.msra.mxu0 %v6818
        %9446 = vmatprep.subr.bf16.mxu0 0
        %9447 = vmatpush1.bf16.msra.mxu0 %v6817
        %9448 = vmatprep.subr.bf16.mxu0 0
        %9449 = vmatpush1.bf16.msra.mxu0 %v6816
        %9450 = vmatprep.subr.bf16.mxu0 0
        %9451 = vmatpush1.bf16.msra.mxu0 %v6815
        %9452 = vmatprep.subr.bf16.mxu0 0
        %9453 = vmatpush1.bf16.msra.mxu0 %v6814
        %9454 = vmatprep.subr.bf16.mxu0 0
        %9455 = vmatpush2.bf16.msra.mxu0 %v6829
        %9456 = vmatprep.subr.bf16.mxu0 0
        %9457 = vmatpush2.bf16.msra.mxu0 %v6828
        %9458 = vmatprep.subr.bf16.mxu0 0
        %9459 = vmatpush2.bf16.msra.mxu0 %v6827
        %9460 = vmatprep.subr.bf16.mxu0 0
        %9461 = vmatpush2.bf16.msra.mxu0 %v6826
        %9462 = vmatprep.subr.bf16.mxu0 0
        %9463 = vmatpush2.bf16.msra.mxu0 %v6825
        %9464 = vmatprep.subr.bf16.mxu0 0
        %9465 = vmatpush2.bf16.msra.mxu0 %v6824
        %9466 = vmatprep.subr.bf16.mxu0 0
        %9467 = vmatpush2.bf16.msra.mxu0 %v6823
        %9468 = vmatprep.subr.bf16.mxu0 0
        %9469 = vmatpush2.bf16.msra.mxu0 %v6822
        %9470 = vmatprep.mubr.bf16.mxu0 %v2842
        %9471 = vmatmul.mubr.bf16.gmra.mxu0 %v2828
        %v9472 = vpop.f32.mrf.mxu0
        %v9473 = vadd.f32 %v9433, %v9472
        %v9474 = vpop.f32.mrf.mxu0
        %v9475 = vpop.f32.mrf.mxu0
        %v9476 = vpop.f32.mrf.mxu0
        %9477 = vdwg.mxu0
        %9478 = vmatprep.subr.bf16.mxu0 0
        %9479 = vmatpush1.bf16.msra.mxu0 %v6837
        %9480 = vmatprep.subr.bf16.mxu0 0
        %9481 = vmatpush1.bf16.msra.mxu0 %v6836
        %9482 = vmatprep.subr.bf16.mxu0 0
        %9483 = vmatpush1.bf16.msra.mxu0 %v6835
        %9484 = vmatprep.subr.bf16.mxu0 0
        %9485 = vmatpush1.bf16.msra.mxu0 %v6834
        %9486 = vmatprep.subr.bf16.mxu0 0
        %9487 = vmatpush1.bf16.msra.mxu0 %v6833
        %9488 = vmatprep.subr.bf16.mxu0 0
        %9489 = vmatpush1.bf16.msra.mxu0 %v6832
        %9490 = vmatprep.subr.bf16.mxu0 0
        %9491 = vmatpush1.bf16.msra.mxu0 %v6831
        %9492 = vmatprep.subr.bf16.mxu0 0
        %9493 = vmatpush1.bf16.msra.mxu0 %v6830
        %9494 = vmatprep.subr.bf16.mxu0 0
        %9495 = vmatpush2.bf16.msra.mxu0 %v6845
        %9496 = vmatprep.subr.bf16.mxu0 0
        %9497 = vmatpush2.bf16.msra.mxu0 %v6844
        %9498 = vmatprep.subr.bf16.mxu0 0
        %9499 = vmatpush2.bf16.msra.mxu0 %v6843
        %9500 = vmatprep.subr.bf16.mxu0 0
        %9501 = vmatpush2.bf16.msra.mxu0 %v6842
        %9502 = vmatprep.subr.bf16.mxu0 0
        %9503 = vmatpush2.bf16.msra.mxu0 %v6841
        %9504 = vmatprep.subr.bf16.mxu0 0
        %9505 = vmatpush2.bf16.msra.mxu0 %v6840
        %9506 = vmatprep.subr.bf16.mxu0 0
        %9507 = vmatpush2.bf16.msra.mxu0 %v6839
        %9508 = vmatprep.subr.bf16.mxu0 0
        %9509 = vmatpush2.bf16.msra.mxu0 %v6838
        %9510 = vmatprep.mubr.bf16.mxu0 %v2852
        %9511 = vmatmul.mubr.bf16.gmra.mxu0 %v2850
        %v9512 = vpop.f32.mrf.mxu0
        %v9513 = vadd.f32 %v9473, %v9512
        %v9514 = vpop.f32.mrf.mxu0
        %v9515 = vpop.f32.mrf.mxu0
        %v9516 = vpop.f32.mrf.mxu0
        %9517 = vdwg.mxu0
        %9518 = vmatprep.subr.bf16.mxu0 0
        %9519 = vmatpush1.bf16.msra.mxu0 %v6853
        %9520 = vmatprep.subr.bf16.mxu0 0
        %9521 = vmatpush1.bf16.msra.mxu0 %v6852
        %9522 = vmatprep.subr.bf16.mxu0 0
        %9523 = vmatpush1.bf16.msra.mxu0 %v6851
        %9524 = vmatprep.subr.bf16.mxu0 0
        %9525 = vmatpush1.bf16.msra.mxu0 %v6850
        %9526 = vmatprep.subr.bf16.mxu0 0
        %9527 = vmatpush1.bf16.msra.mxu0 %v6849
        %9528 = vmatprep.subr.bf16.mxu0 0
        %9529 = vmatpush1.bf16.msra.mxu0 %v6848
        %9530 = vmatprep.subr.bf16.mxu0 0
        %9531 = vmatpush1.bf16.msra.mxu0 %v6847
        %9532 = vmatprep.subr.bf16.mxu0 0
        %9533 = vmatpush1.bf16.msra.mxu0 %v6846
        %9534 = vmatprep.subr.bf16.mxu0 0
        %9535 = vmatpush2.bf16.msra.mxu0 %v6861
        %9536 = vmatprep.subr.bf16.mxu0 0
        %9537 = vmatpush2.bf16.msra.mxu0 %v6860
        %9538 = vmatprep.subr.bf16.mxu0 0
        %9539 = vmatpush2.bf16.msra.mxu0 %v6859
        %9540 = vmatprep.subr.bf16.mxu0 0
        %9541 = vmatpush2.bf16.msra.mxu0 %v6858
        %9542 = vmatprep.subr.bf16.mxu0 0
        %9543 = vmatpush2.bf16.msra.mxu0 %v6857
        %9544 = vmatprep.subr.bf16.mxu0 0
        %9545 = vmatpush2.bf16.msra.mxu0 %v6856
        %9546 = vmatprep.subr.bf16.mxu0 0
        %9547 = vmatpush2.bf16.msra.mxu0 %v6855
        %9548 = vmatprep.subr.bf16.mxu0 0
        %9549 = vmatpush2.bf16.msra.mxu0 %v6854
        %9550 = vmatprep.mubr.bf16.mxu0 %v2849
        %9551 = vmatmul.mubr.bf16.gmra.mxu0 %v2835
        %v9552 = vpop.f32.mrf.mxu0
        %v9553 = vadd.f32 %v9513, %v9552
        %v9554 = vpop.f32.mrf.mxu0
        %v9555 = vpop.f32.mrf.mxu0
        %v9556 = vpop.f32.mrf.mxu0
        %9557 = vdwg.mxu0
        %9558 = vmatprep.subr.bf16.mxu0 0
        %9559 = vmatpush1.bf16.msra.mxu0 %v6869
        %9560 = vmatprep.subr.bf16.mxu0 0
        %9561 = vmatpush1.bf16.msra.mxu0 %v6868
        %9562 = vmatprep.subr.bf16.mxu0 0
        %9563 = vmatpush1.bf16.msra.mxu0 %v6867
        %9564 = vmatprep.subr.bf16.mxu0 0
        %9565 = vmatpush1.bf16.msra.mxu0 %v6866
        %9566 = vmatprep.subr.bf16.mxu0 0
        %9567 = vmatpush1.bf16.msra.mxu0 %v6865
        %9568 = vmatprep.subr.bf16.mxu0 0
        %9569 = vmatpush1.bf16.msra.mxu0 %v6864
        %9570 = vmatprep.subr.bf16.mxu0 0
        %9571 = vmatpush1.bf16.msra.mxu0 %v6863
        %9572 = vmatprep.subr.bf16.mxu0 0
        %9573 = vmatpush1.bf16.msra.mxu0 %v6862
        %9574 = vmatprep.subr.bf16.mxu0 0
        %9575 = vmatpush2.bf16.msra.mxu0 %v6877
        %9576 = vmatprep.subr.bf16.mxu0 0
        %9577 = vmatpush2.bf16.msra.mxu0 %v6876
        %9578 = vmatprep.subr.bf16.mxu0 0
        %9579 = vmatpush2.bf16.msra.mxu0 %v6875
        %9580 = vmatprep.subr.bf16.mxu0 0
        %9581 = vmatpush2.bf16.msra.mxu0 %v6874
        %9582 = vmatprep.subr.bf16.mxu0 0
        %9583 = vmatpush2.bf16.msra.mxu0 %v6873
        %9584 = vmatprep.subr.bf16.mxu0 0
        %9585 = vmatpush2.bf16.msra.mxu0 %v6872
        %9586 = vmatprep.subr.bf16.mxu0 0
        %9587 = vmatpush2.bf16.msra.mxu0 %v6871
        %9588 = vmatprep.subr.bf16.mxu0 0
        %9589 = vmatpush2.bf16.msra.mxu0 %v6870
        %9590 = vmatprep.mubr.bf16.mxu0 %v2853
        %9591 = vmatmul.mubr.bf16.gmra.mxu0 %v2851
        %v9592 = vpop.f32.mrf.mxu0
        %v9593 = vadd.f32 %v9553, %v9592
        %v9594 = vpop.f32.mrf.mxu0
        %v9595 = vpop.f32.mrf.mxu0
        %v9596 = vpop.f32.mrf.mxu0
        %9597 = vdwg.mxu0
        %9598 = vmatprep.subr.bf16.mxu0 0
        %9599 = vmatpush1.bf16.msra.mxu0 %v6885
        %9600 = vmatprep.subr.bf16.mxu0 0
        %9601 = vmatpush1.bf16.msra.mxu0 %v6884
        %9602 = vmatprep.subr.bf16.mxu0 0
        %9603 = vmatpush1.bf16.msra.mxu0 %v6883
        %9604 = vmatprep.subr.bf16.mxu0 0
        %9605 = vmatpush1.bf16.msra.mxu0 %v6882
        %9606 = vmatprep.subr.bf16.mxu0 0
        %9607 = vmatpush1.bf16.msra.mxu0 %v6881
        %9608 = vmatprep.subr.bf16.mxu0 0
        %9609 = vmatpush1.bf16.msra.mxu0 %v6880
        %9610 = vmatprep.subr.bf16.mxu0 0
        %9611 = vmatpush1.bf16.msra.mxu0 %v6879
        %9612 = vmatprep.subr.bf16.mxu0 0
        %9613 = vmatpush1.bf16.msra.mxu0 %v6878
        %9614 = vmatprep.subr.bf16.mxu0 0
        %9615 = vmatpush2.bf16.msra.mxu0 %v6893
        %9616 = vmatprep.subr.bf16.mxu0 0
        %9617 = vmatpush2.bf16.msra.mxu0 %v6892
        %9618 = vmatprep.subr.bf16.mxu0 0
        %9619 = vmatpush2.bf16.msra.mxu0 %v6891
        %9620 = vmatprep.subr.bf16.mxu0 0
        %9621 = vmatpush2.bf16.msra.mxu0 %v6890
        %9622 = vmatprep.subr.bf16.mxu0 0
        %9623 = vmatpush2.bf16.msra.mxu0 %v6889
        %9624 = vmatprep.subr.bf16.mxu0 0
        %9625 = vmatpush2.bf16.msra.mxu0 %v6888
        %9626 = vmatprep.subr.bf16.mxu0 0
        %9627 = vmatpush2.bf16.msra.mxu0 %v6887
        %9628 = vmatprep.subr.bf16.mxu0 0
        %9629 = vmatpush2.bf16.msra.mxu0 %v6886
        %9630 = vmatprep.mubr.bf16.mxu0 %v2875
        %9631 = vmatmul.mubr.bf16.gmra.mxu0 %v2868
        %v9632 = vpop.f32.mrf.mxu0
        %v9633 = vadd.f32 %v9593, %v9632
        %v9634 = vpop.f32.mrf.mxu0
        %v9635 = vpop.f32.mrf.mxu0
        %v9636 = vpop.f32.mrf.mxu0
        %9637 = vdwg.mxu0
        %v9638 = vadd.f32 %v671, %v9633
        %vm9639 = vcmask 254976
        %9640 = vst.msk [vmem:[#allocation2] sm:$0x3] %vm9639, %v9638
        %p9641 = scmp.eq.s32.totalorder %s33, 11
        // Predicated region
        $region109: #{tpu_custom_call.1} parent=103 // pred_check
          %p9642 = pneg %p9641
        $region110: #{tpu_custom_call.1} parent=103 // pred_check_branch
          %9644 = sbr.rel (%p9642) target = $region112
        $region111: #{tpu_custom_call.1} parent=103 // pred_region
          %v9645 = vld [vmem:[#allocation2] sm:$0x3]
          %v9646 = vld [vmem:[%s2] sm:$0x1]
          %v9648 = vlaneseq
          %v9649 = vshrl.u32 %v9648, 7
          %v9650 = vsub.s32 0, %v9649
          %v9651 = vrot.slane %v9646, %v9650
          %v9653 = vadd.f32 %v9645, %v9651
          %v9654 = vmax.f32 %v9653, 0.0
          %v9655 = vld [vmem:[%s5] sm:$0xff]
          %v9656 = vld [vmem:[%s5 + $0x8] sm:$0xff]
          %v9657 = vld [vmem:[%s5 + $0x10] sm:$0xff]
          %v9658 = vld [vmem:[%s5 + $0x18] sm:$0xff]
          %v9659 = vld [vmem:[%s6] sm:$0x1]
          %v9661 = vlaneseq
          %v9662 = vshrl.u32 %v9661, 7
          %v9663 = vsub.s32 0, %v9662
          %v9664 = vrot.slane %v9659, %v9663
          %vm9666 = vcmask 261120
          %v9668 = vsel %vm9666, %v9654, 0
          %9670 = vmatprep.subr.mxu0 0.0
          %9671 = vmatpush1.msra.mxu0 0.0
          %9672 = vmatprep.subr.mxu0 0.0
          %9673 = vmatpush1.msra.mxu0 0.0
          %9674 = vmatprep.subr.mxu0 0.0
          %9675 = vmatpush1.msra.mxu0 0.0
          %9676 = vmatprep.subr.mxu0 0.0
          %9677 = vmatpush1.msra.mxu0 0.0
          %9678 = vmatprep.subr.mxu0 0.0
          %9679 = vmatpush1.msra.mxu0 0.0
          %9680 = vmatprep.subr.mxu0 0.0
          %9681 = vmatpush1.msra.mxu0 0.0
          %9682 = vmatprep.subr.mxu0 0.0
          %9683 = vmatpush1.msra.mxu0 0.0
          %9684 = vmatprep.subr.mxu0 0.0
          %9685 = vmatpush1.msra.mxu0 0.0
          %9686 = vmatprep.subr.mxu0 0.0
          %9687 = vmatpush1.msra.mxu0 0.0
          %9688 = vmatprep.subr.mxu0 0.0
          %9689 = vmatpush1.msra.mxu0 0.0
          %9690 = vmatprep.subr.mxu0 0.0
          %9691 = vmatpush1.msra.mxu0 0.0
          %9692 = vmatprep.subr.mxu0 0.0
          %9693 = vmatpush1.msra.mxu0 0.0
          %9694 = vmatprep.subr.mxu0 0.0
          %9695 = vmatpush1.msra.mxu0 %v9658
          %9696 = vmatprep.subr.mxu0 0.0
          %9697 = vmatpush1.msra.mxu0 %v9657
          %9698 = vmatprep.subr.mxu0 0.0
          %9699 = vmatpush1.msra.mxu0 %v9656
          %9700 = vmatprep.subr.mxu0 0.0
          %9701 = vmatpush1.msra.mxu0 %v9655
          %9702 = vmatprep.subr.mxu0 0.0
          %9703 = vmatpush2.msra.mxu0 0.0
          %9704 = vmatprep.subr.mxu0 0.0
          %9705 = vmatpush2.msra.mxu0 0.0
          %9706 = vmatprep.subr.mxu0 0.0
          %9707 = vmatpush2.msra.mxu0 0.0
          %9708 = vmatprep.subr.mxu0 0.0
          %9709 = vmatpush2.msra.mxu0 0.0
          %9710 = vmatprep.subr.mxu0 0.0
          %9711 = vmatpush2.msra.mxu0 0.0
          %9712 = vmatprep.subr.mxu0 0.0
          %9713 = vmatpush2.msra.mxu0 0.0
          %9714 = vmatprep.subr.mxu0 0.0
          %9715 = vmatpush2.msra.mxu0 0.0
          %9716 = vmatprep.subr.mxu0 0.0
          %9717 = vmatpush2.msra.mxu0 0.0
          %9718 = vmatprep.subr.mxu0 0.0
          %9719 = vmatpush2.msra.mxu0 0.0
          %9720 = vmatprep.subr.mxu0 0.0
          %9721 = vmatpush2.msra.mxu0 0.0
          %9722 = vmatprep.subr.mxu0 0.0
          %9723 = vmatpush2.msra.mxu0 0.0
          %9724 = vmatprep.subr.mxu0 0.0
          %9725 = vmatpush2.msra.mxu0 0.0
          %9726 = vmatprep.subr.mxu0 0.0
          %9727 = vmatpush2.msra.mxu0 0.0
          %9728 = vmatprep.subr.mxu0 0.0
          %9729 = vmatpush2.msra.mxu0 0.0
          %9730 = vmatprep.subr.mxu0 0.0
          %9731 = vmatpush2.msra.mxu0 0.0
          %9732 = vmatprep.subr.mxu0 0.0
          %9733 = vmatpush2.msra.mxu0 0.0
          %9734 = vmatprep.mubr.f32.mxu0 0.0
          %9735 = vmatmul.mubr.f32.gmra.mxu0 %v9668
          %v9736 = vpop.f32.mrf.mxu0
          %v9737 = vadd.f32 %v9664, %v9736
          %v9738 = vpop.f32.mrf.mxu0
          %9739 = vdwg.mxu0
          %v9740 = vld [vmem:[%s3] sm:$0xf]
          %v9741 = vld [vmem:[%s4] sm:$0xff]
          %v9742 = vld [vmem:[%s4 + $0x8] sm:$0xff]
          %v9743 = vld [vmem:[%s4 + $0x10] sm:$0xff]
          %v9744 = vld [vmem:[%s4 + $0x18] sm:$0xff]
          %v9745 = vld [vmem:[%s4 + $0x20] sm:$0xff]
          %v9746 = vld [vmem:[%s4 + $0x28] sm:$0xff]
          %v9747 = vld [vmem:[%s4 + $0x30] sm:$0xff]
          %v9748 = vld [vmem:[%s4 + $0x38] sm:$0xff]
          %v9749 = vld [vmem:[%s4 + $0x40] sm:$0xff]
          %v9750 = vld [vmem:[%s4 + $0x48] sm:$0xff]
          %v9751 = vld [vmem:[%s4 + $0x50] sm:$0xff]
          %v9752 = vld [vmem:[%s4 + $0x58] sm:$0xff]
          %v9753 = vld [vmem:[%s4 + $0x60] sm:$0xff]
          %v9754 = vld [vmem:[%s4 + $0x68] sm:$0xff]
          %v9755 = vld [vmem:[%s4 + $0x70] sm:$0xff]
          %v9756 = vld [vmem:[%s4 + $0x78] sm:$0xff]
          %v9757 = vld [vmem:[%s4 + $0x80] sm:$0xff]
          %v9758 = vld [vmem:[%s4 + $0x88] sm:$0xff]
          %v9759 = vld [vmem:[%s4 + $0x90] sm:$0xff]
          %v9760 = vld [vmem:[%s4 + $0x98] sm:$0xff]
          %v9761 = vld [vmem:[%s4 + $0xa0] sm:$0xff]
          %v9762 = vld [vmem:[%s4 + $0xa8] sm:$0xff]
          %v9763 = vld [vmem:[%s4 + $0xb0] sm:$0xff]
          %v9764 = vld [vmem:[%s4 + $0xb8] sm:$0xff]
          %v9765 = vld [vmem:[%s4 + $0xc0] sm:$0xff]
          %v9766 = vld [vmem:[%s4 + $0xc8] sm:$0xff]
          %v9767 = vld [vmem:[%s4 + $0xd0] sm:$0xff]
          %v9768 = vld [vmem:[%s4 + $0xd8] sm:$0xff]
          %v9769 = vld [vmem:[%s4 + $0xe0] sm:$0xff]
          %v9770 = vld [vmem:[%s4 + $0xe8] sm:$0xff]
          %v9771 = vld [vmem:[%s4 + $0xf0] sm:$0xff]
          %v9772 = vld [vmem:[%s4 + $0xf8] sm:$0xff]
          %v9775 = vunpack.c.l.s4 1983009808
          %v9776 = vunpack.c.0.s8 %v9775
          %v9777 = vlaneseq
          %v9778 = vshrl.u32 %v9777, 7
          %v9779 = vsub.s32 %v9776, %v9778
          %v9780 = vrot.slane %v9740, %v9779
          %v9781 = vcombine.high %v9780, %v9780
          %9784 = vmatprep.subr.mxu0 0.0
          %9785 = vmatpush1.msra.mxu0 %v9756
          %9786 = vmatprep.subr.mxu0 0.0
          %9787 = vmatpush1.msra.mxu0 %v9755
          %9788 = vmatprep.subr.mxu0 0.0
          %9789 = vmatpush1.msra.mxu0 %v9754
          %9790 = vmatprep.subr.mxu0 0.0
          %9791 = vmatpush1.msra.mxu0 %v9753
          %9792 = vmatprep.subr.mxu0 0.0
          %9793 = vmatpush1.msra.mxu0 %v9752
          %9794 = vmatprep.subr.mxu0 0.0
          %9795 = vmatpush1.msra.mxu0 %v9751
          %9796 = vmatprep.subr.mxu0 0.0
          %9797 = vmatpush1.msra.mxu0 %v9750
          %9798 = vmatprep.subr.mxu0 0.0
          %9799 = vmatpush1.msra.mxu0 %v9749
          %9800 = vmatprep.subr.mxu0 0.0
          %9801 = vmatpush1.msra.mxu0 %v9748
          %9802 = vmatprep.subr.mxu0 0.0
          %9803 = vmatpush1.msra.mxu0 %v9747
          %9804 = vmatprep.subr.mxu0 0.0
          %9805 = vmatpush1.msra.mxu0 %v9746
          %9806 = vmatprep.subr.mxu0 0.0
          %9807 = vmatpush1.msra.mxu0 %v9745
          %9808 = vmatprep.subr.mxu0 0.0
          %9809 = vmatpush1.msra.mxu0 %v9744
          %9810 = vmatprep.subr.mxu0 0.0
          %9811 = vmatpush1.msra.mxu0 %v9743
          %9812 = vmatprep.subr.mxu0 0.0
          %9813 = vmatpush1.msra.mxu0 %v9742
          %9814 = vmatprep.subr.mxu0 0.0
          %9815 = vmatpush1.msra.mxu0 %v9741
          %9816 = vmatprep.subr.mxu0 0.0
          %9817 = vmatpush2.msra.mxu0 %v9772
          %9818 = vmatprep.subr.mxu0 0.0
          %9819 = vmatpush2.msra.mxu0 %v9771
          %9820 = vmatprep.subr.mxu0 0.0
          %9821 = vmatpush2.msra.mxu0 %v9770
          %9822 = vmatprep.subr.mxu0 0.0
          %9823 = vmatpush2.msra.mxu0 %v9769
          %9824 = vmatprep.subr.mxu0 0.0
          %9825 = vmatpush2.msra.mxu0 %v9768
          %9826 = vmatprep.subr.mxu0 0.0
          %9827 = vmatpush2.msra.mxu0 %v9767
          %9828 = vmatprep.subr.mxu0 0.0
          %9829 = vmatpush2.msra.mxu0 %v9766
          %9830 = vmatprep.subr.mxu0 0.0
          %9831 = vmatpush2.msra.mxu0 %v9765
          %9832 = vmatprep.subr.mxu0 0.0
          %9833 = vmatpush2.msra.mxu0 %v9764
          %9834 = vmatprep.subr.mxu0 0.0
          %9835 = vmatpush2.msra.mxu0 %v9763
          %9836 = vmatprep.subr.mxu0 0.0
          %9837 = vmatpush2.msra.mxu0 %v9762
          %9838 = vmatprep.subr.mxu0 0.0
          %9839 = vmatpush2.msra.mxu0 %v9761
          %9840 = vmatprep.subr.mxu0 0.0
          %9841 = vmatpush2.msra.mxu0 %v9760
          %9842 = vmatprep.subr.mxu0 0.0
          %9843 = vmatpush2.msra.mxu0 %v9759
          %9844 = vmatprep.subr.mxu0 0.0
          %9845 = vmatpush2.msra.mxu0 %v9758
          %9846 = vmatprep.subr.mxu0 0.0
          %9847 = vmatpush2.msra.mxu0 %v9757
          %9848 = vmatprep.mubr.f32.mxu0 %v9781
          %9849 = vmatmul.mubr.f32.gmra.mxu0 %v9780
          %v9850 = vpop.f32.mrf.mxu0
          %v9851 = vadd.f32 0.0, %v9850
          %v9852 = vpop.f32.mrf.mxu0
          %9853 = vdwg.mxu0
          %v9854 = vld [vmem:[%s7] sm:$0xff]
          %v9855 = vld [vmem:[%s7 + $0x8] sm:$0xff]
          %v9856 = vld [vmem:[%s7 + $0x10] sm:$0xff]
          %v9857 = vld [vmem:[%s7 + $0x18] sm:$0xff]
          %v9858 = vld [vmem:[%s8] sm:$0xff]
          %v9859 = vld [vmem:[%s8 + $0x8] sm:$0xff]
          %v9860 = vld [vmem:[%s8 + $0x10] sm:$0xff]
          %v9861 = vld [vmem:[%s8 + $0x18] sm:$0xff]
          %v9863 = vsel %vm9666, %v9851, 0
          %9865 = vmatprep.subr.mxu0 0.0
          %9866 = vmatpush1.msra.mxu0 0.0
          %9867 = vmatprep.subr.mxu0 0.0
          %9868 = vmatpush1.msra.mxu0 0.0
          %9869 = vmatprep.subr.mxu0 0.0
          %9870 = vmatpush1.msra.mxu0 0.0
          %9871 = vmatprep.subr.mxu0 0.0
          %9872 = vmatpush1.msra.mxu0 0.0
          %9873 = vmatprep.subr.mxu0 0.0
          %9874 = vmatpush1.msra.mxu0 0.0
          %9875 = vmatprep.subr.mxu0 0.0
          %9876 = vmatpush1.msra.mxu0 0.0
          %9877 = vmatprep.subr.mxu0 0.0
          %9878 = vmatpush1.msra.mxu0 0.0
          %9879 = vmatprep.subr.mxu0 0.0
          %9880 = vmatpush1.msra.mxu0 0.0
          %9881 = vmatprep.subr.mxu0 0.0
          %9882 = vmatpush1.msra.mxu0 0.0
          %9883 = vmatprep.subr.mxu0 0.0
          %9884 = vmatpush1.msra.mxu0 0.0
          %9885 = vmatprep.subr.mxu0 0.0
          %9886 = vmatpush1.msra.mxu0 0.0
          %9887 = vmatprep.subr.mxu0 0.0
          %9888 = vmatpush1.msra.mxu0 0.0
          %9889 = vmatprep.subr.mxu0 0.0
          %9890 = vmatpush1.msra.mxu0 %v9861
          %9891 = vmatprep.subr.mxu0 0.0
          %9892 = vmatpush1.msra.mxu0 %v9860
          %9893 = vmatprep.subr.mxu0 0.0
          %9894 = vmatpush1.msra.mxu0 %v9859
          %9895 = vmatprep.subr.mxu0 0.0
          %9896 = vmatpush1.msra.mxu0 %v9858
          %9897 = vmatprep.subr.mxu0 0.0
          %9898 = vmatpush2.msra.mxu0 0.0
          %9899 = vmatprep.subr.mxu0 0.0
          %9900 = vmatpush2.msra.mxu0 0.0
          %9901 = vmatprep.subr.mxu0 0.0
          %9902 = vmatpush2.msra.mxu0 0.0
          %9903 = vmatprep.subr.mxu0 0.0
          %9904 = vmatpush2.msra.mxu0 0.0
          %9905 = vmatprep.subr.mxu0 0.0
          %9906 = vmatpush2.msra.mxu0 0.0
          %9907 = vmatprep.subr.mxu0 0.0
          %9908 = vmatpush2.msra.mxu0 0.0
          %9909 = vmatprep.subr.mxu0 0.0
          %9910 = vmatpush2.msra.mxu0 0.0
          %9911 = vmatprep.subr.mxu0 0.0
          %9912 = vmatpush2.msra.mxu0 0.0
          %9913 = vmatprep.subr.mxu0 0.0
          %9914 = vmatpush2.msra.mxu0 0.0
          %9915 = vmatprep.subr.mxu0 0.0
          %9916 = vmatpush2.msra.mxu0 0.0
          %9917 = vmatprep.subr.mxu0 0.0
          %9918 = vmatpush2.msra.mxu0 0.0
          %9919 = vmatprep.subr.mxu0 0.0
          %9920 = vmatpush2.msra.mxu0 0.0
          %9921 = vmatprep.subr.mxu0 0.0
          %9922 = vmatpush2.msra.mxu0 0.0
          %9923 = vmatprep.subr.mxu0 0.0
          %9924 = vmatpush2.msra.mxu0 0.0
          %9925 = vmatprep.subr.mxu0 0.0
          %9926 = vmatpush2.msra.mxu0 0.0
          %9927 = vmatprep.subr.mxu0 0.0
          %9928 = vmatpush2.msra.mxu0 0.0
          %9929 = vmatprep.mubr.f32.mxu0 0.0
          %9930 = vmatmul.mubr.f32.gmra.mxu0 %v9863
          %v9931 = vpop.f32.mrf.mxu0
          %v9932 = vadd.f32 0.0, %v9931
          %v9933 = vpop.f32.mrf.mxu0
          %9934 = vdwg.mxu0
          %v9936 = vsel %vm9666, %v9737, 0
          %9938 = vmatprep.subr.mxu0 0.0
          %9939 = vmatpush1.msra.mxu0 0.0
          %9940 = vmatprep.subr.mxu0 0.0
          %9941 = vmatpush1.msra.mxu0 0.0
          %9942 = vmatprep.subr.mxu0 0.0
          %9943 = vmatpush1.msra.mxu0 0.0
          %9944 = vmatprep.subr.mxu0 0.0
          %9945 = vmatpush1.msra.mxu0 0.0
          %9946 = vmatprep.subr.mxu0 0.0
          %9947 = vmatpush1.msra.mxu0 0.0
          %9948 = vmatprep.subr.mxu0 0.0
          %9949 = vmatpush1.msra.mxu0 0.0
          %9950 = vmatprep.subr.mxu0 0.0
          %9951 = vmatpush1.msra.mxu0 0.0
          %9952 = vmatprep.subr.mxu0 0.0
          %9953 = vmatpush1.msra.mxu0 0.0
          %9954 = vmatprep.subr.mxu0 0.0
          %9955 = vmatpush1.msra.mxu0 0.0
          %9956 = vmatprep.subr.mxu0 0.0
          %9957 = vmatpush1.msra.mxu0 0.0
          %9958 = vmatprep.subr.mxu0 0.0
          %9959 = vmatpush1.msra.mxu0 0.0
          %9960 = vmatprep.subr.mxu0 0.0
          %9961 = vmatpush1.msra.mxu0 0.0
          %9962 = vmatprep.subr.mxu0 0.0
          %9963 = vmatpush1.msra.mxu0 %v9857
          %9964 = vmatprep.subr.mxu0 0.0
          %9965 = vmatpush1.msra.mxu0 %v9856
          %9966 = vmatprep.subr.mxu0 0.0
          %9967 = vmatpush1.msra.mxu0 %v9855
          %9968 = vmatprep.subr.mxu0 0.0
          %9969 = vmatpush1.msra.mxu0 %v9854
          %9970 = vmatprep.subr.mxu0 0.0
          %9971 = vmatpush2.msra.mxu0 0.0
          %9972 = vmatprep.subr.mxu0 0.0
          %9973 = vmatpush2.msra.mxu0 0.0
          %9974 = vmatprep.subr.mxu0 0.0
          %9975 = vmatpush2.msra.mxu0 0.0
          %9976 = vmatprep.subr.mxu0 0.0
          %9977 = vmatpush2.msra.mxu0 0.0
          %9978 = vmatprep.subr.mxu0 0.0
          %9979 = vmatpush2.msra.mxu0 0.0
          %9980 = vmatprep.subr.mxu0 0.0
          %9981 = vmatpush2.msra.mxu0 0.0
          %9982 = vmatprep.subr.mxu0 0.0
          %9983 = vmatpush2.msra.mxu0 0.0
          %9984 = vmatprep.subr.mxu0 0.0
          %9985 = vmatpush2.msra.mxu0 0.0
          %9986 = vmatprep.subr.mxu0 0.0
          %9987 = vmatpush2.msra.mxu0 0.0
          %9988 = vmatprep.subr.mxu0 0.0
          %9989 = vmatpush2.msra.mxu0 0.0
          %9990 = vmatprep.subr.mxu0 0.0
          %9991 = vmatpush2.msra.mxu0 0.0
          %9992 = vmatprep.subr.mxu0 0.0
          %9993 = vmatpush2.msra.mxu0 0.0
          %9994 = vmatprep.subr.mxu0 0.0
          %9995 = vmatpush2.msra.mxu0 0.0
          %9996 = vmatprep.subr.mxu0 0.0
          %9997 = vmatpush2.msra.mxu0 0.0
          %9998 = vmatprep.subr.mxu0 0.0
          %9999 = vmatpush2.msra.mxu0 0.0
          %10000 = vmatprep.subr.mxu0 0.0
          %10001 = vmatpush2.msra.mxu0 0.0
          %10002 = vmatprep.mubr.f32.mxu0 0.0
          %10003 = vmatmul.mubr.f32.gmra.mxu0 %v9936
          %v10004 = vpop.f32.mrf.mxu0
          %v10005 = vadd.f32 %v9932, %v10004
          %v10006 = vpop.f32.mrf.mxu0
          %10007 = vdwg.mxu0
          %v10008 = vld [vmem:[%s9] sm:$0x1]
          %v10010 = vlaneseq
          %v10011 = vshrl.u32 %v10010, 7
          %v10012 = vsub.s32 0, %v10011
          %v10013 = vrot.slane %v10008, %v10012
          %v10015 = vadd.f32 %v10005, %v10013
          %v10016 = vmax.f32 %v10015, 0.0
          %v10017 = vld [vmem:[%s10] sm:$0xff]
          %v10018 = vld [vmem:[%s10 + $0x8] sm:$0xff]
          %v10019 = vld [vmem:[%s10 + $0x10] sm:$0xff]
          %v10020 = vld [vmem:[%s10 + $0x18] sm:$0xff]
          %v10021 = vld [vmem:[%s11] sm:$0x1]
          %v10023 = vlaneseq
          %v10024 = vshrl.u32 %v10023, 7
          %v10025 = vsub.s32 0, %v10024
          %v10026 = vrot.slane %v10021, %v10025
          %v10029 = vsel %vm9666, %v10016, 0
          %10031 = vmatprep.subr.mxu0 0.0
          %10032 = vmatpush1.msra.mxu0 0.0
          %10033 = vmatprep.subr.mxu0 0.0
          %10034 = vmatpush1.msra.mxu0 0.0
          %10035 = vmatprep.subr.mxu0 0.0
          %10036 = vmatpush1.msra.mxu0 0.0
          %10037 = vmatprep.subr.mxu0 0.0
          %10038 = vmatpush1.msra.mxu0 0.0
          %10039 = vmatprep.subr.mxu0 0.0
          %10040 = vmatpush1.msra.mxu0 0.0
          %10041 = vmatprep.subr.mxu0 0.0
          %10042 = vmatpush1.msra.mxu0 0.0
          %10043 = vmatprep.subr.mxu0 0.0
          %10044 = vmatpush1.msra.mxu0 0.0
          %10045 = vmatprep.subr.mxu0 0.0
          %10046 = vmatpush1.msra.mxu0 0.0
          %10047 = vmatprep.subr.mxu0 0.0
          %10048 = vmatpush1.msra.mxu0 0.0
          %10049 = vmatprep.subr.mxu0 0.0
          %10050 = vmatpush1.msra.mxu0 0.0
          %10051 = vmatprep.subr.mxu0 0.0
          %10052 = vmatpush1.msra.mxu0 0.0
          %10053 = vmatprep.subr.mxu0 0.0
          %10054 = vmatpush1.msra.mxu0 0.0
          %10055 = vmatprep.subr.mxu0 0.0
          %10056 = vmatpush1.msra.mxu0 %v10020
          %10057 = vmatprep.subr.mxu0 0.0
          %10058 = vmatpush1.msra.mxu0 %v10019
          %10059 = vmatprep.subr.mxu0 0.0
          %10060 = vmatpush1.msra.mxu0 %v10018
          %10061 = vmatprep.subr.mxu0 0.0
          %10062 = vmatpush1.msra.mxu0 %v10017
          %10063 = vmatprep.subr.mxu0 0.0
          %10064 = vmatpush2.msra.mxu0 0.0
          %10065 = vmatprep.subr.mxu0 0.0
          %10066 = vmatpush2.msra.mxu0 0.0
          %10067 = vmatprep.subr.mxu0 0.0
          %10068 = vmatpush2.msra.mxu0 0.0
          %10069 = vmatprep.subr.mxu0 0.0
          %10070 = vmatpush2.msra.mxu0 0.0
          %10071 = vmatprep.subr.mxu0 0.0
          %10072 = vmatpush2.msra.mxu0 0.0
          %10073 = vmatprep.subr.mxu0 0.0
          %10074 = vmatpush2.msra.mxu0 0.0
          %10075 = vmatprep.subr.mxu0 0.0
          %10076 = vmatpush2.msra.mxu0 0.0
          %10077 = vmatprep.subr.mxu0 0.0
          %10078 = vmatpush2.msra.mxu0 0.0
          %10079 = vmatprep.subr.mxu0 0.0
          %10080 = vmatpush2.msra.mxu0 0.0
          %10081 = vmatprep.subr.mxu0 0.0
          %10082 = vmatpush2.msra.mxu0 0.0
          %10083 = vmatprep.subr.mxu0 0.0
          %10084 = vmatpush2.msra.mxu0 0.0
          %10085 = vmatprep.subr.mxu0 0.0
          %10086 = vmatpush2.msra.mxu0 0.0
          %10087 = vmatprep.subr.mxu0 0.0
          %10088 = vmatpush2.msra.mxu0 0.0
          %10089 = vmatprep.subr.mxu0 0.0
          %10090 = vmatpush2.msra.mxu0 0.0
          %10091 = vmatprep.subr.mxu0 0.0
          %10092 = vmatpush2.msra.mxu0 0.0
          %10093 = vmatprep.subr.mxu0 0.0
          %10094 = vmatpush2.msra.mxu0 0.0
          %10095 = vmatprep.mubr.f32.mxu0 0.0
          %10096 = vmatmul.mubr.f32.gmra.mxu0 %v10029
          %v10097 = vpop.f32.mrf.mxu0
          %v10098 = vadd.f32 %v10026, %v10097
          %v10099 = vpop.f32.mrf.mxu0
          %10100 = vdwg.mxu0
          %v10101 = vld [vmem:[%s12] sm:$0xff]
          %v10102 = vld [vmem:[%s12 + $0x8] sm:$0xff]
          %v10103 = vld [vmem:[%s12 + $0x10] sm:$0xff]
          %v10104 = vld [vmem:[%s12 + $0x18] sm:$0xff]
          %v10105 = vld [vmem:[%s13] sm:$0x1]
          %v10107 = vlaneseq
          %v10108 = vshrl.u32 %v10107, 7
          %v10109 = vsub.s32 0, %v10108
          %v10110 = vrot.slane %v10105, %v10109
          %v10113 = vsel %vm9666, %v10098, 0
          %10115 = vmatprep.subr.mxu0 0.0
          %10116 = vmatpush1.msra.mxu0 0.0
          %10117 = vmatprep.subr.mxu0 0.0
          %10118 = vmatpush1.msra.mxu0 0.0
          %10119 = vmatprep.subr.mxu0 0.0
          %10120 = vmatpush1.msra.mxu0 0.0
          %10121 = vmatprep.subr.mxu0 0.0
          %10122 = vmatpush1.msra.mxu0 0.0
          %10123 = vmatprep.subr.mxu0 0.0
          %10124 = vmatpush1.msra.mxu0 0.0
          %10125 = vmatprep.subr.mxu0 0.0
          %10126 = vmatpush1.msra.mxu0 0.0
          %10127 = vmatprep.subr.mxu0 0.0
          %10128 = vmatpush1.msra.mxu0 0.0
          %10129 = vmatprep.subr.mxu0 0.0
          %10130 = vmatpush1.msra.mxu0 0.0
          %10131 = vmatprep.subr.mxu0 0.0
          %10132 = vmatpush1.msra.mxu0 0.0
          %10133 = vmatprep.subr.mxu0 0.0
          %10134 = vmatpush1.msra.mxu0 0.0
          %10135 = vmatprep.subr.mxu0 0.0
          %10136 = vmatpush1.msra.mxu0 0.0
          %10137 = vmatprep.subr.mxu0 0.0
          %10138 = vmatpush1.msra.mxu0 0.0
          %10139 = vmatprep.subr.mxu0 0.0
          %10140 = vmatpush1.msra.mxu0 %v10104
          %10141 = vmatprep.subr.mxu0 0.0
          %10142 = vmatpush1.msra.mxu0 %v10103
          %10143 = vmatprep.subr.mxu0 0.0
          %10144 = vmatpush1.msra.mxu0 %v10102
          %10145 = vmatprep.subr.mxu0 0.0
          %10146 = vmatpush1.msra.mxu0 %v10101
          %10147 = vmatprep.subr.mxu0 0.0
          %10148 = vmatpush2.msra.mxu0 0.0
          %10149 = vmatprep.subr.mxu0 0.0
          %10150 = vmatpush2.msra.mxu0 0.0
          %10151 = vmatprep.subr.mxu0 0.0
          %10152 = vmatpush2.msra.mxu0 0.0
          %10153 = vmatprep.subr.mxu0 0.0
          %10154 = vmatpush2.msra.mxu0 0.0
          %10155 = vmatprep.subr.mxu0 0.0
          %10156 = vmatpush2.msra.mxu0 0.0
          %10157 = vmatprep.subr.mxu0 0.0
          %10158 = vmatpush2.msra.mxu0 0.0
          %10159 = vmatprep.subr.mxu0 0.0
          %10160 = vmatpush2.msra.mxu0 0.0
          %10161 = vmatprep.subr.mxu0 0.0
          %10162 = vmatpush2.msra.mxu0 0.0
          %10163 = vmatprep.subr.mxu0 0.0
          %10164 = vmatpush2.msra.mxu0 0.0
          %10165 = vmatprep.subr.mxu0 0.0
          %10166 = vmatpush2.msra.mxu0 0.0
          %10167 = vmatprep.subr.mxu0 0.0
          %10168 = vmatpush2.msra.mxu0 0.0
          %10169 = vmatprep.subr.mxu0 0.0
          %10170 = vmatpush2.msra.mxu0 0.0
          %10171 = vmatprep.subr.mxu0 0.0
          %10172 = vmatpush2.msra.mxu0 0.0
          %10173 = vmatprep.subr.mxu0 0.0
          %10174 = vmatpush2.msra.mxu0 0.0
          %10175 = vmatprep.subr.mxu0 0.0
          %10176 = vmatpush2.msra.mxu0 0.0
          %10177 = vmatprep.subr.mxu0 0.0
          %10178 = vmatpush2.msra.mxu0 0.0
          %10179 = vmatprep.mubr.f32.mxu0 0.0
          %10180 = vmatmul.mubr.f32.gmra.mxu0 %v10113
          %v10181 = vpop.f32.mrf.mxu0
          %v10182 = vadd.f32 %v10110, %v10181
          %v10183 = vpop.f32.mrf.mxu0
          %10184 = vdwg.mxu0
          %vm10185 = vcmask 25600
          %v10186 = vsel %vm10185, %v10182, -inf
          %10187 = vmax.xlane.f32.xlu0 %v10186
          %v10188 = vpop.xlane.xlu0 %10187
          %v10189 = vsub.f32 %v10182, %v10188
          %v10190 = vmul.f32 %v10189, 1.442695
          %v10191 = vpow.pop %v10190
          %v10192 = vsel %vm10185, %v10191, 0.0
          %10193 = vadd.xlane.f32.xlu0 %v10192
          %v10194 = vpop.xlane.xlu0 %10193
          %v10195 = vrcp.pop %v10194
          %v10196 = vmul.f32 %v10191, %v10195
          %v10197 = vld [vmem:[%s14] sm:$0xff]
          %v10198 = vld [vmem:[%s14 + $0x8] sm:$0xff]
          %v10199 = vld [vmem:[%s14 + $0x10] sm:$0xff]
          %v10200 = vld [vmem:[%s14 + $0x18] sm:$0xff]
          %v10201 = vld [vmem:[%s14 + $0x20] sm:$0xff]
          %v10202 = vld [vmem:[%s14 + $0x28] sm:$0xff]
          %v10203 = vld [vmem:[%s14 + $0x30] sm:$0xff]
          %v10204 = vld [vmem:[%s14 + $0x38] sm:$0xff]
          %v10205 = vld [vmem:[%s15] sm:$0x3]
          %v10207 = vlaneseq
          %v10208 = vshrl.u32 %v10207, 7
          %v10209 = vsub.s32 0, %v10208
          %v10210 = vrot.slane %v10205, %v10209
          %v10211 = vlaneseq
          %v10212 = vshrl.u32 %v10211, 7
          %v10213 = vsub.s32 1, %v10212
          %v10214 = vrot.slane %v10205, %v10213
          %10217 = vmatprep.subr.mxu0 0.0
          %10218 = vmatpush1.msra.mxu0 0.0
          %10219 = vmatprep.subr.mxu0 0.0
          %10220 = vmatpush1.msra.mxu0 0.0
          %10221 = vmatprep.subr.mxu0 0.0
          %10222 = vmatpush1.msra.mxu0 0.0
          %10223 = vmatprep.subr.mxu0 0.0
          %10224 = vmatpush1.msra.mxu0 0.0
          %10225 = vmatprep.subr.mxu0 0.0
          %10226 = vmatpush1.msra.mxu0 0.0
          %10227 = vmatprep.subr.mxu0 0.0
          %10228 = vmatpush1.msra.mxu0 0.0
          %10229 = vmatprep.subr.mxu0 0.0
          %10230 = vmatpush1.msra.mxu0 0.0
          %10231 = vmatprep.subr.mxu0 0.0
          %10232 = vmatpush1.msra.mxu0 0.0
          %10233 = vmatprep.subr.mxu0 0.0
          %10234 = vmatpush1.msra.mxu0 0.0
          %10235 = vmatprep.subr.mxu0 0.0
          %10236 = vmatpush1.msra.mxu0 0.0
          %10237 = vmatprep.subr.mxu0 0.0
          %10238 = vmatpush1.msra.mxu0 0.0
          %10239 = vmatprep.subr.mxu0 0.0
          %10240 = vmatpush1.msra.mxu0 0.0
          %10241 = vmatprep.subr.mxu0 %v10204
          %10242 = vmatpush1.msra.mxu0 %v10203
          %10243 = vmatprep.subr.mxu0 %v10202
          %10244 = vmatpush1.msra.mxu0 %v10201
          %10245 = vmatprep.subr.mxu0 %v10200
          %10246 = vmatpush1.msra.mxu0 %v10199
          %10247 = vmatprep.subr.mxu0 %v10198
          %10248 = vmatpush1.msra.mxu0 %v10197
          %10249 = vmatprep.subr.mxu0 0.0
          %10250 = vmatpush2.msra.mxu0 0.0
          %10251 = vmatprep.subr.mxu0 0.0
          %10252 = vmatpush2.msra.mxu0 0.0
          %10253 = vmatprep.subr.mxu0 0.0
          %10254 = vmatpush2.msra.mxu0 0.0
          %10255 = vmatprep.subr.mxu0 0.0
          %10256 = vmatpush2.msra.mxu0 0.0
          %10257 = vmatprep.subr.mxu0 0.0
          %10258 = vmatpush2.msra.mxu0 0.0
          %10259 = vmatprep.subr.mxu0 0.0
          %10260 = vmatpush2.msra.mxu0 0.0
          %10261 = vmatprep.subr.mxu0 0.0
          %10262 = vmatpush2.msra.mxu0 0.0
          %10263 = vmatprep.subr.mxu0 0.0
          %10264 = vmatpush2.msra.mxu0 0.0
          %10265 = vmatprep.subr.mxu0 0.0
          %10266 = vmatpush2.msra.mxu0 0.0
          %10267 = vmatprep.subr.mxu0 0.0
          %10268 = vmatpush2.msra.mxu0 0.0
          %10269 = vmatprep.subr.mxu0 0.0
          %10270 = vmatpush2.msra.mxu0 0.0
          %10271 = vmatprep.subr.mxu0 0.0
          %10272 = vmatpush2.msra.mxu0 0.0
          %10273 = vmatprep.subr.mxu0 0.0
          %10274 = vmatpush2.msra.mxu0 0.0
          %10275 = vmatprep.subr.mxu0 0.0
          %10276 = vmatpush2.msra.mxu0 0.0
          %10277 = vmatprep.subr.mxu0 0.0
          %10278 = vmatpush2.msra.mxu0 0.0
          %10279 = vmatprep.subr.mxu0 0.0
          %10280 = vmatpush2.msra.mxu0 0.0
          %10281 = vmatprep.mubr.f32.mxu0 0.0
          %10282 = vmatmul.mubr.f32.gmra.mxu0 %v10113
          %v10283 = vpop.f32.mrf.mxu0
          %v10284 = vadd.f32 %v10210, %v10283
          %v10285 = vpop.f32.mrf.mxu0
          %v10286 = vadd.f32 %v10214, %v10285
          %10287 = vdwg.mxu0
          %v10288 = vmax.f32 %v10284, 0.0
          %v10289 = vmax.f32 %v10286, 0.0
          %v10290 = vld [vmem:[%s18] sm:$0xff]
          %v10292 = vcombine.high %v10290, %v10290
          %vm10293 = vcmask 31744
          %v10295 = vsel %vm10293, %v10196, 0
          %vm10297 = vcmask 1043456
          %v10298 = vsel %vm10297, %v10290, 0
          %v10300 = vsel %vm10297, %v10292, 0
          %10302 = vmatprep.subr.mxu0 0.0
          %10303 = vmatpush1.msra.mxu0 0.0
          %10304 = vmatprep.subr.mxu0 0.0
          %10305 = vmatpush1.msra.mxu0 0.0
          %10306 = vmatprep.subr.mxu0 0.0
          %10307 = vmatpush1.msra.mxu0 0.0
          %10308 = vmatprep.subr.mxu0 0.0
          %10309 = vmatpush1.msra.mxu0 0.0
          %10310 = vmatprep.subr.mxu0 0.0
          %10311 = vmatpush1.msra.mxu0 0.0
          %10312 = vmatprep.subr.mxu0 0.0
          %10313 = vmatpush1.msra.mxu0 0.0
          %10314 = vmatprep.subr.mxu0 0.0
          %10315 = vmatpush1.msra.mxu0 0.0
          %10316 = vmatprep.subr.mxu0 0.0
          %10317 = vmatpush1.msra.mxu0 0.0
          %10318 = vmatprep.subr.mxu0 0.0
          %10319 = vmatpush1.msra.mxu0 0.0
          %10320 = vmatprep.subr.mxu0 0.0
          %10321 = vmatpush1.msra.mxu0 0.0
          %10322 = vmatprep.subr.mxu0 0.0
          %10323 = vmatpush1.msra.mxu0 0.0
          %10324 = vmatprep.subr.mxu0 0.0
          %10325 = vmatpush1.msra.mxu0 0.0
          %10326 = vmatprep.subr.mxu0 0.0
          %10327 = vmatpush1.msra.mxu0 0.0
          %10328 = vmatprep.subr.mxu0 0.0
          %10329 = vmatpush1.msra.mxu0 0.0
          %10330 = vmatprep.subr.mxu0 0.0
          %10331 = vmatpush1.msra.mxu0 0.0
          %10332 = vmatprep.subr.mxu0 %v10300
          %10333 = vmatpush1.msra.mxu0 %v10298
          %10334 = vmatprep.subr.mxu0 0.0
          %10335 = vmatpush2.msra.mxu0 0.0
          %10336 = vmatprep.subr.mxu0 0.0
          %10337 = vmatpush2.msra.mxu0 0.0
          %10338 = vmatprep.subr.mxu0 0.0
          %10339 = vmatpush2.msra.mxu0 0.0
          %10340 = vmatprep.subr.mxu0 0.0
          %10341 = vmatpush2.msra.mxu0 0.0
          %10342 = vmatprep.subr.mxu0 0.0
          %10343 = vmatpush2.msra.mxu0 0.0
          %10344 = vmatprep.subr.mxu0 0.0
          %10345 = vmatpush2.msra.mxu0 0.0
          %10346 = vmatprep.subr.mxu0 0.0
          %10347 = vmatpush2.msra.mxu0 0.0
          %10348 = vmatprep.subr.mxu0 0.0
          %10349 = vmatpush2.msra.mxu0 0.0
          %10350 = vmatprep.subr.mxu0 0.0
          %10351 = vmatpush2.msra.mxu0 0.0
          %10352 = vmatprep.subr.mxu0 0.0
          %10353 = vmatpush2.msra.mxu0 0.0
          %10354 = vmatprep.subr.mxu0 0.0
          %10355 = vmatpush2.msra.mxu0 0.0
          %10356 = vmatprep.subr.mxu0 0.0
          %10357 = vmatpush2.msra.mxu0 0.0
          %10358 = vmatprep.subr.mxu0 0.0
          %10359 = vmatpush2.msra.mxu0 0.0
          %10360 = vmatprep.subr.mxu0 0.0
          %10361 = vmatpush2.msra.mxu0 0.0
          %10362 = vmatprep.subr.mxu0 0.0
          %10363 = vmatpush2.msra.mxu0 0.0
          %10364 = vmatprep.subr.mxu0 0.0
          %10365 = vmatpush2.msra.mxu0 0.0
          %10366 = vmatprep.mubr.f32.mxu0 0.0
          %10367 = vmatmul.mubr.f32.gmra.mxu0 %v10295
          %v10368 = vpop.f32.mrf.mxu0
          %v10369 = vadd.f32 0.0, %v10368
          %v10370 = vpop.f32.mrf.mxu0
          %v10371 = vadd.f32 0.0, %v10370
          %10372 = vdwg.mxu0
          %v10373 = vmul.f32 %v10288, %v10369
          %v10374 = vmul.f32 %v10289, %v10371
          %v10375 = vld [vmem:[%s16] sm:$0xff]
          %v10376 = vld [vmem:[%s16 + $0x8] sm:$0xff]
          %v10377 = vld [vmem:[%s16 + $0x10] sm:$0xff]
          %v10378 = vld [vmem:[%s16 + $0x18] sm:$0xff]
          %v10379 = vld [vmem:[%s16 + $0x20] sm:$0xff]
          %v10380 = vld [vmem:[%s16 + $0x28] sm:$0xff]
          %v10381 = vld [vmem:[%s16 + $0x30] sm:$0xff]
          %v10382 = vld [vmem:[%s16 + $0x38] sm:$0xff]
          %v10383 = vld [vmem:[%s16 + $0x40] sm:$0xff]
          %v10384 = vld [vmem:[%s16 + $0x48] sm:$0xff]
          %v10385 = vld [vmem:[%s16 + $0x50] sm:$0xff]
          %v10386 = vld [vmem:[%s16 + $0x58] sm:$0xff]
          %v10387 = vld [vmem:[%s16 + $0x60] sm:$0xff]
          %v10388 = vld [vmem:[%s16 + $0x68] sm:$0xff]
          %v10389 = vld [vmem:[%s16 + $0x70] sm:$0xff]
          %v10390 = vld [vmem:[%s16 + $0x78] sm:$0xff]
          %v10391 = vld [vmem:[%s16 + $0x80] sm:$0xff]
          %v10392 = vld [vmem:[%s16 + $0x88] sm:$0xff]
          %v10393 = vld [vmem:[%s16 + $0x90] sm:$0xff]
          %v10394 = vld [vmem:[%s16 + $0x98] sm:$0xff]
          %v10395 = vld [vmem:[%s16 + $0xa0] sm:$0xff]
          %v10396 = vld [vmem:[%s16 + $0xa8] sm:$0xff]
          %v10397 = vld [vmem:[%s16 + $0xb0] sm:$0xff]
          %v10398 = vld [vmem:[%s16 + $0xb8] sm:$0xff]
          %v10399 = vld [vmem:[%s16 + $0xc0] sm:$0xff]
          %v10400 = vld [vmem:[%s16 + $0xc8] sm:$0xff]
          %v10401 = vld [vmem:[%s16 + $0xd0] sm:$0xff]
          %v10402 = vld [vmem:[%s16 + $0xd8] sm:$0xff]
          %v10403 = vld [vmem:[%s16 + $0xe0] sm:$0xff]
          %v10404 = vld [vmem:[%s16 + $0xe8] sm:$0xff]
          %v10405 = vld [vmem:[%s16 + $0xf0] sm:$0xff]
          %v10406 = vld [vmem:[%s16 + $0xf8] sm:$0xff]
          %v10407 = vld [vmem:[%s17] sm:$0xf]
          %v10409 = vsel %vm10297, %v10407, 0
          %10411 = vmatprep.subr.mxu0 0.0
          %10412 = vmatpush1.msra.mxu0 0.0
          %10413 = vmatprep.subr.mxu0 0.0
          %10414 = vmatpush1.msra.mxu0 0.0
          %10415 = vmatprep.subr.mxu0 0.0
          %10416 = vmatpush1.msra.mxu0 0.0
          %10417 = vmatprep.subr.mxu0 0.0
          %10418 = vmatpush1.msra.mxu0 0.0
          %10419 = vmatprep.subr.mxu0 0.0
          %10420 = vmatpush1.msra.mxu0 0.0
          %10421 = vmatprep.subr.mxu0 0.0
          %10422 = vmatpush1.msra.mxu0 0.0
          %10423 = vmatprep.subr.mxu0 0.0
          %10424 = vmatpush1.msra.mxu0 0.0
          %10425 = vmatprep.subr.mxu0 0.0
          %10426 = vmatpush1.msra.mxu0 0.0
          %10427 = vmatprep.subr.mxu0 0.0
          %10428 = vmatpush1.msra.mxu0 0.0
          %10429 = vmatprep.subr.mxu0 0.0
          %10430 = vmatpush1.msra.mxu0 0.0
          %10431 = vmatprep.subr.mxu0 0.0
          %10432 = vmatpush1.msra.mxu0 0.0
          %10433 = vmatprep.subr.mxu0 0.0
          %10434 = vmatpush1.msra.mxu0 0.0
          %10435 = vmatprep.subr.mxu0 0.0
          %10436 = vmatpush1.msra.mxu0 0.0
          %10437 = vmatprep.subr.mxu0 0.0
          %10438 = vmatpush1.msra.mxu0 0.0
          %10439 = vmatprep.subr.mxu0 0.0
          %10440 = vmatpush1.msra.mxu0 0.0
          %10441 = vmatprep.subr.mxu0 0.0
          %10442 = vmatpush1.msra.mxu0 %v10409
          %10443 = vmatprep.subr.mxu0 0.0
          %10444 = vmatpush2.msra.mxu0 0.0
          %10445 = vmatprep.subr.mxu0 0.0
          %10446 = vmatpush2.msra.mxu0 0.0
          %10447 = vmatprep.subr.mxu0 0.0
          %10448 = vmatpush2.msra.mxu0 0.0
          %10449 = vmatprep.subr.mxu0 0.0
          %10450 = vmatpush2.msra.mxu0 0.0
          %10451 = vmatprep.subr.mxu0 0.0
          %10452 = vmatpush2.msra.mxu0 0.0
          %10453 = vmatprep.subr.mxu0 0.0
          %10454 = vmatpush2.msra.mxu0 0.0
          %10455 = vmatprep.subr.mxu0 0.0
          %10456 = vmatpush2.msra.mxu0 0.0
          %10457 = vmatprep.subr.mxu0 0.0
          %10458 = vmatpush2.msra.mxu0 0.0
          %10459 = vmatprep.subr.mxu0 0.0
          %10460 = vmatpush2.msra.mxu0 0.0
          %10461 = vmatprep.subr.mxu0 0.0
          %10462 = vmatpush2.msra.mxu0 0.0
          %10463 = vmatprep.subr.mxu0 0.0
          %10464 = vmatpush2.msra.mxu0 0.0
          %10465 = vmatprep.subr.mxu0 0.0
          %10466 = vmatpush2.msra.mxu0 0.0
          %10467 = vmatprep.subr.mxu0 0.0
          %10468 = vmatpush2.msra.mxu0 0.0
          %10469 = vmatprep.subr.mxu0 0.0
          %10470 = vmatpush2.msra.mxu0 0.0
          %10471 = vmatprep.subr.mxu0 0.0
          %10472 = vmatpush2.msra.mxu0 0.0
          %10473 = vmatprep.subr.mxu0 0.0
          %10474 = vmatpush2.msra.mxu0 0.0
          %10475 = vmatprep.mubr.f32.mxu0 0.0
          %10476 = vmatmul.mubr.f32.gmra.mxu0 %v10295
          %v10477 = vpop.f32.mrf.mxu0
          %v10478 = vadd.f32 0.0, %v10477
          %v10479 = vpop.f32.mrf.mxu0
          %10480 = vdwg.mxu0
          %10481 = vmatprep.subr.mxu0 0.0
          %10482 = vmatpush1.msra.mxu0 %v10390
          %10483 = vmatprep.subr.mxu0 0.0
          %10484 = vmatpush1.msra.mxu0 %v10389
          %10485 = vmatprep.subr.mxu0 0.0
          %10486 = vmatpush1.msra.mxu0 %v10388
          %10487 = vmatprep.subr.mxu0 0.0
          %10488 = vmatpush1.msra.mxu0 %v10387
          %10489 = vmatprep.subr.mxu0 0.0
          %10490 = vmatpush1.msra.mxu0 %v10386
          %10491 = vmatprep.subr.mxu0 0.0
          %10492 = vmatpush1.msra.mxu0 %v10385
          %10493 = vmatprep.subr.mxu0 0.0
          %10494 = vmatpush1.msra.mxu0 %v10384
          %10495 = vmatprep.subr.mxu0 0.0
          %10496 = vmatpush1.msra.mxu0 %v10383
          %10497 = vmatprep.subr.mxu0 0.0
          %10498 = vmatpush1.msra.mxu0 %v10382
          %10499 = vmatprep.subr.mxu0 0.0
          %10500 = vmatpush1.msra.mxu0 %v10381
          %10501 = vmatprep.subr.mxu0 0.0
          %10502 = vmatpush1.msra.mxu0 %v10380
          %10503 = vmatprep.subr.mxu0 0.0
          %10504 = vmatpush1.msra.mxu0 %v10379
          %10505 = vmatprep.subr.mxu0 0.0
          %10506 = vmatpush1.msra.mxu0 %v10378
          %10507 = vmatprep.subr.mxu0 0.0
          %10508 = vmatpush1.msra.mxu0 %v10377
          %10509 = vmatprep.subr.mxu0 0.0
          %10510 = vmatpush1.msra.mxu0 %v10376
          %10511 = vmatprep.subr.mxu0 0.0
          %10512 = vmatpush1.msra.mxu0 %v10375
          %10513 = vmatprep.subr.mxu0 0.0
          %10514 = vmatpush2.msra.mxu0 %v10406
          %10515 = vmatprep.subr.mxu0 0.0
          %10516 = vmatpush2.msra.mxu0 %v10405
          %10517 = vmatprep.subr.mxu0 0.0
          %10518 = vmatpush2.msra.mxu0 %v10404
          %10519 = vmatprep.subr.mxu0 0.0
          %10520 = vmatpush2.msra.mxu0 %v10403
          %10521 = vmatprep.subr.mxu0 0.0
          %10522 = vmatpush2.msra.mxu0 %v10402
          %10523 = vmatprep.subr.mxu0 0.0
          %10524 = vmatpush2.msra.mxu0 %v10401
          %10525 = vmatprep.subr.mxu0 0.0
          %10526 = vmatpush2.msra.mxu0 %v10400
          %10527 = vmatprep.subr.mxu0 0.0
          %10528 = vmatpush2.msra.mxu0 %v10399
          %10529 = vmatprep.subr.mxu0 0.0
          %10530 = vmatpush2.msra.mxu0 %v10398
          %10531 = vmatprep.subr.mxu0 0.0
          %10532 = vmatpush2.msra.mxu0 %v10397
          %10533 = vmatprep.subr.mxu0 0.0
          %10534 = vmatpush2.msra.mxu0 %v10396
          %10535 = vmatprep.subr.mxu0 0.0
          %10536 = vmatpush2.msra.mxu0 %v10395
          %10537 = vmatprep.subr.mxu0 0.0
          %10538 = vmatpush2.msra.mxu0 %v10394
          %10539 = vmatprep.subr.mxu0 0.0
          %10540 = vmatpush2.msra.mxu0 %v10393
          %10541 = vmatprep.subr.mxu0 0.0
          %10542 = vmatpush2.msra.mxu0 %v10392
          %10543 = vmatprep.subr.mxu0 0.0
          %10544 = vmatpush2.msra.mxu0 %v10391
          %10545 = vmatprep.mubr.f32.mxu0 %v10374
          %10546 = vmatmul.mubr.f32.gmra.mxu0 %v10373
          %v10547 = vpop.f32.mrf.mxu0
          %v10548 = vadd.f32 %v10478, %v10547
          %v10549 = vpop.f32.mrf.mxu0
          %10550 = vdwg.mxu0
          %v10551 = vld [vmem:[%s19] sm:$0xff]
          %v10552 = vld [vmem:[%s19 + $0x8] sm:$0xff]
          %v10553 = vld [vmem:[%s19 + $0x10] sm:$0xff]
          %v10554 = vld [vmem:[%s19 + $0x18] sm:$0xff]
          %v10555 = vld [vmem:[%s19 + $0x20] sm:$0xff]
          %v10556 = vld [vmem:[%s19 + $0x28] sm:$0xff]
          %v10557 = vld [vmem:[%s19 + $0x30] sm:$0xff]
          %v10558 = vld [vmem:[%s19 + $0x38] sm:$0xff]
          %v10559 = vld [vmem:[%s20] sm:$0x3]
          %v10561 = vlaneseq
          %v10562 = vshrl.u32 %v10561, 7
          %v10563 = vsub.s32 0, %v10562
          %v10564 = vrot.slane %v10559, %v10563
          %v10565 = vlaneseq
          %v10566 = vshrl.u32 %v10565, 7
          %v10567 = vsub.s32 1, %v10566
          %v10568 = vrot.slane %v10559, %v10567
          %v10572 = vsel %vm9666, %v10548, 0
          %10574 = vmatprep.subr.mxu0 0.0
          %10575 = vmatpush1.msra.mxu0 0.0
          %10576 = vmatprep.subr.mxu0 0.0
          %10577 = vmatpush1.msra.mxu0 0.0
          %10578 = vmatprep.subr.mxu0 0.0
          %10579 = vmatpush1.msra.mxu0 0.0
          %10580 = vmatprep.subr.mxu0 0.0
          %10581 = vmatpush1.msra.mxu0 0.0
          %10582 = vmatprep.subr.mxu0 0.0
          %10583 = vmatpush1.msra.mxu0 0.0
          %10584 = vmatprep.subr.mxu0 0.0
          %10585 = vmatpush1.msra.mxu0 0.0
          %10586 = vmatprep.subr.mxu0 0.0
          %10587 = vmatpush1.msra.mxu0 0.0
          %10588 = vmatprep.subr.mxu0 0.0
          %10589 = vmatpush1.msra.mxu0 0.0
          %10590 = vmatprep.subr.mxu0 0.0
          %10591 = vmatpush1.msra.mxu0 0.0
          %10592 = vmatprep.subr.mxu0 0.0
          %10593 = vmatpush1.msra.mxu0 0.0
          %10594 = vmatprep.subr.mxu0 0.0
          %10595 = vmatpush1.msra.mxu0 0.0
          %10596 = vmatprep.subr.mxu0 0.0
          %10597 = vmatpush1.msra.mxu0 0.0
          %10598 = vmatprep.subr.mxu0 %v10558
          %10599 = vmatpush1.msra.mxu0 %v10557
          %10600 = vmatprep.subr.mxu0 %v10556
          %10601 = vmatpush1.msra.mxu0 %v10555
          %10602 = vmatprep.subr.mxu0 %v10554
          %10603 = vmatpush1.msra.mxu0 %v10553
          %10604 = vmatprep.subr.mxu0 %v10552
          %10605 = vmatpush1.msra.mxu0 %v10551
          %10606 = vmatprep.subr.mxu0 0.0
          %10607 = vmatpush2.msra.mxu0 0.0
          %10608 = vmatprep.subr.mxu0 0.0
          %10609 = vmatpush2.msra.mxu0 0.0
          %10610 = vmatprep.subr.mxu0 0.0
          %10611 = vmatpush2.msra.mxu0 0.0
          %10612 = vmatprep.subr.mxu0 0.0
          %10613 = vmatpush2.msra.mxu0 0.0
          %10614 = vmatprep.subr.mxu0 0.0
          %10615 = vmatpush2.msra.mxu0 0.0
          %10616 = vmatprep.subr.mxu0 0.0
          %10617 = vmatpush2.msra.mxu0 0.0
          %10618 = vmatprep.subr.mxu0 0.0
          %10619 = vmatpush2.msra.mxu0 0.0
          %10620 = vmatprep.subr.mxu0 0.0
          %10621 = vmatpush2.msra.mxu0 0.0
          %10622 = vmatprep.subr.mxu0 0.0
          %10623 = vmatpush2.msra.mxu0 0.0
          %10624 = vmatprep.subr.mxu0 0.0
          %10625 = vmatpush2.msra.mxu0 0.0
          %10626 = vmatprep.subr.mxu0 0.0
          %10627 = vmatpush2.msra.mxu0 0.0
          %10628 = vmatprep.subr.mxu0 0.0
          %10629 = vmatpush2.msra.mxu0 0.0
          %10630 = vmatprep.subr.mxu0 0.0
          %10631 = vmatpush2.msra.mxu0 0.0
          %10632 = vmatprep.subr.mxu0 0.0
          %10633 = vmatpush2.msra.mxu0 0.0
          %10634 = vmatprep.subr.mxu0 0.0
          %10635 = vmatpush2.msra.mxu0 0.0
          %10636 = vmatprep.subr.mxu0 0.0
          %10637 = vmatpush2.msra.mxu0 0.0
          %10638 = vmatprep.mubr.f32.mxu0 0.0
          %10639 = vmatmul.mubr.f32.gmra.mxu0 %v10572
          %v10640 = vpop.f32.mrf.mxu0
          %v10641 = vadd.f32 %v10564, %v10640
          %v10642 = vpop.f32.mrf.mxu0
          %v10643 = vadd.f32 %v10568, %v10642
          %10644 = vdwg.mxu0
          %v10647 = vcombine.low %v10641, %v10643
          %v10649 = vunpack.c.l.s4 1983009808
          %v10650 = vunpack.c.0.s8 %v10649
          %v10651 = vlaneseq
          %v10652 = vshrl.u32 %v10651, 7
          %v10653 = vsub.s32 %v10650, %v10652
          %v10654 = vrot.slane %v10647, %v10653
          %10656 = vst [vmem:[#allocation3] sm:$0xf] %v10654
        $region112: #{tpu_custom_call.1} parent=103 // pred_fallthru
          _
        // Predicated region
        $region113: #{tpu_custom_call.1} parent=103 // pred_check
          %p10657 = pneg %p497
        $region114: #{tpu_custom_call.1} parent=103 // pred_check_branch
          %10659 = sbr.rel (%p10657) target = $region116
        $region115: #{tpu_custom_call.1} parent=103 // pred_region
          %s10661 = ssub.s32 64, 64
          %10662 = vsyncadd [#allocation4], %s10661
          %s10664 = sshll.u32 [#allocation3], 4
          %s10665 = int_to_ptr.vmem [resolvable:$true] %s10664
          %10667 = dma.vmem_to_hbm [thread:$0]  %s10665, 64, %s21, [#allocation4]
        $region116: #{tpu_custom_call.1} parent=103 // pred_fallthru
          _
        // Predicated region
        $region117: #{tpu_custom_call.1} parent=103 // pred_check
          %p10668 = pneg %p497
        $region118: #{tpu_custom_call.1} parent=103 // pred_check_branch
          %10670 = sbr.rel (%p10668) target = $region120
        $region119: #{tpu_custom_call.1} parent=103 // pred_region
          %10671 = dma.done [#allocation4], 64
        $region120: #{tpu_custom_call.1} parent=103 // pred_fallthru
          _
      $region104: #{tpu_custom_call.1} parent=5 // pred_fallthru
        _
      %p10672 = scmp.le.s32.totalorder 2, %s28
      // Predicated region
      $region121: #{tpu_custom_call.1} parent=5 // pred_check
        %p10673 = pneg %p10672
      $region122: #{tpu_custom_call.1} parent=5 // pred_check_branch
        %10675 = sbr.rel (%p10673) target = $region124
      $region123: #{tpu_custom_call.1} parent=5 // pred_region
        %s10676 = ssub.s32 %s28, 2
      $region124: #{tpu_custom_call.1} parent=5 // pred_fallthru
        _
    $region6: #{tpu_custom_call.1} parent=1 // loop_footer
      %s32 = sadd.s32 1, %s28
    $region7: #{tpu_custom_call.1} parent=1 // loop_footer_branch
      %27 = sbr.rel target = $region3
    $region8: #{tpu_custom_call.1} parent=1 // loop_exit
      _
    %10677 = vsyncpa [#allocation4], 1
    %s10678 = scalar_lea.sflag [#allocation4], 1
    %10679 = vsyncpa %s10678, 1

</llo_original>
